<compile_context>
chip_gen: v7x
topology: tpu7x:2x2x1
jax: 0.10.0
libtpu: 0.0.40
codegen_flags: <defaults>
</compile_context>

<pallas_src>
import numpy as np
import jax
import jax.numpy as jnp
from jax import lax
from jax.experimental import pallas as pl
from jax.experimental.pallas import tpu as pltpu


def _round_up(a, m):
    return ((a + m - 1) // m) * m


# Fixed section order inside the packed weight / bias slabs.
_SECTIONS = ("enc1", "enc2", "enc3", "enc4", "fc_ml",
             "dec1", "dec2", "dec3", "dec4", "out")


def slab_layout(C, L):
    """Static row layout of the packed weight slab.

    Returns (lane_width, {name: (row_offset, n_rows, bias_row)}, total_rows).
    All row offsets are multiples of 8 (sublane aligned).
    """
    H1, H2 = C // 2, C // 4
    lstm_io = {"enc1": (C, C), "enc2": (C, H1), "enc3": (H1, H2), "enc4": (H2, L),
               "dec1": (2 * L, H2), "dec2": (H2, H1), "dec3": (H1, C), "dec4": (C, C)}
    n_rows = {n: i + h for n, (i, h) in lstm_io.items()}
    n_cols = {n: 4 * h for n, (i, h) in lstm_io.items()}
    n_rows["fc_ml"], n_cols["fc_ml"] = L, 2 * L
    n_rows["out"], n_cols["out"] = C, C
    lanes = _round_up(max(max(n_cols.values()), 128), 128)
    layout, off = {}, 0
    for b_row, name in enumerate(_SECTIONS):
        layout[name] = (off, n_rows[name], b_row)
        off += _round_up(n_rows[name], 8)
    return lanes, layout, off


def _gate_perm(H):
    # PyTorch LSTM gate order (i, f, g, o) -> (i, f, o, g): in-kernel this
    # becomes one sigmoid over [:, :3H] and one tanh over [:, 3H:4H].
    return np.concatenate([np.arange(0, 2 * H), np.arange(3 * H, 4 * H),
                           np.arange(2 * H, 3 * H)])


def pack_params(raw, C, L):
    """Pack all weights/biases into one weight slab + one bias slab (host side)."""
    lanes, layout, total_rows = slab_layout(C, L)
    w_slab = np.zeros((total_rows, lanes), np.float32)
    b_slab = np.zeros((len(_SECTIONS), lanes), np.float32)

    def put(name, w, b):
        off, k, b_row = layout[name]
        assert w.shape[0] == k and w.shape[1] <= lanes
        w_slab[off:off + k, :w.shape[1]] = w
        b_slab[b_row, :b.shape[0]] = b

    for name in ("enc1", "enc2", "enc3", "enc4", "dec1", "dec2", "dec3", "dec4"):
        p = raw[name]
        H = np.asarray(p["w_hh"]).shape[1]
        perm = _gate_perm(H)
        # Fused [Wih; Whh] with permuted gate columns -> (I+H, 4H)
        w = np.concatenate([np.asarray(p["w_ih"]).T,
                            np.asarray(p["w_hh"]).T], axis=0)[:, perm]
        b = (np.asarray(p["b_ih"]) + np.asarray(p["b_hh"]))[perm]
        put(name, w.astype(np.float32), b.astype(np.float32))

    # fc_mu | fc_logvar fused into one (L, 2L) matmul.
    w_ml = np.concatenate([np.asarray(raw["fc_mu"]["w"]).T,
                           np.asarray(raw["fc_logvar"]["w"]).T], axis=1)
    b_ml = np.concatenate([np.asarray(raw["fc_mu"]["b"]),
                           np.asarray(raw["fc_logvar"]["b"])])
    put("fc_ml", w_ml.astype(np.float32), b_ml.astype(np.float32))

    put("out", np.asarray(raw["out"]["w"]).T.astype(np.float32),
        np.asarray(raw["out"]["b"]).astype(np.float32))

    return jnp.asarray(w_slab), jnp.asarray(b_slab)


# ----------------------------------------------------------------------------
# Fused whole-model kernel
# ----------------------------------------------------------------------------
def make_kernel(T, B, C, H1, H2, L, layout, out_w):
    def kernel(x_ref, eps_ref, w_ref, b_ref, out_ref):
        x2 = x_ref[...]        # (T*B, C), time-major rows (t, b)
        eps2 = eps_ref[...]    # (T*B, L)

        def params(name):
            off, k, b_row = layout[name]           # static offsets
            return w_ref[off:off + k, :], b_ref[b_row:b_row + 1, :]

        def lstm(xs, name, H):
            """xs: list of T (B, I) values -> list of T (B, H) hidden states."""
            w, b = params(name)                    # loaded once per layer
            h = jnp.zeros((B, H), jnp.float32)
            c = jnp.zeros((B, H), jnp.float32)
            ys = []
            for t in range(T):                     # static unroll -> wavefront
                xz = jnp.concatenate([xs[t], h], axis=-1)       # (B, I+H)
                g = jnp.dot(xz, w, preferred_element_type=jnp.float32) + b
                s = jax.nn.sigmoid(g[:, 0:3 * H])  # gates packed (i, f, o | g)
                gg = jnp.tanh(g[:, 3 * H:4 * H])
                c = s[:, H:2 * H] * c + s[:, 0:H] * gg
                h = s[:, 2 * H:3 * H] * jnp.tanh(c)
                ys.append(h)
            return ys

        xs = [x2[t * B:(t + 1) * B, :] for t in range(T)]

        # ---- encoder ----
        h = lstm(xs, "enc1", C)
        h = lstm(h, "enc2", H1)
        h = lstm(h, "enc3", H2)
        h4 = lstm(h, "enc4", L)                    # encoder output x

        # ---- fused fc_mu|fc_logvar + relu + reparameterize + [x, z] ----
        w_ml, b_ml = params("fc_ml")
        mus, lvs, zs, xzs = [], [], [], []
        for t in range(T):
            ml = jnp.dot(h4[t], w_ml, preferred_element_type=jnp.float32) + b_ml
            mu = jnp.maximum(ml[:, 0:L], 0.0)              # F.relu(mu)
            lv = jnp.maximum(ml[:, L:2 * L], 0.0)          # F.relu(logvar)
            z = mu + eps2[t * B:(t + 1) * B, :] * jnp.exp(0.5 * lv)
            mus.append(mu); lvs.append(lv); zs.append(z)
            xzs.append(jnp.concatenate([h4[t], z], axis=-1))

        # ---- decoder ----
        d = lstm(xzs, "dec1", H2)
        d = lstm(d, "dec2", H1)
        d = lstm(d, "dec3", C)
        d4 = lstm(d, "dec4", C)

        # ---- output_fc + fused lane-dense output slab ----
        w_o, b_o = params("out")
        pad_w = out_w - (C + 4 * L)
        pad = jnp.zeros((B, pad_w), jnp.float32) if pad_w > 0 else None
        for t in range(T):
            o = jnp.dot(d4[t], w_o, preferred_element_type=jnp.float32) + b_o
            pieces = [o[:, 0:C], mus[t], lvs[t], h4[t], zs[t]]
            if pad is not None:
                pieces.append(pad)
            # full-128-lane store at a static sublane offset
            out_ref[t * B:(t + 1) * B, :] = jnp.concatenate(pieces, axis=-1)
    return kernel


# ----------------------------------------------------------------------------
# Wrapper
# ----------------------------------------------------------------------------
def _full_block(shape):
    nd = len(shape)
    return pl.BlockSpec(shape, lambda *_: (0,) * nd)


def model_forward(w_slab, b_slab, x_btc, eps_btl):
    B, T, C = x_btc.shape
    L = eps_btl.shape[-1]
    H1, H2 = C // 2, C // 4
    _, layout, _ = slab_layout(C, L)
    out_w = _round_up(C + 4 * L, 128)

    # flat time-major layout at the kernel boundary
    x2 = jnp.transpose(x_btc, (1, 0, 2)).reshape(T * B, C)
    eps2 = jnp.transpose(eps_btl, (1, 0, 2)).reshape(T * B, L)

    out = pl.pallas_call(
        make_kernel(T, B, C, H1, H2, L, layout, out_w),
        out_shape=jax.ShapeDtypeStruct((T * B, out_w), jnp.float32),
        in_specs=[_full_block(a.shape) for a in (x2, eps2, w_slab, b_slab)],
        out_specs=_full_block((T * B, out_w)),
        compiler_params=pltpu.CompilerParams(vmem_limit_bytes=32 * 1024 * 1024),
    )(x2, eps2, w_slab, b_slab)

    # single small transpose + lane slices to recover the 5 outputs
    out_bt = jnp.transpose(out.reshape(T, B, out_w), (1, 0, 2))
    output = out_bt[:, :, 0:C]
    mu = out_bt[:, :, C:C + L]
    logvar = out_bt[:, :, C + L:C + 2 * L]
    x_enc = out_bt[:, :, C + 2 * L:C + 3 * L]
    z = out_bt[:, :, C + 3 * L:C + 4 * L]
    return output, mu, logvar, x_enc, z


# ----------------------------------------------------------------------------
# Parameter construction (deterministic, PyTorch-style uniform init)
# ----------------------------------------------------------------------------
def init_lstm_raw(key, in_size, hidden):
    k = 1.0 / np.sqrt(hidden)
    k1, k2, k3, k4 = jax.random.split(key, 4)
    return {
        "w_ih": jax.random.uniform(k1, (4 * hidden, in_size), jnp.float32, -k, k),
        "w_hh": jax.random.uniform(k2, (4 * hidden, hidden), jnp.float32, -k, k),
        "b_ih": jax.random.uniform(k3, (4 * hidden,), jnp.float32, -k, k),
        "b_hh": jax.random.uniform(k4, (4 * hidden,), jnp.float32, -k, k),
    }


def init_linear_raw(key, in_size, out_size):
    k = 1.0 / np.sqrt(in_size)
    k1, k2 = jax.random.split(key)
    return {"w": jax.random.uniform(k1, (out_size, in_size), jnp.float32, -k, k),
            "b": jax.random.uniform(k2, (out_size,), jnp.float32, -k, k)}


def build_raw_params(key, C, L):
    H1, H2 = C // 2, C // 4
    ks = jax.random.split(key, 11)
    return {
        "enc1": init_lstm_raw(ks[0], C, C),
        "enc2": init_lstm_raw(ks[1], C, H1),
        "enc3": init_lstm_raw(ks[2], H1, H2),
        "enc4": init_lstm_raw(ks[3], H2, L),
        "fc_mu": init_linear_raw(ks[4], L, L),
        "fc_logvar": init_linear_raw(ks[5], L, L),
        "dec1": init_lstm_raw(ks[6], 2 * L, H2),
        "dec2": init_lstm_raw(ks[7], H2, H1),
        "dec3": init_lstm_raw(ks[8], H1, C),
        "dec4": init_lstm_raw(ks[9], C, C),
        "out": init_linear_raw(ks[10], C, C),
    }


# ----------------------------------------------------------------------------
# Pure-JAX reference (correctness check, PyTorch semantics & layouts)
# ----------------------------------------------------------------------------
def lstm_ref(x_tbd, p):
    B = x_tbd.shape[1]
    w_ih, w_hh = p["w_ih"], p["w_hh"]
    H = w_hh.shape[1]
    b = p["b_ih"] + p["b_hh"]

    def step(carry, x_t):
        h, c = carry
        g = x_t @ w_ih.T + h @ w_hh.T + b
        i = jax.nn.sigmoid(g[:, 0:H])
        f = jax.nn.sigmoid(g[:, H:2 * H])
        gg = jnp.tanh(g[:, 2 * H:3 * H])
        o = jax.nn.sigmoid(g[:, 3 * H:4 * H])
        c = f * c + i * gg
        h = o * jnp.tanh(c)
        return (h, c), h

    init = (jnp.zeros((B, H), jnp.float32), jnp.zeros((B, H), jnp.float32))
    _, ys = lax.scan(step, init, x_tbd)
    return ys


def model_forward_ref(raw, x_btc, eps_btl):
    x = jnp.transpose(x_btc, (1, 0, 2))
    for n in ("enc1", "enc2", "enc3", "enc4"):
        x = lstm_ref(x, raw[n])
    mu = jnp.maximum(x @ raw["fc_mu"]["w"].T + raw["fc_mu"]["b"], 0.0)
    lv = jnp.maximum(x @ raw["fc_logvar"]["w"].T + raw["fc_logvar"]["b"], 0.0)
    eps = jnp.transpose(eps_btl, (1, 0, 2))
    z = mu + eps * jnp.exp(0.5 * lv)
    d = jnp.concatenate([x, z], axis=-1)
    for n in ("dec1", "dec2", "dec3", "dec4"):
        d = lstm_ref(d, raw[n])
    out = d @ raw["out"]["w"].T + raw["out"]["b"]

    def to_btd(a):
        return jnp.transpose(a, (1, 0, 2))

    return to_btd(out), to_btd(mu), to_btd(lv), to_btd(x), to_btd(z)


# ----------------------------------------------------------------------------
if __name__ == "__main__":
    # args.channels = 32, args.seq_len = 8, args.vae_latent_size = 16, batch = 2
    CHANNELS, SEQ_LEN, LATENT, BATCH = 32, 8, 16, 2

    root = jax.random.PRNGKey(0)
    k_params, k_x, k_eps = jax.random.split(root, 3)

    raw = build_raw_params(k_params, CHANNELS, LATENT)
    w_slab, b_slab = pack_params(raw, CHANNELS, LATENT)

    x = jax.random.normal(k_x, (BATCH, SEQ_LEN, CHANNELS), jnp.float32)
    # eps for the reparameterization trick (torch.randn_like equivalent)
    eps = jax.random.normal(k_eps, (BATCH, SEQ_LEN, LATENT), jnp.float32)

    fwd = jax.jit(model_forward)
    outs = jax.block_until_ready(fwd(w_slab, b_slab, x, eps))

    # sanity check against pure-JAX reference
    refs = model_forward_ref(raw, x, eps)
    for o, r in zip(outs, refs):
        np.testing.assert_allclose(np.asarray(o), np.asarray(r),
                                   rtol=1e-4, atol=1e-4)

    print("KERNEL_OK")
</pallas_src>

<mosaic_0001>
module attributes {stable_mosaic.version = 11 : i64} {
  func.func @kernel(%arg0: memref<16x32xf32, #tpu.memory_space<vmem>>, %arg1: memref<16x16xf32, #tpu.memory_space<vmem>>, %arg2: memref<384x128xf32, #tpu.memory_space<vmem>>, %arg3: memref<10x128xf32, #tpu.memory_space<vmem>>, %arg4: memref<16x128xf32, #tpu.memory_space<vmem>>) attributes {dimension_semantics = [], scalar_prefetch = 0 : i64, scratch_operands = 0 : i64, tpu.core_type = #tpu.core_type<tc>} {
    %c0 = arith.constant 0 : index
    %c0_0 = arith.constant 0 : index
    %0 = vector.load %arg0[%c0, %c0_0] : memref<16x32xf32, #tpu.memory_space<vmem>>, vector<16x32xf32>
    %c0_1 = arith.constant 0 : index
    %c0_2 = arith.constant 0 : index
    %1 = vector.load %arg1[%c0_1, %c0_2] : memref<16x16xf32, #tpu.memory_space<vmem>>, vector<16x16xf32>
    %2 = vector.extract_strided_slice %0 {offsets = [0, 0], sizes = [2, 32], strides = [1, 1]} : vector<16x32xf32> to vector<2x32xf32>
    %3 = vector.extract_strided_slice %0 {offsets = [2, 0], sizes = [2, 32], strides = [1, 1]} : vector<16x32xf32> to vector<2x32xf32>
    %4 = vector.extract_strided_slice %0 {offsets = [4, 0], sizes = [2, 32], strides = [1, 1]} : vector<16x32xf32> to vector<2x32xf32>
    %5 = vector.extract_strided_slice %0 {offsets = [6, 0], sizes = [2, 32], strides = [1, 1]} : vector<16x32xf32> to vector<2x32xf32>
    %6 = vector.extract_strided_slice %0 {offsets = [8, 0], sizes = [2, 32], strides = [1, 1]} : vector<16x32xf32> to vector<2x32xf32>
    %7 = vector.extract_strided_slice %0 {offsets = [10, 0], sizes = [2, 32], strides = [1, 1]} : vector<16x32xf32> to vector<2x32xf32>
    %8 = vector.extract_strided_slice %0 {offsets = [12, 0], sizes = [2, 32], strides = [1, 1]} : vector<16x32xf32> to vector<2x32xf32>
    %9 = vector.extract_strided_slice %0 {offsets = [14, 0], sizes = [2, 32], strides = [1, 1]} : vector<16x32xf32> to vector<2x32xf32>
    %c0_3 = arith.constant 0 : index
    %c0_4 = arith.constant 0 : index
    %10 = vector.load %arg2[%c0_3, %c0_4] : memref<384x128xf32, #tpu.memory_space<vmem>>, vector<64x128xf32>
    %c0_5 = arith.constant 0 : index
    %c0_6 = arith.constant 0 : index
    %11 = vector.load %arg3[%c0_5, %c0_6] : memref<10x128xf32, #tpu.memory_space<vmem>>, vector<1x128xf32>
    %cst = arith.constant 0.000000e+00 : f32
    %12 = vector.broadcast %cst : f32 to vector<2x32xf32>
    %cst_7 = arith.constant 0.000000e+00 : f32
    %13 = vector.broadcast %cst_7 : f32 to vector<2x32xf32>
    %14 = tpu.concatenate %2, %12 in 1 : vector<2x32xf32>, vector<2x32xf32> -> vector<2x64xf32>
    %cst_8 = arith.constant dense<0.000000e+00> : vector<2x128xf32>
    %15 = tpu.matmul %14, %10, %cst_8 {dimension_numbers = #tpu.dot_dimension_numbers<[1], [0], [0], [1], [0, 0, 1, 1], [], []>} : vector<2x64xf32>, vector<64x128xf32>, vector<2x128xf32> -> vector<2x128xf32>
    %16 = vector.broadcast %11 : vector<1x128xf32> to vector<2x128xf32>
    %17 = arith.addf %15, %16 : vector<2x128xf32>
    %18 = vector.extract_strided_slice %17 {offsets = [0, 0], sizes = [2, 96], strides = [1, 1]} : vector<2x128xf32> to vector<2x96xf32>
    %19 = arith.negf %18 : vector<2x96xf32>
    %20 = math.exp %19 : vector<2x96xf32>
    %cst_9 = arith.constant 1.000000e+00 : f32
    %21 = vector.broadcast %cst_9 : f32 to vector<2x96xf32>
    %22 = arith.addf %21, %20 : vector<2x96xf32>
    %23 = arith.divf %21, %22 : vector<2x96xf32>
    %24 = vector.extract_strided_slice %17 {offsets = [0, 96], sizes = [2, 32], strides = [1, 1]} : vector<2x128xf32> to vector<2x32xf32>
    %25 = math.tanh %24 : vector<2x32xf32>
    %26 = vector.extract_strided_slice %23 {offsets = [0, 32], sizes = [2, 32], strides = [1, 1]} : vector<2x96xf32> to vector<2x32xf32>
    %27 = arith.mulf %26, %13 : vector<2x32xf32>
    %28 = vector.extract_strided_slice %23 {offsets = [0, 0], sizes = [2, 32], strides = [1, 1]} : vector<2x96xf32> to vector<2x32xf32>
    %29 = arith.mulf %28, %25 : vector<2x32xf32>
    %30 = arith.addf %27, %29 : vector<2x32xf32>
    %31 = vector.extract_strided_slice %23 {offsets = [0, 64], sizes = [2, 32], strides = [1, 1]} : vector<2x96xf32> to vector<2x32xf32>
    %32 = math.tanh %30 : vector<2x32xf32>
    %33 = arith.mulf %31, %32 : vector<2x32xf32>
    %34 = tpu.concatenate %3, %33 in 1 : vector<2x32xf32>, vector<2x32xf32> -> vector<2x64xf32>
    %cst_10 = arith.constant dense<0.000000e+00> : vector<2x128xf32>
    %35 = tpu.matmul %34, %10, %cst_10 {dimension_numbers = #tpu.dot_dimension_numbers<[1], [0], [0], [1], [0, 0, 1, 1], [], []>} : vector<2x64xf32>, vector<64x128xf32>, vector<2x128xf32> -> vector<2x128xf32>
    %36 = vector.broadcast %11 : vector<1x128xf32> to vector<2x128xf32>
    %37 = arith.addf %35, %36 : vector<2x128xf32>
    %38 = vector.extract_strided_slice %37 {offsets = [0, 0], sizes = [2, 96], strides = [1, 1]} : vector<2x128xf32> to vector<2x96xf32>
    %39 = arith.negf %38 : vector<2x96xf32>
    %40 = math.exp %39 : vector<2x96xf32>
    %cst_11 = arith.constant 1.000000e+00 : f32
    %41 = vector.broadcast %cst_11 : f32 to vector<2x96xf32>
    %42 = arith.addf %41, %40 : vector<2x96xf32>
    %43 = arith.divf %41, %42 : vector<2x96xf32>
    %44 = vector.extract_strided_slice %37 {offsets = [0, 96], sizes = [2, 32], strides = [1, 1]} : vector<2x128xf32> to vector<2x32xf32>
    %45 = math.tanh %44 : vector<2x32xf32>
    %46 = vector.extract_strided_slice %43 {offsets = [0, 32], sizes = [2, 32], strides = [1, 1]} : vector<2x96xf32> to vector<2x32xf32>
    %47 = arith.mulf %46, %30 : vector<2x32xf32>
    %48 = vector.extract_strided_slice %43 {offsets = [0, 0], sizes = [2, 32], strides = [1, 1]} : vector<2x96xf32> to vector<2x32xf32>
    %49 = arith.mulf %48, %45 : vector<2x32xf32>
    %50 = arith.addf %47, %49 : vector<2x32xf32>
    %51 = vector.extract_strided_slice %43 {offsets = [0, 64], sizes = [2, 32], strides = [1, 1]} : vector<2x96xf32> to vector<2x32xf32>
    %52 = math.tanh %50 : vector<2x32xf32>
    %53 = arith.mulf %51, %52 : vector<2x32xf32>
    %54 = tpu.concatenate %4, %53 in 1 : vector<2x32xf32>, vector<2x32xf32> -> vector<2x64xf32>
    %cst_12 = arith.constant dense<0.000000e+00> : vector<2x128xf32>
    %55 = tpu.matmul %54, %10, %cst_12 {dimension_numbers = #tpu.dot_dimension_numbers<[1], [0], [0], [1], [0, 0, 1, 1], [], []>} : vector<2x64xf32>, vector<64x128xf32>, vector<2x128xf32> -> vector<2x128xf32>
    %56 = vector.broadcast %11 : vector<1x128xf32> to vector<2x128xf32>
    %57 = arith.addf %55, %56 : vector<2x128xf32>
    %58 = vector.extract_strided_slice %57 {offsets = [0, 0], sizes = [2, 96], strides = [1, 1]} : vector<2x128xf32> to vector<2x96xf32>
    %59 = arith.negf %58 : vector<2x96xf32>
    %60 = math.exp %59 : vector<2x96xf32>
    %cst_13 = arith.constant 1.000000e+00 : f32
    %61 = vector.broadcast %cst_13 : f32 to vector<2x96xf32>
    %62 = arith.addf %61, %60 : vector<2x96xf32>
    %63 = arith.divf %61, %62 : vector<2x96xf32>
    %64 = vector.extract_strided_slice %57 {offsets = [0, 96], sizes = [2, 32], strides = [1, 1]} : vector<2x128xf32> to vector<2x32xf32>
    %65 = math.tanh %64 : vector<2x32xf32>
    %66 = vector.extract_strided_slice %63 {offsets = [0, 32], sizes = [2, 32], strides = [1, 1]} : vector<2x96xf32> to vector<2x32xf32>
    %67 = arith.mulf %66, %50 : vector<2x32xf32>
    %68 = vector.extract_strided_slice %63 {offsets = [0, 0], sizes = [2, 32], strides = [1, 1]} : vector<2x96xf32> to vector<2x32xf32>
    %69 = arith.mulf %68, %65 : vector<2x32xf32>
    %70 = arith.addf %67, %69 : vector<2x32xf32>
    %71 = vector.extract_strided_slice %63 {offsets = [0, 64], sizes = [2, 32], strides = [1, 1]} : vector<2x96xf32> to vector<2x32xf32>
    %72 = math.tanh %70 : vector<2x32xf32>
    %73 = arith.mulf %71, %72 : vector<2x32xf32>
    %74 = tpu.concatenate %5, %73 in 1 : vector<2x32xf32>, vector<2x32xf32> -> vector<2x64xf32>
    %cst_14 = arith.constant dense<0.000000e+00> : vector<2x128xf32>
    %75 = tpu.matmul %74, %10, %cst_14 {dimension_numbers = #tpu.dot_dimension_numbers<[1], [0], [0], [1], [0, 0, 1, 1], [], []>} : vector<2x64xf32>, vector<64x128xf32>, vector<2x128xf32> -> vector<2x128xf32>
    %76 = vector.broadcast %11 : vector<1x128xf32> to vector<2x128xf32>
    %77 = arith.addf %75, %76 : vector<2x128xf32>
    %78 = vector.extract_strided_slice %77 {offsets = [0, 0], sizes = [2, 96], strides = [1, 1]} : vector<2x128xf32> to vector<2x96xf32>
    %79 = arith.negf %78 : vector<2x96xf32>
    %80 = math.exp %79 : vector<2x96xf32>
    %cst_15 = arith.constant 1.000000e+00 : f32
    %81 = vector.broadcast %cst_15 : f32 to vector<2x96xf32>
    %82 = arith.addf %81, %80 : vector<2x96xf32>
    %83 = arith.divf %81, %82 : vector<2x96xf32>
    %84 = vector.extract_strided_slice %77 {offsets = [0, 96], sizes = [2, 32], strides = [1, 1]} : vector<2x128xf32> to vector<2x32xf32>
    %85 = math.tanh %84 : vector<2x32xf32>
    %86 = vector.extract_strided_slice %83 {offsets = [0, 32], sizes = [2, 32], strides = [1, 1]} : vector<2x96xf32> to vector<2x32xf32>
    %87 = arith.mulf %86, %70 : vector<2x32xf32>
    %88 = vector.extract_strided_slice %83 {offsets = [0, 0], sizes = [2, 32], strides = [1, 1]} : vector<2x96xf32> to vector<2x32xf32>
    %89 = arith.mulf %88, %85 : vector<2x32xf32>
    %90 = arith.addf %87, %89 : vector<2x32xf32>
    %91 = vector.extract_strided_slice %83 {offsets = [0, 64], sizes = [2, 32], strides = [1, 1]} : vector<2x96xf32> to vector<2x32xf32>
    %92 = math.tanh %90 : vector<2x32xf32>
    %93 = arith.mulf %91, %92 : vector<2x32xf32>
    %94 = tpu.concatenate %6, %93 in 1 : vector<2x32xf32>, vector<2x32xf32> -> vector<2x64xf32>
    %cst_16 = arith.constant dense<0.000000e+00> : vector<2x128xf32>
    %95 = tpu.matmul %94, %10, %cst_16 {dimension_numbers = #tpu.dot_dimension_numbers<[1], [0], [0], [1], [0, 0, 1, 1], [], []>} : vector<2x64xf32>, vector<64x128xf32>, vector<2x128xf32> -> vector<2x128xf32>
    %96 = vector.broadcast %11 : vector<1x128xf32> to vector<2x128xf32>
    %97 = arith.addf %95, %96 : vector<2x128xf32>
    %98 = vector.extract_strided_slice %97 {offsets = [0, 0], sizes = [2, 96], strides = [1, 1]} : vector<2x128xf32> to vector<2x96xf32>
    %99 = arith.negf %98 : vector<2x96xf32>
    %100 = math.exp %99 : vector<2x96xf32>
    %cst_17 = arith.constant 1.000000e+00 : f32
    %101 = vector.broadcast %cst_17 : f32 to vector<2x96xf32>
    %102 = arith.addf %101, %100 : vector<2x96xf32>
    %103 = arith.divf %101, %102 : vector<2x96xf32>
    %104 = vector.extract_strided_slice %97 {offsets = [0, 96], sizes = [2, 32], strides = [1, 1]} : vector<2x128xf32> to vector<2x32xf32>
    %105 = math.tanh %104 : vector<2x32xf32>
    %106 = vector.extract_strided_slice %103 {offsets = [0, 32], sizes = [2, 32], strides = [1, 1]} : vector<2x96xf32> to vector<2x32xf32>
    %107 = arith.mulf %106, %90 : vector<2x32xf32>
    %108 = vector.extract_strided_slice %103 {offsets = [0, 0], sizes = [2, 32], strides = [1, 1]} : vector<2x96xf32> to vector<2x32xf32>
    %109 = arith.mulf %108, %105 : vector<2x32xf32>
    %110 = arith.addf %107, %109 : vector<2x32xf32>
    %111 = vector.extract_strided_slice %103 {offsets = [0, 64], sizes = [2, 32], strides = [1, 1]} : vector<2x96xf32> to vector<2x32xf32>
    %112 = math.tanh %110 : vector<2x32xf32>
    %113 = arith.mulf %111, %112 : vector<2x32xf32>
    %114 = tpu.concatenate %7, %113 in 1 : vector<2x32xf32>, vector<2x32xf32> -> vector<2x64xf32>
    %cst_18 = arith.constant dense<0.000000e+00> : vector<2x128xf32>
    %115 = tpu.matmul %114, %10, %cst_18 {dimension_numbers = #tpu.dot_dimension_numbers<[1], [0], [0], [1], [0, 0, 1, 1], [], []>} : vector<2x64xf32>, vector<64x128xf32>, vector<2x128xf32> -> vector<2x128xf32>
    %116 = vector.broadcast %11 : vector<1x128xf32> to vector<2x128xf32>
    %117 = arith.addf %115, %116 : vector<2x128xf32>
    %118 = vector.extract_strided_slice %117 {offsets = [0, 0], sizes = [2, 96], strides = [1, 1]} : vector<2x128xf32> to vector<2x96xf32>
    %119 = arith.negf %118 : vector<2x96xf32>
    %120 = math.exp %119 : vector<2x96xf32>
    %cst_19 = arith.constant 1.000000e+00 : f32
    %121 = vector.broadcast %cst_19 : f32 to vector<2x96xf32>
    %122 = arith.addf %121, %120 : vector<2x96xf32>
    %123 = arith.divf %121, %122 : vector<2x96xf32>
    %124 = vector.extract_strided_slice %117 {offsets = [0, 96], sizes = [2, 32], strides = [1, 1]} : vector<2x128xf32> to vector<2x32xf32>
    %125 = math.tanh %124 : vector<2x32xf32>
    %126 = vector.extract_strided_slice %123 {offsets = [0, 32], sizes = [2, 32], strides = [1, 1]} : vector<2x96xf32> to vector<2x32xf32>
    %127 = arith.mulf %126, %110 : vector<2x32xf32>
    %128 = vector.extract_strided_slice %123 {offsets = [0, 0], sizes = [2, 32], strides = [1, 1]} : vector<2x96xf32> to vector<2x32xf32>
    %129 = arith.mulf %128, %125 : vector<2x32xf32>
    %130 = arith.addf %127, %129 : vector<2x32xf32>
    %131 = vector.extract_strided_slice %123 {offsets = [0, 64], sizes = [2, 32], strides = [1, 1]} : vector<2x96xf32> to vector<2x32xf32>
    %132 = math.tanh %130 : vector<2x32xf32>
    %133 = arith.mulf %131, %132 : vector<2x32xf32>
    %134 = tpu.concatenate %8, %133 in 1 : vector<2x32xf32>, vector<2x32xf32> -> vector<2x64xf32>
    %cst_20 = arith.constant dense<0.000000e+00> : vector<2x128xf32>
    %135 = tpu.matmul %134, %10, %cst_20 {dimension_numbers = #tpu.dot_dimension_numbers<[1], [0], [0], [1], [0, 0, 1, 1], [], []>} : vector<2x64xf32>, vector<64x128xf32>, vector<2x128xf32> -> vector<2x128xf32>
    %136 = vector.broadcast %11 : vector<1x128xf32> to vector<2x128xf32>
    %137 = arith.addf %135, %136 : vector<2x128xf32>
    %138 = vector.extract_strided_slice %137 {offsets = [0, 0], sizes = [2, 96], strides = [1, 1]} : vector<2x128xf32> to vector<2x96xf32>
    %139 = arith.negf %138 : vector<2x96xf32>
    %140 = math.exp %139 : vector<2x96xf32>
    %cst_21 = arith.constant 1.000000e+00 : f32
    %141 = vector.broadcast %cst_21 : f32 to vector<2x96xf32>
    %142 = arith.addf %141, %140 : vector<2x96xf32>
    %143 = arith.divf %141, %142 : vector<2x96xf32>
    %144 = vector.extract_strided_slice %137 {offsets = [0, 96], sizes = [2, 32], strides = [1, 1]} : vector<2x128xf32> to vector<2x32xf32>
    %145 = math.tanh %144 : vector<2x32xf32>
    %146 = vector.extract_strided_slice %143 {offsets = [0, 32], sizes = [2, 32], strides = [1, 1]} : vector<2x96xf32> to vector<2x32xf32>
    %147 = arith.mulf %146, %130 : vector<2x32xf32>
    %148 = vector.extract_strided_slice %143 {offsets = [0, 0], sizes = [2, 32], strides = [1, 1]} : vector<2x96xf32> to vector<2x32xf32>
    %149 = arith.mulf %148, %145 : vector<2x32xf32>
    %150 = arith.addf %147, %149 : vector<2x32xf32>
    %151 = vector.extract_strided_slice %143 {offsets = [0, 64], sizes = [2, 32], strides = [1, 1]} : vector<2x96xf32> to vector<2x32xf32>
    %152 = math.tanh %150 : vector<2x32xf32>
    %153 = arith.mulf %151, %152 : vector<2x32xf32>
    %154 = tpu.concatenate %9, %153 in 1 : vector<2x32xf32>, vector<2x32xf32> -> vector<2x64xf32>
    %cst_22 = arith.constant dense<0.000000e+00> : vector<2x128xf32>
    %155 = tpu.matmul %154, %10, %cst_22 {dimension_numbers = #tpu.dot_dimension_numbers<[1], [0], [0], [1], [0, 0, 1, 1], [], []>} : vector<2x64xf32>, vector<64x128xf32>, vector<2x128xf32> -> vector<2x128xf32>
    %156 = vector.broadcast %11 : vector<1x128xf32> to vector<2x128xf32>
    %157 = arith.addf %155, %156 : vector<2x128xf32>
    %158 = vector.extract_strided_slice %157 {offsets = [0, 0], sizes = [2, 96], strides = [1, 1]} : vector<2x128xf32> to vector<2x96xf32>
    %159 = arith.negf %158 : vector<2x96xf32>
    %160 = math.exp %159 : vector<2x96xf32>
    %cst_23 = arith.constant 1.000000e+00 : f32
    %161 = vector.broadcast %cst_23 : f32 to vector<2x96xf32>
    %162 = arith.addf %161, %160 : vector<2x96xf32>
    %163 = arith.divf %161, %162 : vector<2x96xf32>
    %164 = vector.extract_strided_slice %157 {offsets = [0, 96], sizes = [2, 32], strides = [1, 1]} : vector<2x128xf32> to vector<2x32xf32>
    %165 = math.tanh %164 : vector<2x32xf32>
    %166 = vector.extract_strided_slice %163 {offsets = [0, 32], sizes = [2, 32], strides = [1, 1]} : vector<2x96xf32> to vector<2x32xf32>
    %167 = arith.mulf %166, %150 : vector<2x32xf32>
    %168 = vector.extract_strided_slice %163 {offsets = [0, 0], sizes = [2, 32], strides = [1, 1]} : vector<2x96xf32> to vector<2x32xf32>
    %169 = arith.mulf %168, %165 : vector<2x32xf32>
    %170 = arith.addf %167, %169 : vector<2x32xf32>
    %171 = vector.extract_strided_slice %163 {offsets = [0, 64], sizes = [2, 32], strides = [1, 1]} : vector<2x96xf32> to vector<2x32xf32>
    %172 = math.tanh %170 : vector<2x32xf32>
    %173 = arith.mulf %171, %172 : vector<2x32xf32>
    %c64 = arith.constant 64 : index
    %c0_24 = arith.constant 0 : index
    %174 = vector.load %arg2[%c64, %c0_24] : memref<384x128xf32, #tpu.memory_space<vmem>>, vector<48x128xf32>
    %c1 = arith.constant 1 : index
    %c0_25 = arith.constant 0 : index
    %175 = vector.load %arg3[%c1, %c0_25] : memref<10x128xf32, #tpu.memory_space<vmem>>, vector<1x128xf32>
    %cst_26 = arith.constant 0.000000e+00 : f32
    %176 = vector.broadcast %cst_26 : f32 to vector<2x16xf32>
    %cst_27 = arith.constant 0.000000e+00 : f32
    %177 = vector.broadcast %cst_27 : f32 to vector<2x16xf32>
    %178 = tpu.concatenate %33, %176 in 1 : vector<2x32xf32>, vector<2x16xf32> -> vector<2x48xf32>
    %cst_28 = arith.constant dense<0.000000e+00> : vector<2x128xf32>
    %179 = tpu.matmul %178, %174, %cst_28 {dimension_numbers = #tpu.dot_dimension_numbers<[1], [0], [0], [1], [0, 0, 1, 1], [], []>} : vector<2x48xf32>, vector<48x128xf32>, vector<2x128xf32> -> vector<2x128xf32>
    %180 = vector.broadcast %175 : vector<1x128xf32> to vector<2x128xf32>
    %181 = arith.addf %179, %180 : vector<2x128xf32>
    %182 = vector.extract_strided_slice %181 {offsets = [0, 0], sizes = [2, 48], strides = [1, 1]} : vector<2x128xf32> to vector<2x48xf32>
    %183 = arith.negf %182 : vector<2x48xf32>
    %184 = math.exp %183 : vector<2x48xf32>
    %cst_29 = arith.constant 1.000000e+00 : f32
    %185 = vector.broadcast %cst_29 : f32 to vector<2x48xf32>
    %186 = arith.addf %185, %184 : vector<2x48xf32>
    %187 = arith.divf %185, %186 : vector<2x48xf32>
    %188 = vector.extract_strided_slice %181 {offsets = [0, 48], sizes = [2, 16], strides = [1, 1]} : vector<2x128xf32> to vector<2x16xf32>
    %189 = math.tanh %188 : vector<2x16xf32>
    %190 = vector.extract_strided_slice %187 {offsets = [0, 16], sizes = [2, 16], strides = [1, 1]} : vector<2x48xf32> to vector<2x16xf32>
    %191 = arith.mulf %190, %177 : vector<2x16xf32>
    %192 = vector.extract_strided_slice %187 {offsets = [0, 0], sizes = [2, 16], strides = [1, 1]} : vector<2x48xf32> to vector<2x16xf32>
    %193 = arith.mulf %192, %189 : vector<2x16xf32>
    %194 = arith.addf %191, %193 : vector<2x16xf32>
    %195 = vector.extract_strided_slice %187 {offsets = [0, 32], sizes = [2, 16], strides = [1, 1]} : vector<2x48xf32> to vector<2x16xf32>
    %196 = math.tanh %194 : vector<2x16xf32>
    %197 = arith.mulf %195, %196 : vector<2x16xf32>
    %198 = tpu.concatenate %53, %197 in 1 : vector<2x32xf32>, vector<2x16xf32> -> vector<2x48xf32>
    %cst_30 = arith.constant dense<0.000000e+00> : vector<2x128xf32>
    %199 = tpu.matmul %198, %174, %cst_30 {dimension_numbers = #tpu.dot_dimension_numbers<[1], [0], [0], [1], [0, 0, 1, 1], [], []>} : vector<2x48xf32>, vector<48x128xf32>, vector<2x128xf32> -> vector<2x128xf32>
    %200 = vector.broadcast %175 : vector<1x128xf32> to vector<2x128xf32>
    %201 = arith.addf %199, %200 : vector<2x128xf32>
    %202 = vector.extract_strided_slice %201 {offsets = [0, 0], sizes = [2, 48], strides = [1, 1]} : vector<2x128xf32> to vector<2x48xf32>
    %203 = arith.negf %202 : vector<2x48xf32>
    %204 = math.exp %203 : vector<2x48xf32>
    %cst_31 = arith.constant 1.000000e+00 : f32
    %205 = vector.broadcast %cst_31 : f32 to vector<2x48xf32>
    %206 = arith.addf %205, %204 : vector<2x48xf32>
    %207 = arith.divf %205, %206 : vector<2x48xf32>
    %208 = vector.extract_strided_slice %201 {offsets = [0, 48], sizes = [2, 16], strides = [1, 1]} : vector<2x128xf32> to vector<2x16xf32>
    %209 = math.tanh %208 : vector<2x16xf32>
    %210 = vector.extract_strided_slice %207 {offsets = [0, 16], sizes = [2, 16], strides = [1, 1]} : vector<2x48xf32> to vector<2x16xf32>
    %211 = arith.mulf %210, %194 : vector<2x16xf32>
    %212 = vector.extract_strided_slice %207 {offsets = [0, 0], sizes = [2, 16], strides = [1, 1]} : vector<2x48xf32> to vector<2x16xf32>
    %213 = arith.mulf %212, %209 : vector<2x16xf32>
    %214 = arith.addf %211, %213 : vector<2x16xf32>
    %215 = vector.extract_strided_slice %207 {offsets = [0, 32], sizes = [2, 16], strides = [1, 1]} : vector<2x48xf32> to vector<2x16xf32>
    %216 = math.tanh %214 : vector<2x16xf32>
    %217 = arith.mulf %215, %216 : vector<2x16xf32>
    %218 = tpu.concatenate %73, %217 in 1 : vector<2x32xf32>, vector<2x16xf32> -> vector<2x48xf32>
    %cst_32 = arith.constant dense<0.000000e+00> : vector<2x128xf32>
    %219 = tpu.matmul %218, %174, %cst_32 {dimension_numbers = #tpu.dot_dimension_numbers<[1], [0], [0], [1], [0, 0, 1, 1], [], []>} : vector<2x48xf32>, vector<48x128xf32>, vector<2x128xf32> -> vector<2x128xf32>
    %220 = vector.broadcast %175 : vector<1x128xf32> to vector<2x128xf32>
    %221 = arith.addf %219, %220 : vector<2x128xf32>
    %222 = vector.extract_strided_slice %221 {offsets = [0, 0], sizes = [2, 48], strides = [1, 1]} : vector<2x128xf32> to vector<2x48xf32>
    %223 = arith.negf %222 : vector<2x48xf32>
    %224 = math.exp %223 : vector<2x48xf32>
    %cst_33 = arith.constant 1.000000e+00 : f32
    %225 = vector.broadcast %cst_33 : f32 to vector<2x48xf32>
    %226 = arith.addf %225, %224 : vector<2x48xf32>
    %227 = arith.divf %225, %226 : vector<2x48xf32>
    %228 = vector.extract_strided_slice %221 {offsets = [0, 48], sizes = [2, 16], strides = [1, 1]} : vector<2x128xf32> to vector<2x16xf32>
    %229 = math.tanh %228 : vector<2x16xf32>
    %230 = vector.extract_strided_slice %227 {offsets = [0, 16], sizes = [2, 16], strides = [1, 1]} : vector<2x48xf32> to vector<2x16xf32>
    %231 = arith.mulf %230, %214 : vector<2x16xf32>
    %232 = vector.extract_strided_slice %227 {offsets = [0, 0], sizes = [2, 16], strides = [1, 1]} : vector<2x48xf32> to vector<2x16xf32>
    %233 = arith.mulf %232, %229 : vector<2x16xf32>
    %234 = arith.addf %231, %233 : vector<2x16xf32>
    %235 = vector.extract_strided_slice %227 {offsets = [0, 32], sizes = [2, 16], strides = [1, 1]} : vector<2x48xf32> to vector<2x16xf32>
    %236 = math.tanh %234 : vector<2x16xf32>
    %237 = arith.mulf %235, %236 : vector<2x16xf32>
    %238 = tpu.concatenate %93, %237 in 1 : vector<2x32xf32>, vector<2x16xf32> -> vector<2x48xf32>
    %cst_34 = arith.constant dense<0.000000e+00> : vector<2x128xf32>
    %239 = tpu.matmul %238, %174, %cst_34 {dimension_numbers = #tpu.dot_dimension_numbers<[1], [0], [0], [1], [0, 0, 1, 1], [], []>} : vector<2x48xf32>, vector<48x128xf32>, vector<2x128xf32> -> vector<2x128xf32>
    %240 = vector.broadcast %175 : vector<1x128xf32> to vector<2x128xf32>
    %241 = arith.addf %239, %240 : vector<2x128xf32>
    %242 = vector.extract_strided_slice %241 {offsets = [0, 0], sizes = [2, 48], strides = [1, 1]} : vector<2x128xf32> to vector<2x48xf32>
    %243 = arith.negf %242 : vector<2x48xf32>
    %244 = math.exp %243 : vector<2x48xf32>
    %cst_35 = arith.constant 1.000000e+00 : f32
    %245 = vector.broadcast %cst_35 : f32 to vector<2x48xf32>
    %246 = arith.addf %245, %244 : vector<2x48xf32>
    %247 = arith.divf %245, %246 : vector<2x48xf32>
    %248 = vector.extract_strided_slice %241 {offsets = [0, 48], sizes = [2, 16], strides = [1, 1]} : vector<2x128xf32> to vector<2x16xf32>
    %249 = math.tanh %248 : vector<2x16xf32>
    %250 = vector.extract_strided_slice %247 {offsets = [0, 16], sizes = [2, 16], strides = [1, 1]} : vector<2x48xf32> to vector<2x16xf32>
    %251 = arith.mulf %250, %234 : vector<2x16xf32>
    %252 = vector.extract_strided_slice %247 {offsets = [0, 0], sizes = [2, 16], strides = [1, 1]} : vector<2x48xf32> to vector<2x16xf32>
    %253 = arith.mulf %252, %249 : vector<2x16xf32>
    %254 = arith.addf %251, %253 : vector<2x16xf32>
    %255 = vector.extract_strided_slice %247 {offsets = [0, 32], sizes = [2, 16], strides = [1, 1]} : vector<2x48xf32> to vector<2x16xf32>
    %256 = math.tanh %254 : vector<2x16xf32>
    %257 = arith.mulf %255, %256 : vector<2x16xf32>
    %258 = tpu.concatenate %113, %257 in 1 : vector<2x32xf32>, vector<2x16xf32> -> vector<2x48xf32>
    %cst_36 = arith.constant dense<0.000000e+00> : vector<2x128xf32>
    %259 = tpu.matmul %258, %174, %cst_36 {dimension_numbers = #tpu.dot_dimension_numbers<[1], [0], [0], [1], [0, 0, 1, 1], [], []>} : vector<2x48xf32>, vector<48x128xf32>, vector<2x128xf32> -> vector<2x128xf32>
    %260 = vector.broadcast %175 : vector<1x128xf32> to vector<2x128xf32>
    %261 = arith.addf %259, %260 : vector<2x128xf32>
    %262 = vector.extract_strided_slice %261 {offsets = [0, 0], sizes = [2, 48], strides = [1, 1]} : vector<2x128xf32> to vector<2x48xf32>
    %263 = arith.negf %262 : vector<2x48xf32>
    %264 = math.exp %263 : vector<2x48xf32>
    %cst_37 = arith.constant 1.000000e+00 : f32
    %265 = vector.broadcast %cst_37 : f32 to vector<2x48xf32>
    %266 = arith.addf %265, %264 : vector<2x48xf32>
    %267 = arith.divf %265, %266 : vector<2x48xf32>
    %268 = vector.extract_strided_slice %261 {offsets = [0, 48], sizes = [2, 16], strides = [1, 1]} : vector<2x128xf32> to vector<2x16xf32>
    %269 = math.tanh %268 : vector<2x16xf32>
    %270 = vector.extract_strided_slice %267 {offsets = [0, 16], sizes = [2, 16], strides = [1, 1]} : vector<2x48xf32> to vector<2x16xf32>
    %271 = arith.mulf %270, %254 : vector<2x16xf32>
    %272 = vector.extract_strided_slice %267 {offsets = [0, 0], sizes = [2, 16], strides = [1, 1]} : vector<2x48xf32> to vector<2x16xf32>
    %273 = arith.mulf %272, %269 : vector<2x16xf32>
    %274 = arith.addf %271, %273 : vector<2x16xf32>
    %275 = vector.extract_strided_slice %267 {offsets = [0, 32], sizes = [2, 16], strides = [1, 1]} : vector<2x48xf32> to vector<2x16xf32>
    %276 = math.tanh %274 : vector<2x16xf32>
    %277 = arith.mulf %275, %276 : vector<2x16xf32>
    %278 = tpu.concatenate %133, %277 in 1 : vector<2x32xf32>, vector<2x16xf32> -> vector<2x48xf32>
    %cst_38 = arith.constant dense<0.000000e+00> : vector<2x128xf32>
    %279 = tpu.matmul %278, %174, %cst_38 {dimension_numbers = #tpu.dot_dimension_numbers<[1], [0], [0], [1], [0, 0, 1, 1], [], []>} : vector<2x48xf32>, vector<48x128xf32>, vector<2x128xf32> -> vector<2x128xf32>
    %280 = vector.broadcast %175 : vector<1x128xf32> to vector<2x128xf32>
    %281 = arith.addf %279, %280 : vector<2x128xf32>
    %282 = vector.extract_strided_slice %281 {offsets = [0, 0], sizes = [2, 48], strides = [1, 1]} : vector<2x128xf32> to vector<2x48xf32>
    %283 = arith.negf %282 : vector<2x48xf32>
    %284 = math.exp %283 : vector<2x48xf32>
    %cst_39 = arith.constant 1.000000e+00 : f32
    %285 = vector.broadcast %cst_39 : f32 to vector<2x48xf32>
    %286 = arith.addf %285, %284 : vector<2x48xf32>
    %287 = arith.divf %285, %286 : vector<2x48xf32>
    %288 = vector.extract_strided_slice %281 {offsets = [0, 48], sizes = [2, 16], strides = [1, 1]} : vector<2x128xf32> to vector<2x16xf32>
    %289 = math.tanh %288 : vector<2x16xf32>
    %290 = vector.extract_strided_slice %287 {offsets = [0, 16], sizes = [2, 16], strides = [1, 1]} : vector<2x48xf32> to vector<2x16xf32>
    %291 = arith.mulf %290, %274 : vector<2x16xf32>
    %292 = vector.extract_strided_slice %287 {offsets = [0, 0], sizes = [2, 16], strides = [1, 1]} : vector<2x48xf32> to vector<2x16xf32>
    %293 = arith.mulf %292, %289 : vector<2x16xf32>
    %294 = arith.addf %291, %293 : vector<2x16xf32>
    %295 = vector.extract_strided_slice %287 {offsets = [0, 32], sizes = [2, 16], strides = [1, 1]} : vector<2x48xf32> to vector<2x16xf32>
    %296 = math.tanh %294 : vector<2x16xf32>
    %297 = arith.mulf %295, %296 : vector<2x16xf32>
    %298 = tpu.concatenate %153, %297 in 1 : vector<2x32xf32>, vector<2x16xf32> -> vector<2x48xf32>
    %cst_40 = arith.constant dense<0.000000e+00> : vector<2x128xf32>
    %299 = tpu.matmul %298, %174, %cst_40 {dimension_numbers = #tpu.dot_dimension_numbers<[1], [0], [0], [1], [0, 0, 1, 1], [], []>} : vector<2x48xf32>, vector<48x128xf32>, vector<2x128xf32> -> vector<2x128xf32>
    %300 = vector.broadcast %175 : vector<1x128xf32> to vector<2x128xf32>
    %301 = arith.addf %299, %300 : vector<2x128xf32>
    %302 = vector.extract_strided_slice %301 {offsets = [0, 0], sizes = [2, 48], strides = [1, 1]} : vector<2x128xf32> to vector<2x48xf32>
    %303 = arith.negf %302 : vector<2x48xf32>
    %304 = math.exp %303 : vector<2x48xf32>
    %cst_41 = arith.constant 1.000000e+00 : f32
    %305 = vector.broadcast %cst_41 : f32 to vector<2x48xf32>
    %306 = arith.addf %305, %304 : vector<2x48xf32>
    %307 = arith.divf %305, %306 : vector<2x48xf32>
    %308 = vector.extract_strided_slice %301 {offsets = [0, 48], sizes = [2, 16], strides = [1, 1]} : vector<2x128xf32> to vector<2x16xf32>
    %309 = math.tanh %308 : vector<2x16xf32>
    %310 = vector.extract_strided_slice %307 {offsets = [0, 16], sizes = [2, 16], strides = [1, 1]} : vector<2x48xf32> to vector<2x16xf32>
    %311 = arith.mulf %310, %294 : vector<2x16xf32>
    %312 = vector.extract_strided_slice %307 {offsets = [0, 0], sizes = [2, 16], strides = [1, 1]} : vector<2x48xf32> to vector<2x16xf32>
    %313 = arith.mulf %312, %309 : vector<2x16xf32>
    %314 = arith.addf %311, %313 : vector<2x16xf32>
    %315 = vector.extract_strided_slice %307 {offsets = [0, 32], sizes = [2, 16], strides = [1, 1]} : vector<2x48xf32> to vector<2x16xf32>
    %316 = math.tanh %314 : vector<2x16xf32>
    %317 = arith.mulf %315, %316 : vector<2x16xf32>
    %318 = tpu.concatenate %173, %317 in 1 : vector<2x32xf32>, vector<2x16xf32> -> vector<2x48xf32>
    %cst_42 = arith.constant dense<0.000000e+00> : vector<2x128xf32>
    %319 = tpu.matmul %318, %174, %cst_42 {dimension_numbers = #tpu.dot_dimension_numbers<[1], [0], [0], [1], [0, 0, 1, 1], [], []>} : vector<2x48xf32>, vector<48x128xf32>, vector<2x128xf32> -> vector<2x128xf32>
    %320 = vector.broadcast %175 : vector<1x128xf32> to vector<2x128xf32>
    %321 = arith.addf %319, %320 : vector<2x128xf32>
    %322 = vector.extract_strided_slice %321 {offsets = [0, 0], sizes = [2, 48], strides = [1, 1]} : vector<2x128xf32> to vector<2x48xf32>
    %323 = arith.negf %322 : vector<2x48xf32>
    %324 = math.exp %323 : vector<2x48xf32>
    %cst_43 = arith.constant 1.000000e+00 : f32
    %325 = vector.broadcast %cst_43 : f32 to vector<2x48xf32>
    %326 = arith.addf %325, %324 : vector<2x48xf32>
    %327 = arith.divf %325, %326 : vector<2x48xf32>
    %328 = vector.extract_strided_slice %321 {offsets = [0, 48], sizes = [2, 16], strides = [1, 1]} : vector<2x128xf32> to vector<2x16xf32>
    %329 = math.tanh %328 : vector<2x16xf32>
    %330 = vector.extract_strided_slice %327 {offsets = [0, 16], sizes = [2, 16], strides = [1, 1]} : vector<2x48xf32> to vector<2x16xf32>
    %331 = arith.mulf %330, %314 : vector<2x16xf32>
    %332 = vector.extract_strided_slice %327 {offsets = [0, 0], sizes = [2, 16], strides = [1, 1]} : vector<2x48xf32> to vector<2x16xf32>
    %333 = arith.mulf %332, %329 : vector<2x16xf32>
    %334 = arith.addf %331, %333 : vector<2x16xf32>
    %335 = vector.extract_strided_slice %327 {offsets = [0, 32], sizes = [2, 16], strides = [1, 1]} : vector<2x48xf32> to vector<2x16xf32>
    %336 = math.tanh %334 : vector<2x16xf32>
    %337 = arith.mulf %335, %336 : vector<2x16xf32>
    %c112 = arith.constant 112 : index
    %c0_44 = arith.constant 0 : index
    %338 = vector.load %arg2[%c112, %c0_44] : memref<384x128xf32, #tpu.memory_space<vmem>>, vector<24x128xf32>
    %c2 = arith.constant 2 : index
    %c0_45 = arith.constant 0 : index
    %339 = vector.load %arg3[%c2, %c0_45] : memref<10x128xf32, #tpu.memory_space<vmem>>, vector<1x128xf32>
    %cst_46 = arith.constant 0.000000e+00 : f32
    %340 = vector.broadcast %cst_46 : f32 to vector<2x8xf32>
    %cst_47 = arith.constant 0.000000e+00 : f32
    %341 = vector.broadcast %cst_47 : f32 to vector<2x8xf32>
    %342 = tpu.concatenate %197, %340 in 1 : vector<2x16xf32>, vector<2x8xf32> -> vector<2x24xf32>
    %cst_48 = arith.constant dense<0.000000e+00> : vector<2x128xf32>
    %343 = tpu.matmul %342, %338, %cst_48 {dimension_numbers = #tpu.dot_dimension_numbers<[1], [0], [0], [1], [0, 0, 1, 1], [], []>} : vector<2x24xf32>, vector<24x128xf32>, vector<2x128xf32> -> vector<2x128xf32>
    %344 = vector.broadcast %339 : vector<1x128xf32> to vector<2x128xf32>
    %345 = arith.addf %343, %344 : vector<2x128xf32>
    %346 = vector.extract_strided_slice %345 {offsets = [0, 0], sizes = [2, 24], strides = [1, 1]} : vector<2x128xf32> to vector<2x24xf32>
    %347 = arith.negf %346 : vector<2x24xf32>
    %348 = math.exp %347 : vector<2x24xf32>
    %cst_49 = arith.constant 1.000000e+00 : f32
    %349 = vector.broadcast %cst_49 : f32 to vector<2x24xf32>
    %350 = arith.addf %349, %348 : vector<2x24xf32>
    %351 = arith.divf %349, %350 : vector<2x24xf32>
    %352 = vector.extract_strided_slice %345 {offsets = [0, 24], sizes = [2, 8], strides = [1, 1]} : vector<2x128xf32> to vector<2x8xf32>
    %353 = math.tanh %352 : vector<2x8xf32>
    %354 = vector.extract_strided_slice %351 {offsets = [0, 8], sizes = [2, 8], strides = [1, 1]} : vector<2x24xf32> to vector<2x8xf32>
    %355 = arith.mulf %354, %341 : vector<2x8xf32>
    %356 = vector.extract_strided_slice %351 {offsets = [0, 0], sizes = [2, 8], strides = [1, 1]} : vector<2x24xf32> to vector<2x8xf32>
    %357 = arith.mulf %356, %353 : vector<2x8xf32>
    %358 = arith.addf %355, %357 : vector<2x8xf32>
    %359 = vector.extract_strided_slice %351 {offsets = [0, 16], sizes = [2, 8], strides = [1, 1]} : vector<2x24xf32> to vector<2x8xf32>
    %360 = math.tanh %358 : vector<2x8xf32>
    %361 = arith.mulf %359, %360 : vector<2x8xf32>
    %362 = tpu.concatenate %217, %361 in 1 : vector<2x16xf32>, vector<2x8xf32> -> vector<2x24xf32>
    %cst_50 = arith.constant dense<0.000000e+00> : vector<2x128xf32>
    %363 = tpu.matmul %362, %338, %cst_50 {dimension_numbers = #tpu.dot_dimension_numbers<[1], [0], [0], [1], [0, 0, 1, 1], [], []>} : vector<2x24xf32>, vector<24x128xf32>, vector<2x128xf32> -> vector<2x128xf32>
    %364 = vector.broadcast %339 : vector<1x128xf32> to vector<2x128xf32>
    %365 = arith.addf %363, %364 : vector<2x128xf32>
    %366 = vector.extract_strided_slice %365 {offsets = [0, 0], sizes = [2, 24], strides = [1, 1]} : vector<2x128xf32> to vector<2x24xf32>
    %367 = arith.negf %366 : vector<2x24xf32>
    %368 = math.exp %367 : vector<2x24xf32>
    %cst_51 = arith.constant 1.000000e+00 : f32
    %369 = vector.broadcast %cst_51 : f32 to vector<2x24xf32>
    %370 = arith.addf %369, %368 : vector<2x24xf32>
    %371 = arith.divf %369, %370 : vector<2x24xf32>
    %372 = vector.extract_strided_slice %365 {offsets = [0, 24], sizes = [2, 8], strides = [1, 1]} : vector<2x128xf32> to vector<2x8xf32>
    %373 = math.tanh %372 : vector<2x8xf32>
    %374 = vector.extract_strided_slice %371 {offsets = [0, 8], sizes = [2, 8], strides = [1, 1]} : vector<2x24xf32> to vector<2x8xf32>
    %375 = arith.mulf %374, %358 : vector<2x8xf32>
    %376 = vector.extract_strided_slice %371 {offsets = [0, 0], sizes = [2, 8], strides = [1, 1]} : vector<2x24xf32> to vector<2x8xf32>
    %377 = arith.mulf %376, %373 : vector<2x8xf32>
    %378 = arith.addf %375, %377 : vector<2x8xf32>
    %379 = vector.extract_strided_slice %371 {offsets = [0, 16], sizes = [2, 8], strides = [1, 1]} : vector<2x24xf32> to vector<2x8xf32>
    %380 = math.tanh %378 : vector<2x8xf32>
    %381 = arith.mulf %379, %380 : vector<2x8xf32>
    %382 = tpu.concatenate %237, %381 in 1 : vector<2x16xf32>, vector<2x8xf32> -> vector<2x24xf32>
    %cst_52 = arith.constant dense<0.000000e+00> : vector<2x128xf32>
    %383 = tpu.matmul %382, %338, %cst_52 {dimension_numbers = #tpu.dot_dimension_numbers<[1], [0], [0], [1], [0, 0, 1, 1], [], []>} : vector<2x24xf32>, vector<24x128xf32>, vector<2x128xf32> -> vector<2x128xf32>
    %384 = vector.broadcast %339 : vector<1x128xf32> to vector<2x128xf32>
    %385 = arith.addf %383, %384 : vector<2x128xf32>
    %386 = vector.extract_strided_slice %385 {offsets = [0, 0], sizes = [2, 24], strides = [1, 1]} : vector<2x128xf32> to vector<2x24xf32>
    %387 = arith.negf %386 : vector<2x24xf32>
    %388 = math.exp %387 : vector<2x24xf32>
    %cst_53 = arith.constant 1.000000e+00 : f32
    %389 = vector.broadcast %cst_53 : f32 to vector<2x24xf32>
    %390 = arith.addf %389, %388 : vector<2x24xf32>
    %391 = arith.divf %389, %390 : vector<2x24xf32>
    %392 = vector.extract_strided_slice %385 {offsets = [0, 24], sizes = [2, 8], strides = [1, 1]} : vector<2x128xf32> to vector<2x8xf32>
    %393 = math.tanh %392 : vector<2x8xf32>
    %394 = vector.extract_strided_slice %391 {offsets = [0, 8], sizes = [2, 8], strides = [1, 1]} : vector<2x24xf32> to vector<2x8xf32>
    %395 = arith.mulf %394, %378 : vector<2x8xf32>
    %396 = vector.extract_strided_slice %391 {offsets = [0, 0], sizes = [2, 8], strides = [1, 1]} : vector<2x24xf32> to vector<2x8xf32>
    %397 = arith.mulf %396, %393 : vector<2x8xf32>
    %398 = arith.addf %395, %397 : vector<2x8xf32>
    %399 = vector.extract_strided_slice %391 {offsets = [0, 16], sizes = [2, 8], strides = [1, 1]} : vector<2x24xf32> to vector<2x8xf32>
    %400 = math.tanh %398 : vector<2x8xf32>
    %401 = arith.mulf %399, %400 : vector<2x8xf32>
    %402 = tpu.concatenate %257, %401 in 1 : vector<2x16xf32>, vector<2x8xf32> -> vector<2x24xf32>
    %cst_54 = arith.constant dense<0.000000e+00> : vector<2x128xf32>
    %403 = tpu.matmul %402, %338, %cst_54 {dimension_numbers = #tpu.dot_dimension_numbers<[1], [0], [0], [1], [0, 0, 1, 1], [], []>} : vector<2x24xf32>, vector<24x128xf32>, vector<2x128xf32> -> vector<2x128xf32>
    %404 = vector.broadcast %339 : vector<1x128xf32> to vector<2x128xf32>
    %405 = arith.addf %403, %404 : vector<2x128xf32>
    %406 = vector.extract_strided_slice %405 {offsets = [0, 0], sizes = [2, 24], strides = [1, 1]} : vector<2x128xf32> to vector<2x24xf32>
    %407 = arith.negf %406 : vector<2x24xf32>
    %408 = math.exp %407 : vector<2x24xf32>
    %cst_55 = arith.constant 1.000000e+00 : f32
    %409 = vector.broadcast %cst_55 : f32 to vector<2x24xf32>
    %410 = arith.addf %409, %408 : vector<2x24xf32>
    %411 = arith.divf %409, %410 : vector<2x24xf32>
    %412 = vector.extract_strided_slice %405 {offsets = [0, 24], sizes = [2, 8], strides = [1, 1]} : vector<2x128xf32> to vector<2x8xf32>
    %413 = math.tanh %412 : vector<2x8xf32>
    %414 = vector.extract_strided_slice %411 {offsets = [0, 8], sizes = [2, 8], strides = [1, 1]} : vector<2x24xf32> to vector<2x8xf32>
    %415 = arith.mulf %414, %398 : vector<2x8xf32>
    %416 = vector.extract_strided_slice %411 {offsets = [0, 0], sizes = [2, 8], strides = [1, 1]} : vector<2x24xf32> to vector<2x8xf32>
    %417 = arith.mulf %416, %413 : vector<2x8xf32>
    %418 = arith.addf %415, %417 : vector<2x8xf32>
    %419 = vector.extract_strided_slice %411 {offsets = [0, 16], sizes = [2, 8], strides = [1, 1]} : vector<2x24xf32> to vector<2x8xf32>
    %420 = math.tanh %418 : vector<2x8xf32>
    %421 = arith.mulf %419, %420 : vector<2x8xf32>
    %422 = tpu.concatenate %277, %421 in 1 : vector<2x16xf32>, vector<2x8xf32> -> vector<2x24xf32>
    %cst_56 = arith.constant dense<0.000000e+00> : vector<2x128xf32>
    %423 = tpu.matmul %422, %338, %cst_56 {dimension_numbers = #tpu.dot_dimension_numbers<[1], [0], [0], [1], [0, 0, 1, 1], [], []>} : vector<2x24xf32>, vector<24x128xf32>, vector<2x128xf32> -> vector<2x128xf32>
    %424 = vector.broadcast %339 : vector<1x128xf32> to vector<2x128xf32>
    %425 = arith.addf %423, %424 : vector<2x128xf32>
    %426 = vector.extract_strided_slice %425 {offsets = [0, 0], sizes = [2, 24], strides = [1, 1]} : vector<2x128xf32> to vector<2x24xf32>
    %427 = arith.negf %426 : vector<2x24xf32>
    %428 = math.exp %427 : vector<2x24xf32>
    %cst_57 = arith.constant 1.000000e+00 : f32
    %429 = vector.broadcast %cst_57 : f32 to vector<2x24xf32>
    %430 = arith.addf %429, %428 : vector<2x24xf32>
    %431 = arith.divf %429, %430 : vector<2x24xf32>
    %432 = vector.extract_strided_slice %425 {offsets = [0, 24], sizes = [2, 8], strides = [1, 1]} : vector<2x128xf32> to vector<2x8xf32>
    %433 = math.tanh %432 : vector<2x8xf32>
    %434 = vector.extract_strided_slice %431 {offsets = [0, 8], sizes = [2, 8], strides = [1, 1]} : vector<2x24xf32> to vector<2x8xf32>
    %435 = arith.mulf %434, %418 : vector<2x8xf32>
    %436 = vector.extract_strided_slice %431 {offsets = [0, 0], sizes = [2, 8], strides = [1, 1]} : vector<2x24xf32> to vector<2x8xf32>
    %437 = arith.mulf %436, %433 : vector<2x8xf32>
    %438 = arith.addf %435, %437 : vector<2x8xf32>
    %439 = vector.extract_strided_slice %431 {offsets = [0, 16], sizes = [2, 8], strides = [1, 1]} : vector<2x24xf32> to vector<2x8xf32>
    %440 = math.tanh %438 : vector<2x8xf32>
    %441 = arith.mulf %439, %440 : vector<2x8xf32>
    %442 = tpu.concatenate %297, %441 in 1 : vector<2x16xf32>, vector<2x8xf32> -> vector<2x24xf32>
    %cst_58 = arith.constant dense<0.000000e+00> : vector<2x128xf32>
    %443 = tpu.matmul %442, %338, %cst_58 {dimension_numbers = #tpu.dot_dimension_numbers<[1], [0], [0], [1], [0, 0, 1, 1], [], []>} : vector<2x24xf32>, vector<24x128xf32>, vector<2x128xf32> -> vector<2x128xf32>
    %444 = vector.broadcast %339 : vector<1x128xf32> to vector<2x128xf32>
    %445 = arith.addf %443, %444 : vector<2x128xf32>
    %446 = vector.extract_strided_slice %445 {offsets = [0, 0], sizes = [2, 24], strides = [1, 1]} : vector<2x128xf32> to vector<2x24xf32>
    %447 = arith.negf %446 : vector<2x24xf32>
    %448 = math.exp %447 : vector<2x24xf32>
    %cst_59 = arith.constant 1.000000e+00 : f32
    %449 = vector.broadcast %cst_59 : f32 to vector<2x24xf32>
    %450 = arith.addf %449, %448 : vector<2x24xf32>
    %451 = arith.divf %449, %450 : vector<2x24xf32>
    %452 = vector.extract_strided_slice %445 {offsets = [0, 24], sizes = [2, 8], strides = [1, 1]} : vector<2x128xf32> to vector<2x8xf32>
    %453 = math.tanh %452 : vector<2x8xf32>
    %454 = vector.extract_strided_slice %451 {offsets = [0, 8], sizes = [2, 8], strides = [1, 1]} : vector<2x24xf32> to vector<2x8xf32>
    %455 = arith.mulf %454, %438 : vector<2x8xf32>
    %456 = vector.extract_strided_slice %451 {offsets = [0, 0], sizes = [2, 8], strides = [1, 1]} : vector<2x24xf32> to vector<2x8xf32>
    %457 = arith.mulf %456, %453 : vector<2x8xf32>
    %458 = arith.addf %455, %457 : vector<2x8xf32>
    %459 = vector.extract_strided_slice %451 {offsets = [0, 16], sizes = [2, 8], strides = [1, 1]} : vector<2x24xf32> to vector<2x8xf32>
    %460 = math.tanh %458 : vector<2x8xf32>
    %461 = arith.mulf %459, %460 : vector<2x8xf32>
    %462 = tpu.concatenate %317, %461 in 1 : vector<2x16xf32>, vector<2x8xf32> -> vector<2x24xf32>
    %cst_60 = arith.constant dense<0.000000e+00> : vector<2x128xf32>
    %463 = tpu.matmul %462, %338, %cst_60 {dimension_numbers = #tpu.dot_dimension_numbers<[1], [0], [0], [1], [0, 0, 1, 1], [], []>} : vector<2x24xf32>, vector<24x128xf32>, vector<2x128xf32> -> vector<2x128xf32>
    %464 = vector.broadcast %339 : vector<1x128xf32> to vector<2x128xf32>
    %465 = arith.addf %463, %464 : vector<2x128xf32>
    %466 = vector.extract_strided_slice %465 {offsets = [0, 0], sizes = [2, 24], strides = [1, 1]} : vector<2x128xf32> to vector<2x24xf32>
    %467 = arith.negf %466 : vector<2x24xf32>
    %468 = math.exp %467 : vector<2x24xf32>
    %cst_61 = arith.constant 1.000000e+00 : f32
    %469 = vector.broadcast %cst_61 : f32 to vector<2x24xf32>
    %470 = arith.addf %469, %468 : vector<2x24xf32>
    %471 = arith.divf %469, %470 : vector<2x24xf32>
    %472 = vector.extract_strided_slice %465 {offsets = [0, 24], sizes = [2, 8], strides = [1, 1]} : vector<2x128xf32> to vector<2x8xf32>
    %473 = math.tanh %472 : vector<2x8xf32>
    %474 = vector.extract_strided_slice %471 {offsets = [0, 8], sizes = [2, 8], strides = [1, 1]} : vector<2x24xf32> to vector<2x8xf32>
    %475 = arith.mulf %474, %458 : vector<2x8xf32>
    %476 = vector.extract_strided_slice %471 {offsets = [0, 0], sizes = [2, 8], strides = [1, 1]} : vector<2x24xf32> to vector<2x8xf32>
    %477 = arith.mulf %476, %473 : vector<2x8xf32>
    %478 = arith.addf %475, %477 : vector<2x8xf32>
    %479 = vector.extract_strided_slice %471 {offsets = [0, 16], sizes = [2, 8], strides = [1, 1]} : vector<2x24xf32> to vector<2x8xf32>
    %480 = math.tanh %478 : vector<2x8xf32>
    %481 = arith.mulf %479, %480 : vector<2x8xf32>
    %482 = tpu.concatenate %337, %481 in 1 : vector<2x16xf32>, vector<2x8xf32> -> vector<2x24xf32>
    %cst_62 = arith.constant dense<0.000000e+00> : vector<2x128xf32>
    %483 = tpu.matmul %482, %338, %cst_62 {dimension_numbers = #tpu.dot_dimension_numbers<[1], [0], [0], [1], [0, 0, 1, 1], [], []>} : vector<2x24xf32>, vector<24x128xf32>, vector<2x128xf32> -> vector<2x128xf32>
    %484 = vector.broadcast %339 : vector<1x128xf32> to vector<2x128xf32>
    %485 = arith.addf %483, %484 : vector<2x128xf32>
    %486 = vector.extract_strided_slice %485 {offsets = [0, 0], sizes = [2, 24], strides = [1, 1]} : vector<2x128xf32> to vector<2x24xf32>
    %487 = arith.negf %486 : vector<2x24xf32>
    %488 = math.exp %487 : vector<2x24xf32>
    %cst_63 = arith.constant 1.000000e+00 : f32
    %489 = vector.broadcast %cst_63 : f32 to vector<2x24xf32>
    %490 = arith.addf %489, %488 : vector<2x24xf32>
    %491 = arith.divf %489, %490 : vector<2x24xf32>
    %492 = vector.extract_strided_slice %485 {offsets = [0, 24], sizes = [2, 8], strides = [1, 1]} : vector<2x128xf32> to vector<2x8xf32>
    %493 = math.tanh %492 : vector<2x8xf32>
    %494 = vector.extract_strided_slice %491 {offsets = [0, 8], sizes = [2, 8], strides = [1, 1]} : vector<2x24xf32> to vector<2x8xf32>
    %495 = arith.mulf %494, %478 : vector<2x8xf32>
    %496 = vector.extract_strided_slice %491 {offsets = [0, 0], sizes = [2, 8], strides = [1, 1]} : vector<2x24xf32> to vector<2x8xf32>
    %497 = arith.mulf %496, %493 : vector<2x8xf32>
    %498 = arith.addf %495, %497 : vector<2x8xf32>
    %499 = vector.extract_strided_slice %491 {offsets = [0, 16], sizes = [2, 8], strides = [1, 1]} : vector<2x24xf32> to vector<2x8xf32>
    %500 = math.tanh %498 : vector<2x8xf32>
    %501 = arith.mulf %499, %500 : vector<2x8xf32>
    %c136 = arith.constant 136 : index
    %c0_64 = arith.constant 0 : index
    %502 = vector.load %arg2[%c136, %c0_64] : memref<384x128xf32, #tpu.memory_space<vmem>>, vector<24x128xf32>
    %c3 = arith.constant 3 : index
    %c0_65 = arith.constant 0 : index
    %503 = vector.load %arg3[%c3, %c0_65] : memref<10x128xf32, #tpu.memory_space<vmem>>, vector<1x128xf32>
    %cst_66 = arith.constant 0.000000e+00 : f32
    %504 = vector.broadcast %cst_66 : f32 to vector<2x16xf32>
    %cst_67 = arith.constant 0.000000e+00 : f32
    %505 = vector.broadcast %cst_67 : f32 to vector<2x16xf32>
    %506 = tpu.concatenate %361, %504 in 1 : vector<2x8xf32>, vector<2x16xf32> -> vector<2x24xf32>
    %cst_68 = arith.constant dense<0.000000e+00> : vector<2x128xf32>
    %507 = tpu.matmul %506, %502, %cst_68 {dimension_numbers = #tpu.dot_dimension_numbers<[1], [0], [0], [1], [0, 0, 1, 1], [], []>} : vector<2x24xf32>, vector<24x128xf32>, vector<2x128xf32> -> vector<2x128xf32>
    %508 = vector.broadcast %503 : vector<1x128xf32> to vector<2x128xf32>
    %509 = arith.addf %507, %508 : vector<2x128xf32>
    %510 = vector.extract_strided_slice %509 {offsets = [0, 0], sizes = [2, 48], strides = [1, 1]} : vector<2x128xf32> to vector<2x48xf32>
    %511 = arith.negf %510 : vector<2x48xf32>
    %512 = math.exp %511 : vector<2x48xf32>
    %cst_69 = arith.constant 1.000000e+00 : f32
    %513 = vector.broadcast %cst_69 : f32 to vector<2x48xf32>
    %514 = arith.addf %513, %512 : vector<2x48xf32>
    %515 = arith.divf %513, %514 : vector<2x48xf32>
    %516 = vector.extract_strided_slice %509 {offsets = [0, 48], sizes = [2, 16], strides = [1, 1]} : vector<2x128xf32> to vector<2x16xf32>
    %517 = math.tanh %516 : vector<2x16xf32>
    %518 = vector.extract_strided_slice %515 {offsets = [0, 16], sizes = [2, 16], strides = [1, 1]} : vector<2x48xf32> to vector<2x16xf32>
    %519 = arith.mulf %518, %505 : vector<2x16xf32>
    %520 = vector.extract_strided_slice %515 {offsets = [0, 0], sizes = [2, 16], strides = [1, 1]} : vector<2x48xf32> to vector<2x16xf32>
    %521 = arith.mulf %520, %517 : vector<2x16xf32>
    %522 = arith.addf %519, %521 : vector<2x16xf32>
    %523 = vector.extract_strided_slice %515 {offsets = [0, 32], sizes = [2, 16], strides = [1, 1]} : vector<2x48xf32> to vector<2x16xf32>
    %524 = math.tanh %522 : vector<2x16xf32>
    %525 = arith.mulf %523, %524 : vector<2x16xf32>
    %526 = tpu.concatenate %381, %525 in 1 : vector<2x8xf32>, vector<2x16xf32> -> vector<2x24xf32>
    %cst_70 = arith.constant dense<0.000000e+00> : vector<2x128xf32>
    %527 = tpu.matmul %526, %502, %cst_70 {dimension_numbers = #tpu.dot_dimension_numbers<[1], [0], [0], [1], [0, 0, 1, 1], [], []>} : vector<2x24xf32>, vector<24x128xf32>, vector<2x128xf32> -> vector<2x128xf32>
    %528 = vector.broadcast %503 : vector<1x128xf32> to vector<2x128xf32>
    %529 = arith.addf %527, %528 : vector<2x128xf32>
    %530 = vector.extract_strided_slice %529 {offsets = [0, 0], sizes = [2, 48], strides = [1, 1]} : vector<2x128xf32> to vector<2x48xf32>
    %531 = arith.negf %530 : vector<2x48xf32>
    %532 = math.exp %531 : vector<2x48xf32>
    %cst_71 = arith.constant 1.000000e+00 : f32
    %533 = vector.broadcast %cst_71 : f32 to vector<2x48xf32>
    %534 = arith.addf %533, %532 : vector<2x48xf32>
    %535 = arith.divf %533, %534 : vector<2x48xf32>
    %536 = vector.extract_strided_slice %529 {offsets = [0, 48], sizes = [2, 16], strides = [1, 1]} : vector<2x128xf32> to vector<2x16xf32>
    %537 = math.tanh %536 : vector<2x16xf32>
    %538 = vector.extract_strided_slice %535 {offsets = [0, 16], sizes = [2, 16], strides = [1, 1]} : vector<2x48xf32> to vector<2x16xf32>
    %539 = arith.mulf %538, %522 : vector<2x16xf32>
    %540 = vector.extract_strided_slice %535 {offsets = [0, 0], sizes = [2, 16], strides = [1, 1]} : vector<2x48xf32> to vector<2x16xf32>
    %541 = arith.mulf %540, %537 : vector<2x16xf32>
    %542 = arith.addf %539, %541 : vector<2x16xf32>
    %543 = vector.extract_strided_slice %535 {offsets = [0, 32], sizes = [2, 16], strides = [1, 1]} : vector<2x48xf32> to vector<2x16xf32>
    %544 = math.tanh %542 : vector<2x16xf32>
    %545 = arith.mulf %543, %544 : vector<2x16xf32>
    %546 = tpu.concatenate %401, %545 in 1 : vector<2x8xf32>, vector<2x16xf32> -> vector<2x24xf32>
    %cst_72 = arith.constant dense<0.000000e+00> : vector<2x128xf32>
    %547 = tpu.matmul %546, %502, %cst_72 {dimension_numbers = #tpu.dot_dimension_numbers<[1], [0], [0], [1], [0, 0, 1, 1], [], []>} : vector<2x24xf32>, vector<24x128xf32>, vector<2x128xf32> -> vector<2x128xf32>
    %548 = vector.broadcast %503 : vector<1x128xf32> to vector<2x128xf32>
    %549 = arith.addf %547, %548 : vector<2x128xf32>
    %550 = vector.extract_strided_slice %549 {offsets = [0, 0], sizes = [2, 48], strides = [1, 1]} : vector<2x128xf32> to vector<2x48xf32>
    %551 = arith.negf %550 : vector<2x48xf32>
    %552 = math.exp %551 : vector<2x48xf32>
    %cst_73 = arith.constant 1.000000e+00 : f32
    %553 = vector.broadcast %cst_73 : f32 to vector<2x48xf32>
    %554 = arith.addf %553, %552 : vector<2x48xf32>
    %555 = arith.divf %553, %554 : vector<2x48xf32>
    %556 = vector.extract_strided_slice %549 {offsets = [0, 48], sizes = [2, 16], strides = [1, 1]} : vector<2x128xf32> to vector<2x16xf32>
    %557 = math.tanh %556 : vector<2x16xf32>
    %558 = vector.extract_strided_slice %555 {offsets = [0, 16], sizes = [2, 16], strides = [1, 1]} : vector<2x48xf32> to vector<2x16xf32>
    %559 = arith.mulf %558, %542 : vector<2x16xf32>
    %560 = vector.extract_strided_slice %555 {offsets = [0, 0], sizes = [2, 16], strides = [1, 1]} : vector<2x48xf32> to vector<2x16xf32>
    %561 = arith.mulf %560, %557 : vector<2x16xf32>
    %562 = arith.addf %559, %561 : vector<2x16xf32>
    %563 = vector.extract_strided_slice %555 {offsets = [0, 32], sizes = [2, 16], strides = [1, 1]} : vector<2x48xf32> to vector<2x16xf32>
    %564 = math.tanh %562 : vector<2x16xf32>
    %565 = arith.mulf %563, %564 : vector<2x16xf32>
    %566 = tpu.concatenate %421, %565 in 1 : vector<2x8xf32>, vector<2x16xf32> -> vector<2x24xf32>
    %cst_74 = arith.constant dense<0.000000e+00> : vector<2x128xf32>
    %567 = tpu.matmul %566, %502, %cst_74 {dimension_numbers = #tpu.dot_dimension_numbers<[1], [0], [0], [1], [0, 0, 1, 1], [], []>} : vector<2x24xf32>, vector<24x128xf32>, vector<2x128xf32> -> vector<2x128xf32>
    %568 = vector.broadcast %503 : vector<1x128xf32> to vector<2x128xf32>
    %569 = arith.addf %567, %568 : vector<2x128xf32>
    %570 = vector.extract_strided_slice %569 {offsets = [0, 0], sizes = [2, 48], strides = [1, 1]} : vector<2x128xf32> to vector<2x48xf32>
    %571 = arith.negf %570 : vector<2x48xf32>
    %572 = math.exp %571 : vector<2x48xf32>
    %cst_75 = arith.constant 1.000000e+00 : f32
    %573 = vector.broadcast %cst_75 : f32 to vector<2x48xf32>
    %574 = arith.addf %573, %572 : vector<2x48xf32>
    %575 = arith.divf %573, %574 : vector<2x48xf32>
    %576 = vector.extract_strided_slice %569 {offsets = [0, 48], sizes = [2, 16], strides = [1, 1]} : vector<2x128xf32> to vector<2x16xf32>
    %577 = math.tanh %576 : vector<2x16xf32>
    %578 = vector.extract_strided_slice %575 {offsets = [0, 16], sizes = [2, 16], strides = [1, 1]} : vector<2x48xf32> to vector<2x16xf32>
    %579 = arith.mulf %578, %562 : vector<2x16xf32>
    %580 = vector.extract_strided_slice %575 {offsets = [0, 0], sizes = [2, 16], strides = [1, 1]} : vector<2x48xf32> to vector<2x16xf32>
    %581 = arith.mulf %580, %577 : vector<2x16xf32>
    %582 = arith.addf %579, %581 : vector<2x16xf32>
    %583 = vector.extract_strided_slice %575 {offsets = [0, 32], sizes = [2, 16], strides = [1, 1]} : vector<2x48xf32> to vector<2x16xf32>
    %584 = math.tanh %582 : vector<2x16xf32>
    %585 = arith.mulf %583, %584 : vector<2x16xf32>
    %586 = tpu.concatenate %441, %585 in 1 : vector<2x8xf32>, vector<2x16xf32> -> vector<2x24xf32>
    %cst_76 = arith.constant dense<0.000000e+00> : vector<2x128xf32>
    %587 = tpu.matmul %586, %502, %cst_76 {dimension_numbers = #tpu.dot_dimension_numbers<[1], [0], [0], [1], [0, 0, 1, 1], [], []>} : vector<2x24xf32>, vector<24x128xf32>, vector<2x128xf32> -> vector<2x128xf32>
    %588 = vector.broadcast %503 : vector<1x128xf32> to vector<2x128xf32>
    %589 = arith.addf %587, %588 : vector<2x128xf32>
    %590 = vector.extract_strided_slice %589 {offsets = [0, 0], sizes = [2, 48], strides = [1, 1]} : vector<2x128xf32> to vector<2x48xf32>
    %591 = arith.negf %590 : vector<2x48xf32>
    %592 = math.exp %591 : vector<2x48xf32>
    %cst_77 = arith.constant 1.000000e+00 : f32
    %593 = vector.broadcast %cst_77 : f32 to vector<2x48xf32>
    %594 = arith.addf %593, %592 : vector<2x48xf32>
    %595 = arith.divf %593, %594 : vector<2x48xf32>
    %596 = vector.extract_strided_slice %589 {offsets = [0, 48], sizes = [2, 16], strides = [1, 1]} : vector<2x128xf32> to vector<2x16xf32>
    %597 = math.tanh %596 : vector<2x16xf32>
    %598 = vector.extract_strided_slice %595 {offsets = [0, 16], sizes = [2, 16], strides = [1, 1]} : vector<2x48xf32> to vector<2x16xf32>
    %599 = arith.mulf %598, %582 : vector<2x16xf32>
    %600 = vector.extract_strided_slice %595 {offsets = [0, 0], sizes = [2, 16], strides = [1, 1]} : vector<2x48xf32> to vector<2x16xf32>
    %601 = arith.mulf %600, %597 : vector<2x16xf32>
    %602 = arith.addf %599, %601 : vector<2x16xf32>
    %603 = vector.extract_strided_slice %595 {offsets = [0, 32], sizes = [2, 16], strides = [1, 1]} : vector<2x48xf32> to vector<2x16xf32>
    %604 = math.tanh %602 : vector<2x16xf32>
    %605 = arith.mulf %603, %604 : vector<2x16xf32>
    %606 = tpu.concatenate %461, %605 in 1 : vector<2x8xf32>, vector<2x16xf32> -> vector<2x24xf32>
    %cst_78 = arith.constant dense<0.000000e+00> : vector<2x128xf32>
    %607 = tpu.matmul %606, %502, %cst_78 {dimension_numbers = #tpu.dot_dimension_numbers<[1], [0], [0], [1], [0, 0, 1, 1], [], []>} : vector<2x24xf32>, vector<24x128xf32>, vector<2x128xf32> -> vector<2x128xf32>
    %608 = vector.broadcast %503 : vector<1x128xf32> to vector<2x128xf32>
    %609 = arith.addf %607, %608 : vector<2x128xf32>
    %610 = vector.extract_strided_slice %609 {offsets = [0, 0], sizes = [2, 48], strides = [1, 1]} : vector<2x128xf32> to vector<2x48xf32>
    %611 = arith.negf %610 : vector<2x48xf32>
    %612 = math.exp %611 : vector<2x48xf32>
    %cst_79 = arith.constant 1.000000e+00 : f32
    %613 = vector.broadcast %cst_79 : f32 to vector<2x48xf32>
    %614 = arith.addf %613, %612 : vector<2x48xf32>
    %615 = arith.divf %613, %614 : vector<2x48xf32>
    %616 = vector.extract_strided_slice %609 {offsets = [0, 48], sizes = [2, 16], strides = [1, 1]} : vector<2x128xf32> to vector<2x16xf32>
    %617 = math.tanh %616 : vector<2x16xf32>
    %618 = vector.extract_strided_slice %615 {offsets = [0, 16], sizes = [2, 16], strides = [1, 1]} : vector<2x48xf32> to vector<2x16xf32>
    %619 = arith.mulf %618, %602 : vector<2x16xf32>
    %620 = vector.extract_strided_slice %615 {offsets = [0, 0], sizes = [2, 16], strides = [1, 1]} : vector<2x48xf32> to vector<2x16xf32>
    %621 = arith.mulf %620, %617 : vector<2x16xf32>
    %622 = arith.addf %619, %621 : vector<2x16xf32>
    %623 = vector.extract_strided_slice %615 {offsets = [0, 32], sizes = [2, 16], strides = [1, 1]} : vector<2x48xf32> to vector<2x16xf32>
    %624 = math.tanh %622 : vector<2x16xf32>
    %625 = arith.mulf %623, %624 : vector<2x16xf32>
    %626 = tpu.concatenate %481, %625 in 1 : vector<2x8xf32>, vector<2x16xf32> -> vector<2x24xf32>
    %cst_80 = arith.constant dense<0.000000e+00> : vector<2x128xf32>
    %627 = tpu.matmul %626, %502, %cst_80 {dimension_numbers = #tpu.dot_dimension_numbers<[1], [0], [0], [1], [0, 0, 1, 1], [], []>} : vector<2x24xf32>, vector<24x128xf32>, vector<2x128xf32> -> vector<2x128xf32>
    %628 = vector.broadcast %503 : vector<1x128xf32> to vector<2x128xf32>
    %629 = arith.addf %627, %628 : vector<2x128xf32>
    %630 = vector.extract_strided_slice %629 {offsets = [0, 0], sizes = [2, 48], strides = [1, 1]} : vector<2x128xf32> to vector<2x48xf32>
    %631 = arith.negf %630 : vector<2x48xf32>
    %632 = math.exp %631 : vector<2x48xf32>
    %cst_81 = arith.constant 1.000000e+00 : f32
    %633 = vector.broadcast %cst_81 : f32 to vector<2x48xf32>
    %634 = arith.addf %633, %632 : vector<2x48xf32>
    %635 = arith.divf %633, %634 : vector<2x48xf32>
    %636 = vector.extract_strided_slice %629 {offsets = [0, 48], sizes = [2, 16], strides = [1, 1]} : vector<2x128xf32> to vector<2x16xf32>
    %637 = math.tanh %636 : vector<2x16xf32>
    %638 = vector.extract_strided_slice %635 {offsets = [0, 16], sizes = [2, 16], strides = [1, 1]} : vector<2x48xf32> to vector<2x16xf32>
    %639 = arith.mulf %638, %622 : vector<2x16xf32>
    %640 = vector.extract_strided_slice %635 {offsets = [0, 0], sizes = [2, 16], strides = [1, 1]} : vector<2x48xf32> to vector<2x16xf32>
    %641 = arith.mulf %640, %637 : vector<2x16xf32>
    %642 = arith.addf %639, %641 : vector<2x16xf32>
    %643 = vector.extract_strided_slice %635 {offsets = [0, 32], sizes = [2, 16], strides = [1, 1]} : vector<2x48xf32> to vector<2x16xf32>
    %644 = math.tanh %642 : vector<2x16xf32>
    %645 = arith.mulf %643, %644 : vector<2x16xf32>
    %646 = tpu.concatenate %501, %645 in 1 : vector<2x8xf32>, vector<2x16xf32> -> vector<2x24xf32>
    %cst_82 = arith.constant dense<0.000000e+00> : vector<2x128xf32>
    %647 = tpu.matmul %646, %502, %cst_82 {dimension_numbers = #tpu.dot_dimension_numbers<[1], [0], [0], [1], [0, 0, 1, 1], [], []>} : vector<2x24xf32>, vector<24x128xf32>, vector<2x128xf32> -> vector<2x128xf32>
    %648 = vector.broadcast %503 : vector<1x128xf32> to vector<2x128xf32>
    %649 = arith.addf %647, %648 : vector<2x128xf32>
    %650 = vector.extract_strided_slice %649 {offsets = [0, 0], sizes = [2, 48], strides = [1, 1]} : vector<2x128xf32> to vector<2x48xf32>
    %651 = arith.negf %650 : vector<2x48xf32>
    %652 = math.exp %651 : vector<2x48xf32>
    %cst_83 = arith.constant 1.000000e+00 : f32
    %653 = vector.broadcast %cst_83 : f32 to vector<2x48xf32>
    %654 = arith.addf %653, %652 : vector<2x48xf32>
    %655 = arith.divf %653, %654 : vector<2x48xf32>
    %656 = vector.extract_strided_slice %649 {offsets = [0, 48], sizes = [2, 16], strides = [1, 1]} : vector<2x128xf32> to vector<2x16xf32>
    %657 = math.tanh %656 : vector<2x16xf32>
    %658 = vector.extract_strided_slice %655 {offsets = [0, 16], sizes = [2, 16], strides = [1, 1]} : vector<2x48xf32> to vector<2x16xf32>
    %659 = arith.mulf %658, %642 : vector<2x16xf32>
    %660 = vector.extract_strided_slice %655 {offsets = [0, 0], sizes = [2, 16], strides = [1, 1]} : vector<2x48xf32> to vector<2x16xf32>
    %661 = arith.mulf %660, %657 : vector<2x16xf32>
    %662 = arith.addf %659, %661 : vector<2x16xf32>
    %663 = vector.extract_strided_slice %655 {offsets = [0, 32], sizes = [2, 16], strides = [1, 1]} : vector<2x48xf32> to vector<2x16xf32>
    %664 = math.tanh %662 : vector<2x16xf32>
    %665 = arith.mulf %663, %664 : vector<2x16xf32>
    %c160 = arith.constant 160 : index
    %c0_84 = arith.constant 0 : index
    %666 = vector.load %arg2[%c160, %c0_84] : memref<384x128xf32, #tpu.memory_space<vmem>>, vector<16x128xf32>
    %c4 = arith.constant 4 : index
    %c0_85 = arith.constant 0 : index
    %667 = vector.load %arg3[%c4, %c0_85] : memref<10x128xf32, #tpu.memory_space<vmem>>, vector<1x128xf32>
    %cst_86 = arith.constant dense<0.000000e+00> : vector<2x128xf32>
    %668 = tpu.matmul %525, %666, %cst_86 {dimension_numbers = #tpu.dot_dimension_numbers<[1], [0], [0], [1], [0, 0, 1, 1], [], []>} : vector<2x16xf32>, vector<16x128xf32>, vector<2x128xf32> -> vector<2x128xf32>
    %669 = vector.broadcast %667 : vector<1x128xf32> to vector<2x128xf32>
    %670 = arith.addf %668, %669 : vector<2x128xf32>
    %671 = vector.extract_strided_slice %670 {offsets = [0, 0], sizes = [2, 16], strides = [1, 1]} : vector<2x128xf32> to vector<2x16xf32>
    %cst_87 = arith.constant 0.000000e+00 : f32
    %672 = vector.broadcast %cst_87 : f32 to vector<2x16xf32>
    %673 = arith.maximumf %671, %672 : vector<2x16xf32>
    %674 = vector.extract_strided_slice %670 {offsets = [0, 16], sizes = [2, 16], strides = [1, 1]} : vector<2x128xf32> to vector<2x16xf32>
    %cst_88 = arith.constant 0.000000e+00 : f32
    %675 = vector.broadcast %cst_88 : f32 to vector<2x16xf32>
    %676 = arith.maximumf %674, %675 : vector<2x16xf32>
    %677 = vector.extract_strided_slice %1 {offsets = [0, 0], sizes = [2, 16], strides = [1, 1]} : vector<16x16xf32> to vector<2x16xf32>
    %cst_89 = arith.constant 5.000000e-01 : f32
    %678 = vector.broadcast %cst_89 : f32 to vector<2x16xf32>
    %679 = arith.mulf %678, %676 : vector<2x16xf32>
    %680 = math.exp %679 : vector<2x16xf32>
    %681 = arith.mulf %677, %680 : vector<2x16xf32>
    %682 = arith.addf %673, %681 : vector<2x16xf32>
    %683 = tpu.concatenate %525, %682 in 1 : vector<2x16xf32>, vector<2x16xf32> -> vector<2x32xf32>
    %cst_90 = arith.constant dense<0.000000e+00> : vector<2x128xf32>
    %684 = tpu.matmul %545, %666, %cst_90 {dimension_numbers = #tpu.dot_dimension_numbers<[1], [0], [0], [1], [0, 0, 1, 1], [], []>} : vector<2x16xf32>, vector<16x128xf32>, vector<2x128xf32> -> vector<2x128xf32>
    %685 = vector.broadcast %667 : vector<1x128xf32> to vector<2x128xf32>
    %686 = arith.addf %684, %685 : vector<2x128xf32>
    %687 = vector.extract_strided_slice %686 {offsets = [0, 0], sizes = [2, 16], strides = [1, 1]} : vector<2x128xf32> to vector<2x16xf32>
    %cst_91 = arith.constant 0.000000e+00 : f32
    %688 = vector.broadcast %cst_91 : f32 to vector<2x16xf32>
    %689 = arith.maximumf %687, %688 : vector<2x16xf32>
    %690 = vector.extract_strided_slice %686 {offsets = [0, 16], sizes = [2, 16], strides = [1, 1]} : vector<2x128xf32> to vector<2x16xf32>
    %cst_92 = arith.constant 0.000000e+00 : f32
    %691 = vector.broadcast %cst_92 : f32 to vector<2x16xf32>
    %692 = arith.maximumf %690, %691 : vector<2x16xf32>
    %693 = vector.extract_strided_slice %1 {offsets = [2, 0], sizes = [2, 16], strides = [1, 1]} : vector<16x16xf32> to vector<2x16xf32>
    %cst_93 = arith.constant 5.000000e-01 : f32
    %694 = vector.broadcast %cst_93 : f32 to vector<2x16xf32>
    %695 = arith.mulf %694, %692 : vector<2x16xf32>
    %696 = math.exp %695 : vector<2x16xf32>
    %697 = arith.mulf %693, %696 : vector<2x16xf32>
    %698 = arith.addf %689, %697 : vector<2x16xf32>
    %699 = tpu.concatenate %545, %698 in 1 : vector<2x16xf32>, vector<2x16xf32> -> vector<2x32xf32>
    %cst_94 = arith.constant dense<0.000000e+00> : vector<2x128xf32>
    %700 = tpu.matmul %565, %666, %cst_94 {dimension_numbers = #tpu.dot_dimension_numbers<[1], [0], [0], [1], [0, 0, 1, 1], [], []>} : vector<2x16xf32>, vector<16x128xf32>, vector<2x128xf32> -> vector<2x128xf32>
    %701 = vector.broadcast %667 : vector<1x128xf32> to vector<2x128xf32>
    %702 = arith.addf %700, %701 : vector<2x128xf32>
    %703 = vector.extract_strided_slice %702 {offsets = [0, 0], sizes = [2, 16], strides = [1, 1]} : vector<2x128xf32> to vector<2x16xf32>
    %cst_95 = arith.constant 0.000000e+00 : f32
    %704 = vector.broadcast %cst_95 : f32 to vector<2x16xf32>
    %705 = arith.maximumf %703, %704 : vector<2x16xf32>
    %706 = vector.extract_strided_slice %702 {offsets = [0, 16], sizes = [2, 16], strides = [1, 1]} : vector<2x128xf32> to vector<2x16xf32>
    %cst_96 = arith.constant 0.000000e+00 : f32
    %707 = vector.broadcast %cst_96 : f32 to vector<2x16xf32>
    %708 = arith.maximumf %706, %707 : vector<2x16xf32>
    %709 = vector.extract_strided_slice %1 {offsets = [4, 0], sizes = [2, 16], strides = [1, 1]} : vector<16x16xf32> to vector<2x16xf32>
    %cst_97 = arith.constant 5.000000e-01 : f32
    %710 = vector.broadcast %cst_97 : f32 to vector<2x16xf32>
    %711 = arith.mulf %710, %708 : vector<2x16xf32>
    %712 = math.exp %711 : vector<2x16xf32>
    %713 = arith.mulf %709, %712 : vector<2x16xf32>
    %714 = arith.addf %705, %713 : vector<2x16xf32>
    %715 = tpu.concatenate %565, %714 in 1 : vector<2x16xf32>, vector<2x16xf32> -> vector<2x32xf32>
    %cst_98 = arith.constant dense<0.000000e+00> : vector<2x128xf32>
    %716 = tpu.matmul %585, %666, %cst_98 {dimension_numbers = #tpu.dot_dimension_numbers<[1], [0], [0], [1], [0, 0, 1, 1], [], []>} : vector<2x16xf32>, vector<16x128xf32>, vector<2x128xf32> -> vector<2x128xf32>
    %717 = vector.broadcast %667 : vector<1x128xf32> to vector<2x128xf32>
    %718 = arith.addf %716, %717 : vector<2x128xf32>
    %719 = vector.extract_strided_slice %718 {offsets = [0, 0], sizes = [2, 16], strides = [1, 1]} : vector<2x128xf32> to vector<2x16xf32>
    %cst_99 = arith.constant 0.000000e+00 : f32
    %720 = vector.broadcast %cst_99 : f32 to vector<2x16xf32>
    %721 = arith.maximumf %719, %720 : vector<2x16xf32>
    %722 = vector.extract_strided_slice %718 {offsets = [0, 16], sizes = [2, 16], strides = [1, 1]} : vector<2x128xf32> to vector<2x16xf32>
    %cst_100 = arith.constant 0.000000e+00 : f32
    %723 = vector.broadcast %cst_100 : f32 to vector<2x16xf32>
    %724 = arith.maximumf %722, %723 : vector<2x16xf32>
    %725 = vector.extract_strided_slice %1 {offsets = [6, 0], sizes = [2, 16], strides = [1, 1]} : vector<16x16xf32> to vector<2x16xf32>
    %cst_101 = arith.constant 5.000000e-01 : f32
    %726 = vector.broadcast %cst_101 : f32 to vector<2x16xf32>
    %727 = arith.mulf %726, %724 : vector<2x16xf32>
    %728 = math.exp %727 : vector<2x16xf32>
    %729 = arith.mulf %725, %728 : vector<2x16xf32>
    %730 = arith.addf %721, %729 : vector<2x16xf32>
    %731 = tpu.concatenate %585, %730 in 1 : vector<2x16xf32>, vector<2x16xf32> -> vector<2x32xf32>
    %cst_102 = arith.constant dense<0.000000e+00> : vector<2x128xf32>
    %732 = tpu.matmul %605, %666, %cst_102 {dimension_numbers = #tpu.dot_dimension_numbers<[1], [0], [0], [1], [0, 0, 1, 1], [], []>} : vector<2x16xf32>, vector<16x128xf32>, vector<2x128xf32> -> vector<2x128xf32>
    %733 = vector.broadcast %667 : vector<1x128xf32> to vector<2x128xf32>
    %734 = arith.addf %732, %733 : vector<2x128xf32>
    %735 = vector.extract_strided_slice %734 {offsets = [0, 0], sizes = [2, 16], strides = [1, 1]} : vector<2x128xf32> to vector<2x16xf32>
    %cst_103 = arith.constant 0.000000e+00 : f32
    %736 = vector.broadcast %cst_103 : f32 to vector<2x16xf32>
    %737 = arith.maximumf %735, %736 : vector<2x16xf32>
    %738 = vector.extract_strided_slice %734 {offsets = [0, 16], sizes = [2, 16], strides = [1, 1]} : vector<2x128xf32> to vector<2x16xf32>
    %cst_104 = arith.constant 0.000000e+00 : f32
    %739 = vector.broadcast %cst_104 : f32 to vector<2x16xf32>
    %740 = arith.maximumf %738, %739 : vector<2x16xf32>
    %741 = vector.extract_strided_slice %1 {offsets = [8, 0], sizes = [2, 16], strides = [1, 1]} : vector<16x16xf32> to vector<2x16xf32>
    %cst_105 = arith.constant 5.000000e-01 : f32
    %742 = vector.broadcast %cst_105 : f32 to vector<2x16xf32>
    %743 = arith.mulf %742, %740 : vector<2x16xf32>
    %744 = math.exp %743 : vector<2x16xf32>
    %745 = arith.mulf %741, %744 : vector<2x16xf32>
    %746 = arith.addf %737, %745 : vector<2x16xf32>
    %747 = tpu.concatenate %605, %746 in 1 : vector<2x16xf32>, vector<2x16xf32> -> vector<2x32xf32>
    %cst_106 = arith.constant dense<0.000000e+00> : vector<2x128xf32>
    %748 = tpu.matmul %625, %666, %cst_106 {dimension_numbers = #tpu.dot_dimension_numbers<[1], [0], [0], [1], [0, 0, 1, 1], [], []>} : vector<2x16xf32>, vector<16x128xf32>, vector<2x128xf32> -> vector<2x128xf32>
    %749 = vector.broadcast %667 : vector<1x128xf32> to vector<2x128xf32>
    %750 = arith.addf %748, %749 : vector<2x128xf32>
    %751 = vector.extract_strided_slice %750 {offsets = [0, 0], sizes = [2, 16], strides = [1, 1]} : vector<2x128xf32> to vector<2x16xf32>
    %cst_107 = arith.constant 0.000000e+00 : f32
    %752 = vector.broadcast %cst_107 : f32 to vector<2x16xf32>
    %753 = arith.maximumf %751, %752 : vector<2x16xf32>
    %754 = vector.extract_strided_slice %750 {offsets = [0, 16], sizes = [2, 16], strides = [1, 1]} : vector<2x128xf32> to vector<2x16xf32>
    %cst_108 = arith.constant 0.000000e+00 : f32
    %755 = vector.broadcast %cst_108 : f32 to vector<2x16xf32>
    %756 = arith.maximumf %754, %755 : vector<2x16xf32>
    %757 = vector.extract_strided_slice %1 {offsets = [10, 0], sizes = [2, 16], strides = [1, 1]} : vector<16x16xf32> to vector<2x16xf32>
    %cst_109 = arith.constant 5.000000e-01 : f32
    %758 = vector.broadcast %cst_109 : f32 to vector<2x16xf32>
    %759 = arith.mulf %758, %756 : vector<2x16xf32>
    %760 = math.exp %759 : vector<2x16xf32>
    %761 = arith.mulf %757, %760 : vector<2x16xf32>
    %762 = arith.addf %753, %761 : vector<2x16xf32>
    %763 = tpu.concatenate %625, %762 in 1 : vector<2x16xf32>, vector<2x16xf32> -> vector<2x32xf32>
    %cst_110 = arith.constant dense<0.000000e+00> : vector<2x128xf32>
    %764 = tpu.matmul %645, %666, %cst_110 {dimension_numbers = #tpu.dot_dimension_numbers<[1], [0], [0], [1], [0, 0, 1, 1], [], []>} : vector<2x16xf32>, vector<16x128xf32>, vector<2x128xf32> -> vector<2x128xf32>
    %765 = vector.broadcast %667 : vector<1x128xf32> to vector<2x128xf32>
    %766 = arith.addf %764, %765 : vector<2x128xf32>
    %767 = vector.extract_strided_slice %766 {offsets = [0, 0], sizes = [2, 16], strides = [1, 1]} : vector<2x128xf32> to vector<2x16xf32>
    %cst_111 = arith.constant 0.000000e+00 : f32
    %768 = vector.broadcast %cst_111 : f32 to vector<2x16xf32>
    %769 = arith.maximumf %767, %768 : vector<2x16xf32>
    %770 = vector.extract_strided_slice %766 {offsets = [0, 16], sizes = [2, 16], strides = [1, 1]} : vector<2x128xf32> to vector<2x16xf32>
    %cst_112 = arith.constant 0.000000e+00 : f32
    %771 = vector.broadcast %cst_112 : f32 to vector<2x16xf32>
    %772 = arith.maximumf %770, %771 : vector<2x16xf32>
    %773 = vector.extract_strided_slice %1 {offsets = [12, 0], sizes = [2, 16], strides = [1, 1]} : vector<16x16xf32> to vector<2x16xf32>
    %cst_113 = arith.constant 5.000000e-01 : f32
    %774 = vector.broadcast %cst_113 : f32 to vector<2x16xf32>
    %775 = arith.mulf %774, %772 : vector<2x16xf32>
    %776 = math.exp %775 : vector<2x16xf32>
    %777 = arith.mulf %773, %776 : vector<2x16xf32>
    %778 = arith.addf %769, %777 : vector<2x16xf32>
    %779 = tpu.concatenate %645, %778 in 1 : vector<2x16xf32>, vector<2x16xf32> -> vector<2x32xf32>
    %cst_114 = arith.constant dense<0.000000e+00> : vector<2x128xf32>
    %780 = tpu.matmul %665, %666, %cst_114 {dimension_numbers = #tpu.dot_dimension_numbers<[1], [0], [0], [1], [0, 0, 1, 1], [], []>} : vector<2x16xf32>, vector<16x128xf32>, vector<2x128xf32> -> vector<2x128xf32>
    %781 = vector.broadcast %667 : vector<1x128xf32> to vector<2x128xf32>
    %782 = arith.addf %780, %781 : vector<2x128xf32>
    %783 = vector.extract_strided_slice %782 {offsets = [0, 0], sizes = [2, 16], strides = [1, 1]} : vector<2x128xf32> to vector<2x16xf32>
    %cst_115 = arith.constant 0.000000e+00 : f32
    %784 = vector.broadcast %cst_115 : f32 to vector<2x16xf32>
    %785 = arith.maximumf %783, %784 : vector<2x16xf32>
    %786 = vector.extract_strided_slice %782 {offsets = [0, 16], sizes = [2, 16], strides = [1, 1]} : vector<2x128xf32> to vector<2x16xf32>
    %cst_116 = arith.constant 0.000000e+00 : f32
    %787 = vector.broadcast %cst_116 : f32 to vector<2x16xf32>
    %788 = arith.maximumf %786, %787 : vector<2x16xf32>
    %789 = vector.extract_strided_slice %1 {offsets = [14, 0], sizes = [2, 16], strides = [1, 1]} : vector<16x16xf32> to vector<2x16xf32>
    %cst_117 = arith.constant 5.000000e-01 : f32
    %790 = vector.broadcast %cst_117 : f32 to vector<2x16xf32>
    %791 = arith.mulf %790, %788 : vector<2x16xf32>
    %792 = math.exp %791 : vector<2x16xf32>
    %793 = arith.mulf %789, %792 : vector<2x16xf32>
    %794 = arith.addf %785, %793 : vector<2x16xf32>
    %795 = tpu.concatenate %665, %794 in 1 : vector<2x16xf32>, vector<2x16xf32> -> vector<2x32xf32>
    %c176 = arith.constant 176 : index
    %c0_118 = arith.constant 0 : index
    %796 = vector.load %arg2[%c176, %c0_118] : memref<384x128xf32, #tpu.memory_space<vmem>>, vector<40x128xf32>
    %c5 = arith.constant 5 : index
    %c0_119 = arith.constant 0 : index
    %797 = vector.load %arg3[%c5, %c0_119] : memref<10x128xf32, #tpu.memory_space<vmem>>, vector<1x128xf32>
    %cst_120 = arith.constant 0.000000e+00 : f32
    %798 = vector.broadcast %cst_120 : f32 to vector<2x8xf32>
    %cst_121 = arith.constant 0.000000e+00 : f32
    %799 = vector.broadcast %cst_121 : f32 to vector<2x8xf32>
    %800 = tpu.concatenate %683, %798 in 1 : vector<2x32xf32>, vector<2x8xf32> -> vector<2x40xf32>
    %cst_122 = arith.constant dense<0.000000e+00> : vector<2x128xf32>
    %801 = tpu.matmul %800, %796, %cst_122 {dimension_numbers = #tpu.dot_dimension_numbers<[1], [0], [0], [1], [0, 0, 1, 1], [], []>} : vector<2x40xf32>, vector<40x128xf32>, vector<2x128xf32> -> vector<2x128xf32>
    %802 = vector.broadcast %797 : vector<1x128xf32> to vector<2x128xf32>
    %803 = arith.addf %801, %802 : vector<2x128xf32>
    %804 = vector.extract_strided_slice %803 {offsets = [0, 0], sizes = [2, 24], strides = [1, 1]} : vector<2x128xf32> to vector<2x24xf32>
    %805 = arith.negf %804 : vector<2x24xf32>
    %806 = math.exp %805 : vector<2x24xf32>
    %cst_123 = arith.constant 1.000000e+00 : f32
    %807 = vector.broadcast %cst_123 : f32 to vector<2x24xf32>
    %808 = arith.addf %807, %806 : vector<2x24xf32>
    %809 = arith.divf %807, %808 : vector<2x24xf32>
    %810 = vector.extract_strided_slice %803 {offsets = [0, 24], sizes = [2, 8], strides = [1, 1]} : vector<2x128xf32> to vector<2x8xf32>
    %811 = math.tanh %810 : vector<2x8xf32>
    %812 = vector.extract_strided_slice %809 {offsets = [0, 8], sizes = [2, 8], strides = [1, 1]} : vector<2x24xf32> to vector<2x8xf32>
    %813 = arith.mulf %812, %799 : vector<2x8xf32>
    %814 = vector.extract_strided_slice %809 {offsets = [0, 0], sizes = [2, 8], strides = [1, 1]} : vector<2x24xf32> to vector<2x8xf32>
    %815 = arith.mulf %814, %811 : vector<2x8xf32>
    %816 = arith.addf %813, %815 : vector<2x8xf32>
    %817 = vector.extract_strided_slice %809 {offsets = [0, 16], sizes = [2, 8], strides = [1, 1]} : vector<2x24xf32> to vector<2x8xf32>
    %818 = math.tanh %816 : vector<2x8xf32>
    %819 = arith.mulf %817, %818 : vector<2x8xf32>
    %820 = tpu.concatenate %699, %819 in 1 : vector<2x32xf32>, vector<2x8xf32> -> vector<2x40xf32>
    %cst_124 = arith.constant dense<0.000000e+00> : vector<2x128xf32>
    %821 = tpu.matmul %820, %796, %cst_124 {dimension_numbers = #tpu.dot_dimension_numbers<[1], [0], [0], [1], [0, 0, 1, 1], [], []>} : vector<2x40xf32>, vector<40x128xf32>, vector<2x128xf32> -> vector<2x128xf32>
    %822 = vector.broadcast %797 : vector<1x128xf32> to vector<2x128xf32>
    %823 = arith.addf %821, %822 : vector<2x128xf32>
    %824 = vector.extract_strided_slice %823 {offsets = [0, 0], sizes = [2, 24], strides = [1, 1]} : vector<2x128xf32> to vector<2x24xf32>
    %825 = arith.negf %824 : vector<2x24xf32>
    %826 = math.exp %825 : vector<2x24xf32>
    %cst_125 = arith.constant 1.000000e+00 : f32
    %827 = vector.broadcast %cst_125 : f32 to vector<2x24xf32>
    %828 = arith.addf %827, %826 : vector<2x24xf32>
    %829 = arith.divf %827, %828 : vector<2x24xf32>
    %830 = vector.extract_strided_slice %823 {offsets = [0, 24], sizes = [2, 8], strides = [1, 1]} : vector<2x128xf32> to vector<2x8xf32>
    %831 = math.tanh %830 : vector<2x8xf32>
    %832 = vector.extract_strided_slice %829 {offsets = [0, 8], sizes = [2, 8], strides = [1, 1]} : vector<2x24xf32> to vector<2x8xf32>
    %833 = arith.mulf %832, %816 : vector<2x8xf32>
    %834 = vector.extract_strided_slice %829 {offsets = [0, 0], sizes = [2, 8], strides = [1, 1]} : vector<2x24xf32> to vector<2x8xf32>
    %835 = arith.mulf %834, %831 : vector<2x8xf32>
    %836 = arith.addf %833, %835 : vector<2x8xf32>
    %837 = vector.extract_strided_slice %829 {offsets = [0, 16], sizes = [2, 8], strides = [1, 1]} : vector<2x24xf32> to vector<2x8xf32>
    %838 = math.tanh %836 : vector<2x8xf32>
    %839 = arith.mulf %837, %838 : vector<2x8xf32>
    %840 = tpu.concatenate %715, %839 in 1 : vector<2x32xf32>, vector<2x8xf32> -> vector<2x40xf32>
    %cst_126 = arith.constant dense<0.000000e+00> : vector<2x128xf32>
    %841 = tpu.matmul %840, %796, %cst_126 {dimension_numbers = #tpu.dot_dimension_numbers<[1], [0], [0], [1], [0, 0, 1, 1], [], []>} : vector<2x40xf32>, vector<40x128xf32>, vector<2x128xf32> -> vector<2x128xf32>
    %842 = vector.broadcast %797 : vector<1x128xf32> to vector<2x128xf32>
    %843 = arith.addf %841, %842 : vector<2x128xf32>
    %844 = vector.extract_strided_slice %843 {offsets = [0, 0], sizes = [2, 24], strides = [1, 1]} : vector<2x128xf32> to vector<2x24xf32>
    %845 = arith.negf %844 : vector<2x24xf32>
    %846 = math.exp %845 : vector<2x24xf32>
    %cst_127 = arith.constant 1.000000e+00 : f32
    %847 = vector.broadcast %cst_127 : f32 to vector<2x24xf32>
    %848 = arith.addf %847, %846 : vector<2x24xf32>
    %849 = arith.divf %847, %848 : vector<2x24xf32>
    %850 = vector.extract_strided_slice %843 {offsets = [0, 24], sizes = [2, 8], strides = [1, 1]} : vector<2x128xf32> to vector<2x8xf32>
    %851 = math.tanh %850 : vector<2x8xf32>
    %852 = vector.extract_strided_slice %849 {offsets = [0, 8], sizes = [2, 8], strides = [1, 1]} : vector<2x24xf32> to vector<2x8xf32>
    %853 = arith.mulf %852, %836 : vector<2x8xf32>
    %854 = vector.extract_strided_slice %849 {offsets = [0, 0], sizes = [2, 8], strides = [1, 1]} : vector<2x24xf32> to vector<2x8xf32>
    %855 = arith.mulf %854, %851 : vector<2x8xf32>
    %856 = arith.addf %853, %855 : vector<2x8xf32>
    %857 = vector.extract_strided_slice %849 {offsets = [0, 16], sizes = [2, 8], strides = [1, 1]} : vector<2x24xf32> to vector<2x8xf32>
    %858 = math.tanh %856 : vector<2x8xf32>
    %859 = arith.mulf %857, %858 : vector<2x8xf32>
    %860 = tpu.concatenate %731, %859 in 1 : vector<2x32xf32>, vector<2x8xf32> -> vector<2x40xf32>
    %cst_128 = arith.constant dense<0.000000e+00> : vector<2x128xf32>
    %861 = tpu.matmul %860, %796, %cst_128 {dimension_numbers = #tpu.dot_dimension_numbers<[1], [0], [0], [1], [0, 0, 1, 1], [], []>} : vector<2x40xf32>, vector<40x128xf32>, vector<2x128xf32> -> vector<2x128xf32>
    %862 = vector.broadcast %797 : vector<1x128xf32> to vector<2x128xf32>
    %863 = arith.addf %861, %862 : vector<2x128xf32>
    %864 = vector.extract_strided_slice %863 {offsets = [0, 0], sizes = [2, 24], strides = [1, 1]} : vector<2x128xf32> to vector<2x24xf32>
    %865 = arith.negf %864 : vector<2x24xf32>
    %866 = math.exp %865 : vector<2x24xf32>
    %cst_129 = arith.constant 1.000000e+00 : f32
    %867 = vector.broadcast %cst_129 : f32 to vector<2x24xf32>
    %868 = arith.addf %867, %866 : vector<2x24xf32>
    %869 = arith.divf %867, %868 : vector<2x24xf32>
    %870 = vector.extract_strided_slice %863 {offsets = [0, 24], sizes = [2, 8], strides = [1, 1]} : vector<2x128xf32> to vector<2x8xf32>
    %871 = math.tanh %870 : vector<2x8xf32>
    %872 = vector.extract_strided_slice %869 {offsets = [0, 8], sizes = [2, 8], strides = [1, 1]} : vector<2x24xf32> to vector<2x8xf32>
    %873 = arith.mulf %872, %856 : vector<2x8xf32>
    %874 = vector.extract_strided_slice %869 {offsets = [0, 0], sizes = [2, 8], strides = [1, 1]} : vector<2x24xf32> to vector<2x8xf32>
    %875 = arith.mulf %874, %871 : vector<2x8xf32>
    %876 = arith.addf %873, %875 : vector<2x8xf32>
    %877 = vector.extract_strided_slice %869 {offsets = [0, 16], sizes = [2, 8], strides = [1, 1]} : vector<2x24xf32> to vector<2x8xf32>
    %878 = math.tanh %876 : vector<2x8xf32>
    %879 = arith.mulf %877, %878 : vector<2x8xf32>
    %880 = tpu.concatenate %747, %879 in 1 : vector<2x32xf32>, vector<2x8xf32> -> vector<2x40xf32>
    %cst_130 = arith.constant dense<0.000000e+00> : vector<2x128xf32>
    %881 = tpu.matmul %880, %796, %cst_130 {dimension_numbers = #tpu.dot_dimension_numbers<[1], [0], [0], [1], [0, 0, 1, 1], [], []>} : vector<2x40xf32>, vector<40x128xf32>, vector<2x128xf32> -> vector<2x128xf32>
    %882 = vector.broadcast %797 : vector<1x128xf32> to vector<2x128xf32>
    %883 = arith.addf %881, %882 : vector<2x128xf32>
    %884 = vector.extract_strided_slice %883 {offsets = [0, 0], sizes = [2, 24], strides = [1, 1]} : vector<2x128xf32> to vector<2x24xf32>
    %885 = arith.negf %884 : vector<2x24xf32>
    %886 = math.exp %885 : vector<2x24xf32>
    %cst_131 = arith.constant 1.000000e+00 : f32
    %887 = vector.broadcast %cst_131 : f32 to vector<2x24xf32>
    %888 = arith.addf %887, %886 : vector<2x24xf32>
    %889 = arith.divf %887, %888 : vector<2x24xf32>
    %890 = vector.extract_strided_slice %883 {offsets = [0, 24], sizes = [2, 8], strides = [1, 1]} : vector<2x128xf32> to vector<2x8xf32>
    %891 = math.tanh %890 : vector<2x8xf32>
    %892 = vector.extract_strided_slice %889 {offsets = [0, 8], sizes = [2, 8], strides = [1, 1]} : vector<2x24xf32> to vector<2x8xf32>
    %893 = arith.mulf %892, %876 : vector<2x8xf32>
    %894 = vector.extract_strided_slice %889 {offsets = [0, 0], sizes = [2, 8], strides = [1, 1]} : vector<2x24xf32> to vector<2x8xf32>
    %895 = arith.mulf %894, %891 : vector<2x8xf32>
    %896 = arith.addf %893, %895 : vector<2x8xf32>
    %897 = vector.extract_strided_slice %889 {offsets = [0, 16], sizes = [2, 8], strides = [1, 1]} : vector<2x24xf32> to vector<2x8xf32>
    %898 = math.tanh %896 : vector<2x8xf32>
    %899 = arith.mulf %897, %898 : vector<2x8xf32>
    %900 = tpu.concatenate %763, %899 in 1 : vector<2x32xf32>, vector<2x8xf32> -> vector<2x40xf32>
    %cst_132 = arith.constant dense<0.000000e+00> : vector<2x128xf32>
    %901 = tpu.matmul %900, %796, %cst_132 {dimension_numbers = #tpu.dot_dimension_numbers<[1], [0], [0], [1], [0, 0, 1, 1], [], []>} : vector<2x40xf32>, vector<40x128xf32>, vector<2x128xf32> -> vector<2x128xf32>
    %902 = vector.broadcast %797 : vector<1x128xf32> to vector<2x128xf32>
    %903 = arith.addf %901, %902 : vector<2x128xf32>
    %904 = vector.extract_strided_slice %903 {offsets = [0, 0], sizes = [2, 24], strides = [1, 1]} : vector<2x128xf32> to vector<2x24xf32>
    %905 = arith.negf %904 : vector<2x24xf32>
    %906 = math.exp %905 : vector<2x24xf32>
    %cst_133 = arith.constant 1.000000e+00 : f32
    %907 = vector.broadcast %cst_133 : f32 to vector<2x24xf32>
    %908 = arith.addf %907, %906 : vector<2x24xf32>
    %909 = arith.divf %907, %908 : vector<2x24xf32>
    %910 = vector.extract_strided_slice %903 {offsets = [0, 24], sizes = [2, 8], strides = [1, 1]} : vector<2x128xf32> to vector<2x8xf32>
    %911 = math.tanh %910 : vector<2x8xf32>
    %912 = vector.extract_strided_slice %909 {offsets = [0, 8], sizes = [2, 8], strides = [1, 1]} : vector<2x24xf32> to vector<2x8xf32>
    %913 = arith.mulf %912, %896 : vector<2x8xf32>
    %914 = vector.extract_strided_slice %909 {offsets = [0, 0], sizes = [2, 8], strides = [1, 1]} : vector<2x24xf32> to vector<2x8xf32>
    %915 = arith.mulf %914, %911 : vector<2x8xf32>
    %916 = arith.addf %913, %915 : vector<2x8xf32>
    %917 = vector.extract_strided_slice %909 {offsets = [0, 16], sizes = [2, 8], strides = [1, 1]} : vector<2x24xf32> to vector<2x8xf32>
    %918 = math.tanh %916 : vector<2x8xf32>
    %919 = arith.mulf %917, %918 : vector<2x8xf32>
    %920 = tpu.concatenate %779, %919 in 1 : vector<2x32xf32>, vector<2x8xf32> -> vector<2x40xf32>
    %cst_134 = arith.constant dense<0.000000e+00> : vector<2x128xf32>
    %921 = tpu.matmul %920, %796, %cst_134 {dimension_numbers = #tpu.dot_dimension_numbers<[1], [0], [0], [1], [0, 0, 1, 1], [], []>} : vector<2x40xf32>, vector<40x128xf32>, vector<2x128xf32> -> vector<2x128xf32>
    %922 = vector.broadcast %797 : vector<1x128xf32> to vector<2x128xf32>
    %923 = arith.addf %921, %922 : vector<2x128xf32>
    %924 = vector.extract_strided_slice %923 {offsets = [0, 0], sizes = [2, 24], strides = [1, 1]} : vector<2x128xf32> to vector<2x24xf32>
    %925 = arith.negf %924 : vector<2x24xf32>
    %926 = math.exp %925 : vector<2x24xf32>
    %cst_135 = arith.constant 1.000000e+00 : f32
    %927 = vector.broadcast %cst_135 : f32 to vector<2x24xf32>
    %928 = arith.addf %927, %926 : vector<2x24xf32>
    %929 = arith.divf %927, %928 : vector<2x24xf32>
    %930 = vector.extract_strided_slice %923 {offsets = [0, 24], sizes = [2, 8], strides = [1, 1]} : vector<2x128xf32> to vector<2x8xf32>
    %931 = math.tanh %930 : vector<2x8xf32>
    %932 = vector.extract_strided_slice %929 {offsets = [0, 8], sizes = [2, 8], strides = [1, 1]} : vector<2x24xf32> to vector<2x8xf32>
    %933 = arith.mulf %932, %916 : vector<2x8xf32>
    %934 = vector.extract_strided_slice %929 {offsets = [0, 0], sizes = [2, 8], strides = [1, 1]} : vector<2x24xf32> to vector<2x8xf32>
    %935 = arith.mulf %934, %931 : vector<2x8xf32>
    %936 = arith.addf %933, %935 : vector<2x8xf32>
    %937 = vector.extract_strided_slice %929 {offsets = [0, 16], sizes = [2, 8], strides = [1, 1]} : vector<2x24xf32> to vector<2x8xf32>
    %938 = math.tanh %936 : vector<2x8xf32>
    %939 = arith.mulf %937, %938 : vector<2x8xf32>
    %940 = tpu.concatenate %795, %939 in 1 : vector<2x32xf32>, vector<2x8xf32> -> vector<2x40xf32>
    %cst_136 = arith.constant dense<0.000000e+00> : vector<2x128xf32>
    %941 = tpu.matmul %940, %796, %cst_136 {dimension_numbers = #tpu.dot_dimension_numbers<[1], [0], [0], [1], [0, 0, 1, 1], [], []>} : vector<2x40xf32>, vector<40x128xf32>, vector<2x128xf32> -> vector<2x128xf32>
    %942 = vector.broadcast %797 : vector<1x128xf32> to vector<2x128xf32>
    %943 = arith.addf %941, %942 : vector<2x128xf32>
    %944 = vector.extract_strided_slice %943 {offsets = [0, 0], sizes = [2, 24], strides = [1, 1]} : vector<2x128xf32> to vector<2x24xf32>
    %945 = arith.negf %944 : vector<2x24xf32>
    %946 = math.exp %945 : vector<2x24xf32>
    %cst_137 = arith.constant 1.000000e+00 : f32
    %947 = vector.broadcast %cst_137 : f32 to vector<2x24xf32>
    %948 = arith.addf %947, %946 : vector<2x24xf32>
    %949 = arith.divf %947, %948 : vector<2x24xf32>
    %950 = vector.extract_strided_slice %943 {offsets = [0, 24], sizes = [2, 8], strides = [1, 1]} : vector<2x128xf32> to vector<2x8xf32>
    %951 = math.tanh %950 : vector<2x8xf32>
    %952 = vector.extract_strided_slice %949 {offsets = [0, 8], sizes = [2, 8], strides = [1, 1]} : vector<2x24xf32> to vector<2x8xf32>
    %953 = arith.mulf %952, %936 : vector<2x8xf32>
    %954 = vector.extract_strided_slice %949 {offsets = [0, 0], sizes = [2, 8], strides = [1, 1]} : vector<2x24xf32> to vector<2x8xf32>
    %955 = arith.mulf %954, %951 : vector<2x8xf32>
    %956 = arith.addf %953, %955 : vector<2x8xf32>
    %957 = vector.extract_strided_slice %949 {offsets = [0, 16], sizes = [2, 8], strides = [1, 1]} : vector<2x24xf32> to vector<2x8xf32>
    %958 = math.tanh %956 : vector<2x8xf32>
    %959 = arith.mulf %957, %958 : vector<2x8xf32>
    %c216 = arith.constant 216 : index
    %c0_138 = arith.constant 0 : index
    %960 = vector.load %arg2[%c216, %c0_138] : memref<384x128xf32, #tpu.memory_space<vmem>>, vector<24x128xf32>
    %c6 = arith.constant 6 : index
    %c0_139 = arith.constant 0 : index
    %961 = vector.load %arg3[%c6, %c0_139] : memref<10x128xf32, #tpu.memory_space<vmem>>, vector<1x128xf32>
    %cst_140 = arith.constant 0.000000e+00 : f32
    %962 = vector.broadcast %cst_140 : f32 to vector<2x16xf32>
    %cst_141 = arith.constant 0.000000e+00 : f32
    %963 = vector.broadcast %cst_141 : f32 to vector<2x16xf32>
    %964 = tpu.concatenate %819, %962 in 1 : vector<2x8xf32>, vector<2x16xf32> -> vector<2x24xf32>
    %cst_142 = arith.constant dense<0.000000e+00> : vector<2x128xf32>
    %965 = tpu.matmul %964, %960, %cst_142 {dimension_numbers = #tpu.dot_dimension_numbers<[1], [0], [0], [1], [0, 0, 1, 1], [], []>} : vector<2x24xf32>, vector<24x128xf32>, vector<2x128xf32> -> vector<2x128xf32>
    %966 = vector.broadcast %961 : vector<1x128xf32> to vector<2x128xf32>
    %967 = arith.addf %965, %966 : vector<2x128xf32>
    %968 = vector.extract_strided_slice %967 {offsets = [0, 0], sizes = [2, 48], strides = [1, 1]} : vector<2x128xf32> to vector<2x48xf32>
    %969 = arith.negf %968 : vector<2x48xf32>
    %970 = math.exp %969 : vector<2x48xf32>
    %cst_143 = arith.constant 1.000000e+00 : f32
    %971 = vector.broadcast %cst_143 : f32 to vector<2x48xf32>
    %972 = arith.addf %971, %970 : vector<2x48xf32>
    %973 = arith.divf %971, %972 : vector<2x48xf32>
    %974 = vector.extract_strided_slice %967 {offsets = [0, 48], sizes = [2, 16], strides = [1, 1]} : vector<2x128xf32> to vector<2x16xf32>
    %975 = math.tanh %974 : vector<2x16xf32>
    %976 = vector.extract_strided_slice %973 {offsets = [0, 16], sizes = [2, 16], strides = [1, 1]} : vector<2x48xf32> to vector<2x16xf32>
    %977 = arith.mulf %976, %963 : vector<2x16xf32>
    %978 = vector.extract_strided_slice %973 {offsets = [0, 0], sizes = [2, 16], strides = [1, 1]} : vector<2x48xf32> to vector<2x16xf32>
    %979 = arith.mulf %978, %975 : vector<2x16xf32>
    %980 = arith.addf %977, %979 : vector<2x16xf32>
    %981 = vector.extract_strided_slice %973 {offsets = [0, 32], sizes = [2, 16], strides = [1, 1]} : vector<2x48xf32> to vector<2x16xf32>
    %982 = math.tanh %980 : vector<2x16xf32>
    %983 = arith.mulf %981, %982 : vector<2x16xf32>
    %984 = tpu.concatenate %839, %983 in 1 : vector<2x8xf32>, vector<2x16xf32> -> vector<2x24xf32>
    %cst_144 = arith.constant dense<0.000000e+00> : vector<2x128xf32>
    %985 = tpu.matmul %984, %960, %cst_144 {dimension_numbers = #tpu.dot_dimension_numbers<[1], [0], [0], [1], [0, 0, 1, 1], [], []>} : vector<2x24xf32>, vector<24x128xf32>, vector<2x128xf32> -> vector<2x128xf32>
    %986 = vector.broadcast %961 : vector<1x128xf32> to vector<2x128xf32>
    %987 = arith.addf %985, %986 : vector<2x128xf32>
    %988 = vector.extract_strided_slice %987 {offsets = [0, 0], sizes = [2, 48], strides = [1, 1]} : vector<2x128xf32> to vector<2x48xf32>
    %989 = arith.negf %988 : vector<2x48xf32>
    %990 = math.exp %989 : vector<2x48xf32>
    %cst_145 = arith.constant 1.000000e+00 : f32
    %991 = vector.broadcast %cst_145 : f32 to vector<2x48xf32>
    %992 = arith.addf %991, %990 : vector<2x48xf32>
    %993 = arith.divf %991, %992 : vector<2x48xf32>
    %994 = vector.extract_strided_slice %987 {offsets = [0, 48], sizes = [2, 16], strides = [1, 1]} : vector<2x128xf32> to vector<2x16xf32>
    %995 = math.tanh %994 : vector<2x16xf32>
    %996 = vector.extract_strided_slice %993 {offsets = [0, 16], sizes = [2, 16], strides = [1, 1]} : vector<2x48xf32> to vector<2x16xf32>
    %997 = arith.mulf %996, %980 : vector<2x16xf32>
    %998 = vector.extract_strided_slice %993 {offsets = [0, 0], sizes = [2, 16], strides = [1, 1]} : vector<2x48xf32> to vector<2x16xf32>
    %999 = arith.mulf %998, %995 : vector<2x16xf32>
    %1000 = arith.addf %997, %999 : vector<2x16xf32>
    %1001 = vector.extract_strided_slice %993 {offsets = [0, 32], sizes = [2, 16], strides = [1, 1]} : vector<2x48xf32> to vector<2x16xf32>
    %1002 = math.tanh %1000 : vector<2x16xf32>
    %1003 = arith.mulf %1001, %1002 : vector<2x16xf32>
    %1004 = tpu.concatenate %859, %1003 in 1 : vector<2x8xf32>, vector<2x16xf32> -> vector<2x24xf32>
    %cst_146 = arith.constant dense<0.000000e+00> : vector<2x128xf32>
    %1005 = tpu.matmul %1004, %960, %cst_146 {dimension_numbers = #tpu.dot_dimension_numbers<[1], [0], [0], [1], [0, 0, 1, 1], [], []>} : vector<2x24xf32>, vector<24x128xf32>, vector<2x128xf32> -> vector<2x128xf32>
    %1006 = vector.broadcast %961 : vector<1x128xf32> to vector<2x128xf32>
    %1007 = arith.addf %1005, %1006 : vector<2x128xf32>
    %1008 = vector.extract_strided_slice %1007 {offsets = [0, 0], sizes = [2, 48], strides = [1, 1]} : vector<2x128xf32> to vector<2x48xf32>
    %1009 = arith.negf %1008 : vector<2x48xf32>
    %1010 = math.exp %1009 : vector<2x48xf32>
    %cst_147 = arith.constant 1.000000e+00 : f32
    %1011 = vector.broadcast %cst_147 : f32 to vector<2x48xf32>
    %1012 = arith.addf %1011, %1010 : vector<2x48xf32>
    %1013 = arith.divf %1011, %1012 : vector<2x48xf32>
    %1014 = vector.extract_strided_slice %1007 {offsets = [0, 48], sizes = [2, 16], strides = [1, 1]} : vector<2x128xf32> to vector<2x16xf32>
    %1015 = math.tanh %1014 : vector<2x16xf32>
    %1016 = vector.extract_strided_slice %1013 {offsets = [0, 16], sizes = [2, 16], strides = [1, 1]} : vector<2x48xf32> to vector<2x16xf32>
    %1017 = arith.mulf %1016, %1000 : vector<2x16xf32>
    %1018 = vector.extract_strided_slice %1013 {offsets = [0, 0], sizes = [2, 16], strides = [1, 1]} : vector<2x48xf32> to vector<2x16xf32>
    %1019 = arith.mulf %1018, %1015 : vector<2x16xf32>
    %1020 = arith.addf %1017, %1019 : vector<2x16xf32>
    %1021 = vector.extract_strided_slice %1013 {offsets = [0, 32], sizes = [2, 16], strides = [1, 1]} : vector<2x48xf32> to vector<2x16xf32>
    %1022 = math.tanh %1020 : vector<2x16xf32>
    %1023 = arith.mulf %1021, %1022 : vector<2x16xf32>
    %1024 = tpu.concatenate %879, %1023 in 1 : vector<2x8xf32>, vector<2x16xf32> -> vector<2x24xf32>
    %cst_148 = arith.constant dense<0.000000e+00> : vector<2x128xf32>
    %1025 = tpu.matmul %1024, %960, %cst_148 {dimension_numbers = #tpu.dot_dimension_numbers<[1], [0], [0], [1], [0, 0, 1, 1], [], []>} : vector<2x24xf32>, vector<24x128xf32>, vector<2x128xf32> -> vector<2x128xf32>
    %1026 = vector.broadcast %961 : vector<1x128xf32> to vector<2x128xf32>
    %1027 = arith.addf %1025, %1026 : vector<2x128xf32>
    %1028 = vector.extract_strided_slice %1027 {offsets = [0, 0], sizes = [2, 48], strides = [1, 1]} : vector<2x128xf32> to vector<2x48xf32>
    %1029 = arith.negf %1028 : vector<2x48xf32>
    %1030 = math.exp %1029 : vector<2x48xf32>
    %cst_149 = arith.constant 1.000000e+00 : f32
    %1031 = vector.broadcast %cst_149 : f32 to vector<2x48xf32>
    %1032 = arith.addf %1031, %1030 : vector<2x48xf32>
    %1033 = arith.divf %1031, %1032 : vector<2x48xf32>
    %1034 = vector.extract_strided_slice %1027 {offsets = [0, 48], sizes = [2, 16], strides = [1, 1]} : vector<2x128xf32> to vector<2x16xf32>
    %1035 = math.tanh %1034 : vector<2x16xf32>
    %1036 = vector.extract_strided_slice %1033 {offsets = [0, 16], sizes = [2, 16], strides = [1, 1]} : vector<2x48xf32> to vector<2x16xf32>
    %1037 = arith.mulf %1036, %1020 : vector<2x16xf32>
    %1038 = vector.extract_strided_slice %1033 {offsets = [0, 0], sizes = [2, 16], strides = [1, 1]} : vector<2x48xf32> to vector<2x16xf32>
    %1039 = arith.mulf %1038, %1035 : vector<2x16xf32>
    %1040 = arith.addf %1037, %1039 : vector<2x16xf32>
    %1041 = vector.extract_strided_slice %1033 {offsets = [0, 32], sizes = [2, 16], strides = [1, 1]} : vector<2x48xf32> to vector<2x16xf32>
    %1042 = math.tanh %1040 : vector<2x16xf32>
    %1043 = arith.mulf %1041, %1042 : vector<2x16xf32>
    %1044 = tpu.concatenate %899, %1043 in 1 : vector<2x8xf32>, vector<2x16xf32> -> vector<2x24xf32>
    %cst_150 = arith.constant dense<0.000000e+00> : vector<2x128xf32>
    %1045 = tpu.matmul %1044, %960, %cst_150 {dimension_numbers = #tpu.dot_dimension_numbers<[1], [0], [0], [1], [0, 0, 1, 1], [], []>} : vector<2x24xf32>, vector<24x128xf32>, vector<2x128xf32> -> vector<2x128xf32>
    %1046 = vector.broadcast %961 : vector<1x128xf32> to vector<2x128xf32>
    %1047 = arith.addf %1045, %1046 : vector<2x128xf32>
    %1048 = vector.extract_strided_slice %1047 {offsets = [0, 0], sizes = [2, 48], strides = [1, 1]} : vector<2x128xf32> to vector<2x48xf32>
    %1049 = arith.negf %1048 : vector<2x48xf32>
    %1050 = math.exp %1049 : vector<2x48xf32>
    %cst_151 = arith.constant 1.000000e+00 : f32
    %1051 = vector.broadcast %cst_151 : f32 to vector<2x48xf32>
    %1052 = arith.addf %1051, %1050 : vector<2x48xf32>
    %1053 = arith.divf %1051, %1052 : vector<2x48xf32>
    %1054 = vector.extract_strided_slice %1047 {offsets = [0, 48], sizes = [2, 16], strides = [1, 1]} : vector<2x128xf32> to vector<2x16xf32>
    %1055 = math.tanh %1054 : vector<2x16xf32>
    %1056 = vector.extract_strided_slice %1053 {offsets = [0, 16], sizes = [2, 16], strides = [1, 1]} : vector<2x48xf32> to vector<2x16xf32>
    %1057 = arith.mulf %1056, %1040 : vector<2x16xf32>
    %1058 = vector.extract_strided_slice %1053 {offsets = [0, 0], sizes = [2, 16], strides = [1, 1]} : vector<2x48xf32> to vector<2x16xf32>
    %1059 = arith.mulf %1058, %1055 : vector<2x16xf32>
    %1060 = arith.addf %1057, %1059 : vector<2x16xf32>
    %1061 = vector.extract_strided_slice %1053 {offsets = [0, 32], sizes = [2, 16], strides = [1, 1]} : vector<2x48xf32> to vector<2x16xf32>
    %1062 = math.tanh %1060 : vector<2x16xf32>
    %1063 = arith.mulf %1061, %1062 : vector<2x16xf32>
    %1064 = tpu.concatenate %919, %1063 in 1 : vector<2x8xf32>, vector<2x16xf32> -> vector<2x24xf32>
    %cst_152 = arith.constant dense<0.000000e+00> : vector<2x128xf32>
    %1065 = tpu.matmul %1064, %960, %cst_152 {dimension_numbers = #tpu.dot_dimension_numbers<[1], [0], [0], [1], [0, 0, 1, 1], [], []>} : vector<2x24xf32>, vector<24x128xf32>, vector<2x128xf32> -> vector<2x128xf32>
    %1066 = vector.broadcast %961 : vector<1x128xf32> to vector<2x128xf32>
    %1067 = arith.addf %1065, %1066 : vector<2x128xf32>
    %1068 = vector.extract_strided_slice %1067 {offsets = [0, 0], sizes = [2, 48], strides = [1, 1]} : vector<2x128xf32> to vector<2x48xf32>
    %1069 = arith.negf %1068 : vector<2x48xf32>
    %1070 = math.exp %1069 : vector<2x48xf32>
    %cst_153 = arith.constant 1.000000e+00 : f32
    %1071 = vector.broadcast %cst_153 : f32 to vector<2x48xf32>
    %1072 = arith.addf %1071, %1070 : vector<2x48xf32>
    %1073 = arith.divf %1071, %1072 : vector<2x48xf32>
    %1074 = vector.extract_strided_slice %1067 {offsets = [0, 48], sizes = [2, 16], strides = [1, 1]} : vector<2x128xf32> to vector<2x16xf32>
    %1075 = math.tanh %1074 : vector<2x16xf32>
    %1076 = vector.extract_strided_slice %1073 {offsets = [0, 16], sizes = [2, 16], strides = [1, 1]} : vector<2x48xf32> to vector<2x16xf32>
    %1077 = arith.mulf %1076, %1060 : vector<2x16xf32>
    %1078 = vector.extract_strided_slice %1073 {offsets = [0, 0], sizes = [2, 16], strides = [1, 1]} : vector<2x48xf32> to vector<2x16xf32>
    %1079 = arith.mulf %1078, %1075 : vector<2x16xf32>
    %1080 = arith.addf %1077, %1079 : vector<2x16xf32>
    %1081 = vector.extract_strided_slice %1073 {offsets = [0, 32], sizes = [2, 16], strides = [1, 1]} : vector<2x48xf32> to vector<2x16xf32>
    %1082 = math.tanh %1080 : vector<2x16xf32>
    %1083 = arith.mulf %1081, %1082 : vector<2x16xf32>
    %1084 = tpu.concatenate %939, %1083 in 1 : vector<2x8xf32>, vector<2x16xf32> -> vector<2x24xf32>
    %cst_154 = arith.constant dense<0.000000e+00> : vector<2x128xf32>
    %1085 = tpu.matmul %1084, %960, %cst_154 {dimension_numbers = #tpu.dot_dimension_numbers<[1], [0], [0], [1], [0, 0, 1, 1], [], []>} : vector<2x24xf32>, vector<24x128xf32>, vector<2x128xf32> -> vector<2x128xf32>
    %1086 = vector.broadcast %961 : vector<1x128xf32> to vector<2x128xf32>
    %1087 = arith.addf %1085, %1086 : vector<2x128xf32>
    %1088 = vector.extract_strided_slice %1087 {offsets = [0, 0], sizes = [2, 48], strides = [1, 1]} : vector<2x128xf32> to vector<2x48xf32>
    %1089 = arith.negf %1088 : vector<2x48xf32>
    %1090 = math.exp %1089 : vector<2x48xf32>
    %cst_155 = arith.constant 1.000000e+00 : f32
    %1091 = vector.broadcast %cst_155 : f32 to vector<2x48xf32>
    %1092 = arith.addf %1091, %1090 : vector<2x48xf32>
    %1093 = arith.divf %1091, %1092 : vector<2x48xf32>
    %1094 = vector.extract_strided_slice %1087 {offsets = [0, 48], sizes = [2, 16], strides = [1, 1]} : vector<2x128xf32> to vector<2x16xf32>
    %1095 = math.tanh %1094 : vector<2x16xf32>
    %1096 = vector.extract_strided_slice %1093 {offsets = [0, 16], sizes = [2, 16], strides = [1, 1]} : vector<2x48xf32> to vector<2x16xf32>
    %1097 = arith.mulf %1096, %1080 : vector<2x16xf32>
    %1098 = vector.extract_strided_slice %1093 {offsets = [0, 0], sizes = [2, 16], strides = [1, 1]} : vector<2x48xf32> to vector<2x16xf32>
    %1099 = arith.mulf %1098, %1095 : vector<2x16xf32>
    %1100 = arith.addf %1097, %1099 : vector<2x16xf32>
    %1101 = vector.extract_strided_slice %1093 {offsets = [0, 32], sizes = [2, 16], strides = [1, 1]} : vector<2x48xf32> to vector<2x16xf32>
    %1102 = math.tanh %1100 : vector<2x16xf32>
    %1103 = arith.mulf %1101, %1102 : vector<2x16xf32>
    %1104 = tpu.concatenate %959, %1103 in 1 : vector<2x8xf32>, vector<2x16xf32> -> vector<2x24xf32>
    %cst_156 = arith.constant dense<0.000000e+00> : vector<2x128xf32>
    %1105 = tpu.matmul %1104, %960, %cst_156 {dimension_numbers = #tpu.dot_dimension_numbers<[1], [0], [0], [1], [0, 0, 1, 1], [], []>} : vector<2x24xf32>, vector<24x128xf32>, vector<2x128xf32> -> vector<2x128xf32>
    %1106 = vector.broadcast %961 : vector<1x128xf32> to vector<2x128xf32>
    %1107 = arith.addf %1105, %1106 : vector<2x128xf32>
    %1108 = vector.extract_strided_slice %1107 {offsets = [0, 0], sizes = [2, 48], strides = [1, 1]} : vector<2x128xf32> to vector<2x48xf32>
    %1109 = arith.negf %1108 : vector<2x48xf32>
    %1110 = math.exp %1109 : vector<2x48xf32>
    %cst_157 = arith.constant 1.000000e+00 : f32
    %1111 = vector.broadcast %cst_157 : f32 to vector<2x48xf32>
    %1112 = arith.addf %1111, %1110 : vector<2x48xf32>
    %1113 = arith.divf %1111, %1112 : vector<2x48xf32>
    %1114 = vector.extract_strided_slice %1107 {offsets = [0, 48], sizes = [2, 16], strides = [1, 1]} : vector<2x128xf32> to vector<2x16xf32>
    %1115 = math.tanh %1114 : vector<2x16xf32>
    %1116 = vector.extract_strided_slice %1113 {offsets = [0, 16], sizes = [2, 16], strides = [1, 1]} : vector<2x48xf32> to vector<2x16xf32>
    %1117 = arith.mulf %1116, %1100 : vector<2x16xf32>
    %1118 = vector.extract_strided_slice %1113 {offsets = [0, 0], sizes = [2, 16], strides = [1, 1]} : vector<2x48xf32> to vector<2x16xf32>
    %1119 = arith.mulf %1118, %1115 : vector<2x16xf32>
    %1120 = arith.addf %1117, %1119 : vector<2x16xf32>
    %1121 = vector.extract_strided_slice %1113 {offsets = [0, 32], sizes = [2, 16], strides = [1, 1]} : vector<2x48xf32> to vector<2x16xf32>
    %1122 = math.tanh %1120 : vector<2x16xf32>
    %1123 = arith.mulf %1121, %1122 : vector<2x16xf32>
    %c240 = arith.constant 240 : index
    %c0_158 = arith.constant 0 : index
    %1124 = vector.load %arg2[%c240, %c0_158] : memref<384x128xf32, #tpu.memory_space<vmem>>, vector<48x128xf32>
    %c7 = arith.constant 7 : index
    %c0_159 = arith.constant 0 : index
    %1125 = vector.load %arg3[%c7, %c0_159] : memref<10x128xf32, #tpu.memory_space<vmem>>, vector<1x128xf32>
    %cst_160 = arith.constant 0.000000e+00 : f32
    %1126 = vector.broadcast %cst_160 : f32 to vector<2x32xf32>
    %cst_161 = arith.constant 0.000000e+00 : f32
    %1127 = vector.broadcast %cst_161 : f32 to vector<2x32xf32>
    %1128 = tpu.concatenate %983, %1126 in 1 : vector<2x16xf32>, vector<2x32xf32> -> vector<2x48xf32>
    %cst_162 = arith.constant dense<0.000000e+00> : vector<2x128xf32>
    %1129 = tpu.matmul %1128, %1124, %cst_162 {dimension_numbers = #tpu.dot_dimension_numbers<[1], [0], [0], [1], [0, 0, 1, 1], [], []>} : vector<2x48xf32>, vector<48x128xf32>, vector<2x128xf32> -> vector<2x128xf32>
    %1130 = vector.broadcast %1125 : vector<1x128xf32> to vector<2x128xf32>
    %1131 = arith.addf %1129, %1130 : vector<2x128xf32>
    %1132 = vector.extract_strided_slice %1131 {offsets = [0, 0], sizes = [2, 96], strides = [1, 1]} : vector<2x128xf32> to vector<2x96xf32>
    %1133 = arith.negf %1132 : vector<2x96xf32>
    %1134 = math.exp %1133 : vector<2x96xf32>
    %cst_163 = arith.constant 1.000000e+00 : f32
    %1135 = vector.broadcast %cst_163 : f32 to vector<2x96xf32>
    %1136 = arith.addf %1135, %1134 : vector<2x96xf32>
    %1137 = arith.divf %1135, %1136 : vector<2x96xf32>
    %1138 = vector.extract_strided_slice %1131 {offsets = [0, 96], sizes = [2, 32], strides = [1, 1]} : vector<2x128xf32> to vector<2x32xf32>
    %1139 = math.tanh %1138 : vector<2x32xf32>
    %1140 = vector.extract_strided_slice %1137 {offsets = [0, 32], sizes = [2, 32], strides = [1, 1]} : vector<2x96xf32> to vector<2x32xf32>
    %1141 = arith.mulf %1140, %1127 : vector<2x32xf32>
    %1142 = vector.extract_strided_slice %1137 {offsets = [0, 0], sizes = [2, 32], strides = [1, 1]} : vector<2x96xf32> to vector<2x32xf32>
    %1143 = arith.mulf %1142, %1139 : vector<2x32xf32>
    %1144 = arith.addf %1141, %1143 : vector<2x32xf32>
    %1145 = vector.extract_strided_slice %1137 {offsets = [0, 64], sizes = [2, 32], strides = [1, 1]} : vector<2x96xf32> to vector<2x32xf32>
    %1146 = math.tanh %1144 : vector<2x32xf32>
    %1147 = arith.mulf %1145, %1146 : vector<2x32xf32>
    %1148 = tpu.concatenate %1003, %1147 in 1 : vector<2x16xf32>, vector<2x32xf32> -> vector<2x48xf32>
    %cst_164 = arith.constant dense<0.000000e+00> : vector<2x128xf32>
    %1149 = tpu.matmul %1148, %1124, %cst_164 {dimension_numbers = #tpu.dot_dimension_numbers<[1], [0], [0], [1], [0, 0, 1, 1], [], []>} : vector<2x48xf32>, vector<48x128xf32>, vector<2x128xf32> -> vector<2x128xf32>
    %1150 = vector.broadcast %1125 : vector<1x128xf32> to vector<2x128xf32>
    %1151 = arith.addf %1149, %1150 : vector<2x128xf32>
    %1152 = vector.extract_strided_slice %1151 {offsets = [0, 0], sizes = [2, 96], strides = [1, 1]} : vector<2x128xf32> to vector<2x96xf32>
    %1153 = arith.negf %1152 : vector<2x96xf32>
    %1154 = math.exp %1153 : vector<2x96xf32>
    %cst_165 = arith.constant 1.000000e+00 : f32
    %1155 = vector.broadcast %cst_165 : f32 to vector<2x96xf32>
    %1156 = arith.addf %1155, %1154 : vector<2x96xf32>
    %1157 = arith.divf %1155, %1156 : vector<2x96xf32>
    %1158 = vector.extract_strided_slice %1151 {offsets = [0, 96], sizes = [2, 32], strides = [1, 1]} : vector<2x128xf32> to vector<2x32xf32>
    %1159 = math.tanh %1158 : vector<2x32xf32>
    %1160 = vector.extract_strided_slice %1157 {offsets = [0, 32], sizes = [2, 32], strides = [1, 1]} : vector<2x96xf32> to vector<2x32xf32>
    %1161 = arith.mulf %1160, %1144 : vector<2x32xf32>
    %1162 = vector.extract_strided_slice %1157 {offsets = [0, 0], sizes = [2, 32], strides = [1, 1]} : vector<2x96xf32> to vector<2x32xf32>
    %1163 = arith.mulf %1162, %1159 : vector<2x32xf32>
    %1164 = arith.addf %1161, %1163 : vector<2x32xf32>
    %1165 = vector.extract_strided_slice %1157 {offsets = [0, 64], sizes = [2, 32], strides = [1, 1]} : vector<2x96xf32> to vector<2x32xf32>
    %1166 = math.tanh %1164 : vector<2x32xf32>
    %1167 = arith.mulf %1165, %1166 : vector<2x32xf32>
    %1168 = tpu.concatenate %1023, %1167 in 1 : vector<2x16xf32>, vector<2x32xf32> -> vector<2x48xf32>
    %cst_166 = arith.constant dense<0.000000e+00> : vector<2x128xf32>
    %1169 = tpu.matmul %1168, %1124, %cst_166 {dimension_numbers = #tpu.dot_dimension_numbers<[1], [0], [0], [1], [0, 0, 1, 1], [], []>} : vector<2x48xf32>, vector<48x128xf32>, vector<2x128xf32> -> vector<2x128xf32>
    %1170 = vector.broadcast %1125 : vector<1x128xf32> to vector<2x128xf32>
    %1171 = arith.addf %1169, %1170 : vector<2x128xf32>
    %1172 = vector.extract_strided_slice %1171 {offsets = [0, 0], sizes = [2, 96], strides = [1, 1]} : vector<2x128xf32> to vector<2x96xf32>
    %1173 = arith.negf %1172 : vector<2x96xf32>
    %1174 = math.exp %1173 : vector<2x96xf32>
    %cst_167 = arith.constant 1.000000e+00 : f32
    %1175 = vector.broadcast %cst_167 : f32 to vector<2x96xf32>
    %1176 = arith.addf %1175, %1174 : vector<2x96xf32>
    %1177 = arith.divf %1175, %1176 : vector<2x96xf32>
    %1178 = vector.extract_strided_slice %1171 {offsets = [0, 96], sizes = [2, 32], strides = [1, 1]} : vector<2x128xf32> to vector<2x32xf32>
    %1179 = math.tanh %1178 : vector<2x32xf32>
    %1180 = vector.extract_strided_slice %1177 {offsets = [0, 32], sizes = [2, 32], strides = [1, 1]} : vector<2x96xf32> to vector<2x32xf32>
    %1181 = arith.mulf %1180, %1164 : vector<2x32xf32>
    %1182 = vector.extract_strided_slice %1177 {offsets = [0, 0], sizes = [2, 32], strides = [1, 1]} : vector<2x96xf32> to vector<2x32xf32>
    %1183 = arith.mulf %1182, %1179 : vector<2x32xf32>
    %1184 = arith.addf %1181, %1183 : vector<2x32xf32>
    %1185 = vector.extract_strided_slice %1177 {offsets = [0, 64], sizes = [2, 32], strides = [1, 1]} : vector<2x96xf32> to vector<2x32xf32>
    %1186 = math.tanh %1184 : vector<2x32xf32>
    %1187 = arith.mulf %1185, %1186 : vector<2x32xf32>
    %1188 = tpu.concatenate %1043, %1187 in 1 : vector<2x16xf32>, vector<2x32xf32> -> vector<2x48xf32>
    %cst_168 = arith.constant dense<0.000000e+00> : vector<2x128xf32>
    %1189 = tpu.matmul %1188, %1124, %cst_168 {dimension_numbers = #tpu.dot_dimension_numbers<[1], [0], [0], [1], [0, 0, 1, 1], [], []>} : vector<2x48xf32>, vector<48x128xf32>, vector<2x128xf32> -> vector<2x128xf32>
    %1190 = vector.broadcast %1125 : vector<1x128xf32> to vector<2x128xf32>
    %1191 = arith.addf %1189, %1190 : vector<2x128xf32>
    %1192 = vector.extract_strided_slice %1191 {offsets = [0, 0], sizes = [2, 96], strides = [1, 1]} : vector<2x128xf32> to vector<2x96xf32>
    %1193 = arith.negf %1192 : vector<2x96xf32>
    %1194 = math.exp %1193 : vector<2x96xf32>
    %cst_169 = arith.constant 1.000000e+00 : f32
    %1195 = vector.broadcast %cst_169 : f32 to vector<2x96xf32>
    %1196 = arith.addf %1195, %1194 : vector<2x96xf32>
    %1197 = arith.divf %1195, %1196 : vector<2x96xf32>
    %1198 = vector.extract_strided_slice %1191 {offsets = [0, 96], sizes = [2, 32], strides = [1, 1]} : vector<2x128xf32> to vector<2x32xf32>
    %1199 = math.tanh %1198 : vector<2x32xf32>
    %1200 = vector.extract_strided_slice %1197 {offsets = [0, 32], sizes = [2, 32], strides = [1, 1]} : vector<2x96xf32> to vector<2x32xf32>
    %1201 = arith.mulf %1200, %1184 : vector<2x32xf32>
    %1202 = vector.extract_strided_slice %1197 {offsets = [0, 0], sizes = [2, 32], strides = [1, 1]} : vector<2x96xf32> to vector<2x32xf32>
    %1203 = arith.mulf %1202, %1199 : vector<2x32xf32>
    %1204 = arith.addf %1201, %1203 : vector<2x32xf32>
    %1205 = vector.extract_strided_slice %1197 {offsets = [0, 64], sizes = [2, 32], strides = [1, 1]} : vector<2x96xf32> to vector<2x32xf32>
    %1206 = math.tanh %1204 : vector<2x32xf32>
    %1207 = arith.mulf %1205, %1206 : vector<2x32xf32>
    %1208 = tpu.concatenate %1063, %1207 in 1 : vector<2x16xf32>, vector<2x32xf32> -> vector<2x48xf32>
    %cst_170 = arith.constant dense<0.000000e+00> : vector<2x128xf32>
    %1209 = tpu.matmul %1208, %1124, %cst_170 {dimension_numbers = #tpu.dot_dimension_numbers<[1], [0], [0], [1], [0, 0, 1, 1], [], []>} : vector<2x48xf32>, vector<48x128xf32>, vector<2x128xf32> -> vector<2x128xf32>
    %1210 = vector.broadcast %1125 : vector<1x128xf32> to vector<2x128xf32>
    %1211 = arith.addf %1209, %1210 : vector<2x128xf32>
    %1212 = vector.extract_strided_slice %1211 {offsets = [0, 0], sizes = [2, 96], strides = [1, 1]} : vector<2x128xf32> to vector<2x96xf32>
    %1213 = arith.negf %1212 : vector<2x96xf32>
    %1214 = math.exp %1213 : vector<2x96xf32>
    %cst_171 = arith.constant 1.000000e+00 : f32
    %1215 = vector.broadcast %cst_171 : f32 to vector<2x96xf32>
    %1216 = arith.addf %1215, %1214 : vector<2x96xf32>
    %1217 = arith.divf %1215, %1216 : vector<2x96xf32>
    %1218 = vector.extract_strided_slice %1211 {offsets = [0, 96], sizes = [2, 32], strides = [1, 1]} : vector<2x128xf32> to vector<2x32xf32>
    %1219 = math.tanh %1218 : vector<2x32xf32>
    %1220 = vector.extract_strided_slice %1217 {offsets = [0, 32], sizes = [2, 32], strides = [1, 1]} : vector<2x96xf32> to vector<2x32xf32>
    %1221 = arith.mulf %1220, %1204 : vector<2x32xf32>
    %1222 = vector.extract_strided_slice %1217 {offsets = [0, 0], sizes = [2, 32], strides = [1, 1]} : vector<2x96xf32> to vector<2x32xf32>
    %1223 = arith.mulf %1222, %1219 : vector<2x32xf32>
    %1224 = arith.addf %1221, %1223 : vector<2x32xf32>
    %1225 = vector.extract_strided_slice %1217 {offsets = [0, 64], sizes = [2, 32], strides = [1, 1]} : vector<2x96xf32> to vector<2x32xf32>
    %1226 = math.tanh %1224 : vector<2x32xf32>
    %1227 = arith.mulf %1225, %1226 : vector<2x32xf32>
    %1228 = tpu.concatenate %1083, %1227 in 1 : vector<2x16xf32>, vector<2x32xf32> -> vector<2x48xf32>
    %cst_172 = arith.constant dense<0.000000e+00> : vector<2x128xf32>
    %1229 = tpu.matmul %1228, %1124, %cst_172 {dimension_numbers = #tpu.dot_dimension_numbers<[1], [0], [0], [1], [0, 0, 1, 1], [], []>} : vector<2x48xf32>, vector<48x128xf32>, vector<2x128xf32> -> vector<2x128xf32>
    %1230 = vector.broadcast %1125 : vector<1x128xf32> to vector<2x128xf32>
    %1231 = arith.addf %1229, %1230 : vector<2x128xf32>
    %1232 = vector.extract_strided_slice %1231 {offsets = [0, 0], sizes = [2, 96], strides = [1, 1]} : vector<2x128xf32> to vector<2x96xf32>
    %1233 = arith.negf %1232 : vector<2x96xf32>
    %1234 = math.exp %1233 : vector<2x96xf32>
    %cst_173 = arith.constant 1.000000e+00 : f32
    %1235 = vector.broadcast %cst_173 : f32 to vector<2x96xf32>
    %1236 = arith.addf %1235, %1234 : vector<2x96xf32>
    %1237 = arith.divf %1235, %1236 : vector<2x96xf32>
    %1238 = vector.extract_strided_slice %1231 {offsets = [0, 96], sizes = [2, 32], strides = [1, 1]} : vector<2x128xf32> to vector<2x32xf32>
    %1239 = math.tanh %1238 : vector<2x32xf32>
    %1240 = vector.extract_strided_slice %1237 {offsets = [0, 32], sizes = [2, 32], strides = [1, 1]} : vector<2x96xf32> to vector<2x32xf32>
    %1241 = arith.mulf %1240, %1224 : vector<2x32xf32>
    %1242 = vector.extract_strided_slice %1237 {offsets = [0, 0], sizes = [2, 32], strides = [1, 1]} : vector<2x96xf32> to vector<2x32xf32>
    %1243 = arith.mulf %1242, %1239 : vector<2x32xf32>
    %1244 = arith.addf %1241, %1243 : vector<2x32xf32>
    %1245 = vector.extract_strided_slice %1237 {offsets = [0, 64], sizes = [2, 32], strides = [1, 1]} : vector<2x96xf32> to vector<2x32xf32>
    %1246 = math.tanh %1244 : vector<2x32xf32>
    %1247 = arith.mulf %1245, %1246 : vector<2x32xf32>
    %1248 = tpu.concatenate %1103, %1247 in 1 : vector<2x16xf32>, vector<2x32xf32> -> vector<2x48xf32>
    %cst_174 = arith.constant dense<0.000000e+00> : vector<2x128xf32>
    %1249 = tpu.matmul %1248, %1124, %cst_174 {dimension_numbers = #tpu.dot_dimension_numbers<[1], [0], [0], [1], [0, 0, 1, 1], [], []>} : vector<2x48xf32>, vector<48x128xf32>, vector<2x128xf32> -> vector<2x128xf32>
    %1250 = vector.broadcast %1125 : vector<1x128xf32> to vector<2x128xf32>
    %1251 = arith.addf %1249, %1250 : vector<2x128xf32>
    %1252 = vector.extract_strided_slice %1251 {offsets = [0, 0], sizes = [2, 96], strides = [1, 1]} : vector<2x128xf32> to vector<2x96xf32>
    %1253 = arith.negf %1252 : vector<2x96xf32>
    %1254 = math.exp %1253 : vector<2x96xf32>
    %cst_175 = arith.constant 1.000000e+00 : f32
    %1255 = vector.broadcast %cst_175 : f32 to vector<2x96xf32>
    %1256 = arith.addf %1255, %1254 : vector<2x96xf32>
    %1257 = arith.divf %1255, %1256 : vector<2x96xf32>
    %1258 = vector.extract_strided_slice %1251 {offsets = [0, 96], sizes = [2, 32], strides = [1, 1]} : vector<2x128xf32> to vector<2x32xf32>
    %1259 = math.tanh %1258 : vector<2x32xf32>
    %1260 = vector.extract_strided_slice %1257 {offsets = [0, 32], sizes = [2, 32], strides = [1, 1]} : vector<2x96xf32> to vector<2x32xf32>
    %1261 = arith.mulf %1260, %1244 : vector<2x32xf32>
    %1262 = vector.extract_strided_slice %1257 {offsets = [0, 0], sizes = [2, 32], strides = [1, 1]} : vector<2x96xf32> to vector<2x32xf32>
    %1263 = arith.mulf %1262, %1259 : vector<2x32xf32>
    %1264 = arith.addf %1261, %1263 : vector<2x32xf32>
    %1265 = vector.extract_strided_slice %1257 {offsets = [0, 64], sizes = [2, 32], strides = [1, 1]} : vector<2x96xf32> to vector<2x32xf32>
    %1266 = math.tanh %1264 : vector<2x32xf32>
    %1267 = arith.mulf %1265, %1266 : vector<2x32xf32>
    %1268 = tpu.concatenate %1123, %1267 in 1 : vector<2x16xf32>, vector<2x32xf32> -> vector<2x48xf32>
    %cst_176 = arith.constant dense<0.000000e+00> : vector<2x128xf32>
    %1269 = tpu.matmul %1268, %1124, %cst_176 {dimension_numbers = #tpu.dot_dimension_numbers<[1], [0], [0], [1], [0, 0, 1, 1], [], []>} : vector<2x48xf32>, vector<48x128xf32>, vector<2x128xf32> -> vector<2x128xf32>
    %1270 = vector.broadcast %1125 : vector<1x128xf32> to vector<2x128xf32>
    %1271 = arith.addf %1269, %1270 : vector<2x128xf32>
    %1272 = vector.extract_strided_slice %1271 {offsets = [0, 0], sizes = [2, 96], strides = [1, 1]} : vector<2x128xf32> to vector<2x96xf32>
    %1273 = arith.negf %1272 : vector<2x96xf32>
    %1274 = math.exp %1273 : vector<2x96xf32>
    %cst_177 = arith.constant 1.000000e+00 : f32
    %1275 = vector.broadcast %cst_177 : f32 to vector<2x96xf32>
    %1276 = arith.addf %1275, %1274 : vector<2x96xf32>
    %1277 = arith.divf %1275, %1276 : vector<2x96xf32>
    %1278 = vector.extract_strided_slice %1271 {offsets = [0, 96], sizes = [2, 32], strides = [1, 1]} : vector<2x128xf32> to vector<2x32xf32>
    %1279 = math.tanh %1278 : vector<2x32xf32>
    %1280 = vector.extract_strided_slice %1277 {offsets = [0, 32], sizes = [2, 32], strides = [1, 1]} : vector<2x96xf32> to vector<2x32xf32>
    %1281 = arith.mulf %1280, %1264 : vector<2x32xf32>
    %1282 = vector.extract_strided_slice %1277 {offsets = [0, 0], sizes = [2, 32], strides = [1, 1]} : vector<2x96xf32> to vector<2x32xf32>
    %1283 = arith.mulf %1282, %1279 : vector<2x32xf32>
    %1284 = arith.addf %1281, %1283 : vector<2x32xf32>
    %1285 = vector.extract_strided_slice %1277 {offsets = [0, 64], sizes = [2, 32], strides = [1, 1]} : vector<2x96xf32> to vector<2x32xf32>
    %1286 = math.tanh %1284 : vector<2x32xf32>
    %1287 = arith.mulf %1285, %1286 : vector<2x32xf32>
    %c288 = arith.constant 288 : index
    %c0_178 = arith.constant 0 : index
    %1288 = vector.load %arg2[%c288, %c0_178] : memref<384x128xf32, #tpu.memory_space<vmem>>, vector<64x128xf32>
    %c8 = arith.constant 8 : index
    %c0_179 = arith.constant 0 : index
    %1289 = vector.load %arg3[%c8, %c0_179] : memref<10x128xf32, #tpu.memory_space<vmem>>, vector<1x128xf32>
    %cst_180 = arith.constant 0.000000e+00 : f32
    %1290 = vector.broadcast %cst_180 : f32 to vector<2x32xf32>
    %cst_181 = arith.constant 0.000000e+00 : f32
    %1291 = vector.broadcast %cst_181 : f32 to vector<2x32xf32>
    %1292 = tpu.concatenate %1147, %1290 in 1 : vector<2x32xf32>, vector<2x32xf32> -> vector<2x64xf32>
    %cst_182 = arith.constant dense<0.000000e+00> : vector<2x128xf32>
    %1293 = tpu.matmul %1292, %1288, %cst_182 {dimension_numbers = #tpu.dot_dimension_numbers<[1], [0], [0], [1], [0, 0, 1, 1], [], []>} : vector<2x64xf32>, vector<64x128xf32>, vector<2x128xf32> -> vector<2x128xf32>
    %1294 = vector.broadcast %1289 : vector<1x128xf32> to vector<2x128xf32>
    %1295 = arith.addf %1293, %1294 : vector<2x128xf32>
    %1296 = vector.extract_strided_slice %1295 {offsets = [0, 0], sizes = [2, 96], strides = [1, 1]} : vector<2x128xf32> to vector<2x96xf32>
    %1297 = arith.negf %1296 : vector<2x96xf32>
    %1298 = math.exp %1297 : vector<2x96xf32>
    %cst_183 = arith.constant 1.000000e+00 : f32
    %1299 = vector.broadcast %cst_183 : f32 to vector<2x96xf32>
    %1300 = arith.addf %1299, %1298 : vector<2x96xf32>
    %1301 = arith.divf %1299, %1300 : vector<2x96xf32>
    %1302 = vector.extract_strided_slice %1295 {offsets = [0, 96], sizes = [2, 32], strides = [1, 1]} : vector<2x128xf32> to vector<2x32xf32>
    %1303 = math.tanh %1302 : vector<2x32xf32>
    %1304 = vector.extract_strided_slice %1301 {offsets = [0, 32], sizes = [2, 32], strides = [1, 1]} : vector<2x96xf32> to vector<2x32xf32>
    %1305 = arith.mulf %1304, %1291 : vector<2x32xf32>
    %1306 = vector.extract_strided_slice %1301 {offsets = [0, 0], sizes = [2, 32], strides = [1, 1]} : vector<2x96xf32> to vector<2x32xf32>
    %1307 = arith.mulf %1306, %1303 : vector<2x32xf32>
    %1308 = arith.addf %1305, %1307 : vector<2x32xf32>
    %1309 = vector.extract_strided_slice %1301 {offsets = [0, 64], sizes = [2, 32], strides = [1, 1]} : vector<2x96xf32> to vector<2x32xf32>
    %1310 = math.tanh %1308 : vector<2x32xf32>
    %1311 = arith.mulf %1309, %1310 : vector<2x32xf32>
    %1312 = tpu.concatenate %1167, %1311 in 1 : vector<2x32xf32>, vector<2x32xf32> -> vector<2x64xf32>
    %cst_184 = arith.constant dense<0.000000e+00> : vector<2x128xf32>
    %1313 = tpu.matmul %1312, %1288, %cst_184 {dimension_numbers = #tpu.dot_dimension_numbers<[1], [0], [0], [1], [0, 0, 1, 1], [], []>} : vector<2x64xf32>, vector<64x128xf32>, vector<2x128xf32> -> vector<2x128xf32>
    %1314 = vector.broadcast %1289 : vector<1x128xf32> to vector<2x128xf32>
    %1315 = arith.addf %1313, %1314 : vector<2x128xf32>
    %1316 = vector.extract_strided_slice %1315 {offsets = [0, 0], sizes = [2, 96], strides = [1, 1]} : vector<2x128xf32> to vector<2x96xf32>
    %1317 = arith.negf %1316 : vector<2x96xf32>
    %1318 = math.exp %1317 : vector<2x96xf32>
    %cst_185 = arith.constant 1.000000e+00 : f32
    %1319 = vector.broadcast %cst_185 : f32 to vector<2x96xf32>
    %1320 = arith.addf %1319, %1318 : vector<2x96xf32>
    %1321 = arith.divf %1319, %1320 : vector<2x96xf32>
    %1322 = vector.extract_strided_slice %1315 {offsets = [0, 96], sizes = [2, 32], strides = [1, 1]} : vector<2x128xf32> to vector<2x32xf32>
    %1323 = math.tanh %1322 : vector<2x32xf32>
    %1324 = vector.extract_strided_slice %1321 {offsets = [0, 32], sizes = [2, 32], strides = [1, 1]} : vector<2x96xf32> to vector<2x32xf32>
    %1325 = arith.mulf %1324, %1308 : vector<2x32xf32>
    %1326 = vector.extract_strided_slice %1321 {offsets = [0, 0], sizes = [2, 32], strides = [1, 1]} : vector<2x96xf32> to vector<2x32xf32>
    %1327 = arith.mulf %1326, %1323 : vector<2x32xf32>
    %1328 = arith.addf %1325, %1327 : vector<2x32xf32>
    %1329 = vector.extract_strided_slice %1321 {offsets = [0, 64], sizes = [2, 32], strides = [1, 1]} : vector<2x96xf32> to vector<2x32xf32>
    %1330 = math.tanh %1328 : vector<2x32xf32>
    %1331 = arith.mulf %1329, %1330 : vector<2x32xf32>
    %1332 = tpu.concatenate %1187, %1331 in 1 : vector<2x32xf32>, vector<2x32xf32> -> vector<2x64xf32>
    %cst_186 = arith.constant dense<0.000000e+00> : vector<2x128xf32>
    %1333 = tpu.matmul %1332, %1288, %cst_186 {dimension_numbers = #tpu.dot_dimension_numbers<[1], [0], [0], [1], [0, 0, 1, 1], [], []>} : vector<2x64xf32>, vector<64x128xf32>, vector<2x128xf32> -> vector<2x128xf32>
    %1334 = vector.broadcast %1289 : vector<1x128xf32> to vector<2x128xf32>
    %1335 = arith.addf %1333, %1334 : vector<2x128xf32>
    %1336 = vector.extract_strided_slice %1335 {offsets = [0, 0], sizes = [2, 96], strides = [1, 1]} : vector<2x128xf32> to vector<2x96xf32>
    %1337 = arith.negf %1336 : vector<2x96xf32>
    %1338 = math.exp %1337 : vector<2x96xf32>
    %cst_187 = arith.constant 1.000000e+00 : f32
    %1339 = vector.broadcast %cst_187 : f32 to vector<2x96xf32>
    %1340 = arith.addf %1339, %1338 : vector<2x96xf32>
    %1341 = arith.divf %1339, %1340 : vector<2x96xf32>
    %1342 = vector.extract_strided_slice %1335 {offsets = [0, 96], sizes = [2, 32], strides = [1, 1]} : vector<2x128xf32> to vector<2x32xf32>
    %1343 = math.tanh %1342 : vector<2x32xf32>
    %1344 = vector.extract_strided_slice %1341 {offsets = [0, 32], sizes = [2, 32], strides = [1, 1]} : vector<2x96xf32> to vector<2x32xf32>
    %1345 = arith.mulf %1344, %1328 : vector<2x32xf32>
    %1346 = vector.extract_strided_slice %1341 {offsets = [0, 0], sizes = [2, 32], strides = [1, 1]} : vector<2x96xf32> to vector<2x32xf32>
    %1347 = arith.mulf %1346, %1343 : vector<2x32xf32>
    %1348 = arith.addf %1345, %1347 : vector<2x32xf32>
    %1349 = vector.extract_strided_slice %1341 {offsets = [0, 64], sizes = [2, 32], strides = [1, 1]} : vector<2x96xf32> to vector<2x32xf32>
    %1350 = math.tanh %1348 : vector<2x32xf32>
    %1351 = arith.mulf %1349, %1350 : vector<2x32xf32>
    %1352 = tpu.concatenate %1207, %1351 in 1 : vector<2x32xf32>, vector<2x32xf32> -> vector<2x64xf32>
    %cst_188 = arith.constant dense<0.000000e+00> : vector<2x128xf32>
    %1353 = tpu.matmul %1352, %1288, %cst_188 {dimension_numbers = #tpu.dot_dimension_numbers<[1], [0], [0], [1], [0, 0, 1, 1], [], []>} : vector<2x64xf32>, vector<64x128xf32>, vector<2x128xf32> -> vector<2x128xf32>
    %1354 = vector.broadcast %1289 : vector<1x128xf32> to vector<2x128xf32>
    %1355 = arith.addf %1353, %1354 : vector<2x128xf32>
    %1356 = vector.extract_strided_slice %1355 {offsets = [0, 0], sizes = [2, 96], strides = [1, 1]} : vector<2x128xf32> to vector<2x96xf32>
    %1357 = arith.negf %1356 : vector<2x96xf32>
    %1358 = math.exp %1357 : vector<2x96xf32>
    %cst_189 = arith.constant 1.000000e+00 : f32
    %1359 = vector.broadcast %cst_189 : f32 to vector<2x96xf32>
    %1360 = arith.addf %1359, %1358 : vector<2x96xf32>
    %1361 = arith.divf %1359, %1360 : vector<2x96xf32>
    %1362 = vector.extract_strided_slice %1355 {offsets = [0, 96], sizes = [2, 32], strides = [1, 1]} : vector<2x128xf32> to vector<2x32xf32>
    %1363 = math.tanh %1362 : vector<2x32xf32>
    %1364 = vector.extract_strided_slice %1361 {offsets = [0, 32], sizes = [2, 32], strides = [1, 1]} : vector<2x96xf32> to vector<2x32xf32>
    %1365 = arith.mulf %1364, %1348 : vector<2x32xf32>
    %1366 = vector.extract_strided_slice %1361 {offsets = [0, 0], sizes = [2, 32], strides = [1, 1]} : vector<2x96xf32> to vector<2x32xf32>
    %1367 = arith.mulf %1366, %1363 : vector<2x32xf32>
    %1368 = arith.addf %1365, %1367 : vector<2x32xf32>
    %1369 = vector.extract_strided_slice %1361 {offsets = [0, 64], sizes = [2, 32], strides = [1, 1]} : vector<2x96xf32> to vector<2x32xf32>
    %1370 = math.tanh %1368 : vector<2x32xf32>
    %1371 = arith.mulf %1369, %1370 : vector<2x32xf32>
    %1372 = tpu.concatenate %1227, %1371 in 1 : vector<2x32xf32>, vector<2x32xf32> -> vector<2x64xf32>
    %cst_190 = arith.constant dense<0.000000e+00> : vector<2x128xf32>
    %1373 = tpu.matmul %1372, %1288, %cst_190 {dimension_numbers = #tpu.dot_dimension_numbers<[1], [0], [0], [1], [0, 0, 1, 1], [], []>} : vector<2x64xf32>, vector<64x128xf32>, vector<2x128xf32> -> vector<2x128xf32>
    %1374 = vector.broadcast %1289 : vector<1x128xf32> to vector<2x128xf32>
    %1375 = arith.addf %1373, %1374 : vector<2x128xf32>
    %1376 = vector.extract_strided_slice %1375 {offsets = [0, 0], sizes = [2, 96], strides = [1, 1]} : vector<2x128xf32> to vector<2x96xf32>
    %1377 = arith.negf %1376 : vector<2x96xf32>
    %1378 = math.exp %1377 : vector<2x96xf32>
    %cst_191 = arith.constant 1.000000e+00 : f32
    %1379 = vector.broadcast %cst_191 : f32 to vector<2x96xf32>
    %1380 = arith.addf %1379, %1378 : vector<2x96xf32>
    %1381 = arith.divf %1379, %1380 : vector<2x96xf32>
    %1382 = vector.extract_strided_slice %1375 {offsets = [0, 96], sizes = [2, 32], strides = [1, 1]} : vector<2x128xf32> to vector<2x32xf32>
    %1383 = math.tanh %1382 : vector<2x32xf32>
    %1384 = vector.extract_strided_slice %1381 {offsets = [0, 32], sizes = [2, 32], strides = [1, 1]} : vector<2x96xf32> to vector<2x32xf32>
    %1385 = arith.mulf %1384, %1368 : vector<2x32xf32>
    %1386 = vector.extract_strided_slice %1381 {offsets = [0, 0], sizes = [2, 32], strides = [1, 1]} : vector<2x96xf32> to vector<2x32xf32>
    %1387 = arith.mulf %1386, %1383 : vector<2x32xf32>
    %1388 = arith.addf %1385, %1387 : vector<2x32xf32>
    %1389 = vector.extract_strided_slice %1381 {offsets = [0, 64], sizes = [2, 32], strides = [1, 1]} : vector<2x96xf32> to vector<2x32xf32>
    %1390 = math.tanh %1388 : vector<2x32xf32>
    %1391 = arith.mulf %1389, %1390 : vector<2x32xf32>
    %1392 = tpu.concatenate %1247, %1391 in 1 : vector<2x32xf32>, vector<2x32xf32> -> vector<2x64xf32>
    %cst_192 = arith.constant dense<0.000000e+00> : vector<2x128xf32>
    %1393 = tpu.matmul %1392, %1288, %cst_192 {dimension_numbers = #tpu.dot_dimension_numbers<[1], [0], [0], [1], [0, 0, 1, 1], [], []>} : vector<2x64xf32>, vector<64x128xf32>, vector<2x128xf32> -> vector<2x128xf32>
    %1394 = vector.broadcast %1289 : vector<1x128xf32> to vector<2x128xf32>
    %1395 = arith.addf %1393, %1394 : vector<2x128xf32>
    %1396 = vector.extract_strided_slice %1395 {offsets = [0, 0], sizes = [2, 96], strides = [1, 1]} : vector<2x128xf32> to vector<2x96xf32>
    %1397 = arith.negf %1396 : vector<2x96xf32>
    %1398 = math.exp %1397 : vector<2x96xf32>
    %cst_193 = arith.constant 1.000000e+00 : f32
    %1399 = vector.broadcast %cst_193 : f32 to vector<2x96xf32>
    %1400 = arith.addf %1399, %1398 : vector<2x96xf32>
    %1401 = arith.divf %1399, %1400 : vector<2x96xf32>
    %1402 = vector.extract_strided_slice %1395 {offsets = [0, 96], sizes = [2, 32], strides = [1, 1]} : vector<2x128xf32> to vector<2x32xf32>
    %1403 = math.tanh %1402 : vector<2x32xf32>
    %1404 = vector.extract_strided_slice %1401 {offsets = [0, 32], sizes = [2, 32], strides = [1, 1]} : vector<2x96xf32> to vector<2x32xf32>
    %1405 = arith.mulf %1404, %1388 : vector<2x32xf32>
    %1406 = vector.extract_strided_slice %1401 {offsets = [0, 0], sizes = [2, 32], strides = [1, 1]} : vector<2x96xf32> to vector<2x32xf32>
    %1407 = arith.mulf %1406, %1403 : vector<2x32xf32>
    %1408 = arith.addf %1405, %1407 : vector<2x32xf32>
    %1409 = vector.extract_strided_slice %1401 {offsets = [0, 64], sizes = [2, 32], strides = [1, 1]} : vector<2x96xf32> to vector<2x32xf32>
    %1410 = math.tanh %1408 : vector<2x32xf32>
    %1411 = arith.mulf %1409, %1410 : vector<2x32xf32>
    %1412 = tpu.concatenate %1267, %1411 in 1 : vector<2x32xf32>, vector<2x32xf32> -> vector<2x64xf32>
    %cst_194 = arith.constant dense<0.000000e+00> : vector<2x128xf32>
    %1413 = tpu.matmul %1412, %1288, %cst_194 {dimension_numbers = #tpu.dot_dimension_numbers<[1], [0], [0], [1], [0, 0, 1, 1], [], []>} : vector<2x64xf32>, vector<64x128xf32>, vector<2x128xf32> -> vector<2x128xf32>
    %1414 = vector.broadcast %1289 : vector<1x128xf32> to vector<2x128xf32>
    %1415 = arith.addf %1413, %1414 : vector<2x128xf32>
    %1416 = vector.extract_strided_slice %1415 {offsets = [0, 0], sizes = [2, 96], strides = [1, 1]} : vector<2x128xf32> to vector<2x96xf32>
    %1417 = arith.negf %1416 : vector<2x96xf32>
    %1418 = math.exp %1417 : vector<2x96xf32>
    %cst_195 = arith.constant 1.000000e+00 : f32
    %1419 = vector.broadcast %cst_195 : f32 to vector<2x96xf32>
    %1420 = arith.addf %1419, %1418 : vector<2x96xf32>
    %1421 = arith.divf %1419, %1420 : vector<2x96xf32>
    %1422 = vector.extract_strided_slice %1415 {offsets = [0, 96], sizes = [2, 32], strides = [1, 1]} : vector<2x128xf32> to vector<2x32xf32>
    %1423 = math.tanh %1422 : vector<2x32xf32>
    %1424 = vector.extract_strided_slice %1421 {offsets = [0, 32], sizes = [2, 32], strides = [1, 1]} : vector<2x96xf32> to vector<2x32xf32>
    %1425 = arith.mulf %1424, %1408 : vector<2x32xf32>
    %1426 = vector.extract_strided_slice %1421 {offsets = [0, 0], sizes = [2, 32], strides = [1, 1]} : vector<2x96xf32> to vector<2x32xf32>
    %1427 = arith.mulf %1426, %1423 : vector<2x32xf32>
    %1428 = arith.addf %1425, %1427 : vector<2x32xf32>
    %1429 = vector.extract_strided_slice %1421 {offsets = [0, 64], sizes = [2, 32], strides = [1, 1]} : vector<2x96xf32> to vector<2x32xf32>
    %1430 = math.tanh %1428 : vector<2x32xf32>
    %1431 = arith.mulf %1429, %1430 : vector<2x32xf32>
    %1432 = tpu.concatenate %1287, %1431 in 1 : vector<2x32xf32>, vector<2x32xf32> -> vector<2x64xf32>
    %cst_196 = arith.constant dense<0.000000e+00> : vector<2x128xf32>
    %1433 = tpu.matmul %1432, %1288, %cst_196 {dimension_numbers = #tpu.dot_dimension_numbers<[1], [0], [0], [1], [0, 0, 1, 1], [], []>} : vector<2x64xf32>, vector<64x128xf32>, vector<2x128xf32> -> vector<2x128xf32>
    %1434 = vector.broadcast %1289 : vector<1x128xf32> to vector<2x128xf32>
    %1435 = arith.addf %1433, %1434 : vector<2x128xf32>
    %1436 = vector.extract_strided_slice %1435 {offsets = [0, 0], sizes = [2, 96], strides = [1, 1]} : vector<2x128xf32> to vector<2x96xf32>
    %1437 = arith.negf %1436 : vector<2x96xf32>
    %1438 = math.exp %1437 : vector<2x96xf32>
    %cst_197 = arith.constant 1.000000e+00 : f32
    %1439 = vector.broadcast %cst_197 : f32 to vector<2x96xf32>
    %1440 = arith.addf %1439, %1438 : vector<2x96xf32>
    %1441 = arith.divf %1439, %1440 : vector<2x96xf32>
    %1442 = vector.extract_strided_slice %1435 {offsets = [0, 96], sizes = [2, 32], strides = [1, 1]} : vector<2x128xf32> to vector<2x32xf32>
    %1443 = math.tanh %1442 : vector<2x32xf32>
    %1444 = vector.extract_strided_slice %1441 {offsets = [0, 32], sizes = [2, 32], strides = [1, 1]} : vector<2x96xf32> to vector<2x32xf32>
    %1445 = arith.mulf %1444, %1428 : vector<2x32xf32>
    %1446 = vector.extract_strided_slice %1441 {offsets = [0, 0], sizes = [2, 32], strides = [1, 1]} : vector<2x96xf32> to vector<2x32xf32>
    %1447 = arith.mulf %1446, %1443 : vector<2x32xf32>
    %1448 = arith.addf %1445, %1447 : vector<2x32xf32>
    %1449 = vector.extract_strided_slice %1441 {offsets = [0, 64], sizes = [2, 32], strides = [1, 1]} : vector<2x96xf32> to vector<2x32xf32>
    %1450 = math.tanh %1448 : vector<2x32xf32>
    %1451 = arith.mulf %1449, %1450 : vector<2x32xf32>
    %c352 = arith.constant 352 : index
    %c0_198 = arith.constant 0 : index
    %1452 = vector.load %arg2[%c352, %c0_198] : memref<384x128xf32, #tpu.memory_space<vmem>>, vector<32x128xf32>
    %c9 = arith.constant 9 : index
    %c0_199 = arith.constant 0 : index
    %1453 = vector.load %arg3[%c9, %c0_199] : memref<10x128xf32, #tpu.memory_space<vmem>>, vector<1x128xf32>
    %cst_200 = arith.constant 0.000000e+00 : f32
    %1454 = vector.broadcast %cst_200 : f32 to vector<2x32xf32>
    %cst_201 = arith.constant dense<0.000000e+00> : vector<2x128xf32>
    %1455 = tpu.matmul %1311, %1452, %cst_201 {dimension_numbers = #tpu.dot_dimension_numbers<[1], [0], [0], [1], [0, 0, 1, 1], [], []>} : vector<2x32xf32>, vector<32x128xf32>, vector<2x128xf32> -> vector<2x128xf32>
    %1456 = vector.broadcast %1453 : vector<1x128xf32> to vector<2x128xf32>
    %1457 = arith.addf %1455, %1456 : vector<2x128xf32>
    %1458 = vector.extract_strided_slice %1457 {offsets = [0, 0], sizes = [2, 32], strides = [1, 1]} : vector<2x128xf32> to vector<2x32xf32>
    %1459 = tpu.concatenate %1458, %673, %676, %525, %682, %1454 in 1 : vector<2x32xf32>, vector<2x16xf32>, vector<2x16xf32>, vector<2x16xf32>, vector<2x16xf32>, vector<2x32xf32> -> vector<2x128xf32>
    %c0_202 = arith.constant 0 : index
    %c0_203 = arith.constant 0 : index
    %1460 = vector.load %arg4[%c0_202, %c0_203] : memref<16x128xf32, #tpu.memory_space<vmem>>, vector<2x128xf32>
    tpu.vector_store %arg4[%c0_202, %c0_203], %1459 {strides = array<i32>} : memref<16x128xf32, #tpu.memory_space<vmem>>, vector<2x128xf32>,
    %cst_204 = arith.constant dense<0.000000e+00> : vector<2x128xf32>
    %1461 = tpu.matmul %1331, %1452, %cst_204 {dimension_numbers = #tpu.dot_dimension_numbers<[1], [0], [0], [1], [0, 0, 1, 1], [], []>} : vector<2x32xf32>, vector<32x128xf32>, vector<2x128xf32> -> vector<2x128xf32>
    %1462 = vector.broadcast %1453 : vector<1x128xf32> to vector<2x128xf32>
    %1463 = arith.addf %1461, %1462 : vector<2x128xf32>
    %1464 = vector.extract_strided_slice %1463 {offsets = [0, 0], sizes = [2, 32], strides = [1, 1]} : vector<2x128xf32> to vector<2x32xf32>
    %1465 = tpu.concatenate %1464, %689, %692, %545, %698, %1454 in 1 : vector<2x32xf32>, vector<2x16xf32>, vector<2x16xf32>, vector<2x16xf32>, vector<2x16xf32>, vector<2x32xf32> -> vector<2x128xf32>
    %c2_205 = arith.constant 2 : index
    %c0_206 = arith.constant 0 : index
    %1466 = vector.load %arg4[%c2_205, %c0_206] : memref<16x128xf32, #tpu.memory_space<vmem>>, vector<2x128xf32>
    tpu.vector_store %arg4[%c2_205, %c0_206], %1465 {strides = array<i32>} : memref<16x128xf32, #tpu.memory_space<vmem>>, vector<2x128xf32>,
    %cst_207 = arith.constant dense<0.000000e+00> : vector<2x128xf32>
    %1467 = tpu.matmul %1351, %1452, %cst_207 {dimension_numbers = #tpu.dot_dimension_numbers<[1], [0], [0], [1], [0, 0, 1, 1], [], []>} : vector<2x32xf32>, vector<32x128xf32>, vector<2x128xf32> -> vector<2x128xf32>
    %1468 = vector.broadcast %1453 : vector<1x128xf32> to vector<2x128xf32>
    %1469 = arith.addf %1467, %1468 : vector<2x128xf32>
    %1470 = vector.extract_strided_slice %1469 {offsets = [0, 0], sizes = [2, 32], strides = [1, 1]} : vector<2x128xf32> to vector<2x32xf32>
    %1471 = tpu.concatenate %1470, %705, %708, %565, %714, %1454 in 1 : vector<2x32xf32>, vector<2x16xf32>, vector<2x16xf32>, vector<2x16xf32>, vector<2x16xf32>, vector<2x32xf32> -> vector<2x128xf32>
    %c4_208 = arith.constant 4 : index
    %c0_209 = arith.constant 0 : index
    %1472 = vector.load %arg4[%c4_208, %c0_209] : memref<16x128xf32, #tpu.memory_space<vmem>>, vector<2x128xf32>
    tpu.vector_store %arg4[%c4_208, %c0_209], %1471 {strides = array<i32>} : memref<16x128xf32, #tpu.memory_space<vmem>>, vector<2x128xf32>,
    %cst_210 = arith.constant dense<0.000000e+00> : vector<2x128xf32>
    %1473 = tpu.matmul %1371, %1452, %cst_210 {dimension_numbers = #tpu.dot_dimension_numbers<[1], [0], [0], [1], [0, 0, 1, 1], [], []>} : vector<2x32xf32>, vector<32x128xf32>, vector<2x128xf32> -> vector<2x128xf32>
    %1474 = vector.broadcast %1453 : vector<1x128xf32> to vector<2x128xf32>
    %1475 = arith.addf %1473, %1474 : vector<2x128xf32>
    %1476 = vector.extract_strided_slice %1475 {offsets = [0, 0], sizes = [2, 32], strides = [1, 1]} : vector<2x128xf32> to vector<2x32xf32>
    %1477 = tpu.concatenate %1476, %721, %724, %585, %730, %1454 in 1 : vector<2x32xf32>, vector<2x16xf32>, vector<2x16xf32>, vector<2x16xf32>, vector<2x16xf32>, vector<2x32xf32> -> vector<2x128xf32>
    %c6_211 = arith.constant 6 : index
    %c0_212 = arith.constant 0 : index
    %1478 = vector.load %arg4[%c6_211, %c0_212] : memref<16x128xf32, #tpu.memory_space<vmem>>, vector<2x128xf32>
    tpu.vector_store %arg4[%c6_211, %c0_212], %1477 {strides = array<i32>} : memref<16x128xf32, #tpu.memory_space<vmem>>, vector<2x128xf32>,
    %cst_213 = arith.constant dense<0.000000e+00> : vector<2x128xf32>
    %1479 = tpu.matmul %1391, %1452, %cst_213 {dimension_numbers = #tpu.dot_dimension_numbers<[1], [0], [0], [1], [0, 0, 1, 1], [], []>} : vector<2x32xf32>, vector<32x128xf32>, vector<2x128xf32> -> vector<2x128xf32>
    %1480 = vector.broadcast %1453 : vector<1x128xf32> to vector<2x128xf32>
    %1481 = arith.addf %1479, %1480 : vector<2x128xf32>
    %1482 = vector.extract_strided_slice %1481 {offsets = [0, 0], sizes = [2, 32], strides = [1, 1]} : vector<2x128xf32> to vector<2x32xf32>
    %1483 = tpu.concatenate %1482, %737, %740, %605, %746, %1454 in 1 : vector<2x32xf32>, vector<2x16xf32>, vector<2x16xf32>, vector<2x16xf32>, vector<2x16xf32>, vector<2x32xf32> -> vector<2x128xf32>
    %c8_214 = arith.constant 8 : index
    %c0_215 = arith.constant 0 : index
    %1484 = vector.load %arg4[%c8_214, %c0_215] : memref<16x128xf32, #tpu.memory_space<vmem>>, vector<2x128xf32>
    tpu.vector_store %arg4[%c8_214, %c0_215], %1483 {strides = array<i32>} : memref<16x128xf32, #tpu.memory_space<vmem>>, vector<2x128xf32>,
    %cst_216 = arith.constant dense<0.000000e+00> : vector<2x128xf32>
    %1485 = tpu.matmul %1411, %1452, %cst_216 {dimension_numbers = #tpu.dot_dimension_numbers<[1], [0], [0], [1], [0, 0, 1, 1], [], []>} : vector<2x32xf32>, vector<32x128xf32>, vector<2x128xf32> -> vector<2x128xf32>
    %1486 = vector.broadcast %1453 : vector<1x128xf32> to vector<2x128xf32>
    %1487 = arith.addf %1485, %1486 : vector<2x128xf32>
    %1488 = vector.extract_strided_slice %1487 {offsets = [0, 0], sizes = [2, 32], strides = [1, 1]} : vector<2x128xf32> to vector<2x32xf32>
    %1489 = tpu.concatenate %1488, %753, %756, %625, %762, %1454 in 1 : vector<2x32xf32>, vector<2x16xf32>, vector<2x16xf32>, vector<2x16xf32>, vector<2x16xf32>, vector<2x32xf32> -> vector<2x128xf32>
    %c10 = arith.constant 10 : index
    %c0_217 = arith.constant 0 : index
    %1490 = vector.load %arg4[%c10, %c0_217] : memref<16x128xf32, #tpu.memory_space<vmem>>, vector<2x128xf32>
    tpu.vector_store %arg4[%c10, %c0_217], %1489 {strides = array<i32>} : memref<16x128xf32, #tpu.memory_space<vmem>>, vector<2x128xf32>,
    %cst_218 = arith.constant dense<0.000000e+00> : vector<2x128xf32>
    %1491 = tpu.matmul %1431, %1452, %cst_218 {dimension_numbers = #tpu.dot_dimension_numbers<[1], [0], [0], [1], [0, 0, 1, 1], [], []>} : vector<2x32xf32>, vector<32x128xf32>, vector<2x128xf32> -> vector<2x128xf32>
    %1492 = vector.broadcast %1453 : vector<1x128xf32> to vector<2x128xf32>
    %1493 = arith.addf %1491, %1492 : vector<2x128xf32>
    %1494 = vector.extract_strided_slice %1493 {offsets = [0, 0], sizes = [2, 32], strides = [1, 1]} : vector<2x128xf32> to vector<2x32xf32>
    %1495 = tpu.concatenate %1494, %769, %772, %645, %778, %1454 in 1 : vector<2x32xf32>, vector<2x16xf32>, vector<2x16xf32>, vector<2x16xf32>, vector<2x16xf32>, vector<2x32xf32> -> vector<2x128xf32>
    %c12 = arith.constant 12 : index
    %c0_219 = arith.constant 0 : index
    %1496 = vector.load %arg4[%c12, %c0_219] : memref<16x128xf32, #tpu.memory_space<vmem>>, vector<2x128xf32>
    tpu.vector_store %arg4[%c12, %c0_219], %1495 {strides = array<i32>} : memref<16x128xf32, #tpu.memory_space<vmem>>, vector<2x128xf32>,
    %cst_220 = arith.constant dense<0.000000e+00> : vector<2x128xf32>
    %1497 = tpu.matmul %1451, %1452, %cst_220 {dimension_numbers = #tpu.dot_dimension_numbers<[1], [0], [0], [1], [0, 0, 1, 1], [], []>} : vector<2x32xf32>, vector<32x128xf32>, vector<2x128xf32> -> vector<2x128xf32>
    %1498 = vector.broadcast %1453 : vector<1x128xf32> to vector<2x128xf32>
    %1499 = arith.addf %1497, %1498 : vector<2x128xf32>
    %1500 = vector.extract_strided_slice %1499 {offsets = [0, 0], sizes = [2, 32], strides = [1, 1]} : vector<2x128xf32> to vector<2x32xf32>
    %1501 = tpu.concatenate %1500, %785, %788, %665, %794, %1454 in 1 : vector<2x32xf32>, vector<2x16xf32>, vector<2x16xf32>, vector<2x16xf32>, vector<2x16xf32>, vector<2x32xf32> -> vector<2x128xf32>
    %c14 = arith.constant 14 : index
    %c0_221 = arith.constant 0 : index
    %1502 = vector.load %arg4[%c14, %c0_221] : memref<16x128xf32, #tpu.memory_space<vmem>>, vector<2x128xf32>
    tpu.vector_store %arg4[%c14, %c0_221], %1501 {strides = array<i32>} : memref<16x128xf32, #tpu.memory_space<vmem>>, vector<2x128xf32>,
    return
  }
}

</mosaic_0001>

<llo_original>
// kernel: model_forward.1
$region0: #{model_forward.1}
  #allocation0 [shape = 'u32[]', space=smem, size = 0x4, offset = 0x4, fixed_abs, tag = 'smem constant byte address 0x4 - core index']
  #allocation1 [shape = 'u32[144,128]{1,0:T(1,128)}', space=vmem, size = 0x12000, scoped, tag = 'internal scratch']
  %s0 = inlined_call_operand.vmem [shape: f32[16,32], index: 0, kind: input, shape index: {}]
  %s1 = inlined_call_operand.vmem [shape: f32[16,16], index: 1, kind: input, shape index: {}]
  %s2 = inlined_call_operand.hbm [shape: f32[384,128], index: 2, kind: input, shape index: {}]
  %s3 = inlined_call_operand.vmem [shape: f32[10,128], index: 3, kind: input, shape index: {}]
  %s4 = inlined_call_operand.vmem [shape: f32[16,128], index: 4, kind: output, shape index: {}]
  %s5 = sld [smem:[#allocation0]]
  $region30: #{model_forward.1} parent=0
    _
  %s7 = ssub.s32 1, %s5
  %s8 = scalar_select 0, %s7, %s5
  $region1: #{model_forward.1} parent=0
    #allocation2 [shape = 'u8[196608]{0}', space=vmem, size = 0x30000, scoped, tag = 'input window, operand 2, single buffered']
    #allocation3 [shape = 's32[1]{0}', space=sflag, size = 0x4, scoped, tag = 'scoped memory for model_forward.1']
    %9 = vsyncpa [#allocation3], 0
    // Predicated region
    $region2: #{model_forward.1} parent=1 // pred_check
      _
    $region3: #{model_forward.1} parent=1 // pred_check_branch
      %11 = sbr.rel (0) target = $region5
    $region4: #{model_forward.1} parent=1 // pred_region
      _
    $region5: #{model_forward.1} parent=1 // pred_fallthru
      _
    // Predicated region
    $region6: #{model_forward.1} parent=1 // pred_check
      _
    $region7: #{model_forward.1} parent=1 // pred_check_branch
      %13 = sbr.rel (0) target = $region9
    $region8: #{model_forward.1} parent=1 // pred_region
      _
    $region9: #{model_forward.1} parent=1 // pred_fallthru
      _
    // Predicated region
    $region10: #{model_forward.1} parent=1 // pred_check
      _
    $region11: #{model_forward.1} parent=1 // pred_check_branch
      %15 = sbr.rel (0) target = $region13
    $region12: #{model_forward.1} parent=1 // pred_region
      %s17 = ssub.s32 6144, 6144
      %18 = vsyncadd [#allocation3], %s17
      %s19 = sshll.u32 [#allocation2], 4
      %s20 = int_to_ptr.vmem [resolvable:$true] %s19
      %25 = dma.hbm_to_vmem [thread:$0]  %s2, 6144, %s20, [#allocation3], 128, 128, 8
    $region13: #{model_forward.1} parent=1 // pred_fallthru
      _
    // Predicated region
    $region14: #{model_forward.1} parent=1 // pred_check
      _
    $region15: #{model_forward.1} parent=1 // pred_check_branch
      %27 = sbr.rel (0) target = $region17
    $region16: #{model_forward.1} parent=1 // pred_region
      _
    $region17: #{model_forward.1} parent=1 // pred_fallthru
      _
    // Predicated region
    $region18: #{model_forward.1} parent=1 // pred_check
      _
    $region19: #{model_forward.1} parent=1 // pred_check_branch
      %29 = sbr.rel (0) target = $region21
    $region20: #{model_forward.1} parent=1 // pred_region
      %30 = dma.done [#allocation3], 6144
    $region21: #{model_forward.1} parent=1 // pred_fallthru
      _
    %v31 = vld [vmem:[%s0] sm:$0xff]
    %v32 = vld [vmem:[%s0 + $0x8] sm:$0xff]
    %v33 = vld [vmem:[%s1] sm:$0xff]
    %v34 = vld [vmem:[%s1 + $0x8] sm:$0xff]
    %v35 = vld [vmem:[#allocation2] sm:$0xff]
    %v36 = vld [vmem:[#allocation2 + $0x8] sm:$0xff]
    %v37 = vld [vmem:[#allocation2 + $0x10] sm:$0xff]
    %v38 = vld [vmem:[#allocation2 + $0x18] sm:$0xff]
    %v39 = vld [vmem:[#allocation2 + $0x20] sm:$0xff]
    %v40 = vld [vmem:[#allocation2 + $0x28] sm:$0xff]
    %v41 = vld [vmem:[#allocation2 + $0x30] sm:$0xff]
    %v42 = vld [vmem:[#allocation2 + $0x38] sm:$0xff]
    %v43 = vld [vmem:[%s3] sm:$0x1]
    %vm44 = vcmask 261120
    %v45 = vsel %vm44, %v31, 0.0
    %v46 = vlaneseq
    %v47 = vshrl.u32 %v46, 7
    %v48 = vsub.s32 0, %v47
    %v49 = vrot.slane %v43, %v48
    %vm50 = vcmask 523264
    %v52 = vsel %vm50, %v45, 0
    %54 = vmatprep.subr.mxu0 0.0
    %55 = vmatpush1.msra.mxu0 %v35
    %56 = vmatprep.subr.mxu0 0.0
    %57 = vmatpush1.msra.mxu0 %v36
    %58 = vmatprep.subr.mxu0 0.0
    %59 = vmatpush1.msra.mxu0 %v37
    %60 = vmatprep.subr.mxu0 0.0
    %61 = vmatpush1.msra.mxu0 %v38
    %62 = vmatprep.subr.mxu0 0.0
    %63 = vmatpush1.msra.mxu0 %v39
    %64 = vmatprep.subr.mxu0 0.0
    %65 = vmatpush1.msra.mxu0 %v40
    %66 = vmatprep.subr.mxu0 0.0
    %67 = vmatpush1.msra.mxu0 %v41
    %68 = vmatprep.subr.mxu0 0.0
    %69 = vmatpush1.msra.mxu0 %v42
    %70 = vmatprep.subr.mxu0 0.0
    %71 = vmatpush1.msra.mxu0 0.0
    %72 = vmatprep.subr.mxu0 0.0
    %73 = vmatpush1.msra.mxu0 0.0
    %74 = vmatprep.subr.mxu0 0.0
    %75 = vmatpush1.msra.mxu0 0.0
    %76 = vmatprep.subr.mxu0 0.0
    %77 = vmatpush1.msra.mxu0 0.0
    %78 = vmatprep.subr.mxu0 0.0
    %79 = vmatpush1.msra.mxu0 0.0
    %80 = vmatprep.subr.mxu0 0.0
    %81 = vmatpush1.msra.mxu0 0.0
    %82 = vmatprep.subr.mxu0 0.0
    %83 = vmatpush1.msra.mxu0 0.0
    %84 = vmatprep.subr.mxu0 0.0
    %85 = vmatpush1.msra.mxu0 0.0
    %86 = vmatprep.subr.mxu0 0.0
    %87 = vmatpush1.msra.mxu0 0.0
    %88 = vmatprep.subr.mxu0 0.0
    %89 = vmatpush1.msra.mxu0 0.0
    %90 = vmatprep.subr.mxu0 0.0
    %91 = vmatpush1.msra.mxu0 0.0
    %92 = vmatprep.subr.mxu0 0.0
    %93 = vmatpush1.msra.mxu0 0.0
    %94 = vmatprep.subr.mxu0 0.0
    %95 = vmatpush1.msra.mxu0 0.0
    %96 = vmatprep.subr.mxu0 0.0
    %97 = vmatpush1.msra.mxu0 0.0
    %98 = vmatprep.subr.mxu0 0.0
    %99 = vmatpush1.msra.mxu0 0.0
    %100 = vmatprep.subr.mxu0 0.0
    %101 = vmatpush1.msra.mxu0 0.0
    %102 = vmatprep.subr.mxu0 0.0
    %103 = vmatpush1.msra.mxu0 0.0
    %104 = vmatprep.subr.mxu0 0.0
    %105 = vmatpush1.msra.mxu0 0.0
    %106 = vmatprep.subr.mxu0 0.0
    %107 = vmatpush1.msra.mxu0 0.0
    %108 = vmatprep.subr.mxu0 0.0
    %109 = vmatpush1.msra.mxu0 0.0
    %110 = vmatprep.subr.mxu0 0.0
    %111 = vmatpush1.msra.mxu0 0.0
    %112 = vmatprep.subr.mxu0 0.0
    %113 = vmatpush1.msra.mxu0 0.0
    %114 = vmatprep.subr.mxu0 0.0
    %115 = vmatpush1.msra.mxu0 0.0
    %116 = vmatprep.subr.mxu0 0.0
    %117 = vmatpush1.msra.mxu0 0.0
    %118 = vmatprep.mubr.f32.mxu0 0.0
    %119 = vmatmul.mubr.f32.gmra.mrb[0].mxu0 %v52
    %v120 = vpop.f32.mrb[0].mxu0
    %v121 = vadd.f32 %v49, %v120
    %v122 = vpop.f32.mrb[0].mxu0
    %123 = vdwg.mxu0
    %v124 = vxor.u32 %v121, 2147483648
    %v125 = vmul.f32 %v124, 1.442695
    %v126 = vpow.pop %v125
    %v127 = vadd.f32 %v126, 1.0
    %v128 = vrcp.pop %v127
    %v129 = vmul.f32 1.0, %v128
    %v130 = vtanh.pop %v121
    %v131 = vmul.f32 %v129, 0.0
    %133 = vrot.lane.b32.xlu0 %v130, 32
    %v134 = vpop.permute.xlu0 %133
    %v136 = vmul.f32 %v129, %v134
    %138 = vrot.lane.b32.xlu0 %v136, 32
    %v139 = vpop.permute.xlu0 %138
    %v141 = vadd.f32 %v131, %v139
    %v142 = vtanh.pop %v141
    %144 = vrot.lane.b32.xlu0 %v142, 32
    %v145 = vpop.permute.xlu0 %144
    %v147 = vmul.f32 %v129, %v145
    %v149 = vrot.slane %v147, 6
    %150 = vrot.lane.b32.xlu0 %v149, 96
    %v151 = vpop.permute.xlu0 %150
    %v153 = vsel %vm44, %v31, %v151
    %v155 = vrot.slane %v153, 2
    %v156 = vsel %vm50, %v155, 0
    %158 = vmatprep.subr.mxu0 0.0
    %159 = vmatpush1.msra.mxu0 %v35
    %160 = vmatprep.subr.mxu0 0.0
    %161 = vmatpush1.msra.mxu0 %v36
    %162 = vmatprep.subr.mxu0 0.0
    %163 = vmatpush1.msra.mxu0 %v37
    %164 = vmatprep.subr.mxu0 0.0
    %165 = vmatpush1.msra.mxu0 %v38
    %166 = vmatprep.subr.mxu0 0.0
    %167 = vmatpush1.msra.mxu0 %v39
    %168 = vmatprep.subr.mxu0 0.0
    %169 = vmatpush1.msra.mxu0 %v40
    %170 = vmatprep.subr.mxu0 0.0
    %171 = vmatpush1.msra.mxu0 %v41
    %172 = vmatprep.subr.mxu0 0.0
    %173 = vmatpush1.msra.mxu0 %v42
    %174 = vmatprep.subr.mxu0 0.0
    %175 = vmatpush1.msra.mxu0 0.0
    %176 = vmatprep.subr.mxu0 0.0
    %177 = vmatpush1.msra.mxu0 0.0
    %178 = vmatprep.subr.mxu0 0.0
    %179 = vmatpush1.msra.mxu0 0.0
    %180 = vmatprep.subr.mxu0 0.0
    %181 = vmatpush1.msra.mxu0 0.0
    %182 = vmatprep.subr.mxu0 0.0
    %183 = vmatpush1.msra.mxu0 0.0
    %184 = vmatprep.subr.mxu0 0.0
    %185 = vmatpush1.msra.mxu0 0.0
    %186 = vmatprep.subr.mxu0 0.0
    %187 = vmatpush1.msra.mxu0 0.0
    %188 = vmatprep.subr.mxu0 0.0
    %189 = vmatpush1.msra.mxu0 0.0
    %190 = vmatprep.subr.mxu0 0.0
    %191 = vmatpush1.msra.mxu0 0.0
    %192 = vmatprep.subr.mxu0 0.0
    %193 = vmatpush1.msra.mxu0 0.0
    %194 = vmatprep.subr.mxu0 0.0
    %195 = vmatpush1.msra.mxu0 0.0
    %196 = vmatprep.subr.mxu0 0.0
    %197 = vmatpush1.msra.mxu0 0.0
    %198 = vmatprep.subr.mxu0 0.0
    %199 = vmatpush1.msra.mxu0 0.0
    %200 = vmatprep.subr.mxu0 0.0
    %201 = vmatpush1.msra.mxu0 0.0
    %202 = vmatprep.subr.mxu0 0.0
    %203 = vmatpush1.msra.mxu0 0.0
    %204 = vmatprep.subr.mxu0 0.0
    %205 = vmatpush1.msra.mxu0 0.0
    %206 = vmatprep.subr.mxu0 0.0
    %207 = vmatpush1.msra.mxu0 0.0
    %208 = vmatprep.subr.mxu0 0.0
    %209 = vmatpush1.msra.mxu0 0.0
    %210 = vmatprep.subr.mxu0 0.0
    %211 = vmatpush1.msra.mxu0 0.0
    %212 = vmatprep.subr.mxu0 0.0
    %213 = vmatpush1.msra.mxu0 0.0
    %214 = vmatprep.subr.mxu0 0.0
    %215 = vmatpush1.msra.mxu0 0.0
    %216 = vmatprep.subr.mxu0 0.0
    %217 = vmatpush1.msra.mxu0 0.0
    %218 = vmatprep.subr.mxu0 0.0
    %219 = vmatpush1.msra.mxu0 0.0
    %220 = vmatprep.subr.mxu0 0.0
    %221 = vmatpush1.msra.mxu0 0.0
    %222 = vmatprep.mubr.f32.mxu0 0.0
    %223 = vmatmul.mubr.f32.gmra.mrb[0].mxu0 %v156
    %v224 = vpop.f32.mrb[0].mxu0
    %v225 = vadd.f32 %v49, %v224
    %v226 = vpop.f32.mrb[0].mxu0
    %227 = vdwg.mxu0
    %v228 = vxor.u32 %v225, 2147483648
    %v229 = vmul.f32 %v228, 1.442695
    %v230 = vpow.pop %v229
    %v231 = vadd.f32 %v230, 1.0
    %v232 = vrcp.pop %v231
    %v233 = vmul.f32 1.0, %v232
    %v234 = vtanh.pop %v225
    %v235 = vmul.f32 %v233, %v141
    %237 = vrot.lane.b32.xlu0 %v234, 32
    %v238 = vpop.permute.xlu0 %237
    %v240 = vmul.f32 %v233, %v238
    %242 = vrot.lane.b32.xlu0 %v240, 32
    %v243 = vpop.permute.xlu0 %242
    %v245 = vadd.f32 %v235, %v243
    %v246 = vtanh.pop %v245
    %248 = vrot.lane.b32.xlu0 %v246, 32
    %v249 = vpop.permute.xlu0 %248
    %v251 = vmul.f32 %v233, %v249
    %v253 = vrot.slane %v251, 4
    %254 = vrot.lane.b32.xlu0 %v253, 96
    %v255 = vpop.permute.xlu0 %254
    %v257 = vsel %vm44, %v31, %v255
    %v259 = vrot.slane %v257, 4
    %v260 = vsel %vm50, %v259, 0
    %262 = vmatprep.subr.mxu0 0.0
    %263 = vmatpush1.msra.mxu0 %v35
    %264 = vmatprep.subr.mxu0 0.0
    %265 = vmatpush1.msra.mxu0 %v36
    %266 = vmatprep.subr.mxu0 0.0
    %267 = vmatpush1.msra.mxu0 %v37
    %268 = vmatprep.subr.mxu0 0.0
    %269 = vmatpush1.msra.mxu0 %v38
    %270 = vmatprep.subr.mxu0 0.0
    %271 = vmatpush1.msra.mxu0 %v39
    %272 = vmatprep.subr.mxu0 0.0
    %273 = vmatpush1.msra.mxu0 %v40
    %274 = vmatprep.subr.mxu0 0.0
    %275 = vmatpush1.msra.mxu0 %v41
    %276 = vmatprep.subr.mxu0 0.0
    %277 = vmatpush1.msra.mxu0 %v42
    %278 = vmatprep.subr.mxu0 0.0
    %279 = vmatpush1.msra.mxu0 0.0
    %280 = vmatprep.subr.mxu0 0.0
    %281 = vmatpush1.msra.mxu0 0.0
    %282 = vmatprep.subr.mxu0 0.0
    %283 = vmatpush1.msra.mxu0 0.0
    %284 = vmatprep.subr.mxu0 0.0
    %285 = vmatpush1.msra.mxu0 0.0
    %286 = vmatprep.subr.mxu0 0.0
    %287 = vmatpush1.msra.mxu0 0.0
    %288 = vmatprep.subr.mxu0 0.0
    %289 = vmatpush1.msra.mxu0 0.0
    %290 = vmatprep.subr.mxu0 0.0
    %291 = vmatpush1.msra.mxu0 0.0
    %292 = vmatprep.subr.mxu0 0.0
    %293 = vmatpush1.msra.mxu0 0.0
    %294 = vmatprep.subr.mxu0 0.0
    %295 = vmatpush1.msra.mxu0 0.0
    %296 = vmatprep.subr.mxu0 0.0
    %297 = vmatpush1.msra.mxu0 0.0
    %298 = vmatprep.subr.mxu0 0.0
    %299 = vmatpush1.msra.mxu0 0.0
    %300 = vmatprep.subr.mxu0 0.0
    %301 = vmatpush1.msra.mxu0 0.0
    %302 = vmatprep.subr.mxu0 0.0
    %303 = vmatpush1.msra.mxu0 0.0
    %304 = vmatprep.subr.mxu0 0.0
    %305 = vmatpush1.msra.mxu0 0.0
    %306 = vmatprep.subr.mxu0 0.0
    %307 = vmatpush1.msra.mxu0 0.0
    %308 = vmatprep.subr.mxu0 0.0
    %309 = vmatpush1.msra.mxu0 0.0
    %310 = vmatprep.subr.mxu0 0.0
    %311 = vmatpush1.msra.mxu0 0.0
    %312 = vmatprep.subr.mxu0 0.0
    %313 = vmatpush1.msra.mxu0 0.0
    %314 = vmatprep.subr.mxu0 0.0
    %315 = vmatpush1.msra.mxu0 0.0
    %316 = vmatprep.subr.mxu0 0.0
    %317 = vmatpush1.msra.mxu0 0.0
    %318 = vmatprep.subr.mxu0 0.0
    %319 = vmatpush1.msra.mxu0 0.0
    %320 = vmatprep.subr.mxu0 0.0
    %321 = vmatpush1.msra.mxu0 0.0
    %322 = vmatprep.subr.mxu0 0.0
    %323 = vmatpush1.msra.mxu0 0.0
    %324 = vmatprep.subr.mxu0 0.0
    %325 = vmatpush1.msra.mxu0 0.0
    %326 = vmatprep.mubr.f32.mxu0 0.0
    %327 = vmatmul.mubr.f32.gmra.mrb[0].mxu0 %v260
    %v328 = vpop.f32.mrb[0].mxu0
    %v329 = vadd.f32 %v49, %v328
    %v330 = vpop.f32.mrb[0].mxu0
    %331 = vdwg.mxu0
    %v332 = vxor.u32 %v329, 2147483648
    %v333 = vmul.f32 %v332, 1.442695
    %v334 = vpow.pop %v333
    %v335 = vadd.f32 %v334, 1.0
    %v336 = vrcp.pop %v335
    %v337 = vmul.f32 1.0, %v336
    %v338 = vtanh.pop %v329
    %v339 = vmul.f32 %v337, %v245
    %341 = vrot.lane.b32.xlu0 %v338, 32
    %v342 = vpop.permute.xlu0 %341
    %v344 = vmul.f32 %v337, %v342
    %346 = vrot.lane.b32.xlu0 %v344, 32
    %v347 = vpop.permute.xlu0 %346
    %v349 = vadd.f32 %v339, %v347
    %v350 = vtanh.pop %v349
    %352 = vrot.lane.b32.xlu0 %v350, 32
    %v353 = vpop.permute.xlu0 %352
    %v355 = vmul.f32 %v337, %v353
    %v357 = vrot.slane %v355, 2
    %358 = vrot.lane.b32.xlu0 %v357, 96
    %v359 = vpop.permute.xlu0 %358
    %v361 = vsel %vm44, %v31, %v359
    %v363 = vrot.slane %v361, 6
    %v364 = vsel %vm50, %v363, 0
    %366 = vmatprep.subr.mxu0 0.0
    %367 = vmatpush1.msra.mxu0 %v35
    %368 = vmatprep.subr.mxu0 0.0
    %369 = vmatpush1.msra.mxu0 %v36
    %370 = vmatprep.subr.mxu0 0.0
    %371 = vmatpush1.msra.mxu0 %v37
    %372 = vmatprep.subr.mxu0 0.0
    %373 = vmatpush1.msra.mxu0 %v38
    %374 = vmatprep.subr.mxu0 0.0
    %375 = vmatpush1.msra.mxu0 %v39
    %376 = vmatprep.subr.mxu0 0.0
    %377 = vmatpush1.msra.mxu0 %v40
    %378 = vmatprep.subr.mxu0 0.0
    %379 = vmatpush1.msra.mxu0 %v41
    %380 = vmatprep.subr.mxu0 0.0
    %381 = vmatpush1.msra.mxu0 %v42
    %382 = vmatprep.subr.mxu0 0.0
    %383 = vmatpush1.msra.mxu0 0.0
    %384 = vmatprep.subr.mxu0 0.0
    %385 = vmatpush1.msra.mxu0 0.0
    %386 = vmatprep.subr.mxu0 0.0
    %387 = vmatpush1.msra.mxu0 0.0
    %388 = vmatprep.subr.mxu0 0.0
    %389 = vmatpush1.msra.mxu0 0.0
    %390 = vmatprep.subr.mxu0 0.0
    %391 = vmatpush1.msra.mxu0 0.0
    %392 = vmatprep.subr.mxu0 0.0
    %393 = vmatpush1.msra.mxu0 0.0
    %394 = vmatprep.subr.mxu0 0.0
    %395 = vmatpush1.msra.mxu0 0.0
    %396 = vmatprep.subr.mxu0 0.0
    %397 = vmatpush1.msra.mxu0 0.0
    %398 = vmatprep.subr.mxu0 0.0
    %399 = vmatpush1.msra.mxu0 0.0
    %400 = vmatprep.subr.mxu0 0.0
    %401 = vmatpush1.msra.mxu0 0.0
    %402 = vmatprep.subr.mxu0 0.0
    %403 = vmatpush1.msra.mxu0 0.0
    %404 = vmatprep.subr.mxu0 0.0
    %405 = vmatpush1.msra.mxu0 0.0
    %406 = vmatprep.subr.mxu0 0.0
    %407 = vmatpush1.msra.mxu0 0.0
    %408 = vmatprep.subr.mxu0 0.0
    %409 = vmatpush1.msra.mxu0 0.0
    %410 = vmatprep.subr.mxu0 0.0
    %411 = vmatpush1.msra.mxu0 0.0
    %412 = vmatprep.subr.mxu0 0.0
    %413 = vmatpush1.msra.mxu0 0.0
    %414 = vmatprep.subr.mxu0 0.0
    %415 = vmatpush1.msra.mxu0 0.0
    %416 = vmatprep.subr.mxu0 0.0
    %417 = vmatpush1.msra.mxu0 0.0
    %418 = vmatprep.subr.mxu0 0.0
    %419 = vmatpush1.msra.mxu0 0.0
    %420 = vmatprep.subr.mxu0 0.0
    %421 = vmatpush1.msra.mxu0 0.0
    %422 = vmatprep.subr.mxu0 0.0
    %423 = vmatpush1.msra.mxu0 0.0
    %424 = vmatprep.subr.mxu0 0.0
    %425 = vmatpush1.msra.mxu0 0.0
    %426 = vmatprep.subr.mxu0 0.0
    %427 = vmatpush1.msra.mxu0 0.0
    %428 = vmatprep.subr.mxu0 0.0
    %429 = vmatpush1.msra.mxu0 0.0
    %430 = vmatprep.mubr.f32.mxu0 0.0
    %431 = vmatmul.mubr.f32.gmra.mrb[0].mxu0 %v364
    %v432 = vpop.f32.mrb[0].mxu0
    %v433 = vadd.f32 %v49, %v432
    %v434 = vpop.f32.mrb[0].mxu0
    %435 = vdwg.mxu0
    %v436 = vxor.u32 %v433, 2147483648
    %v437 = vmul.f32 %v436, 1.442695
    %v438 = vpow.pop %v437
    %v439 = vadd.f32 %v438, 1.0
    %v440 = vrcp.pop %v439
    %v441 = vmul.f32 1.0, %v440
    %v442 = vtanh.pop %v433
    %v443 = vmul.f32 %v441, %v349
    %445 = vrot.lane.b32.xlu0 %v442, 32
    %v446 = vpop.permute.xlu0 %445
    %v448 = vmul.f32 %v441, %v446
    %450 = vrot.lane.b32.xlu0 %v448, 32
    %v451 = vpop.permute.xlu0 %450
    %v453 = vadd.f32 %v443, %v451
    %v454 = vtanh.pop %v453
    %456 = vrot.lane.b32.xlu0 %v454, 32
    %v457 = vpop.permute.xlu0 %456
    %v459 = vmul.f32 %v441, %v457
    %461 = vrot.lane.b32.xlu0 %v459, 96
    %v462 = vpop.permute.xlu0 %461
    %v464 = vsel %vm44, %v32, %v462
    %v466 = vsel %vm50, %v464, 0
    %468 = vmatprep.subr.mxu0 0.0
    %469 = vmatpush1.msra.mxu0 %v35
    %470 = vmatprep.subr.mxu0 0.0
    %471 = vmatpush1.msra.mxu0 %v36
    %472 = vmatprep.subr.mxu0 0.0
    %473 = vmatpush1.msra.mxu0 %v37
    %474 = vmatprep.subr.mxu0 0.0
    %475 = vmatpush1.msra.mxu0 %v38
    %476 = vmatprep.subr.mxu0 0.0
    %477 = vmatpush1.msra.mxu0 %v39
    %478 = vmatprep.subr.mxu0 0.0
    %479 = vmatpush1.msra.mxu0 %v40
    %480 = vmatprep.subr.mxu0 0.0
    %481 = vmatpush1.msra.mxu0 %v41
    %482 = vmatprep.subr.mxu0 0.0
    %483 = vmatpush1.msra.mxu0 %v42
    %484 = vmatprep.subr.mxu0 0.0
    %485 = vmatpush1.msra.mxu0 0.0
    %486 = vmatprep.subr.mxu0 0.0
    %487 = vmatpush1.msra.mxu0 0.0
    %488 = vmatprep.subr.mxu0 0.0
    %489 = vmatpush1.msra.mxu0 0.0
    %490 = vmatprep.subr.mxu0 0.0
    %491 = vmatpush1.msra.mxu0 0.0
    %492 = vmatprep.subr.mxu0 0.0
    %493 = vmatpush1.msra.mxu0 0.0
    %494 = vmatprep.subr.mxu0 0.0
    %495 = vmatpush1.msra.mxu0 0.0
    %496 = vmatprep.subr.mxu0 0.0
    %497 = vmatpush1.msra.mxu0 0.0
    %498 = vmatprep.subr.mxu0 0.0
    %499 = vmatpush1.msra.mxu0 0.0
    %500 = vmatprep.subr.mxu0 0.0
    %501 = vmatpush1.msra.mxu0 0.0
    %502 = vmatprep.subr.mxu0 0.0
    %503 = vmatpush1.msra.mxu0 0.0
    %504 = vmatprep.subr.mxu0 0.0
    %505 = vmatpush1.msra.mxu0 0.0
    %506 = vmatprep.subr.mxu0 0.0
    %507 = vmatpush1.msra.mxu0 0.0
    %508 = vmatprep.subr.mxu0 0.0
    %509 = vmatpush1.msra.mxu0 0.0
    %510 = vmatprep.subr.mxu0 0.0
    %511 = vmatpush1.msra.mxu0 0.0
    %512 = vmatprep.subr.mxu0 0.0
    %513 = vmatpush1.msra.mxu0 0.0
    %514 = vmatprep.subr.mxu0 0.0
    %515 = vmatpush1.msra.mxu0 0.0
    %516 = vmatprep.subr.mxu0 0.0
    %517 = vmatpush1.msra.mxu0 0.0
    %518 = vmatprep.subr.mxu0 0.0
    %519 = vmatpush1.msra.mxu0 0.0
    %520 = vmatprep.subr.mxu0 0.0
    %521 = vmatpush1.msra.mxu0 0.0
    %522 = vmatprep.subr.mxu0 0.0
    %523 = vmatpush1.msra.mxu0 0.0
    %524 = vmatprep.subr.mxu0 0.0
    %525 = vmatpush1.msra.mxu0 0.0
    %526 = vmatprep.subr.mxu0 0.0
    %527 = vmatpush1.msra.mxu0 0.0
    %528 = vmatprep.subr.mxu0 0.0
    %529 = vmatpush1.msra.mxu0 0.0
    %530 = vmatprep.subr.mxu0 0.0
    %531 = vmatpush1.msra.mxu0 0.0
    %532 = vmatprep.mubr.f32.mxu0 0.0
    %533 = vmatmul.mubr.f32.gmra.mrb[0].mxu0 %v466
    %v534 = vpop.f32.mrb[0].mxu0
    %v535 = vadd.f32 %v49, %v534
    %v536 = vpop.f32.mrb[0].mxu0
    %537 = vdwg.mxu0
    %v538 = vxor.u32 %v535, 2147483648
    %v539 = vmul.f32 %v538, 1.442695
    %v540 = vpow.pop %v539
    %v541 = vadd.f32 %v540, 1.0
    %v542 = vrcp.pop %v541
    %v543 = vmul.f32 1.0, %v542
    %v544 = vtanh.pop %v535
    %v545 = vmul.f32 %v543, %v453
    %547 = vrot.lane.b32.xlu0 %v544, 32
    %v548 = vpop.permute.xlu0 %547
    %v550 = vmul.f32 %v543, %v548
    %552 = vrot.lane.b32.xlu0 %v550, 32
    %v553 = vpop.permute.xlu0 %552
    %v555 = vadd.f32 %v545, %v553
    %v556 = vtanh.pop %v555
    %558 = vrot.lane.b32.xlu0 %v556, 32
    %v559 = vpop.permute.xlu0 %558
    %v561 = vmul.f32 %v543, %v559
    %v563 = vrot.slane %v561, 6
    %564 = vrot.lane.b32.xlu0 %v563, 96
    %v565 = vpop.permute.xlu0 %564
    %v567 = vsel %vm44, %v32, %v565
    %v569 = vrot.slane %v567, 2
    %v570 = vsel %vm50, %v569, 0
    %572 = vmatprep.subr.mxu0 0.0
    %573 = vmatpush1.msra.mxu0 %v35
    %574 = vmatprep.subr.mxu0 0.0
    %575 = vmatpush1.msra.mxu0 %v36
    %576 = vmatprep.subr.mxu0 0.0
    %577 = vmatpush1.msra.mxu0 %v37
    %578 = vmatprep.subr.mxu0 0.0
    %579 = vmatpush1.msra.mxu0 %v38
    %580 = vmatprep.subr.mxu0 0.0
    %581 = vmatpush1.msra.mxu0 %v39
    %582 = vmatprep.subr.mxu0 0.0
    %583 = vmatpush1.msra.mxu0 %v40
    %584 = vmatprep.subr.mxu0 0.0
    %585 = vmatpush1.msra.mxu0 %v41
    %586 = vmatprep.subr.mxu0 0.0
    %587 = vmatpush1.msra.mxu0 %v42
    %588 = vmatprep.subr.mxu0 0.0
    %589 = vmatpush1.msra.mxu0 0.0
    %590 = vmatprep.subr.mxu0 0.0
    %591 = vmatpush1.msra.mxu0 0.0
    %592 = vmatprep.subr.mxu0 0.0
    %593 = vmatpush1.msra.mxu0 0.0
    %594 = vmatprep.subr.mxu0 0.0
    %595 = vmatpush1.msra.mxu0 0.0
    %596 = vmatprep.subr.mxu0 0.0
    %597 = vmatpush1.msra.mxu0 0.0
    %598 = vmatprep.subr.mxu0 0.0
    %599 = vmatpush1.msra.mxu0 0.0
    %600 = vmatprep.subr.mxu0 0.0
    %601 = vmatpush1.msra.mxu0 0.0
    %602 = vmatprep.subr.mxu0 0.0
    %603 = vmatpush1.msra.mxu0 0.0
    %604 = vmatprep.subr.mxu0 0.0
    %605 = vmatpush1.msra.mxu0 0.0
    %606 = vmatprep.subr.mxu0 0.0
    %607 = vmatpush1.msra.mxu0 0.0
    %608 = vmatprep.subr.mxu0 0.0
    %609 = vmatpush1.msra.mxu0 0.0
    %610 = vmatprep.subr.mxu0 0.0
    %611 = vmatpush1.msra.mxu0 0.0
    %612 = vmatprep.subr.mxu0 0.0
    %613 = vmatpush1.msra.mxu0 0.0
    %614 = vmatprep.subr.mxu0 0.0
    %615 = vmatpush1.msra.mxu0 0.0
    %616 = vmatprep.subr.mxu0 0.0
    %617 = vmatpush1.msra.mxu0 0.0
    %618 = vmatprep.subr.mxu0 0.0
    %619 = vmatpush1.msra.mxu0 0.0
    %620 = vmatprep.subr.mxu0 0.0
    %621 = vmatpush1.msra.mxu0 0.0
    %622 = vmatprep.subr.mxu0 0.0
    %623 = vmatpush1.msra.mxu0 0.0
    %624 = vmatprep.subr.mxu0 0.0
    %625 = vmatpush1.msra.mxu0 0.0
    %626 = vmatprep.subr.mxu0 0.0
    %627 = vmatpush1.msra.mxu0 0.0
    %628 = vmatprep.subr.mxu0 0.0
    %629 = vmatpush1.msra.mxu0 0.0
    %630 = vmatprep.subr.mxu0 0.0
    %631 = vmatpush1.msra.mxu0 0.0
    %632 = vmatprep.subr.mxu0 0.0
    %633 = vmatpush1.msra.mxu0 0.0
    %634 = vmatprep.subr.mxu0 0.0
    %635 = vmatpush1.msra.mxu0 0.0
    %636 = vmatprep.mubr.f32.mxu0 0.0
    %637 = vmatmul.mubr.f32.gmra.mrb[0].mxu0 %v570
    %v638 = vpop.f32.mrb[0].mxu0
    %v639 = vadd.f32 %v49, %v638
    %v640 = vpop.f32.mrb[0].mxu0
    %641 = vdwg.mxu0
    %v642 = vxor.u32 %v639, 2147483648
    %v643 = vmul.f32 %v642, 1.442695
    %v644 = vpow.pop %v643
    %v645 = vadd.f32 %v644, 1.0
    %v646 = vrcp.pop %v645
    %v647 = vmul.f32 1.0, %v646
    %v648 = vtanh.pop %v639
    %v649 = vmul.f32 %v647, %v555
    %651 = vrot.lane.b32.xlu0 %v648, 32
    %v652 = vpop.permute.xlu0 %651
    %v654 = vmul.f32 %v647, %v652
    %656 = vrot.lane.b32.xlu0 %v654, 32
    %v657 = vpop.permute.xlu0 %656
    %v659 = vadd.f32 %v649, %v657
    %v660 = vtanh.pop %v659
    %662 = vrot.lane.b32.xlu0 %v660, 32
    %v663 = vpop.permute.xlu0 %662
    %v665 = vmul.f32 %v647, %v663
    %v667 = vrot.slane %v665, 4
    %668 = vrot.lane.b32.xlu0 %v667, 96
    %v669 = vpop.permute.xlu0 %668
    %v671 = vsel %vm44, %v32, %v669
    %v673 = vrot.slane %v671, 4
    %v674 = vsel %vm50, %v673, 0
    %676 = vmatprep.subr.mxu0 0.0
    %677 = vmatpush1.msra.mxu0 %v35
    %678 = vmatprep.subr.mxu0 0.0
    %679 = vmatpush1.msra.mxu0 %v36
    %680 = vmatprep.subr.mxu0 0.0
    %681 = vmatpush1.msra.mxu0 %v37
    %682 = vmatprep.subr.mxu0 0.0
    %683 = vmatpush1.msra.mxu0 %v38
    %684 = vmatprep.subr.mxu0 0.0
    %685 = vmatpush1.msra.mxu0 %v39
    %686 = vmatprep.subr.mxu0 0.0
    %687 = vmatpush1.msra.mxu0 %v40
    %688 = vmatprep.subr.mxu0 0.0
    %689 = vmatpush1.msra.mxu0 %v41
    %690 = vmatprep.subr.mxu0 0.0
    %691 = vmatpush1.msra.mxu0 %v42
    %692 = vmatprep.subr.mxu0 0.0
    %693 = vmatpush1.msra.mxu0 0.0
    %694 = vmatprep.subr.mxu0 0.0
    %695 = vmatpush1.msra.mxu0 0.0
    %696 = vmatprep.subr.mxu0 0.0
    %697 = vmatpush1.msra.mxu0 0.0
    %698 = vmatprep.subr.mxu0 0.0
    %699 = vmatpush1.msra.mxu0 0.0
    %700 = vmatprep.subr.mxu0 0.0
    %701 = vmatpush1.msra.mxu0 0.0
    %702 = vmatprep.subr.mxu0 0.0
    %703 = vmatpush1.msra.mxu0 0.0
    %704 = vmatprep.subr.mxu0 0.0
    %705 = vmatpush1.msra.mxu0 0.0
    %706 = vmatprep.subr.mxu0 0.0
    %707 = vmatpush1.msra.mxu0 0.0
    %708 = vmatprep.subr.mxu0 0.0
    %709 = vmatpush1.msra.mxu0 0.0
    %710 = vmatprep.subr.mxu0 0.0
    %711 = vmatpush1.msra.mxu0 0.0
    %712 = vmatprep.subr.mxu0 0.0
    %713 = vmatpush1.msra.mxu0 0.0
    %714 = vmatprep.subr.mxu0 0.0
    %715 = vmatpush1.msra.mxu0 0.0
    %716 = vmatprep.subr.mxu0 0.0
    %717 = vmatpush1.msra.mxu0 0.0
    %718 = vmatprep.subr.mxu0 0.0
    %719 = vmatpush1.msra.mxu0 0.0
    %720 = vmatprep.subr.mxu0 0.0
    %721 = vmatpush1.msra.mxu0 0.0
    %722 = vmatprep.subr.mxu0 0.0
    %723 = vmatpush1.msra.mxu0 0.0
    %724 = vmatprep.subr.mxu0 0.0
    %725 = vmatpush1.msra.mxu0 0.0
    %726 = vmatprep.subr.mxu0 0.0
    %727 = vmatpush1.msra.mxu0 0.0
    %728 = vmatprep.subr.mxu0 0.0
    %729 = vmatpush1.msra.mxu0 0.0
    %730 = vmatprep.subr.mxu0 0.0
    %731 = vmatpush1.msra.mxu0 0.0
    %732 = vmatprep.subr.mxu0 0.0
    %733 = vmatpush1.msra.mxu0 0.0
    %734 = vmatprep.subr.mxu0 0.0
    %735 = vmatpush1.msra.mxu0 0.0
    %736 = vmatprep.subr.mxu0 0.0
    %737 = vmatpush1.msra.mxu0 0.0
    %738 = vmatprep.subr.mxu0 0.0
    %739 = vmatpush1.msra.mxu0 0.0
    %740 = vmatprep.mubr.f32.mxu0 0.0
    %741 = vmatmul.mubr.f32.gmra.mrb[0].mxu0 %v674
    %v742 = vpop.f32.mrb[0].mxu0
    %v743 = vadd.f32 %v49, %v742
    %v744 = vpop.f32.mrb[0].mxu0
    %745 = vdwg.mxu0
    %v746 = vxor.u32 %v743, 2147483648
    %v747 = vmul.f32 %v746, 1.442695
    %v748 = vpow.pop %v747
    %v749 = vadd.f32 %v748, 1.0
    %v750 = vrcp.pop %v749
    %v751 = vmul.f32 1.0, %v750
    %v752 = vtanh.pop %v743
    %v753 = vmul.f32 %v751, %v659
    %755 = vrot.lane.b32.xlu0 %v752, 32
    %v756 = vpop.permute.xlu0 %755
    %v758 = vmul.f32 %v751, %v756
    %760 = vrot.lane.b32.xlu0 %v758, 32
    %v761 = vpop.permute.xlu0 %760
    %v763 = vadd.f32 %v753, %v761
    %v764 = vtanh.pop %v763
    %766 = vrot.lane.b32.xlu0 %v764, 32
    %v767 = vpop.permute.xlu0 %766
    %v769 = vmul.f32 %v751, %v767
    %v771 = vrot.slane %v769, 2
    %772 = vrot.lane.b32.xlu0 %v771, 96
    %v773 = vpop.permute.xlu0 %772
    %v775 = vsel %vm44, %v32, %v773
    %v777 = vrot.slane %v775, 6
    %v778 = vsel %vm50, %v777, 0
    %780 = vmatprep.subr.mxu0 0.0
    %781 = vmatpush1.msra.mxu0 %v35
    %782 = vmatprep.subr.mxu0 0.0
    %783 = vmatpush1.msra.mxu0 %v36
    %784 = vmatprep.subr.mxu0 0.0
    %785 = vmatpush1.msra.mxu0 %v37
    %786 = vmatprep.subr.mxu0 0.0
    %787 = vmatpush1.msra.mxu0 %v38
    %788 = vmatprep.subr.mxu0 0.0
    %789 = vmatpush1.msra.mxu0 %v39
    %790 = vmatprep.subr.mxu0 0.0
    %791 = vmatpush1.msra.mxu0 %v40
    %792 = vmatprep.subr.mxu0 0.0
    %793 = vmatpush1.msra.mxu0 %v41
    %794 = vmatprep.subr.mxu0 0.0
    %795 = vmatpush1.msra.mxu0 %v42
    %796 = vmatprep.subr.mxu0 0.0
    %797 = vmatpush1.msra.mxu0 0.0
    %798 = vmatprep.subr.mxu0 0.0
    %799 = vmatpush1.msra.mxu0 0.0
    %800 = vmatprep.subr.mxu0 0.0
    %801 = vmatpush1.msra.mxu0 0.0
    %802 = vmatprep.subr.mxu0 0.0
    %803 = vmatpush1.msra.mxu0 0.0
    %804 = vmatprep.subr.mxu0 0.0
    %805 = vmatpush1.msra.mxu0 0.0
    %806 = vmatprep.subr.mxu0 0.0
    %807 = vmatpush1.msra.mxu0 0.0
    %808 = vmatprep.subr.mxu0 0.0
    %809 = vmatpush1.msra.mxu0 0.0
    %810 = vmatprep.subr.mxu0 0.0
    %811 = vmatpush1.msra.mxu0 0.0
    %812 = vmatprep.subr.mxu0 0.0
    %813 = vmatpush1.msra.mxu0 0.0
    %814 = vmatprep.subr.mxu0 0.0
    %815 = vmatpush1.msra.mxu0 0.0
    %816 = vmatprep.subr.mxu0 0.0
    %817 = vmatpush1.msra.mxu0 0.0
    %818 = vmatprep.subr.mxu0 0.0
    %819 = vmatpush1.msra.mxu0 0.0
    %820 = vmatprep.subr.mxu0 0.0
    %821 = vmatpush1.msra.mxu0 0.0
    %822 = vmatprep.subr.mxu0 0.0
    %823 = vmatpush1.msra.mxu0 0.0
    %824 = vmatprep.subr.mxu0 0.0
    %825 = vmatpush1.msra.mxu0 0.0
    %826 = vmatprep.subr.mxu0 0.0
    %827 = vmatpush1.msra.mxu0 0.0
    %828 = vmatprep.subr.mxu0 0.0
    %829 = vmatpush1.msra.mxu0 0.0
    %830 = vmatprep.subr.mxu0 0.0
    %831 = vmatpush1.msra.mxu0 0.0
    %832 = vmatprep.subr.mxu0 0.0
    %833 = vmatpush1.msra.mxu0 0.0
    %834 = vmatprep.subr.mxu0 0.0
    %835 = vmatpush1.msra.mxu0 0.0
    %836 = vmatprep.subr.mxu0 0.0
    %837 = vmatpush1.msra.mxu0 0.0
    %838 = vmatprep.subr.mxu0 0.0
    %839 = vmatpush1.msra.mxu0 0.0
    %840 = vmatprep.subr.mxu0 0.0
    %841 = vmatpush1.msra.mxu0 0.0
    %842 = vmatprep.subr.mxu0 0.0
    %843 = vmatpush1.msra.mxu0 0.0
    %844 = vmatprep.mubr.f32.mxu0 0.0
    %845 = vmatmul.mubr.f32.gmra.mrb[0].mxu0 %v778
    %v846 = vpop.f32.mrb[0].mxu0
    %v847 = vadd.f32 %v49, %v846
    %v848 = vpop.f32.mrb[0].mxu0
    %849 = vdwg.mxu0
    %v850 = vxor.u32 %v847, 2147483648
    %v851 = vmul.f32 %v850, 1.442695
    %v852 = vpow.pop %v851
    %v853 = vadd.f32 %v852, 1.0
    %v854 = vrcp.pop %v853
    %v855 = vmul.f32 1.0, %v854
    %v856 = vtanh.pop %v847
    %v857 = vmul.f32 %v855, %v763
    %859 = vrot.lane.b32.xlu0 %v856, 32
    %v860 = vpop.permute.xlu0 %859
    %v862 = vmul.f32 %v855, %v860
    %864 = vrot.lane.b32.xlu0 %v862, 32
    %v865 = vpop.permute.xlu0 %864
    %v867 = vadd.f32 %v857, %v865
    %v868 = vtanh.pop %v867
    %870 = vrot.lane.b32.xlu0 %v868, 32
    %v871 = vpop.permute.xlu0 %870
    %v873 = vmul.f32 %v855, %v871
    %v874 = vld [vmem:[#allocation2 + $0x40] sm:$0xff]
    %v875 = vld [vmem:[#allocation2 + $0x48] sm:$0xff]
    %v876 = vld [vmem:[#allocation2 + $0x50] sm:$0xff]
    %v877 = vld [vmem:[#allocation2 + $0x58] sm:$0xff]
    %v878 = vld [vmem:[#allocation2 + $0x60] sm:$0xff]
    %v879 = vld [vmem:[#allocation2 + $0x68] sm:$0xff]
    %v880 = vld [vmem:[%s3 + $0x1] sm:$0x1]
    %881 = vrot.lane.b32.xlu0 %v147, 64
    %v882 = vpop.permute.xlu0 %881
    %v884 = vsel %vm44, %v882, 0.0
    %v885 = vlaneseq
    %v886 = vshrl.u32 %v885, 7
    %v887 = vsub.s32 0, %v886
    %v888 = vrot.slane %v880, %v887
    %vm889 = vcmask 392192
    %v891 = vsel %vm889, %v884, 0
    %893 = vmatprep.subr.mxu0 0.0
    %894 = vmatpush1.msra.mxu0 %v874
    %895 = vmatprep.subr.mxu0 0.0
    %896 = vmatpush1.msra.mxu0 %v875
    %897 = vmatprep.subr.mxu0 0.0
    %898 = vmatpush1.msra.mxu0 %v876
    %899 = vmatprep.subr.mxu0 0.0
    %900 = vmatpush1.msra.mxu0 %v877
    %901 = vmatprep.subr.mxu0 0.0
    %902 = vmatpush1.msra.mxu0 %v878
    %903 = vmatprep.subr.mxu0 0.0
    %904 = vmatpush1.msra.mxu0 %v879
    %905 = vmatprep.subr.mxu0 0.0
    %906 = vmatpush1.msra.mxu0 0.0
    %907 = vmatprep.subr.mxu0 0.0
    %908 = vmatpush1.msra.mxu0 0.0
    %909 = vmatprep.subr.mxu0 0.0
    %910 = vmatpush1.msra.mxu0 0.0
    %911 = vmatprep.subr.mxu0 0.0
    %912 = vmatpush1.msra.mxu0 0.0
    %913 = vmatprep.subr.mxu0 0.0
    %914 = vmatpush1.msra.mxu0 0.0
    %915 = vmatprep.subr.mxu0 0.0
    %916 = vmatpush1.msra.mxu0 0.0
    %917 = vmatprep.subr.mxu0 0.0
    %918 = vmatpush1.msra.mxu0 0.0
    %919 = vmatprep.subr.mxu0 0.0
    %920 = vmatpush1.msra.mxu0 0.0
    %921 = vmatprep.subr.mxu0 0.0
    %922 = vmatpush1.msra.mxu0 0.0
    %923 = vmatprep.subr.mxu0 0.0
    %924 = vmatpush1.msra.mxu0 0.0
    %925 = vmatprep.subr.mxu0 0.0
    %926 = vmatpush1.msra.mxu0 0.0
    %927 = vmatprep.subr.mxu0 0.0
    %928 = vmatpush1.msra.mxu0 0.0
    %929 = vmatprep.subr.mxu0 0.0
    %930 = vmatpush1.msra.mxu0 0.0
    %931 = vmatprep.subr.mxu0 0.0
    %932 = vmatpush1.msra.mxu0 0.0
    %933 = vmatprep.subr.mxu0 0.0
    %934 = vmatpush1.msra.mxu0 0.0
    %935 = vmatprep.subr.mxu0 0.0
    %936 = vmatpush1.msra.mxu0 0.0
    %937 = vmatprep.subr.mxu0 0.0
    %938 = vmatpush1.msra.mxu0 0.0
    %939 = vmatprep.subr.mxu0 0.0
    %940 = vmatpush1.msra.mxu0 0.0
    %941 = vmatprep.subr.mxu0 0.0
    %942 = vmatpush1.msra.mxu0 0.0
    %943 = vmatprep.subr.mxu0 0.0
    %944 = vmatpush1.msra.mxu0 0.0
    %945 = vmatprep.subr.mxu0 0.0
    %946 = vmatpush1.msra.mxu0 0.0
    %947 = vmatprep.subr.mxu0 0.0
    %948 = vmatpush1.msra.mxu0 0.0
    %949 = vmatprep.subr.mxu0 0.0
    %950 = vmatpush1.msra.mxu0 0.0
    %951 = vmatprep.subr.mxu0 0.0
    %952 = vmatpush1.msra.mxu0 0.0
    %953 = vmatprep.subr.mxu0 0.0
    %954 = vmatpush1.msra.mxu0 0.0
    %955 = vmatprep.subr.mxu0 0.0
    %956 = vmatpush1.msra.mxu0 0.0
    %957 = vmatprep.mubr.f32.mxu0 0.0
    %958 = vmatmul.mubr.f32.gmra.mrb[0].mxu0 %v891
    %v959 = vpop.f32.mrb[0].mxu0
    %v960 = vadd.f32 %v888, %v959
    %v961 = vpop.f32.mrb[0].mxu0
    %962 = vdwg.mxu0
    %v963 = vxor.u32 %v960, 2147483648
    %v964 = vmul.f32 %v963, 1.442695
    %v965 = vpow.pop %v964
    %v966 = vadd.f32 %v965, 1.0
    %v967 = vrcp.pop %v966
    %v968 = vmul.f32 1.0, %v967
    %v969 = vtanh.pop %v960
    %v970 = vmul.f32 %v968, 0.0
    %972 = vrot.lane.b32.xlu0 %v969, 80
    %v973 = vpop.permute.xlu0 %972
    %v975 = vmul.f32 %v968, %v973
    %977 = vrot.lane.b32.xlu0 %v975, 16
    %v978 = vpop.permute.xlu0 %977
    %v980 = vadd.f32 %v970, %v978
    %v981 = vtanh.pop %v980
    %983 = vrot.lane.b32.xlu0 %v981, 16
    %v984 = vpop.permute.xlu0 %983
    %v986 = vmul.f32 %v968, %v984
    %987 = vrot.lane.b32.xlu0 %v251, 64
    %v988 = vpop.permute.xlu0 %987
    %v990 = vsel %vm44, %v988, %v986
    %v992 = vsel %vm889, %v990, 0
    %994 = vmatprep.subr.mxu0 0.0
    %995 = vmatpush1.msra.mxu0 %v874
    %996 = vmatprep.subr.mxu0 0.0
    %997 = vmatpush1.msra.mxu0 %v875
    %998 = vmatprep.subr.mxu0 0.0
    %999 = vmatpush1.msra.mxu0 %v876
    %1000 = vmatprep.subr.mxu0 0.0
    %1001 = vmatpush1.msra.mxu0 %v877
    %1002 = vmatprep.subr.mxu0 0.0
    %1003 = vmatpush1.msra.mxu0 %v878
    %1004 = vmatprep.subr.mxu0 0.0
    %1005 = vmatpush1.msra.mxu0 %v879
    %1006 = vmatprep.subr.mxu0 0.0
    %1007 = vmatpush1.msra.mxu0 0.0
    %1008 = vmatprep.subr.mxu0 0.0
    %1009 = vmatpush1.msra.mxu0 0.0
    %1010 = vmatprep.subr.mxu0 0.0
    %1011 = vmatpush1.msra.mxu0 0.0
    %1012 = vmatprep.subr.mxu0 0.0
    %1013 = vmatpush1.msra.mxu0 0.0
    %1014 = vmatprep.subr.mxu0 0.0
    %1015 = vmatpush1.msra.mxu0 0.0
    %1016 = vmatprep.subr.mxu0 0.0
    %1017 = vmatpush1.msra.mxu0 0.0
    %1018 = vmatprep.subr.mxu0 0.0
    %1019 = vmatpush1.msra.mxu0 0.0
    %1020 = vmatprep.subr.mxu0 0.0
    %1021 = vmatpush1.msra.mxu0 0.0
    %1022 = vmatprep.subr.mxu0 0.0
    %1023 = vmatpush1.msra.mxu0 0.0
    %1024 = vmatprep.subr.mxu0 0.0
    %1025 = vmatpush1.msra.mxu0 0.0
    %1026 = vmatprep.subr.mxu0 0.0
    %1027 = vmatpush1.msra.mxu0 0.0
    %1028 = vmatprep.subr.mxu0 0.0
    %1029 = vmatpush1.msra.mxu0 0.0
    %1030 = vmatprep.subr.mxu0 0.0
    %1031 = vmatpush1.msra.mxu0 0.0
    %1032 = vmatprep.subr.mxu0 0.0
    %1033 = vmatpush1.msra.mxu0 0.0
    %1034 = vmatprep.subr.mxu0 0.0
    %1035 = vmatpush1.msra.mxu0 0.0
    %1036 = vmatprep.subr.mxu0 0.0
    %1037 = vmatpush1.msra.mxu0 0.0
    %1038 = vmatprep.subr.mxu0 0.0
    %1039 = vmatpush1.msra.mxu0 0.0
    %1040 = vmatprep.subr.mxu0 0.0
    %1041 = vmatpush1.msra.mxu0 0.0
    %1042 = vmatprep.subr.mxu0 0.0
    %1043 = vmatpush1.msra.mxu0 0.0
    %1044 = vmatprep.subr.mxu0 0.0
    %1045 = vmatpush1.msra.mxu0 0.0
    %1046 = vmatprep.subr.mxu0 0.0
    %1047 = vmatpush1.msra.mxu0 0.0
    %1048 = vmatprep.subr.mxu0 0.0
    %1049 = vmatpush1.msra.mxu0 0.0
    %1050 = vmatprep.subr.mxu0 0.0
    %1051 = vmatpush1.msra.mxu0 0.0
    %1052 = vmatprep.subr.mxu0 0.0
    %1053 = vmatpush1.msra.mxu0 0.0
    %1054 = vmatprep.subr.mxu0 0.0
    %1055 = vmatpush1.msra.mxu0 0.0
    %1056 = vmatprep.subr.mxu0 0.0
    %1057 = vmatpush1.msra.mxu0 0.0
    %1058 = vmatprep.mubr.f32.mxu0 0.0
    %1059 = vmatmul.mubr.f32.gmra.mrb[0].mxu0 %v992
    %v1060 = vpop.f32.mrb[0].mxu0
    %v1061 = vadd.f32 %v888, %v1060
    %v1062 = vpop.f32.mrb[0].mxu0
    %1063 = vdwg.mxu0
    %v1064 = vxor.u32 %v1061, 2147483648
    %v1065 = vmul.f32 %v1064, 1.442695
    %v1066 = vpow.pop %v1065
    %v1067 = vadd.f32 %v1066, 1.0
    %v1068 = vrcp.pop %v1067
    %v1069 = vmul.f32 1.0, %v1068
    %v1070 = vtanh.pop %v1061
    %v1071 = vmul.f32 %v1069, %v980
    %1073 = vrot.lane.b32.xlu0 %v1070, 80
    %v1074 = vpop.permute.xlu0 %1073
    %v1076 = vmul.f32 %v1069, %v1074
    %1078 = vrot.lane.b32.xlu0 %v1076, 16
    %v1079 = vpop.permute.xlu0 %1078
    %v1081 = vadd.f32 %v1071, %v1079
    %v1082 = vtanh.pop %v1081
    %1084 = vrot.lane.b32.xlu0 %v1082, 16
    %v1085 = vpop.permute.xlu0 %1084
    %v1087 = vmul.f32 %v1069, %v1085
    %1088 = vrot.lane.b32.xlu0 %v355, 64
    %v1089 = vpop.permute.xlu0 %1088
    %v1091 = vsel %vm44, %v1089, %v1087
    %v1093 = vsel %vm889, %v1091, 0
    %1095 = vmatprep.subr.mxu0 0.0
    %1096 = vmatpush1.msra.mxu0 %v874
    %1097 = vmatprep.subr.mxu0 0.0
    %1098 = vmatpush1.msra.mxu0 %v875
    %1099 = vmatprep.subr.mxu0 0.0
    %1100 = vmatpush1.msra.mxu0 %v876
    %1101 = vmatprep.subr.mxu0 0.0
    %1102 = vmatpush1.msra.mxu0 %v877
    %1103 = vmatprep.subr.mxu0 0.0
    %1104 = vmatpush1.msra.mxu0 %v878
    %1105 = vmatprep.subr.mxu0 0.0
    %1106 = vmatpush1.msra.mxu0 %v879
    %1107 = vmatprep.subr.mxu0 0.0
    %1108 = vmatpush1.msra.mxu0 0.0
    %1109 = vmatprep.subr.mxu0 0.0
    %1110 = vmatpush1.msra.mxu0 0.0
    %1111 = vmatprep.subr.mxu0 0.0
    %1112 = vmatpush1.msra.mxu0 0.0
    %1113 = vmatprep.subr.mxu0 0.0
    %1114 = vmatpush1.msra.mxu0 0.0
    %1115 = vmatprep.subr.mxu0 0.0
    %1116 = vmatpush1.msra.mxu0 0.0
    %1117 = vmatprep.subr.mxu0 0.0
    %1118 = vmatpush1.msra.mxu0 0.0
    %1119 = vmatprep.subr.mxu0 0.0
    %1120 = vmatpush1.msra.mxu0 0.0
    %1121 = vmatprep.subr.mxu0 0.0
    %1122 = vmatpush1.msra.mxu0 0.0
    %1123 = vmatprep.subr.mxu0 0.0
    %1124 = vmatpush1.msra.mxu0 0.0
    %1125 = vmatprep.subr.mxu0 0.0
    %1126 = vmatpush1.msra.mxu0 0.0
    %1127 = vmatprep.subr.mxu0 0.0
    %1128 = vmatpush1.msra.mxu0 0.0
    %1129 = vmatprep.subr.mxu0 0.0
    %1130 = vmatpush1.msra.mxu0 0.0
    %1131 = vmatprep.subr.mxu0 0.0
    %1132 = vmatpush1.msra.mxu0 0.0
    %1133 = vmatprep.subr.mxu0 0.0
    %1134 = vmatpush1.msra.mxu0 0.0
    %1135 = vmatprep.subr.mxu0 0.0
    %1136 = vmatpush1.msra.mxu0 0.0
    %1137 = vmatprep.subr.mxu0 0.0
    %1138 = vmatpush1.msra.mxu0 0.0
    %1139 = vmatprep.subr.mxu0 0.0
    %1140 = vmatpush1.msra.mxu0 0.0
    %1141 = vmatprep.subr.mxu0 0.0
    %1142 = vmatpush1.msra.mxu0 0.0
    %1143 = vmatprep.subr.mxu0 0.0
    %1144 = vmatpush1.msra.mxu0 0.0
    %1145 = vmatprep.subr.mxu0 0.0
    %1146 = vmatpush1.msra.mxu0 0.0
    %1147 = vmatprep.subr.mxu0 0.0
    %1148 = vmatpush1.msra.mxu0 0.0
    %1149 = vmatprep.subr.mxu0 0.0
    %1150 = vmatpush1.msra.mxu0 0.0
    %1151 = vmatprep.subr.mxu0 0.0
    %1152 = vmatpush1.msra.mxu0 0.0
    %1153 = vmatprep.subr.mxu0 0.0
    %1154 = vmatpush1.msra.mxu0 0.0
    %1155 = vmatprep.subr.mxu0 0.0
    %1156 = vmatpush1.msra.mxu0 0.0
    %1157 = vmatprep.subr.mxu0 0.0
    %1158 = vmatpush1.msra.mxu0 0.0
    %1159 = vmatprep.mubr.f32.mxu0 0.0
    %1160 = vmatmul.mubr.f32.gmra.mrb[0].mxu0 %v1093
    %v1161 = vpop.f32.mrb[0].mxu0
    %v1162 = vadd.f32 %v888, %v1161
    %v1163 = vpop.f32.mrb[0].mxu0
    %1164 = vdwg.mxu0
    %v1165 = vxor.u32 %v1162, 2147483648
    %v1166 = vmul.f32 %v1165, 1.442695
    %v1167 = vpow.pop %v1166
    %v1168 = vadd.f32 %v1167, 1.0
    %v1169 = vrcp.pop %v1168
    %v1170 = vmul.f32 1.0, %v1169
    %v1171 = vtanh.pop %v1162
    %v1172 = vmul.f32 %v1170, %v1081
    %1174 = vrot.lane.b32.xlu0 %v1171, 80
    %v1175 = vpop.permute.xlu0 %1174
    %v1177 = vmul.f32 %v1170, %v1175
    %1179 = vrot.lane.b32.xlu0 %v1177, 16
    %v1180 = vpop.permute.xlu0 %1179
    %v1182 = vadd.f32 %v1172, %v1180
    %v1183 = vtanh.pop %v1182
    %1185 = vrot.lane.b32.xlu0 %v1183, 16
    %v1186 = vpop.permute.xlu0 %1185
    %v1188 = vmul.f32 %v1170, %v1186
    %1189 = vrot.lane.b32.xlu0 %v459, 64
    %v1190 = vpop.permute.xlu0 %1189
    %v1192 = vsel %vm44, %v1190, %v1188
    %v1194 = vsel %vm889, %v1192, 0
    %1196 = vmatprep.subr.mxu0 0.0
    %1197 = vmatpush1.msra.mxu0 %v874
    %1198 = vmatprep.subr.mxu0 0.0
    %1199 = vmatpush1.msra.mxu0 %v875
    %1200 = vmatprep.subr.mxu0 0.0
    %1201 = vmatpush1.msra.mxu0 %v876
    %1202 = vmatprep.subr.mxu0 0.0
    %1203 = vmatpush1.msra.mxu0 %v877
    %1204 = vmatprep.subr.mxu0 0.0
    %1205 = vmatpush1.msra.mxu0 %v878
    %1206 = vmatprep.subr.mxu0 0.0
    %1207 = vmatpush1.msra.mxu0 %v879
    %1208 = vmatprep.subr.mxu0 0.0
    %1209 = vmatpush1.msra.mxu0 0.0
    %1210 = vmatprep.subr.mxu0 0.0
    %1211 = vmatpush1.msra.mxu0 0.0
    %1212 = vmatprep.subr.mxu0 0.0
    %1213 = vmatpush1.msra.mxu0 0.0
    %1214 = vmatprep.subr.mxu0 0.0
    %1215 = vmatpush1.msra.mxu0 0.0
    %1216 = vmatprep.subr.mxu0 0.0
    %1217 = vmatpush1.msra.mxu0 0.0
    %1218 = vmatprep.subr.mxu0 0.0
    %1219 = vmatpush1.msra.mxu0 0.0
    %1220 = vmatprep.subr.mxu0 0.0
    %1221 = vmatpush1.msra.mxu0 0.0
    %1222 = vmatprep.subr.mxu0 0.0
    %1223 = vmatpush1.msra.mxu0 0.0
    %1224 = vmatprep.subr.mxu0 0.0
    %1225 = vmatpush1.msra.mxu0 0.0
    %1226 = vmatprep.subr.mxu0 0.0
    %1227 = vmatpush1.msra.mxu0 0.0
    %1228 = vmatprep.subr.mxu0 0.0
    %1229 = vmatpush1.msra.mxu0 0.0
    %1230 = vmatprep.subr.mxu0 0.0
    %1231 = vmatpush1.msra.mxu0 0.0
    %1232 = vmatprep.subr.mxu0 0.0
    %1233 = vmatpush1.msra.mxu0 0.0
    %1234 = vmatprep.subr.mxu0 0.0
    %1235 = vmatpush1.msra.mxu0 0.0
    %1236 = vmatprep.subr.mxu0 0.0
    %1237 = vmatpush1.msra.mxu0 0.0
    %1238 = vmatprep.subr.mxu0 0.0
    %1239 = vmatpush1.msra.mxu0 0.0
    %1240 = vmatprep.subr.mxu0 0.0
    %1241 = vmatpush1.msra.mxu0 0.0
    %1242 = vmatprep.subr.mxu0 0.0
    %1243 = vmatpush1.msra.mxu0 0.0
    %1244 = vmatprep.subr.mxu0 0.0
    %1245 = vmatpush1.msra.mxu0 0.0
    %1246 = vmatprep.subr.mxu0 0.0
    %1247 = vmatpush1.msra.mxu0 0.0
    %1248 = vmatprep.subr.mxu0 0.0
    %1249 = vmatpush1.msra.mxu0 0.0
    %1250 = vmatprep.subr.mxu0 0.0
    %1251 = vmatpush1.msra.mxu0 0.0
    %1252 = vmatprep.subr.mxu0 0.0
    %1253 = vmatpush1.msra.mxu0 0.0
    %1254 = vmatprep.subr.mxu0 0.0
    %1255 = vmatpush1.msra.mxu0 0.0
    %1256 = vmatprep.subr.mxu0 0.0
    %1257 = vmatpush1.msra.mxu0 0.0
    %1258 = vmatprep.subr.mxu0 0.0
    %1259 = vmatpush1.msra.mxu0 0.0
    %1260 = vmatprep.mubr.f32.mxu0 0.0
    %1261 = vmatmul.mubr.f32.gmra.mrb[0].mxu0 %v1194
    %v1262 = vpop.f32.mrb[0].mxu0
    %v1263 = vadd.f32 %v888, %v1262
    %v1264 = vpop.f32.mrb[0].mxu0
    %1265 = vdwg.mxu0
    %v1266 = vxor.u32 %v1263, 2147483648
    %v1267 = vmul.f32 %v1266, 1.442695
    %v1268 = vpow.pop %v1267
    %v1269 = vadd.f32 %v1268, 1.0
    %v1270 = vrcp.pop %v1269
    %v1271 = vmul.f32 1.0, %v1270
    %v1272 = vtanh.pop %v1263
    %v1273 = vmul.f32 %v1271, %v1182
    %1275 = vrot.lane.b32.xlu0 %v1272, 80
    %v1276 = vpop.permute.xlu0 %1275
    %v1278 = vmul.f32 %v1271, %v1276
    %1280 = vrot.lane.b32.xlu0 %v1278, 16
    %v1281 = vpop.permute.xlu0 %1280
    %v1283 = vadd.f32 %v1273, %v1281
    %v1284 = vtanh.pop %v1283
    %1286 = vrot.lane.b32.xlu0 %v1284, 16
    %v1287 = vpop.permute.xlu0 %1286
    %v1289 = vmul.f32 %v1271, %v1287
    %1290 = vrot.lane.b32.xlu0 %v561, 64
    %v1291 = vpop.permute.xlu0 %1290
    %v1293 = vsel %vm44, %v1291, %v1289
    %v1295 = vsel %vm889, %v1293, 0
    %1297 = vmatprep.subr.mxu0 0.0
    %1298 = vmatpush1.msra.mxu0 %v874
    %1299 = vmatprep.subr.mxu0 0.0
    %1300 = vmatpush1.msra.mxu0 %v875
    %1301 = vmatprep.subr.mxu0 0.0
    %1302 = vmatpush1.msra.mxu0 %v876
    %1303 = vmatprep.subr.mxu0 0.0
    %1304 = vmatpush1.msra.mxu0 %v877
    %1305 = vmatprep.subr.mxu0 0.0
    %1306 = vmatpush1.msra.mxu0 %v878
    %1307 = vmatprep.subr.mxu0 0.0
    %1308 = vmatpush1.msra.mxu0 %v879
    %1309 = vmatprep.subr.mxu0 0.0
    %1310 = vmatpush1.msra.mxu0 0.0
    %1311 = vmatprep.subr.mxu0 0.0
    %1312 = vmatpush1.msra.mxu0 0.0
    %1313 = vmatprep.subr.mxu0 0.0
    %1314 = vmatpush1.msra.mxu0 0.0
    %1315 = vmatprep.subr.mxu0 0.0
    %1316 = vmatpush1.msra.mxu0 0.0
    %1317 = vmatprep.subr.mxu0 0.0
    %1318 = vmatpush1.msra.mxu0 0.0
    %1319 = vmatprep.subr.mxu0 0.0
    %1320 = vmatpush1.msra.mxu0 0.0
    %1321 = vmatprep.subr.mxu0 0.0
    %1322 = vmatpush1.msra.mxu0 0.0
    %1323 = vmatprep.subr.mxu0 0.0
    %1324 = vmatpush1.msra.mxu0 0.0
    %1325 = vmatprep.subr.mxu0 0.0
    %1326 = vmatpush1.msra.mxu0 0.0
    %1327 = vmatprep.subr.mxu0 0.0
    %1328 = vmatpush1.msra.mxu0 0.0
    %1329 = vmatprep.subr.mxu0 0.0
    %1330 = vmatpush1.msra.mxu0 0.0
    %1331 = vmatprep.subr.mxu0 0.0
    %1332 = vmatpush1.msra.mxu0 0.0
    %1333 = vmatprep.subr.mxu0 0.0
    %1334 = vmatpush1.msra.mxu0 0.0
    %1335 = vmatprep.subr.mxu0 0.0
    %1336 = vmatpush1.msra.mxu0 0.0
    %1337 = vmatprep.subr.mxu0 0.0
    %1338 = vmatpush1.msra.mxu0 0.0
    %1339 = vmatprep.subr.mxu0 0.0
    %1340 = vmatpush1.msra.mxu0 0.0
    %1341 = vmatprep.subr.mxu0 0.0
    %1342 = vmatpush1.msra.mxu0 0.0
    %1343 = vmatprep.subr.mxu0 0.0
    %1344 = vmatpush1.msra.mxu0 0.0
    %1345 = vmatprep.subr.mxu0 0.0
    %1346 = vmatpush1.msra.mxu0 0.0
    %1347 = vmatprep.subr.mxu0 0.0
    %1348 = vmatpush1.msra.mxu0 0.0
    %1349 = vmatprep.subr.mxu0 0.0
    %1350 = vmatpush1.msra.mxu0 0.0
    %1351 = vmatprep.subr.mxu0 0.0
    %1352 = vmatpush1.msra.mxu0 0.0
    %1353 = vmatprep.subr.mxu0 0.0
    %1354 = vmatpush1.msra.mxu0 0.0
    %1355 = vmatprep.subr.mxu0 0.0
    %1356 = vmatpush1.msra.mxu0 0.0
    %1357 = vmatprep.subr.mxu0 0.0
    %1358 = vmatpush1.msra.mxu0 0.0
    %1359 = vmatprep.subr.mxu0 0.0
    %1360 = vmatpush1.msra.mxu0 0.0
    %1361 = vmatprep.mubr.f32.mxu0 0.0
    %1362 = vmatmul.mubr.f32.gmra.mrb[0].mxu0 %v1295
    %v1363 = vpop.f32.mrb[0].mxu0
    %v1364 = vadd.f32 %v888, %v1363
    %v1365 = vpop.f32.mrb[0].mxu0
    %1366 = vdwg.mxu0
    %v1367 = vxor.u32 %v1364, 2147483648
    %v1368 = vmul.f32 %v1367, 1.442695
    %v1369 = vpow.pop %v1368
    %v1370 = vadd.f32 %v1369, 1.0
    %v1371 = vrcp.pop %v1370
    %v1372 = vmul.f32 1.0, %v1371
    %v1373 = vtanh.pop %v1364
    %v1374 = vmul.f32 %v1372, %v1283
    %1376 = vrot.lane.b32.xlu0 %v1373, 80
    %v1377 = vpop.permute.xlu0 %1376
    %v1379 = vmul.f32 %v1372, %v1377
    %1381 = vrot.lane.b32.xlu0 %v1379, 16
    %v1382 = vpop.permute.xlu0 %1381
    %v1384 = vadd.f32 %v1374, %v1382
    %v1385 = vtanh.pop %v1384
    %1387 = vrot.lane.b32.xlu0 %v1385, 16
    %v1388 = vpop.permute.xlu0 %1387
    %v1390 = vmul.f32 %v1372, %v1388
    %1391 = vrot.lane.b32.xlu0 %v665, 64
    %v1392 = vpop.permute.xlu0 %1391
    %v1394 = vsel %vm44, %v1392, %v1390
    %v1396 = vsel %vm889, %v1394, 0
    %1398 = vmatprep.subr.mxu0 0.0
    %1399 = vmatpush1.msra.mxu0 %v874
    %1400 = vmatprep.subr.mxu0 0.0
    %1401 = vmatpush1.msra.mxu0 %v875
    %1402 = vmatprep.subr.mxu0 0.0
    %1403 = vmatpush1.msra.mxu0 %v876
    %1404 = vmatprep.subr.mxu0 0.0
    %1405 = vmatpush1.msra.mxu0 %v877
    %1406 = vmatprep.subr.mxu0 0.0
    %1407 = vmatpush1.msra.mxu0 %v878
    %1408 = vmatprep.subr.mxu0 0.0
    %1409 = vmatpush1.msra.mxu0 %v879
    %1410 = vmatprep.subr.mxu0 0.0
    %1411 = vmatpush1.msra.mxu0 0.0
    %1412 = vmatprep.subr.mxu0 0.0
    %1413 = vmatpush1.msra.mxu0 0.0
    %1414 = vmatprep.subr.mxu0 0.0
    %1415 = vmatpush1.msra.mxu0 0.0
    %1416 = vmatprep.subr.mxu0 0.0
    %1417 = vmatpush1.msra.mxu0 0.0
    %1418 = vmatprep.subr.mxu0 0.0
    %1419 = vmatpush1.msra.mxu0 0.0
    %1420 = vmatprep.subr.mxu0 0.0
    %1421 = vmatpush1.msra.mxu0 0.0
    %1422 = vmatprep.subr.mxu0 0.0
    %1423 = vmatpush1.msra.mxu0 0.0
    %1424 = vmatprep.subr.mxu0 0.0
    %1425 = vmatpush1.msra.mxu0 0.0
    %1426 = vmatprep.subr.mxu0 0.0
    %1427 = vmatpush1.msra.mxu0 0.0
    %1428 = vmatprep.subr.mxu0 0.0
    %1429 = vmatpush1.msra.mxu0 0.0
    %1430 = vmatprep.subr.mxu0 0.0
    %1431 = vmatpush1.msra.mxu0 0.0
    %1432 = vmatprep.subr.mxu0 0.0
    %1433 = vmatpush1.msra.mxu0 0.0
    %1434 = vmatprep.subr.mxu0 0.0
    %1435 = vmatpush1.msra.mxu0 0.0
    %1436 = vmatprep.subr.mxu0 0.0
    %1437 = vmatpush1.msra.mxu0 0.0
    %1438 = vmatprep.subr.mxu0 0.0
    %1439 = vmatpush1.msra.mxu0 0.0
    %1440 = vmatprep.subr.mxu0 0.0
    %1441 = vmatpush1.msra.mxu0 0.0
    %1442 = vmatprep.subr.mxu0 0.0
    %1443 = vmatpush1.msra.mxu0 0.0
    %1444 = vmatprep.subr.mxu0 0.0
    %1445 = vmatpush1.msra.mxu0 0.0
    %1446 = vmatprep.subr.mxu0 0.0
    %1447 = vmatpush1.msra.mxu0 0.0
    %1448 = vmatprep.subr.mxu0 0.0
    %1449 = vmatpush1.msra.mxu0 0.0
    %1450 = vmatprep.subr.mxu0 0.0
    %1451 = vmatpush1.msra.mxu0 0.0
    %1452 = vmatprep.subr.mxu0 0.0
    %1453 = vmatpush1.msra.mxu0 0.0
    %1454 = vmatprep.subr.mxu0 0.0
    %1455 = vmatpush1.msra.mxu0 0.0
    %1456 = vmatprep.subr.mxu0 0.0
    %1457 = vmatpush1.msra.mxu0 0.0
    %1458 = vmatprep.subr.mxu0 0.0
    %1459 = vmatpush1.msra.mxu0 0.0
    %1460 = vmatprep.subr.mxu0 0.0
    %1461 = vmatpush1.msra.mxu0 0.0
    %1462 = vmatprep.mubr.f32.mxu0 0.0
    %1463 = vmatmul.mubr.f32.gmra.mrb[0].mxu0 %v1396
    %v1464 = vpop.f32.mrb[0].mxu0
    %v1465 = vadd.f32 %v888, %v1464
    %v1466 = vpop.f32.mrb[0].mxu0
    %1467 = vdwg.mxu0
    %v1468 = vxor.u32 %v1465, 2147483648
    %v1469 = vmul.f32 %v1468, 1.442695
    %v1470 = vpow.pop %v1469
    %v1471 = vadd.f32 %v1470, 1.0
    %v1472 = vrcp.pop %v1471
    %v1473 = vmul.f32 1.0, %v1472
    %v1474 = vtanh.pop %v1465
    %v1475 = vmul.f32 %v1473, %v1384
    %1477 = vrot.lane.b32.xlu0 %v1474, 80
    %v1478 = vpop.permute.xlu0 %1477
    %v1480 = vmul.f32 %v1473, %v1478
    %1482 = vrot.lane.b32.xlu0 %v1480, 16
    %v1483 = vpop.permute.xlu0 %1482
    %v1485 = vadd.f32 %v1475, %v1483
    %v1486 = vtanh.pop %v1485
    %1488 = vrot.lane.b32.xlu0 %v1486, 16
    %v1489 = vpop.permute.xlu0 %1488
    %v1491 = vmul.f32 %v1473, %v1489
    %1492 = vrot.lane.b32.xlu0 %v769, 64
    %v1493 = vpop.permute.xlu0 %1492
    %v1495 = vsel %vm44, %v1493, %v1491
    %v1497 = vsel %vm889, %v1495, 0
    %1499 = vmatprep.subr.mxu0 0.0
    %1500 = vmatpush1.msra.mxu0 %v874
    %1501 = vmatprep.subr.mxu0 0.0
    %1502 = vmatpush1.msra.mxu0 %v875
    %1503 = vmatprep.subr.mxu0 0.0
    %1504 = vmatpush1.msra.mxu0 %v876
    %1505 = vmatprep.subr.mxu0 0.0
    %1506 = vmatpush1.msra.mxu0 %v877
    %1507 = vmatprep.subr.mxu0 0.0
    %1508 = vmatpush1.msra.mxu0 %v878
    %1509 = vmatprep.subr.mxu0 0.0
    %1510 = vmatpush1.msra.mxu0 %v879
    %1511 = vmatprep.subr.mxu0 0.0
    %1512 = vmatpush1.msra.mxu0 0.0
    %1513 = vmatprep.subr.mxu0 0.0
    %1514 = vmatpush1.msra.mxu0 0.0
    %1515 = vmatprep.subr.mxu0 0.0
    %1516 = vmatpush1.msra.mxu0 0.0
    %1517 = vmatprep.subr.mxu0 0.0
    %1518 = vmatpush1.msra.mxu0 0.0
    %1519 = vmatprep.subr.mxu0 0.0
    %1520 = vmatpush1.msra.mxu0 0.0
    %1521 = vmatprep.subr.mxu0 0.0
    %1522 = vmatpush1.msra.mxu0 0.0
    %1523 = vmatprep.subr.mxu0 0.0
    %1524 = vmatpush1.msra.mxu0 0.0
    %1525 = vmatprep.subr.mxu0 0.0
    %1526 = vmatpush1.msra.mxu0 0.0
    %1527 = vmatprep.subr.mxu0 0.0
    %1528 = vmatpush1.msra.mxu0 0.0
    %1529 = vmatprep.subr.mxu0 0.0
    %1530 = vmatpush1.msra.mxu0 0.0
    %1531 = vmatprep.subr.mxu0 0.0
    %1532 = vmatpush1.msra.mxu0 0.0
    %1533 = vmatprep.subr.mxu0 0.0
    %1534 = vmatpush1.msra.mxu0 0.0
    %1535 = vmatprep.subr.mxu0 0.0
    %1536 = vmatpush1.msra.mxu0 0.0
    %1537 = vmatprep.subr.mxu0 0.0
    %1538 = vmatpush1.msra.mxu0 0.0
    %1539 = vmatprep.subr.mxu0 0.0
    %1540 = vmatpush1.msra.mxu0 0.0
    %1541 = vmatprep.subr.mxu0 0.0
    %1542 = vmatpush1.msra.mxu0 0.0
    %1543 = vmatprep.subr.mxu0 0.0
    %1544 = vmatpush1.msra.mxu0 0.0
    %1545 = vmatprep.subr.mxu0 0.0
    %1546 = vmatpush1.msra.mxu0 0.0
    %1547 = vmatprep.subr.mxu0 0.0
    %1548 = vmatpush1.msra.mxu0 0.0
    %1549 = vmatprep.subr.mxu0 0.0
    %1550 = vmatpush1.msra.mxu0 0.0
    %1551 = vmatprep.subr.mxu0 0.0
    %1552 = vmatpush1.msra.mxu0 0.0
    %1553 = vmatprep.subr.mxu0 0.0
    %1554 = vmatpush1.msra.mxu0 0.0
    %1555 = vmatprep.subr.mxu0 0.0
    %1556 = vmatpush1.msra.mxu0 0.0
    %1557 = vmatprep.subr.mxu0 0.0
    %1558 = vmatpush1.msra.mxu0 0.0
    %1559 = vmatprep.subr.mxu0 0.0
    %1560 = vmatpush1.msra.mxu0 0.0
    %1561 = vmatprep.subr.mxu0 0.0
    %1562 = vmatpush1.msra.mxu0 0.0
    %1563 = vmatprep.mubr.f32.mxu0 0.0
    %1564 = vmatmul.mubr.f32.gmra.mrb[0].mxu0 %v1497
    %v1565 = vpop.f32.mrb[0].mxu0
    %v1566 = vadd.f32 %v888, %v1565
    %v1567 = vpop.f32.mrb[0].mxu0
    %1568 = vdwg.mxu0
    %v1569 = vxor.u32 %v1566, 2147483648
    %v1570 = vmul.f32 %v1569, 1.442695
    %v1571 = vpow.pop %v1570
    %v1572 = vadd.f32 %v1571, 1.0
    %v1573 = vrcp.pop %v1572
    %v1574 = vmul.f32 1.0, %v1573
    %v1575 = vtanh.pop %v1566
    %v1576 = vmul.f32 %v1574, %v1485
    %1578 = vrot.lane.b32.xlu0 %v1575, 80
    %v1579 = vpop.permute.xlu0 %1578
    %v1581 = vmul.f32 %v1574, %v1579
    %1583 = vrot.lane.b32.xlu0 %v1581, 16
    %v1584 = vpop.permute.xlu0 %1583
    %v1586 = vadd.f32 %v1576, %v1584
    %v1587 = vtanh.pop %v1586
    %1589 = vrot.lane.b32.xlu0 %v1587, 16
    %v1590 = vpop.permute.xlu0 %1589
    %v1592 = vmul.f32 %v1574, %v1590
    %1594 = vrot.lane.b32.xlu0 %v873, 64
    %v1595 = vpop.permute.xlu0 %1594
    %v1597 = vsel %vm44, %v1595, %v1592
    %v1599 = vsel %vm889, %v1597, 0
    %1601 = vmatprep.subr.mxu0 0.0
    %1602 = vmatpush1.msra.mxu0 %v874
    %1603 = vmatprep.subr.mxu0 0.0
    %1604 = vmatpush1.msra.mxu0 %v875
    %1605 = vmatprep.subr.mxu0 0.0
    %1606 = vmatpush1.msra.mxu0 %v876
    %1607 = vmatprep.subr.mxu0 0.0
    %1608 = vmatpush1.msra.mxu0 %v877
    %1609 = vmatprep.subr.mxu0 0.0
    %1610 = vmatpush1.msra.mxu0 %v878
    %1611 = vmatprep.subr.mxu0 0.0
    %1612 = vmatpush1.msra.mxu0 %v879
    %1613 = vmatprep.subr.mxu0 0.0
    %1614 = vmatpush1.msra.mxu0 0.0
    %1615 = vmatprep.subr.mxu0 0.0
    %1616 = vmatpush1.msra.mxu0 0.0
    %1617 = vmatprep.subr.mxu0 0.0
    %1618 = vmatpush1.msra.mxu0 0.0
    %1619 = vmatprep.subr.mxu0 0.0
    %1620 = vmatpush1.msra.mxu0 0.0
    %1621 = vmatprep.subr.mxu0 0.0
    %1622 = vmatpush1.msra.mxu0 0.0
    %1623 = vmatprep.subr.mxu0 0.0
    %1624 = vmatpush1.msra.mxu0 0.0
    %1625 = vmatprep.subr.mxu0 0.0
    %1626 = vmatpush1.msra.mxu0 0.0
    %1627 = vmatprep.subr.mxu0 0.0
    %1628 = vmatpush1.msra.mxu0 0.0
    %1629 = vmatprep.subr.mxu0 0.0
    %1630 = vmatpush1.msra.mxu0 0.0
    %1631 = vmatprep.subr.mxu0 0.0
    %1632 = vmatpush1.msra.mxu0 0.0
    %1633 = vmatprep.subr.mxu0 0.0
    %1634 = vmatpush1.msra.mxu0 0.0
    %1635 = vmatprep.subr.mxu0 0.0
    %1636 = vmatpush1.msra.mxu0 0.0
    %1637 = vmatprep.subr.mxu0 0.0
    %1638 = vmatpush1.msra.mxu0 0.0
    %1639 = vmatprep.subr.mxu0 0.0
    %1640 = vmatpush1.msra.mxu0 0.0
    %1641 = vmatprep.subr.mxu0 0.0
    %1642 = vmatpush1.msra.mxu0 0.0
    %1643 = vmatprep.subr.mxu0 0.0
    %1644 = vmatpush1.msra.mxu0 0.0
    %1645 = vmatprep.subr.mxu0 0.0
    %1646 = vmatpush1.msra.mxu0 0.0
    %1647 = vmatprep.subr.mxu0 0.0
    %1648 = vmatpush1.msra.mxu0 0.0
    %1649 = vmatprep.subr.mxu0 0.0
    %1650 = vmatpush1.msra.mxu0 0.0
    %1651 = vmatprep.subr.mxu0 0.0
    %1652 = vmatpush1.msra.mxu0 0.0
    %1653 = vmatprep.subr.mxu0 0.0
    %1654 = vmatpush1.msra.mxu0 0.0
    %1655 = vmatprep.subr.mxu0 0.0
    %1656 = vmatpush1.msra.mxu0 0.0
    %1657 = vmatprep.subr.mxu0 0.0
    %1658 = vmatpush1.msra.mxu0 0.0
    %1659 = vmatprep.subr.mxu0 0.0
    %1660 = vmatpush1.msra.mxu0 0.0
    %1661 = vmatprep.subr.mxu0 0.0
    %1662 = vmatpush1.msra.mxu0 0.0
    %1663 = vmatprep.subr.mxu0 0.0
    %1664 = vmatpush1.msra.mxu0 0.0
    %1665 = vmatprep.mubr.f32.mxu0 0.0
    %1666 = vmatmul.mubr.f32.gmra.mrb[0].mxu0 %v1599
    %v1667 = vpop.f32.mrb[0].mxu0
    %v1668 = vadd.f32 %v888, %v1667
    %v1669 = vpop.f32.mrb[0].mxu0
    %1670 = vdwg.mxu0
    %v1671 = vxor.u32 %v1668, 2147483648
    %v1672 = vmul.f32 %v1671, 1.442695
    %v1673 = vpow.pop %v1672
    %v1674 = vadd.f32 %v1673, 1.0
    %v1675 = vrcp.pop %v1674
    %v1676 = vmul.f32 1.0, %v1675
    %v1677 = vtanh.pop %v1668
    %v1678 = vmul.f32 %v1676, %v1586
    %1680 = vrot.lane.b32.xlu0 %v1677, 80
    %v1681 = vpop.permute.xlu0 %1680
    %v1683 = vmul.f32 %v1676, %v1681
    %1685 = vrot.lane.b32.xlu0 %v1683, 16
    %v1686 = vpop.permute.xlu0 %1685
    %v1688 = vadd.f32 %v1678, %v1686
    %v1689 = vtanh.pop %v1688
    %1691 = vrot.lane.b32.xlu0 %v1689, 16
    %v1692 = vpop.permute.xlu0 %1691
    %v1694 = vmul.f32 %v1676, %v1692
    %v1695 = vld [vmem:[#allocation2 + $0x70] sm:$0xff]
    %v1696 = vld [vmem:[#allocation2 + $0x78] sm:$0xff]
    %v1697 = vld [vmem:[#allocation2 + $0x80] sm:$0xff]
    %v1698 = vld [vmem:[%s3 + $0x2] sm:$0x1]
    %1700 = vrot.lane.b32.xlu0 %v986, 96
    %v1701 = vpop.permute.xlu0 %1700
    %vm1703 = vcmask 130048
    %v1704 = vsel %vm1703, %v1701, 0.0
    %v1705 = vlaneseq
    %v1706 = vshrl.u32 %v1705, 7
    %v1707 = vsub.s32 0, %v1706
    %v1708 = vrot.slane %v1698, %v1707
    %vm1709 = vcmask 195584
    %v1711 = vsel %vm1709, %v1704, 0
    %1713 = vmatprep.subr.mxu0 0.0
    %1714 = vmatpush1.msra.mxu0 %v1695
    %1715 = vmatprep.subr.mxu0 0.0
    %1716 = vmatpush1.msra.mxu0 %v1696
    %1717 = vmatprep.subr.mxu0 0.0
    %1718 = vmatpush1.msra.mxu0 %v1697
    %1719 = vmatprep.subr.mxu0 0.0
    %1720 = vmatpush1.msra.mxu0 0.0
    %1721 = vmatprep.subr.mxu0 0.0
    %1722 = vmatpush1.msra.mxu0 0.0
    %1723 = vmatprep.subr.mxu0 0.0
    %1724 = vmatpush1.msra.mxu0 0.0
    %1725 = vmatprep.subr.mxu0 0.0
    %1726 = vmatpush1.msra.mxu0 0.0
    %1727 = vmatprep.subr.mxu0 0.0
    %1728 = vmatpush1.msra.mxu0 0.0
    %1729 = vmatprep.subr.mxu0 0.0
    %1730 = vmatpush1.msra.mxu0 0.0
    %1731 = vmatprep.subr.mxu0 0.0
    %1732 = vmatpush1.msra.mxu0 0.0
    %1733 = vmatprep.subr.mxu0 0.0
    %1734 = vmatpush1.msra.mxu0 0.0
    %1735 = vmatprep.subr.mxu0 0.0
    %1736 = vmatpush1.msra.mxu0 0.0
    %1737 = vmatprep.subr.mxu0 0.0
    %1738 = vmatpush1.msra.mxu0 0.0
    %1739 = vmatprep.subr.mxu0 0.0
    %1740 = vmatpush1.msra.mxu0 0.0
    %1741 = vmatprep.subr.mxu0 0.0
    %1742 = vmatpush1.msra.mxu0 0.0
    %1743 = vmatprep.subr.mxu0 0.0
    %1744 = vmatpush1.msra.mxu0 0.0
    %1745 = vmatprep.subr.mxu0 0.0
    %1746 = vmatpush1.msra.mxu0 0.0
    %1747 = vmatprep.subr.mxu0 0.0
    %1748 = vmatpush1.msra.mxu0 0.0
    %1749 = vmatprep.subr.mxu0 0.0
    %1750 = vmatpush1.msra.mxu0 0.0
    %1751 = vmatprep.subr.mxu0 0.0
    %1752 = vmatpush1.msra.mxu0 0.0
    %1753 = vmatprep.subr.mxu0 0.0
    %1754 = vmatpush1.msra.mxu0 0.0
    %1755 = vmatprep.subr.mxu0 0.0
    %1756 = vmatpush1.msra.mxu0 0.0
    %1757 = vmatprep.subr.mxu0 0.0
    %1758 = vmatpush1.msra.mxu0 0.0
    %1759 = vmatprep.subr.mxu0 0.0
    %1760 = vmatpush1.msra.mxu0 0.0
    %1761 = vmatprep.subr.mxu0 0.0
    %1762 = vmatpush1.msra.mxu0 0.0
    %1763 = vmatprep.subr.mxu0 0.0
    %1764 = vmatpush1.msra.mxu0 0.0
    %1765 = vmatprep.subr.mxu0 0.0
    %1766 = vmatpush1.msra.mxu0 0.0
    %1767 = vmatprep.subr.mxu0 0.0
    %1768 = vmatpush1.msra.mxu0 0.0
    %1769 = vmatprep.subr.mxu0 0.0
    %1770 = vmatpush1.msra.mxu0 0.0
    %1771 = vmatprep.subr.mxu0 0.0
    %1772 = vmatpush1.msra.mxu0 0.0
    %1773 = vmatprep.subr.mxu0 0.0
    %1774 = vmatpush1.msra.mxu0 0.0
    %1775 = vmatprep.subr.mxu0 0.0
    %1776 = vmatpush1.msra.mxu0 0.0
    %1777 = vmatprep.mubr.f32.mxu0 0.0
    %1778 = vmatmul.mubr.f32.gmra.mrb[0].mxu0 %v1711
    %v1779 = vpop.f32.mrb[0].mxu0
    %v1780 = vadd.f32 %v1708, %v1779
    %v1781 = vpop.f32.mrb[0].mxu0
    %1782 = vdwg.mxu0
    %v1783 = vxor.u32 %v1780, 2147483648
    %v1784 = vmul.f32 %v1783, 1.442695
    %v1785 = vpow.pop %v1784
    %v1786 = vadd.f32 %v1785, 1.0
    %v1787 = vrcp.pop %v1786
    %v1788 = vmul.f32 1.0, %v1787
    %v1789 = vtanh.pop %v1780
    %v1790 = vmul.f32 %v1788, 0.0
    %1792 = vrot.lane.b32.xlu0 %v1789, 104
    %v1793 = vpop.permute.xlu0 %1792
    %v1795 = vmul.f32 %v1788, %v1793
    %1797 = vrot.lane.b32.xlu0 %v1795, 8
    %v1798 = vpop.permute.xlu0 %1797
    %v1800 = vadd.f32 %v1790, %v1798
    %v1801 = vtanh.pop %v1800
    %1803 = vrot.lane.b32.xlu0 %v1801, 8
    %v1804 = vpop.permute.xlu0 %1803
    %v1806 = vmul.f32 %v1788, %v1804
    %1808 = vrot.lane.b32.xlu0 %v1087, 96
    %v1809 = vpop.permute.xlu0 %1808
    %v1811 = vsel %vm1703, %v1809, %v1806
    %v1813 = vsel %vm1709, %v1811, 0
    %1815 = vmatprep.subr.mxu0 0.0
    %1816 = vmatpush1.msra.mxu0 %v1695
    %1817 = vmatprep.subr.mxu0 0.0
    %1818 = vmatpush1.msra.mxu0 %v1696
    %1819 = vmatprep.subr.mxu0 0.0
    %1820 = vmatpush1.msra.mxu0 %v1697
    %1821 = vmatprep.subr.mxu0 0.0
    %1822 = vmatpush1.msra.mxu0 0.0
    %1823 = vmatprep.subr.mxu0 0.0
    %1824 = vmatpush1.msra.mxu0 0.0
    %1825 = vmatprep.subr.mxu0 0.0
    %1826 = vmatpush1.msra.mxu0 0.0
    %1827 = vmatprep.subr.mxu0 0.0
    %1828 = vmatpush1.msra.mxu0 0.0
    %1829 = vmatprep.subr.mxu0 0.0
    %1830 = vmatpush1.msra.mxu0 0.0
    %1831 = vmatprep.subr.mxu0 0.0
    %1832 = vmatpush1.msra.mxu0 0.0
    %1833 = vmatprep.subr.mxu0 0.0
    %1834 = vmatpush1.msra.mxu0 0.0
    %1835 = vmatprep.subr.mxu0 0.0
    %1836 = vmatpush1.msra.mxu0 0.0
    %1837 = vmatprep.subr.mxu0 0.0
    %1838 = vmatpush1.msra.mxu0 0.0
    %1839 = vmatprep.subr.mxu0 0.0
    %1840 = vmatpush1.msra.mxu0 0.0
    %1841 = vmatprep.subr.mxu0 0.0
    %1842 = vmatpush1.msra.mxu0 0.0
    %1843 = vmatprep.subr.mxu0 0.0
    %1844 = vmatpush1.msra.mxu0 0.0
    %1845 = vmatprep.subr.mxu0 0.0
    %1846 = vmatpush1.msra.mxu0 0.0
    %1847 = vmatprep.subr.mxu0 0.0
    %1848 = vmatpush1.msra.mxu0 0.0
    %1849 = vmatprep.subr.mxu0 0.0
    %1850 = vmatpush1.msra.mxu0 0.0
    %1851 = vmatprep.subr.mxu0 0.0
    %1852 = vmatpush1.msra.mxu0 0.0
    %1853 = vmatprep.subr.mxu0 0.0
    %1854 = vmatpush1.msra.mxu0 0.0
    %1855 = vmatprep.subr.mxu0 0.0
    %1856 = vmatpush1.msra.mxu0 0.0
    %1857 = vmatprep.subr.mxu0 0.0
    %1858 = vmatpush1.msra.mxu0 0.0
    %1859 = vmatprep.subr.mxu0 0.0
    %1860 = vmatpush1.msra.mxu0 0.0
    %1861 = vmatprep.subr.mxu0 0.0
    %1862 = vmatpush1.msra.mxu0 0.0
    %1863 = vmatprep.subr.mxu0 0.0
    %1864 = vmatpush1.msra.mxu0 0.0
    %1865 = vmatprep.subr.mxu0 0.0
    %1866 = vmatpush1.msra.mxu0 0.0
    %1867 = vmatprep.subr.mxu0 0.0
    %1868 = vmatpush1.msra.mxu0 0.0
    %1869 = vmatprep.subr.mxu0 0.0
    %1870 = vmatpush1.msra.mxu0 0.0
    %1871 = vmatprep.subr.mxu0 0.0
    %1872 = vmatpush1.msra.mxu0 0.0
    %1873 = vmatprep.subr.mxu0 0.0
    %1874 = vmatpush1.msra.mxu0 0.0
    %1875 = vmatprep.subr.mxu0 0.0
    %1876 = vmatpush1.msra.mxu0 0.0
    %1877 = vmatprep.subr.mxu0 0.0
    %1878 = vmatpush1.msra.mxu0 0.0
    %1879 = vmatprep.mubr.f32.mxu0 0.0
    %1880 = vmatmul.mubr.f32.gmra.mrb[0].mxu0 %v1813
    %v1881 = vpop.f32.mrb[0].mxu0
    %v1882 = vadd.f32 %v1708, %v1881
    %v1883 = vpop.f32.mrb[0].mxu0
    %1884 = vdwg.mxu0
    %v1885 = vxor.u32 %v1882, 2147483648
    %v1886 = vmul.f32 %v1885, 1.442695
    %v1887 = vpow.pop %v1886
    %v1888 = vadd.f32 %v1887, 1.0
    %v1889 = vrcp.pop %v1888
    %v1890 = vmul.f32 1.0, %v1889
    %v1891 = vtanh.pop %v1882
    %v1892 = vmul.f32 %v1890, %v1800
    %1894 = vrot.lane.b32.xlu0 %v1891, 104
    %v1895 = vpop.permute.xlu0 %1894
    %v1897 = vmul.f32 %v1890, %v1895
    %1899 = vrot.lane.b32.xlu0 %v1897, 8
    %v1900 = vpop.permute.xlu0 %1899
    %v1902 = vadd.f32 %v1892, %v1900
    %v1903 = vtanh.pop %v1902
    %1905 = vrot.lane.b32.xlu0 %v1903, 8
    %v1906 = vpop.permute.xlu0 %1905
    %v1908 = vmul.f32 %v1890, %v1906
    %1910 = vrot.lane.b32.xlu0 %v1188, 96
    %v1911 = vpop.permute.xlu0 %1910
    %v1913 = vsel %vm1703, %v1911, %v1908
    %v1915 = vsel %vm1709, %v1913, 0
    %1917 = vmatprep.subr.mxu0 0.0
    %1918 = vmatpush1.msra.mxu0 %v1695
    %1919 = vmatprep.subr.mxu0 0.0
    %1920 = vmatpush1.msra.mxu0 %v1696
    %1921 = vmatprep.subr.mxu0 0.0
    %1922 = vmatpush1.msra.mxu0 %v1697
    %1923 = vmatprep.subr.mxu0 0.0
    %1924 = vmatpush1.msra.mxu0 0.0
    %1925 = vmatprep.subr.mxu0 0.0
    %1926 = vmatpush1.msra.mxu0 0.0
    %1927 = vmatprep.subr.mxu0 0.0
    %1928 = vmatpush1.msra.mxu0 0.0
    %1929 = vmatprep.subr.mxu0 0.0
    %1930 = vmatpush1.msra.mxu0 0.0
    %1931 = vmatprep.subr.mxu0 0.0
    %1932 = vmatpush1.msra.mxu0 0.0
    %1933 = vmatprep.subr.mxu0 0.0
    %1934 = vmatpush1.msra.mxu0 0.0
    %1935 = vmatprep.subr.mxu0 0.0
    %1936 = vmatpush1.msra.mxu0 0.0
    %1937 = vmatprep.subr.mxu0 0.0
    %1938 = vmatpush1.msra.mxu0 0.0
    %1939 = vmatprep.subr.mxu0 0.0
    %1940 = vmatpush1.msra.mxu0 0.0
    %1941 = vmatprep.subr.mxu0 0.0
    %1942 = vmatpush1.msra.mxu0 0.0
    %1943 = vmatprep.subr.mxu0 0.0
    %1944 = vmatpush1.msra.mxu0 0.0
    %1945 = vmatprep.subr.mxu0 0.0
    %1946 = vmatpush1.msra.mxu0 0.0
    %1947 = vmatprep.subr.mxu0 0.0
    %1948 = vmatpush1.msra.mxu0 0.0
    %1949 = vmatprep.subr.mxu0 0.0
    %1950 = vmatpush1.msra.mxu0 0.0
    %1951 = vmatprep.subr.mxu0 0.0
    %1952 = vmatpush1.msra.mxu0 0.0
    %1953 = vmatprep.subr.mxu0 0.0
    %1954 = vmatpush1.msra.mxu0 0.0
    %1955 = vmatprep.subr.mxu0 0.0
    %1956 = vmatpush1.msra.mxu0 0.0
    %1957 = vmatprep.subr.mxu0 0.0
    %1958 = vmatpush1.msra.mxu0 0.0
    %1959 = vmatprep.subr.mxu0 0.0
    %1960 = vmatpush1.msra.mxu0 0.0
    %1961 = vmatprep.subr.mxu0 0.0
    %1962 = vmatpush1.msra.mxu0 0.0
    %1963 = vmatprep.subr.mxu0 0.0
    %1964 = vmatpush1.msra.mxu0 0.0
    %1965 = vmatprep.subr.mxu0 0.0
    %1966 = vmatpush1.msra.mxu0 0.0
    %1967 = vmatprep.subr.mxu0 0.0
    %1968 = vmatpush1.msra.mxu0 0.0
    %1969 = vmatprep.subr.mxu0 0.0
    %1970 = vmatpush1.msra.mxu0 0.0
    %1971 = vmatprep.subr.mxu0 0.0
    %1972 = vmatpush1.msra.mxu0 0.0
    %1973 = vmatprep.subr.mxu0 0.0
    %1974 = vmatpush1.msra.mxu0 0.0
    %1975 = vmatprep.subr.mxu0 0.0
    %1976 = vmatpush1.msra.mxu0 0.0
    %1977 = vmatprep.subr.mxu0 0.0
    %1978 = vmatpush1.msra.mxu0 0.0
    %1979 = vmatprep.subr.mxu0 0.0
    %1980 = vmatpush1.msra.mxu0 0.0
    %1981 = vmatprep.mubr.f32.mxu0 0.0
    %1982 = vmatmul.mubr.f32.gmra.mrb[0].mxu0 %v1915
    %v1983 = vpop.f32.mrb[0].mxu0
    %v1984 = vadd.f32 %v1708, %v1983
    %v1985 = vpop.f32.mrb[0].mxu0
    %1986 = vdwg.mxu0
    %v1987 = vxor.u32 %v1984, 2147483648
    %v1988 = vmul.f32 %v1987, 1.442695
    %v1989 = vpow.pop %v1988
    %v1990 = vadd.f32 %v1989, 1.0
    %v1991 = vrcp.pop %v1990
    %v1992 = vmul.f32 1.0, %v1991
    %v1993 = vtanh.pop %v1984
    %v1994 = vmul.f32 %v1992, %v1902
    %1996 = vrot.lane.b32.xlu0 %v1993, 104
    %v1997 = vpop.permute.xlu0 %1996
    %v1999 = vmul.f32 %v1992, %v1997
    %2001 = vrot.lane.b32.xlu0 %v1999, 8
    %v2002 = vpop.permute.xlu0 %2001
    %v2004 = vadd.f32 %v1994, %v2002
    %v2005 = vtanh.pop %v2004
    %2007 = vrot.lane.b32.xlu0 %v2005, 8
    %v2008 = vpop.permute.xlu0 %2007
    %v2010 = vmul.f32 %v1992, %v2008
    %2012 = vrot.lane.b32.xlu0 %v1289, 96
    %v2013 = vpop.permute.xlu0 %2012
    %v2015 = vsel %vm1703, %v2013, %v2010
    %v2017 = vsel %vm1709, %v2015, 0
    %2019 = vmatprep.subr.mxu0 0.0
    %2020 = vmatpush1.msra.mxu0 %v1695
    %2021 = vmatprep.subr.mxu0 0.0
    %2022 = vmatpush1.msra.mxu0 %v1696
    %2023 = vmatprep.subr.mxu0 0.0
    %2024 = vmatpush1.msra.mxu0 %v1697
    %2025 = vmatprep.subr.mxu0 0.0
    %2026 = vmatpush1.msra.mxu0 0.0
    %2027 = vmatprep.subr.mxu0 0.0
    %2028 = vmatpush1.msra.mxu0 0.0
    %2029 = vmatprep.subr.mxu0 0.0
    %2030 = vmatpush1.msra.mxu0 0.0
    %2031 = vmatprep.subr.mxu0 0.0
    %2032 = vmatpush1.msra.mxu0 0.0
    %2033 = vmatprep.subr.mxu0 0.0
    %2034 = vmatpush1.msra.mxu0 0.0
    %2035 = vmatprep.subr.mxu0 0.0
    %2036 = vmatpush1.msra.mxu0 0.0
    %2037 = vmatprep.subr.mxu0 0.0
    %2038 = vmatpush1.msra.mxu0 0.0
    %2039 = vmatprep.subr.mxu0 0.0
    %2040 = vmatpush1.msra.mxu0 0.0
    %2041 = vmatprep.subr.mxu0 0.0
    %2042 = vmatpush1.msra.mxu0 0.0
    %2043 = vmatprep.subr.mxu0 0.0
    %2044 = vmatpush1.msra.mxu0 0.0
    %2045 = vmatprep.subr.mxu0 0.0
    %2046 = vmatpush1.msra.mxu0 0.0
    %2047 = vmatprep.subr.mxu0 0.0
    %2048 = vmatpush1.msra.mxu0 0.0
    %2049 = vmatprep.subr.mxu0 0.0
    %2050 = vmatpush1.msra.mxu0 0.0
    %2051 = vmatprep.subr.mxu0 0.0
    %2052 = vmatpush1.msra.mxu0 0.0
    %2053 = vmatprep.subr.mxu0 0.0
    %2054 = vmatpush1.msra.mxu0 0.0
    %2055 = vmatprep.subr.mxu0 0.0
    %2056 = vmatpush1.msra.mxu0 0.0
    %2057 = vmatprep.subr.mxu0 0.0
    %2058 = vmatpush1.msra.mxu0 0.0
    %2059 = vmatprep.subr.mxu0 0.0
    %2060 = vmatpush1.msra.mxu0 0.0
    %2061 = vmatprep.subr.mxu0 0.0
    %2062 = vmatpush1.msra.mxu0 0.0
    %2063 = vmatprep.subr.mxu0 0.0
    %2064 = vmatpush1.msra.mxu0 0.0
    %2065 = vmatprep.subr.mxu0 0.0
    %2066 = vmatpush1.msra.mxu0 0.0
    %2067 = vmatprep.subr.mxu0 0.0
    %2068 = vmatpush1.msra.mxu0 0.0
    %2069 = vmatprep.subr.mxu0 0.0
    %2070 = vmatpush1.msra.mxu0 0.0
    %2071 = vmatprep.subr.mxu0 0.0
    %2072 = vmatpush1.msra.mxu0 0.0
    %2073 = vmatprep.subr.mxu0 0.0
    %2074 = vmatpush1.msra.mxu0 0.0
    %2075 = vmatprep.subr.mxu0 0.0
    %2076 = vmatpush1.msra.mxu0 0.0
    %2077 = vmatprep.subr.mxu0 0.0
    %2078 = vmatpush1.msra.mxu0 0.0
    %2079 = vmatprep.subr.mxu0 0.0
    %2080 = vmatpush1.msra.mxu0 0.0
    %2081 = vmatprep.subr.mxu0 0.0
    %2082 = vmatpush1.msra.mxu0 0.0
    %2083 = vmatprep.mubr.f32.mxu0 0.0
    %2084 = vmatmul.mubr.f32.gmra.mrb[0].mxu0 %v2017
    %v2085 = vpop.f32.mrb[0].mxu0
    %v2086 = vadd.f32 %v1708, %v2085
    %v2087 = vpop.f32.mrb[0].mxu0
    %2088 = vdwg.mxu0
    %v2089 = vxor.u32 %v2086, 2147483648
    %v2090 = vmul.f32 %v2089, 1.442695
    %v2091 = vpow.pop %v2090
    %v2092 = vadd.f32 %v2091, 1.0
    %v2093 = vrcp.pop %v2092
    %v2094 = vmul.f32 1.0, %v2093
    %v2095 = vtanh.pop %v2086
    %v2096 = vmul.f32 %v2094, %v2004
    %2098 = vrot.lane.b32.xlu0 %v2095, 104
    %v2099 = vpop.permute.xlu0 %2098
    %v2101 = vmul.f32 %v2094, %v2099
    %2103 = vrot.lane.b32.xlu0 %v2101, 8
    %v2104 = vpop.permute.xlu0 %2103
    %v2106 = vadd.f32 %v2096, %v2104
    %v2107 = vtanh.pop %v2106
    %2109 = vrot.lane.b32.xlu0 %v2107, 8
    %v2110 = vpop.permute.xlu0 %2109
    %v2112 = vmul.f32 %v2094, %v2110
    %2114 = vrot.lane.b32.xlu0 %v1390, 96
    %v2115 = vpop.permute.xlu0 %2114
    %v2117 = vsel %vm1703, %v2115, %v2112
    %v2119 = vsel %vm1709, %v2117, 0
    %2121 = vmatprep.subr.mxu0 0.0
    %2122 = vmatpush1.msra.mxu0 %v1695
    %2123 = vmatprep.subr.mxu0 0.0
    %2124 = vmatpush1.msra.mxu0 %v1696
    %2125 = vmatprep.subr.mxu0 0.0
    %2126 = vmatpush1.msra.mxu0 %v1697
    %2127 = vmatprep.subr.mxu0 0.0
    %2128 = vmatpush1.msra.mxu0 0.0
    %2129 = vmatprep.subr.mxu0 0.0
    %2130 = vmatpush1.msra.mxu0 0.0
    %2131 = vmatprep.subr.mxu0 0.0
    %2132 = vmatpush1.msra.mxu0 0.0
    %2133 = vmatprep.subr.mxu0 0.0
    %2134 = vmatpush1.msra.mxu0 0.0
    %2135 = vmatprep.subr.mxu0 0.0
    %2136 = vmatpush1.msra.mxu0 0.0
    %2137 = vmatprep.subr.mxu0 0.0
    %2138 = vmatpush1.msra.mxu0 0.0
    %2139 = vmatprep.subr.mxu0 0.0
    %2140 = vmatpush1.msra.mxu0 0.0
    %2141 = vmatprep.subr.mxu0 0.0
    %2142 = vmatpush1.msra.mxu0 0.0
    %2143 = vmatprep.subr.mxu0 0.0
    %2144 = vmatpush1.msra.mxu0 0.0
    %2145 = vmatprep.subr.mxu0 0.0
    %2146 = vmatpush1.msra.mxu0 0.0
    %2147 = vmatprep.subr.mxu0 0.0
    %2148 = vmatpush1.msra.mxu0 0.0
    %2149 = vmatprep.subr.mxu0 0.0
    %2150 = vmatpush1.msra.mxu0 0.0
    %2151 = vmatprep.subr.mxu0 0.0
    %2152 = vmatpush1.msra.mxu0 0.0
    %2153 = vmatprep.subr.mxu0 0.0
    %2154 = vmatpush1.msra.mxu0 0.0
    %2155 = vmatprep.subr.mxu0 0.0
    %2156 = vmatpush1.msra.mxu0 0.0
    %2157 = vmatprep.subr.mxu0 0.0
    %2158 = vmatpush1.msra.mxu0 0.0
    %2159 = vmatprep.subr.mxu0 0.0
    %2160 = vmatpush1.msra.mxu0 0.0
    %2161 = vmatprep.subr.mxu0 0.0
    %2162 = vmatpush1.msra.mxu0 0.0
    %2163 = vmatprep.subr.mxu0 0.0
    %2164 = vmatpush1.msra.mxu0 0.0
    %2165 = vmatprep.subr.mxu0 0.0
    %2166 = vmatpush1.msra.mxu0 0.0
    %2167 = vmatprep.subr.mxu0 0.0
    %2168 = vmatpush1.msra.mxu0 0.0
    %2169 = vmatprep.subr.mxu0 0.0
    %2170 = vmatpush1.msra.mxu0 0.0
    %2171 = vmatprep.subr.mxu0 0.0
    %2172 = vmatpush1.msra.mxu0 0.0
    %2173 = vmatprep.subr.mxu0 0.0
    %2174 = vmatpush1.msra.mxu0 0.0
    %2175 = vmatprep.subr.mxu0 0.0
    %2176 = vmatpush1.msra.mxu0 0.0
    %2177 = vmatprep.subr.mxu0 0.0
    %2178 = vmatpush1.msra.mxu0 0.0
    %2179 = vmatprep.subr.mxu0 0.0
    %2180 = vmatpush1.msra.mxu0 0.0
    %2181 = vmatprep.subr.mxu0 0.0
    %2182 = vmatpush1.msra.mxu0 0.0
    %2183 = vmatprep.subr.mxu0 0.0
    %2184 = vmatpush1.msra.mxu0 0.0
    %2185 = vmatprep.mubr.f32.mxu0 0.0
    %2186 = vmatmul.mubr.f32.gmra.mrb[0].mxu0 %v2119
    %v2187 = vpop.f32.mrb[0].mxu0
    %v2188 = vadd.f32 %v1708, %v2187
    %v2189 = vpop.f32.mrb[0].mxu0
    %2190 = vdwg.mxu0
    %v2191 = vxor.u32 %v2188, 2147483648
    %v2192 = vmul.f32 %v2191, 1.442695
    %v2193 = vpow.pop %v2192
    %v2194 = vadd.f32 %v2193, 1.0
    %v2195 = vrcp.pop %v2194
    %v2196 = vmul.f32 1.0, %v2195
    %v2197 = vtanh.pop %v2188
    %v2198 = vmul.f32 %v2196, %v2106
    %2200 = vrot.lane.b32.xlu0 %v2197, 104
    %v2201 = vpop.permute.xlu0 %2200
    %v2203 = vmul.f32 %v2196, %v2201
    %2205 = vrot.lane.b32.xlu0 %v2203, 8
    %v2206 = vpop.permute.xlu0 %2205
    %v2208 = vadd.f32 %v2198, %v2206
    %v2209 = vtanh.pop %v2208
    %2211 = vrot.lane.b32.xlu0 %v2209, 8
    %v2212 = vpop.permute.xlu0 %2211
    %v2214 = vmul.f32 %v2196, %v2212
    %2216 = vrot.lane.b32.xlu0 %v1491, 96
    %v2217 = vpop.permute.xlu0 %2216
    %v2219 = vsel %vm1703, %v2217, %v2214
    %v2221 = vsel %vm1709, %v2219, 0
    %2223 = vmatprep.subr.mxu0 0.0
    %2224 = vmatpush1.msra.mxu0 %v1695
    %2225 = vmatprep.subr.mxu0 0.0
    %2226 = vmatpush1.msra.mxu0 %v1696
    %2227 = vmatprep.subr.mxu0 0.0
    %2228 = vmatpush1.msra.mxu0 %v1697
    %2229 = vmatprep.subr.mxu0 0.0
    %2230 = vmatpush1.msra.mxu0 0.0
    %2231 = vmatprep.subr.mxu0 0.0
    %2232 = vmatpush1.msra.mxu0 0.0
    %2233 = vmatprep.subr.mxu0 0.0
    %2234 = vmatpush1.msra.mxu0 0.0
    %2235 = vmatprep.subr.mxu0 0.0
    %2236 = vmatpush1.msra.mxu0 0.0
    %2237 = vmatprep.subr.mxu0 0.0
    %2238 = vmatpush1.msra.mxu0 0.0
    %2239 = vmatprep.subr.mxu0 0.0
    %2240 = vmatpush1.msra.mxu0 0.0
    %2241 = vmatprep.subr.mxu0 0.0
    %2242 = vmatpush1.msra.mxu0 0.0
    %2243 = vmatprep.subr.mxu0 0.0
    %2244 = vmatpush1.msra.mxu0 0.0
    %2245 = vmatprep.subr.mxu0 0.0
    %2246 = vmatpush1.msra.mxu0 0.0
    %2247 = vmatprep.subr.mxu0 0.0
    %2248 = vmatpush1.msra.mxu0 0.0
    %2249 = vmatprep.subr.mxu0 0.0
    %2250 = vmatpush1.msra.mxu0 0.0
    %2251 = vmatprep.subr.mxu0 0.0
    %2252 = vmatpush1.msra.mxu0 0.0
    %2253 = vmatprep.subr.mxu0 0.0
    %2254 = vmatpush1.msra.mxu0 0.0
    %2255 = vmatprep.subr.mxu0 0.0
    %2256 = vmatpush1.msra.mxu0 0.0
    %2257 = vmatprep.subr.mxu0 0.0
    %2258 = vmatpush1.msra.mxu0 0.0
    %2259 = vmatprep.subr.mxu0 0.0
    %2260 = vmatpush1.msra.mxu0 0.0
    %2261 = vmatprep.subr.mxu0 0.0
    %2262 = vmatpush1.msra.mxu0 0.0
    %2263 = vmatprep.subr.mxu0 0.0
    %2264 = vmatpush1.msra.mxu0 0.0
    %2265 = vmatprep.subr.mxu0 0.0
    %2266 = vmatpush1.msra.mxu0 0.0
    %2267 = vmatprep.subr.mxu0 0.0
    %2268 = vmatpush1.msra.mxu0 0.0
    %2269 = vmatprep.subr.mxu0 0.0
    %2270 = vmatpush1.msra.mxu0 0.0
    %2271 = vmatprep.subr.mxu0 0.0
    %2272 = vmatpush1.msra.mxu0 0.0
    %2273 = vmatprep.subr.mxu0 0.0
    %2274 = vmatpush1.msra.mxu0 0.0
    %2275 = vmatprep.subr.mxu0 0.0
    %2276 = vmatpush1.msra.mxu0 0.0
    %2277 = vmatprep.subr.mxu0 0.0
    %2278 = vmatpush1.msra.mxu0 0.0
    %2279 = vmatprep.subr.mxu0 0.0
    %2280 = vmatpush1.msra.mxu0 0.0
    %2281 = vmatprep.subr.mxu0 0.0
    %2282 = vmatpush1.msra.mxu0 0.0
    %2283 = vmatprep.subr.mxu0 0.0
    %2284 = vmatpush1.msra.mxu0 0.0
    %2285 = vmatprep.subr.mxu0 0.0
    %2286 = vmatpush1.msra.mxu0 0.0
    %2287 = vmatprep.mubr.f32.mxu0 0.0
    %2288 = vmatmul.mubr.f32.gmra.mrb[0].mxu0 %v2221
    %v2289 = vpop.f32.mrb[0].mxu0
    %v2290 = vadd.f32 %v1708, %v2289
    %v2291 = vpop.f32.mrb[0].mxu0
    %2292 = vdwg.mxu0
    %v2293 = vxor.u32 %v2290, 2147483648
    %v2294 = vmul.f32 %v2293, 1.442695
    %v2295 = vpow.pop %v2294
    %v2296 = vadd.f32 %v2295, 1.0
    %v2297 = vrcp.pop %v2296
    %v2298 = vmul.f32 1.0, %v2297
    %v2299 = vtanh.pop %v2290
    %v2300 = vmul.f32 %v2298, %v2208
    %2302 = vrot.lane.b32.xlu0 %v2299, 104
    %v2303 = vpop.permute.xlu0 %2302
    %v2305 = vmul.f32 %v2298, %v2303
    %2307 = vrot.lane.b32.xlu0 %v2305, 8
    %v2308 = vpop.permute.xlu0 %2307
    %v2310 = vadd.f32 %v2300, %v2308
    %v2311 = vtanh.pop %v2310
    %2313 = vrot.lane.b32.xlu0 %v2311, 8
    %v2314 = vpop.permute.xlu0 %2313
    %v2316 = vmul.f32 %v2298, %v2314
    %2318 = vrot.lane.b32.xlu0 %v1592, 96
    %v2319 = vpop.permute.xlu0 %2318
    %v2321 = vsel %vm1703, %v2319, %v2316
    %v2323 = vsel %vm1709, %v2321, 0
    %2325 = vmatprep.subr.mxu0 0.0
    %2326 = vmatpush1.msra.mxu0 %v1695
    %2327 = vmatprep.subr.mxu0 0.0
    %2328 = vmatpush1.msra.mxu0 %v1696
    %2329 = vmatprep.subr.mxu0 0.0
    %2330 = vmatpush1.msra.mxu0 %v1697
    %2331 = vmatprep.subr.mxu0 0.0
    %2332 = vmatpush1.msra.mxu0 0.0
    %2333 = vmatprep.subr.mxu0 0.0
    %2334 = vmatpush1.msra.mxu0 0.0
    %2335 = vmatprep.subr.mxu0 0.0
    %2336 = vmatpush1.msra.mxu0 0.0
    %2337 = vmatprep.subr.mxu0 0.0
    %2338 = vmatpush1.msra.mxu0 0.0
    %2339 = vmatprep.subr.mxu0 0.0
    %2340 = vmatpush1.msra.mxu0 0.0
    %2341 = vmatprep.subr.mxu0 0.0
    %2342 = vmatpush1.msra.mxu0 0.0
    %2343 = vmatprep.subr.mxu0 0.0
    %2344 = vmatpush1.msra.mxu0 0.0
    %2345 = vmatprep.subr.mxu0 0.0
    %2346 = vmatpush1.msra.mxu0 0.0
    %2347 = vmatprep.subr.mxu0 0.0
    %2348 = vmatpush1.msra.mxu0 0.0
    %2349 = vmatprep.subr.mxu0 0.0
    %2350 = vmatpush1.msra.mxu0 0.0
    %2351 = vmatprep.subr.mxu0 0.0
    %2352 = vmatpush1.msra.mxu0 0.0
    %2353 = vmatprep.subr.mxu0 0.0
    %2354 = vmatpush1.msra.mxu0 0.0
    %2355 = vmatprep.subr.mxu0 0.0
    %2356 = vmatpush1.msra.mxu0 0.0
    %2357 = vmatprep.subr.mxu0 0.0
    %2358 = vmatpush1.msra.mxu0 0.0
    %2359 = vmatprep.subr.mxu0 0.0
    %2360 = vmatpush1.msra.mxu0 0.0
    %2361 = vmatprep.subr.mxu0 0.0
    %2362 = vmatpush1.msra.mxu0 0.0
    %2363 = vmatprep.subr.mxu0 0.0
    %2364 = vmatpush1.msra.mxu0 0.0
    %2365 = vmatprep.subr.mxu0 0.0
    %2366 = vmatpush1.msra.mxu0 0.0
    %2367 = vmatprep.subr.mxu0 0.0
    %2368 = vmatpush1.msra.mxu0 0.0
    %2369 = vmatprep.subr.mxu0 0.0
    %2370 = vmatpush1.msra.mxu0 0.0
    %2371 = vmatprep.subr.mxu0 0.0
    %2372 = vmatpush1.msra.mxu0 0.0
    %2373 = vmatprep.subr.mxu0 0.0
    %2374 = vmatpush1.msra.mxu0 0.0
    %2375 = vmatprep.subr.mxu0 0.0
    %2376 = vmatpush1.msra.mxu0 0.0
    %2377 = vmatprep.subr.mxu0 0.0
    %2378 = vmatpush1.msra.mxu0 0.0
    %2379 = vmatprep.subr.mxu0 0.0
    %2380 = vmatpush1.msra.mxu0 0.0
    %2381 = vmatprep.subr.mxu0 0.0
    %2382 = vmatpush1.msra.mxu0 0.0
    %2383 = vmatprep.subr.mxu0 0.0
    %2384 = vmatpush1.msra.mxu0 0.0
    %2385 = vmatprep.subr.mxu0 0.0
    %2386 = vmatpush1.msra.mxu0 0.0
    %2387 = vmatprep.subr.mxu0 0.0
    %2388 = vmatpush1.msra.mxu0 0.0
    %2389 = vmatprep.mubr.f32.mxu0 0.0
    %2390 = vmatmul.mubr.f32.gmra.mrb[0].mxu0 %v2323
    %v2391 = vpop.f32.mrb[0].mxu0
    %v2392 = vadd.f32 %v1708, %v2391
    %v2393 = vpop.f32.mrb[0].mxu0
    %2394 = vdwg.mxu0
    %v2395 = vxor.u32 %v2392, 2147483648
    %v2396 = vmul.f32 %v2395, 1.442695
    %v2397 = vpow.pop %v2396
    %v2398 = vadd.f32 %v2397, 1.0
    %v2399 = vrcp.pop %v2398
    %v2400 = vmul.f32 1.0, %v2399
    %v2401 = vtanh.pop %v2392
    %v2402 = vmul.f32 %v2400, %v2310
    %2404 = vrot.lane.b32.xlu0 %v2401, 104
    %v2405 = vpop.permute.xlu0 %2404
    %v2407 = vmul.f32 %v2400, %v2405
    %2409 = vrot.lane.b32.xlu0 %v2407, 8
    %v2410 = vpop.permute.xlu0 %2409
    %v2412 = vadd.f32 %v2402, %v2410
    %v2413 = vtanh.pop %v2412
    %2415 = vrot.lane.b32.xlu0 %v2413, 8
    %v2416 = vpop.permute.xlu0 %2415
    %v2418 = vmul.f32 %v2400, %v2416
    %2420 = vrot.lane.b32.xlu0 %v1694, 96
    %v2421 = vpop.permute.xlu0 %2420
    %v2423 = vsel %vm1703, %v2421, %v2418
    %v2425 = vsel %vm1709, %v2423, 0
    %2427 = vmatprep.subr.mxu0 0.0
    %2428 = vmatpush1.msra.mxu0 %v1695
    %2429 = vmatprep.subr.mxu0 0.0
    %2430 = vmatpush1.msra.mxu0 %v1696
    %2431 = vmatprep.subr.mxu0 0.0
    %2432 = vmatpush1.msra.mxu0 %v1697
    %2433 = vmatprep.subr.mxu0 0.0
    %2434 = vmatpush1.msra.mxu0 0.0
    %2435 = vmatprep.subr.mxu0 0.0
    %2436 = vmatpush1.msra.mxu0 0.0
    %2437 = vmatprep.subr.mxu0 0.0
    %2438 = vmatpush1.msra.mxu0 0.0
    %2439 = vmatprep.subr.mxu0 0.0
    %2440 = vmatpush1.msra.mxu0 0.0
    %2441 = vmatprep.subr.mxu0 0.0
    %2442 = vmatpush1.msra.mxu0 0.0
    %2443 = vmatprep.subr.mxu0 0.0
    %2444 = vmatpush1.msra.mxu0 0.0
    %2445 = vmatprep.subr.mxu0 0.0
    %2446 = vmatpush1.msra.mxu0 0.0
    %2447 = vmatprep.subr.mxu0 0.0
    %2448 = vmatpush1.msra.mxu0 0.0
    %2449 = vmatprep.subr.mxu0 0.0
    %2450 = vmatpush1.msra.mxu0 0.0
    %2451 = vmatprep.subr.mxu0 0.0
    %2452 = vmatpush1.msra.mxu0 0.0
    %2453 = vmatprep.subr.mxu0 0.0
    %2454 = vmatpush1.msra.mxu0 0.0
    %2455 = vmatprep.subr.mxu0 0.0
    %2456 = vmatpush1.msra.mxu0 0.0
    %2457 = vmatprep.subr.mxu0 0.0
    %2458 = vmatpush1.msra.mxu0 0.0
    %2459 = vmatprep.subr.mxu0 0.0
    %2460 = vmatpush1.msra.mxu0 0.0
    %2461 = vmatprep.subr.mxu0 0.0
    %2462 = vmatpush1.msra.mxu0 0.0
    %2463 = vmatprep.subr.mxu0 0.0
    %2464 = vmatpush1.msra.mxu0 0.0
    %2465 = vmatprep.subr.mxu0 0.0
    %2466 = vmatpush1.msra.mxu0 0.0
    %2467 = vmatprep.subr.mxu0 0.0
    %2468 = vmatpush1.msra.mxu0 0.0
    %2469 = vmatprep.subr.mxu0 0.0
    %2470 = vmatpush1.msra.mxu0 0.0
    %2471 = vmatprep.subr.mxu0 0.0
    %2472 = vmatpush1.msra.mxu0 0.0
    %2473 = vmatprep.subr.mxu0 0.0
    %2474 = vmatpush1.msra.mxu0 0.0
    %2475 = vmatprep.subr.mxu0 0.0
    %2476 = vmatpush1.msra.mxu0 0.0
    %2477 = vmatprep.subr.mxu0 0.0
    %2478 = vmatpush1.msra.mxu0 0.0
    %2479 = vmatprep.subr.mxu0 0.0
    %2480 = vmatpush1.msra.mxu0 0.0
    %2481 = vmatprep.subr.mxu0 0.0
    %2482 = vmatpush1.msra.mxu0 0.0
    %2483 = vmatprep.subr.mxu0 0.0
    %2484 = vmatpush1.msra.mxu0 0.0
    %2485 = vmatprep.subr.mxu0 0.0
    %2486 = vmatpush1.msra.mxu0 0.0
    %2487 = vmatprep.subr.mxu0 0.0
    %2488 = vmatpush1.msra.mxu0 0.0
    %2489 = vmatprep.subr.mxu0 0.0
    %2490 = vmatpush1.msra.mxu0 0.0
    %2491 = vmatprep.mubr.f32.mxu0 0.0
    %2492 = vmatmul.mubr.f32.gmra.mrb[0].mxu0 %v2425
    %v2493 = vpop.f32.mrb[0].mxu0
    %v2494 = vadd.f32 %v1708, %v2493
    %v2495 = vpop.f32.mrb[0].mxu0
    %2496 = vdwg.mxu0
    %v2497 = vxor.u32 %v2494, 2147483648
    %v2498 = vmul.f32 %v2497, 1.442695
    %v2499 = vpow.pop %v2498
    %v2500 = vadd.f32 %v2499, 1.0
    %v2501 = vrcp.pop %v2500
    %v2502 = vmul.f32 1.0, %v2501
    %v2503 = vtanh.pop %v2494
    %v2504 = vmul.f32 %v2502, %v2412
    %2506 = vrot.lane.b32.xlu0 %v2503, 104
    %v2507 = vpop.permute.xlu0 %2506
    %v2509 = vmul.f32 %v2502, %v2507
    %2511 = vrot.lane.b32.xlu0 %v2509, 8
    %v2512 = vpop.permute.xlu0 %2511
    %v2514 = vadd.f32 %v2504, %v2512
    %v2515 = vtanh.pop %v2514
    %2517 = vrot.lane.b32.xlu0 %v2515, 8
    %v2518 = vpop.permute.xlu0 %2517
    %v2520 = vmul.f32 %v2502, %v2518
    %v2521 = vld [vmem:[#allocation2 + $0x88] sm:$0xff]
    %v2522 = vld [vmem:[#allocation2 + $0x90] sm:$0xff]
    %v2523 = vld [vmem:[#allocation2 + $0x98] sm:$0xff]
    %v2524 = vld [vmem:[%s3 + $0x3] sm:$0x1]
    %2526 = vrot.lane.b32.xlu0 %v1806, 112
    %v2527 = vpop.permute.xlu0 %2526
    %vm2529 = vcmask 64512
    %v2530 = vsel %vm2529, %v2527, 0.0
    %v2531 = vlaneseq
    %v2532 = vshrl.u32 %v2531, 7
    %v2533 = vsub.s32 0, %v2532
    %v2534 = vrot.slane %v2524, %v2533
    %v2536 = vsel %vm1709, %v2530, 0
    %2538 = vmatprep.subr.mxu0 0.0
    %2539 = vmatpush1.msra.mxu0 %v2521
    %2540 = vmatprep.subr.mxu0 0.0
    %2541 = vmatpush1.msra.mxu0 %v2522
    %2542 = vmatprep.subr.mxu0 0.0
    %2543 = vmatpush1.msra.mxu0 %v2523
    %2544 = vmatprep.subr.mxu0 0.0
    %2545 = vmatpush1.msra.mxu0 0.0
    %2546 = vmatprep.subr.mxu0 0.0
    %2547 = vmatpush1.msra.mxu0 0.0
    %2548 = vmatprep.subr.mxu0 0.0
    %2549 = vmatpush1.msra.mxu0 0.0
    %2550 = vmatprep.subr.mxu0 0.0
    %2551 = vmatpush1.msra.mxu0 0.0
    %2552 = vmatprep.subr.mxu0 0.0
    %2553 = vmatpush1.msra.mxu0 0.0
    %2554 = vmatprep.subr.mxu0 0.0
    %2555 = vmatpush1.msra.mxu0 0.0
    %2556 = vmatprep.subr.mxu0 0.0
    %2557 = vmatpush1.msra.mxu0 0.0
    %2558 = vmatprep.subr.mxu0 0.0
    %2559 = vmatpush1.msra.mxu0 0.0
    %2560 = vmatprep.subr.mxu0 0.0
    %2561 = vmatpush1.msra.mxu0 0.0
    %2562 = vmatprep.subr.mxu0 0.0
    %2563 = vmatpush1.msra.mxu0 0.0
    %2564 = vmatprep.subr.mxu0 0.0
    %2565 = vmatpush1.msra.mxu0 0.0
    %2566 = vmatprep.subr.mxu0 0.0
    %2567 = vmatpush1.msra.mxu0 0.0
    %2568 = vmatprep.subr.mxu0 0.0
    %2569 = vmatpush1.msra.mxu0 0.0
    %2570 = vmatprep.subr.mxu0 0.0
    %2571 = vmatpush1.msra.mxu0 0.0
    %2572 = vmatprep.subr.mxu0 0.0
    %2573 = vmatpush1.msra.mxu0 0.0
    %2574 = vmatprep.subr.mxu0 0.0
    %2575 = vmatpush1.msra.mxu0 0.0
    %2576 = vmatprep.subr.mxu0 0.0
    %2577 = vmatpush1.msra.mxu0 0.0
    %2578 = vmatprep.subr.mxu0 0.0
    %2579 = vmatpush1.msra.mxu0 0.0
    %2580 = vmatprep.subr.mxu0 0.0
    %2581 = vmatpush1.msra.mxu0 0.0
    %2582 = vmatprep.subr.mxu0 0.0
    %2583 = vmatpush1.msra.mxu0 0.0
    %2584 = vmatprep.subr.mxu0 0.0
    %2585 = vmatpush1.msra.mxu0 0.0
    %2586 = vmatprep.subr.mxu0 0.0
    %2587 = vmatpush1.msra.mxu0 0.0
    %2588 = vmatprep.subr.mxu0 0.0
    %2589 = vmatpush1.msra.mxu0 0.0
    %2590 = vmatprep.subr.mxu0 0.0
    %2591 = vmatpush1.msra.mxu0 0.0
    %2592 = vmatprep.subr.mxu0 0.0
    %2593 = vmatpush1.msra.mxu0 0.0
    %2594 = vmatprep.subr.mxu0 0.0
    %2595 = vmatpush1.msra.mxu0 0.0
    %2596 = vmatprep.subr.mxu0 0.0
    %2597 = vmatpush1.msra.mxu0 0.0
    %2598 = vmatprep.subr.mxu0 0.0
    %2599 = vmatpush1.msra.mxu0 0.0
    %2600 = vmatprep.subr.mxu0 0.0
    %2601 = vmatpush1.msra.mxu0 0.0
    %2602 = vmatprep.mubr.f32.mxu0 0.0
    %2603 = vmatmul.mubr.f32.gmra.mrb[0].mxu0 %v2536
    %v2604 = vpop.f32.mrb[0].mxu0
    %v2605 = vadd.f32 %v2534, %v2604
    %v2606 = vpop.f32.mrb[0].mxu0
    %2607 = vdwg.mxu0
    %v2608 = vxor.u32 %v2605, 2147483648
    %v2609 = vmul.f32 %v2608, 1.442695
    %v2610 = vpow.pop %v2609
    %v2611 = vadd.f32 %v2610, 1.0
    %v2612 = vrcp.pop %v2611
    %v2613 = vmul.f32 1.0, %v2612
    %v2614 = vtanh.pop %v2605
    %v2615 = vmul.f32 %v2613, 0.0
    %2617 = vrot.lane.b32.xlu0 %v2614, 80
    %v2618 = vpop.permute.xlu0 %2617
    %v2620 = vmul.f32 %v2613, %v2618
    %2622 = vrot.lane.b32.xlu0 %v2620, 16
    %v2623 = vpop.permute.xlu0 %2622
    %v2625 = vadd.f32 %v2615, %v2623
    %v2626 = vtanh.pop %v2625
    %2628 = vrot.lane.b32.xlu0 %v2626, 16
    %v2629 = vpop.permute.xlu0 %2628
    %v2631 = vmul.f32 %v2613, %v2629
    %2633 = vrot.lane.b32.xlu0 %v1908, 112
    %v2634 = vpop.permute.xlu0 %2633
    %2637 = vrot.lane.b32.xlu0 %v2631, 104
    %v2638 = vpop.permute.xlu0 %2637
    %v2640 = vsel %vm2529, %v2634, %v2638
    %v2642 = vsel %vm1709, %v2640, 0
    %2644 = vmatprep.subr.mxu0 0.0
    %2645 = vmatpush1.msra.mxu0 %v2521
    %2646 = vmatprep.subr.mxu0 0.0
    %2647 = vmatpush1.msra.mxu0 %v2522
    %2648 = vmatprep.subr.mxu0 0.0
    %2649 = vmatpush1.msra.mxu0 %v2523
    %2650 = vmatprep.subr.mxu0 0.0
    %2651 = vmatpush1.msra.mxu0 0.0
    %2652 = vmatprep.subr.mxu0 0.0
    %2653 = vmatpush1.msra.mxu0 0.0
    %2654 = vmatprep.subr.mxu0 0.0
    %2655 = vmatpush1.msra.mxu0 0.0
    %2656 = vmatprep.subr.mxu0 0.0
    %2657 = vmatpush1.msra.mxu0 0.0
    %2658 = vmatprep.subr.mxu0 0.0
    %2659 = vmatpush1.msra.mxu0 0.0
    %2660 = vmatprep.subr.mxu0 0.0
    %2661 = vmatpush1.msra.mxu0 0.0
    %2662 = vmatprep.subr.mxu0 0.0
    %2663 = vmatpush1.msra.mxu0 0.0
    %2664 = vmatprep.subr.mxu0 0.0
    %2665 = vmatpush1.msra.mxu0 0.0
    %2666 = vmatprep.subr.mxu0 0.0
    %2667 = vmatpush1.msra.mxu0 0.0
    %2668 = vmatprep.subr.mxu0 0.0
    %2669 = vmatpush1.msra.mxu0 0.0
    %2670 = vmatprep.subr.mxu0 0.0
    %2671 = vmatpush1.msra.mxu0 0.0
    %2672 = vmatprep.subr.mxu0 0.0
    %2673 = vmatpush1.msra.mxu0 0.0
    %2674 = vmatprep.subr.mxu0 0.0
    %2675 = vmatpush1.msra.mxu0 0.0
    %2676 = vmatprep.subr.mxu0 0.0
    %2677 = vmatpush1.msra.mxu0 0.0
    %2678 = vmatprep.subr.mxu0 0.0
    %2679 = vmatpush1.msra.mxu0 0.0
    %2680 = vmatprep.subr.mxu0 0.0
    %2681 = vmatpush1.msra.mxu0 0.0
    %2682 = vmatprep.subr.mxu0 0.0
    %2683 = vmatpush1.msra.mxu0 0.0
    %2684 = vmatprep.subr.mxu0 0.0
    %2685 = vmatpush1.msra.mxu0 0.0
    %2686 = vmatprep.subr.mxu0 0.0
    %2687 = vmatpush1.msra.mxu0 0.0
    %2688 = vmatprep.subr.mxu0 0.0
    %2689 = vmatpush1.msra.mxu0 0.0
    %2690 = vmatprep.subr.mxu0 0.0
    %2691 = vmatpush1.msra.mxu0 0.0
    %2692 = vmatprep.subr.mxu0 0.0
    %2693 = vmatpush1.msra.mxu0 0.0
    %2694 = vmatprep.subr.mxu0 0.0
    %2695 = vmatpush1.msra.mxu0 0.0
    %2696 = vmatprep.subr.mxu0 0.0
    %2697 = vmatpush1.msra.mxu0 0.0
    %2698 = vmatprep.subr.mxu0 0.0
    %2699 = vmatpush1.msra.mxu0 0.0
    %2700 = vmatprep.subr.mxu0 0.0
    %2701 = vmatpush1.msra.mxu0 0.0
    %2702 = vmatprep.subr.mxu0 0.0
    %2703 = vmatpush1.msra.mxu0 0.0
    %2704 = vmatprep.subr.mxu0 0.0
    %2705 = vmatpush1.msra.mxu0 0.0
    %2706 = vmatprep.subr.mxu0 0.0
    %2707 = vmatpush1.msra.mxu0 0.0
    %2708 = vmatprep.mubr.f32.mxu0 0.0
    %2709 = vmatmul.mubr.f32.gmra.mrb[0].mxu0 %v2642
    %v2710 = vpop.f32.mrb[0].mxu0
    %v2711 = vadd.f32 %v2534, %v2710
    %v2712 = vpop.f32.mrb[0].mxu0
    %2713 = vdwg.mxu0
    %v2714 = vxor.u32 %v2711, 2147483648
    %v2715 = vmul.f32 %v2714, 1.442695
    %v2716 = vpow.pop %v2715
    %v2717 = vadd.f32 %v2716, 1.0
    %v2718 = vrcp.pop %v2717
    %v2719 = vmul.f32 1.0, %v2718
    %v2720 = vtanh.pop %v2711
    %v2721 = vmul.f32 %v2719, %v2625
    %2723 = vrot.lane.b32.xlu0 %v2720, 80
    %v2724 = vpop.permute.xlu0 %2723
    %v2726 = vmul.f32 %v2719, %v2724
    %2728 = vrot.lane.b32.xlu0 %v2726, 16
    %v2729 = vpop.permute.xlu0 %2728
    %v2731 = vadd.f32 %v2721, %v2729
    %v2732 = vtanh.pop %v2731
    %2734 = vrot.lane.b32.xlu0 %v2732, 16
    %v2735 = vpop.permute.xlu0 %2734
    %v2737 = vmul.f32 %v2719, %v2735
    %2739 = vrot.lane.b32.xlu0 %v2010, 112
    %v2740 = vpop.permute.xlu0 %2739
    %2743 = vrot.lane.b32.xlu0 %v2737, 104
    %v2744 = vpop.permute.xlu0 %2743
    %v2746 = vsel %vm2529, %v2740, %v2744
    %v2748 = vsel %vm1709, %v2746, 0
    %2750 = vmatprep.subr.mxu0 0.0
    %2751 = vmatpush1.msra.mxu0 %v2521
    %2752 = vmatprep.subr.mxu0 0.0
    %2753 = vmatpush1.msra.mxu0 %v2522
    %2754 = vmatprep.subr.mxu0 0.0
    %2755 = vmatpush1.msra.mxu0 %v2523
    %2756 = vmatprep.subr.mxu0 0.0
    %2757 = vmatpush1.msra.mxu0 0.0
    %2758 = vmatprep.subr.mxu0 0.0
    %2759 = vmatpush1.msra.mxu0 0.0
    %2760 = vmatprep.subr.mxu0 0.0
    %2761 = vmatpush1.msra.mxu0 0.0
    %2762 = vmatprep.subr.mxu0 0.0
    %2763 = vmatpush1.msra.mxu0 0.0
    %2764 = vmatprep.subr.mxu0 0.0
    %2765 = vmatpush1.msra.mxu0 0.0
    %2766 = vmatprep.subr.mxu0 0.0
    %2767 = vmatpush1.msra.mxu0 0.0
    %2768 = vmatprep.subr.mxu0 0.0
    %2769 = vmatpush1.msra.mxu0 0.0
    %2770 = vmatprep.subr.mxu0 0.0
    %2771 = vmatpush1.msra.mxu0 0.0
    %2772 = vmatprep.subr.mxu0 0.0
    %2773 = vmatpush1.msra.mxu0 0.0
    %2774 = vmatprep.subr.mxu0 0.0
    %2775 = vmatpush1.msra.mxu0 0.0
    %2776 = vmatprep.subr.mxu0 0.0
    %2777 = vmatpush1.msra.mxu0 0.0
    %2778 = vmatprep.subr.mxu0 0.0
    %2779 = vmatpush1.msra.mxu0 0.0
    %2780 = vmatprep.subr.mxu0 0.0
    %2781 = vmatpush1.msra.mxu0 0.0
    %2782 = vmatprep.subr.mxu0 0.0
    %2783 = vmatpush1.msra.mxu0 0.0
    %2784 = vmatprep.subr.mxu0 0.0
    %2785 = vmatpush1.msra.mxu0 0.0
    %2786 = vmatprep.subr.mxu0 0.0
    %2787 = vmatpush1.msra.mxu0 0.0
    %2788 = vmatprep.subr.mxu0 0.0
    %2789 = vmatpush1.msra.mxu0 0.0
    %2790 = vmatprep.subr.mxu0 0.0
    %2791 = vmatpush1.msra.mxu0 0.0
    %2792 = vmatprep.subr.mxu0 0.0
    %2793 = vmatpush1.msra.mxu0 0.0
    %2794 = vmatprep.subr.mxu0 0.0
    %2795 = vmatpush1.msra.mxu0 0.0
    %2796 = vmatprep.subr.mxu0 0.0
    %2797 = vmatpush1.msra.mxu0 0.0
    %2798 = vmatprep.subr.mxu0 0.0
    %2799 = vmatpush1.msra.mxu0 0.0
    %2800 = vmatprep.subr.mxu0 0.0
    %2801 = vmatpush1.msra.mxu0 0.0
    %2802 = vmatprep.subr.mxu0 0.0
    %2803 = vmatpush1.msra.mxu0 0.0
    %2804 = vmatprep.subr.mxu0 0.0
    %2805 = vmatpush1.msra.mxu0 0.0
    %2806 = vmatprep.subr.mxu0 0.0
    %2807 = vmatpush1.msra.mxu0 0.0
    %2808 = vmatprep.subr.mxu0 0.0
    %2809 = vmatpush1.msra.mxu0 0.0
    %2810 = vmatprep.subr.mxu0 0.0
    %2811 = vmatpush1.msra.mxu0 0.0
    %2812 = vmatprep.subr.mxu0 0.0
    %2813 = vmatpush1.msra.mxu0 0.0
    %2814 = vmatprep.mubr.f32.mxu0 0.0
    %2815 = vmatmul.mubr.f32.gmra.mrb[0].mxu0 %v2748
    %v2816 = vpop.f32.mrb[0].mxu0
    %v2817 = vadd.f32 %v2534, %v2816
    %v2818 = vpop.f32.mrb[0].mxu0
    %2819 = vdwg.mxu0
    %v2820 = vxor.u32 %v2817, 2147483648
    %v2821 = vmul.f32 %v2820, 1.442695
    %v2822 = vpow.pop %v2821
    %v2823 = vadd.f32 %v2822, 1.0
    %v2824 = vrcp.pop %v2823
    %v2825 = vmul.f32 1.0, %v2824
    %v2826 = vtanh.pop %v2817
    %v2827 = vmul.f32 %v2825, %v2731
    %2829 = vrot.lane.b32.xlu0 %v2826, 80
    %v2830 = vpop.permute.xlu0 %2829
    %v2832 = vmul.f32 %v2825, %v2830
    %2834 = vrot.lane.b32.xlu0 %v2832, 16
    %v2835 = vpop.permute.xlu0 %2834
    %v2837 = vadd.f32 %v2827, %v2835
    %v2838 = vtanh.pop %v2837
    %2840 = vrot.lane.b32.xlu0 %v2838, 16
    %v2841 = vpop.permute.xlu0 %2840
    %v2843 = vmul.f32 %v2825, %v2841
    %2845 = vrot.lane.b32.xlu0 %v2112, 112
    %v2846 = vpop.permute.xlu0 %2845
    %2849 = vrot.lane.b32.xlu0 %v2843, 104
    %v2850 = vpop.permute.xlu0 %2849
    %v2852 = vsel %vm2529, %v2846, %v2850
    %v2854 = vsel %vm1709, %v2852, 0
    %2856 = vmatprep.subr.mxu0 0.0
    %2857 = vmatpush1.msra.mxu0 %v2521
    %2858 = vmatprep.subr.mxu0 0.0
    %2859 = vmatpush1.msra.mxu0 %v2522
    %2860 = vmatprep.subr.mxu0 0.0
    %2861 = vmatpush1.msra.mxu0 %v2523
    %2862 = vmatprep.subr.mxu0 0.0
    %2863 = vmatpush1.msra.mxu0 0.0
    %2864 = vmatprep.subr.mxu0 0.0
    %2865 = vmatpush1.msra.mxu0 0.0
    %2866 = vmatprep.subr.mxu0 0.0
    %2867 = vmatpush1.msra.mxu0 0.0
    %2868 = vmatprep.subr.mxu0 0.0
    %2869 = vmatpush1.msra.mxu0 0.0
    %2870 = vmatprep.subr.mxu0 0.0
    %2871 = vmatpush1.msra.mxu0 0.0
    %2872 = vmatprep.subr.mxu0 0.0
    %2873 = vmatpush1.msra.mxu0 0.0
    %2874 = vmatprep.subr.mxu0 0.0
    %2875 = vmatpush1.msra.mxu0 0.0
    %2876 = vmatprep.subr.mxu0 0.0
    %2877 = vmatpush1.msra.mxu0 0.0
    %2878 = vmatprep.subr.mxu0 0.0
    %2879 = vmatpush1.msra.mxu0 0.0
    %2880 = vmatprep.subr.mxu0 0.0
    %2881 = vmatpush1.msra.mxu0 0.0
    %2882 = vmatprep.subr.mxu0 0.0
    %2883 = vmatpush1.msra.mxu0 0.0
    %2884 = vmatprep.subr.mxu0 0.0
    %2885 = vmatpush1.msra.mxu0 0.0
    %2886 = vmatprep.subr.mxu0 0.0
    %2887 = vmatpush1.msra.mxu0 0.0
    %2888 = vmatprep.subr.mxu0 0.0
    %2889 = vmatpush1.msra.mxu0 0.0
    %2890 = vmatprep.subr.mxu0 0.0
    %2891 = vmatpush1.msra.mxu0 0.0
    %2892 = vmatprep.subr.mxu0 0.0
    %2893 = vmatpush1.msra.mxu0 0.0
    %2894 = vmatprep.subr.mxu0 0.0
    %2895 = vmatpush1.msra.mxu0 0.0
    %2896 = vmatprep.subr.mxu0 0.0
    %2897 = vmatpush1.msra.mxu0 0.0
    %2898 = vmatprep.subr.mxu0 0.0
    %2899 = vmatpush1.msra.mxu0 0.0
    %2900 = vmatprep.subr.mxu0 0.0
    %2901 = vmatpush1.msra.mxu0 0.0
    %2902 = vmatprep.subr.mxu0 0.0
    %2903 = vmatpush1.msra.mxu0 0.0
    %2904 = vmatprep.subr.mxu0 0.0
    %2905 = vmatpush1.msra.mxu0 0.0
    %2906 = vmatprep.subr.mxu0 0.0
    %2907 = vmatpush1.msra.mxu0 0.0
    %2908 = vmatprep.subr.mxu0 0.0
    %2909 = vmatpush1.msra.mxu0 0.0
    %2910 = vmatprep.subr.mxu0 0.0
    %2911 = vmatpush1.msra.mxu0 0.0
    %2912 = vmatprep.subr.mxu0 0.0
    %2913 = vmatpush1.msra.mxu0 0.0
    %2914 = vmatprep.subr.mxu0 0.0
    %2915 = vmatpush1.msra.mxu0 0.0
    %2916 = vmatprep.subr.mxu0 0.0
    %2917 = vmatpush1.msra.mxu0 0.0
    %2918 = vmatprep.subr.mxu0 0.0
    %2919 = vmatpush1.msra.mxu0 0.0
    %2920 = vmatprep.mubr.f32.mxu0 0.0
    %2921 = vmatmul.mubr.f32.gmra.mrb[0].mxu0 %v2854
    %v2922 = vpop.f32.mrb[0].mxu0
    %v2923 = vadd.f32 %v2534, %v2922
    %v2924 = vpop.f32.mrb[0].mxu0
    %2925 = vdwg.mxu0
    %v2926 = vxor.u32 %v2923, 2147483648
    %v2927 = vmul.f32 %v2926, 1.442695
    %v2928 = vpow.pop %v2927
    %v2929 = vadd.f32 %v2928, 1.0
    %v2930 = vrcp.pop %v2929
    %v2931 = vmul.f32 1.0, %v2930
    %v2932 = vtanh.pop %v2923
    %v2933 = vmul.f32 %v2931, %v2837
    %2935 = vrot.lane.b32.xlu0 %v2932, 80
    %v2936 = vpop.permute.xlu0 %2935
    %v2938 = vmul.f32 %v2931, %v2936
    %2940 = vrot.lane.b32.xlu0 %v2938, 16
    %v2941 = vpop.permute.xlu0 %2940
    %v2943 = vadd.f32 %v2933, %v2941
    %v2944 = vtanh.pop %v2943
    %2946 = vrot.lane.b32.xlu0 %v2944, 16
    %v2947 = vpop.permute.xlu0 %2946
    %v2949 = vmul.f32 %v2931, %v2947
    %2951 = vrot.lane.b32.xlu0 %v2214, 112
    %v2952 = vpop.permute.xlu0 %2951
    %2955 = vrot.lane.b32.xlu0 %v2949, 104
    %v2956 = vpop.permute.xlu0 %2955
    %v2958 = vsel %vm2529, %v2952, %v2956
    %v2960 = vsel %vm1709, %v2958, 0
    %2962 = vmatprep.subr.mxu0 0.0
    %2963 = vmatpush1.msra.mxu0 %v2521
    %2964 = vmatprep.subr.mxu0 0.0
    %2965 = vmatpush1.msra.mxu0 %v2522
    %2966 = vmatprep.subr.mxu0 0.0
    %2967 = vmatpush1.msra.mxu0 %v2523
    %2968 = vmatprep.subr.mxu0 0.0
    %2969 = vmatpush1.msra.mxu0 0.0
    %2970 = vmatprep.subr.mxu0 0.0
    %2971 = vmatpush1.msra.mxu0 0.0
    %2972 = vmatprep.subr.mxu0 0.0
    %2973 = vmatpush1.msra.mxu0 0.0
    %2974 = vmatprep.subr.mxu0 0.0
    %2975 = vmatpush1.msra.mxu0 0.0
    %2976 = vmatprep.subr.mxu0 0.0
    %2977 = vmatpush1.msra.mxu0 0.0
    %2978 = vmatprep.subr.mxu0 0.0
    %2979 = vmatpush1.msra.mxu0 0.0
    %2980 = vmatprep.subr.mxu0 0.0
    %2981 = vmatpush1.msra.mxu0 0.0
    %2982 = vmatprep.subr.mxu0 0.0
    %2983 = vmatpush1.msra.mxu0 0.0
    %2984 = vmatprep.subr.mxu0 0.0
    %2985 = vmatpush1.msra.mxu0 0.0
    %2986 = vmatprep.subr.mxu0 0.0
    %2987 = vmatpush1.msra.mxu0 0.0
    %2988 = vmatprep.subr.mxu0 0.0
    %2989 = vmatpush1.msra.mxu0 0.0
    %2990 = vmatprep.subr.mxu0 0.0
    %2991 = vmatpush1.msra.mxu0 0.0
    %2992 = vmatprep.subr.mxu0 0.0
    %2993 = vmatpush1.msra.mxu0 0.0
    %2994 = vmatprep.subr.mxu0 0.0
    %2995 = vmatpush1.msra.mxu0 0.0
    %2996 = vmatprep.subr.mxu0 0.0
    %2997 = vmatpush1.msra.mxu0 0.0
    %2998 = vmatprep.subr.mxu0 0.0
    %2999 = vmatpush1.msra.mxu0 0.0
    %3000 = vmatprep.subr.mxu0 0.0
    %3001 = vmatpush1.msra.mxu0 0.0
    %3002 = vmatprep.subr.mxu0 0.0
    %3003 = vmatpush1.msra.mxu0 0.0
    %3004 = vmatprep.subr.mxu0 0.0
    %3005 = vmatpush1.msra.mxu0 0.0
    %3006 = vmatprep.subr.mxu0 0.0
    %3007 = vmatpush1.msra.mxu0 0.0
    %3008 = vmatprep.subr.mxu0 0.0
    %3009 = vmatpush1.msra.mxu0 0.0
    %3010 = vmatprep.subr.mxu0 0.0
    %3011 = vmatpush1.msra.mxu0 0.0
    %3012 = vmatprep.subr.mxu0 0.0
    %3013 = vmatpush1.msra.mxu0 0.0
    %3014 = vmatprep.subr.mxu0 0.0
    %3015 = vmatpush1.msra.mxu0 0.0
    %3016 = vmatprep.subr.mxu0 0.0
    %3017 = vmatpush1.msra.mxu0 0.0
    %3018 = vmatprep.subr.mxu0 0.0
    %3019 = vmatpush1.msra.mxu0 0.0
    %3020 = vmatprep.subr.mxu0 0.0
    %3021 = vmatpush1.msra.mxu0 0.0
    %3022 = vmatprep.subr.mxu0 0.0
    %3023 = vmatpush1.msra.mxu0 0.0
    %3024 = vmatprep.subr.mxu0 0.0
    %3025 = vmatpush1.msra.mxu0 0.0
    %3026 = vmatprep.mubr.f32.mxu0 0.0
    %3027 = vmatmul.mubr.f32.gmra.mrb[0].mxu0 %v2960
    %v3028 = vpop.f32.mrb[0].mxu0
    %v3029 = vadd.f32 %v2534, %v3028
    %v3030 = vpop.f32.mrb[0].mxu0
    %3031 = vdwg.mxu0
    %v3032 = vxor.u32 %v3029, 2147483648
    %v3033 = vmul.f32 %v3032, 1.442695
    %v3034 = vpow.pop %v3033
    %v3035 = vadd.f32 %v3034, 1.0
    %v3036 = vrcp.pop %v3035
    %v3037 = vmul.f32 1.0, %v3036
    %v3038 = vtanh.pop %v3029
    %v3039 = vmul.f32 %v3037, %v2943
    %3041 = vrot.lane.b32.xlu0 %v3038, 80
    %v3042 = vpop.permute.xlu0 %3041
    %v3044 = vmul.f32 %v3037, %v3042
    %3046 = vrot.lane.b32.xlu0 %v3044, 16
    %v3047 = vpop.permute.xlu0 %3046
    %v3049 = vadd.f32 %v3039, %v3047
    %v3050 = vtanh.pop %v3049
    %3052 = vrot.lane.b32.xlu0 %v3050, 16
    %v3053 = vpop.permute.xlu0 %3052
    %v3055 = vmul.f32 %v3037, %v3053
    %3057 = vrot.lane.b32.xlu0 %v2316, 112
    %v3058 = vpop.permute.xlu0 %3057
    %3061 = vrot.lane.b32.xlu0 %v3055, 104
    %v3062 = vpop.permute.xlu0 %3061
    %v3064 = vsel %vm2529, %v3058, %v3062
    %v3066 = vsel %vm1709, %v3064, 0
    %3068 = vmatprep.subr.mxu0 0.0
    %3069 = vmatpush1.msra.mxu0 %v2521
    %3070 = vmatprep.subr.mxu0 0.0
    %3071 = vmatpush1.msra.mxu0 %v2522
    %3072 = vmatprep.subr.mxu0 0.0
    %3073 = vmatpush1.msra.mxu0 %v2523
    %3074 = vmatprep.subr.mxu0 0.0
    %3075 = vmatpush1.msra.mxu0 0.0
    %3076 = vmatprep.subr.mxu0 0.0
    %3077 = vmatpush1.msra.mxu0 0.0
    %3078 = vmatprep.subr.mxu0 0.0
    %3079 = vmatpush1.msra.mxu0 0.0
    %3080 = vmatprep.subr.mxu0 0.0
    %3081 = vmatpush1.msra.mxu0 0.0
    %3082 = vmatprep.subr.mxu0 0.0
    %3083 = vmatpush1.msra.mxu0 0.0
    %3084 = vmatprep.subr.mxu0 0.0
    %3085 = vmatpush1.msra.mxu0 0.0
    %3086 = vmatprep.subr.mxu0 0.0
    %3087 = vmatpush1.msra.mxu0 0.0
    %3088 = vmatprep.subr.mxu0 0.0
    %3089 = vmatpush1.msra.mxu0 0.0
    %3090 = vmatprep.subr.mxu0 0.0
    %3091 = vmatpush1.msra.mxu0 0.0
    %3092 = vmatprep.subr.mxu0 0.0
    %3093 = vmatpush1.msra.mxu0 0.0
    %3094 = vmatprep.subr.mxu0 0.0
    %3095 = vmatpush1.msra.mxu0 0.0
    %3096 = vmatprep.subr.mxu0 0.0
    %3097 = vmatpush1.msra.mxu0 0.0
    %3098 = vmatprep.subr.mxu0 0.0
    %3099 = vmatpush1.msra.mxu0 0.0
    %3100 = vmatprep.subr.mxu0 0.0
    %3101 = vmatpush1.msra.mxu0 0.0
    %3102 = vmatprep.subr.mxu0 0.0
    %3103 = vmatpush1.msra.mxu0 0.0
    %3104 = vmatprep.subr.mxu0 0.0
    %3105 = vmatpush1.msra.mxu0 0.0
    %3106 = vmatprep.subr.mxu0 0.0
    %3107 = vmatpush1.msra.mxu0 0.0
    %3108 = vmatprep.subr.mxu0 0.0
    %3109 = vmatpush1.msra.mxu0 0.0
    %3110 = vmatprep.subr.mxu0 0.0
    %3111 = vmatpush1.msra.mxu0 0.0
    %3112 = vmatprep.subr.mxu0 0.0
    %3113 = vmatpush1.msra.mxu0 0.0
    %3114 = vmatprep.subr.mxu0 0.0
    %3115 = vmatpush1.msra.mxu0 0.0
    %3116 = vmatprep.subr.mxu0 0.0
    %3117 = vmatpush1.msra.mxu0 0.0
    %3118 = vmatprep.subr.mxu0 0.0
    %3119 = vmatpush1.msra.mxu0 0.0
    %3120 = vmatprep.subr.mxu0 0.0
    %3121 = vmatpush1.msra.mxu0 0.0
    %3122 = vmatprep.subr.mxu0 0.0
    %3123 = vmatpush1.msra.mxu0 0.0
    %3124 = vmatprep.subr.mxu0 0.0
    %3125 = vmatpush1.msra.mxu0 0.0
    %3126 = vmatprep.subr.mxu0 0.0
    %3127 = vmatpush1.msra.mxu0 0.0
    %3128 = vmatprep.subr.mxu0 0.0
    %3129 = vmatpush1.msra.mxu0 0.0
    %3130 = vmatprep.subr.mxu0 0.0
    %3131 = vmatpush1.msra.mxu0 0.0
    %3132 = vmatprep.mubr.f32.mxu0 0.0
    %3133 = vmatmul.mubr.f32.gmra.mrb[0].mxu0 %v3066
    %v3134 = vpop.f32.mrb[0].mxu0
    %v3135 = vadd.f32 %v2534, %v3134
    %v3136 = vpop.f32.mrb[0].mxu0
    %3137 = vdwg.mxu0
    %v3138 = vxor.u32 %v3135, 2147483648
    %v3139 = vmul.f32 %v3138, 1.442695
    %v3140 = vpow.pop %v3139
    %v3141 = vadd.f32 %v3140, 1.0
    %v3142 = vrcp.pop %v3141
    %v3143 = vmul.f32 1.0, %v3142
    %v3144 = vtanh.pop %v3135
    %v3145 = vmul.f32 %v3143, %v3049
    %3147 = vrot.lane.b32.xlu0 %v3144, 80
    %v3148 = vpop.permute.xlu0 %3147
    %v3150 = vmul.f32 %v3143, %v3148
    %3152 = vrot.lane.b32.xlu0 %v3150, 16
    %v3153 = vpop.permute.xlu0 %3152
    %v3155 = vadd.f32 %v3145, %v3153
    %v3156 = vtanh.pop %v3155
    %3158 = vrot.lane.b32.xlu0 %v3156, 16
    %v3159 = vpop.permute.xlu0 %3158
    %v3161 = vmul.f32 %v3143, %v3159
    %3163 = vrot.lane.b32.xlu0 %v2418, 112
    %v3164 = vpop.permute.xlu0 %3163
    %3167 = vrot.lane.b32.xlu0 %v3161, 104
    %v3168 = vpop.permute.xlu0 %3167
    %v3170 = vsel %vm2529, %v3164, %v3168
    %v3172 = vsel %vm1709, %v3170, 0
    %3174 = vmatprep.subr.mxu0 0.0
    %3175 = vmatpush1.msra.mxu0 %v2521
    %3176 = vmatprep.subr.mxu0 0.0
    %3177 = vmatpush1.msra.mxu0 %v2522
    %3178 = vmatprep.subr.mxu0 0.0
    %3179 = vmatpush1.msra.mxu0 %v2523
    %3180 = vmatprep.subr.mxu0 0.0
    %3181 = vmatpush1.msra.mxu0 0.0
    %3182 = vmatprep.subr.mxu0 0.0
    %3183 = vmatpush1.msra.mxu0 0.0
    %3184 = vmatprep.subr.mxu0 0.0
    %3185 = vmatpush1.msra.mxu0 0.0
    %3186 = vmatprep.subr.mxu0 0.0
    %3187 = vmatpush1.msra.mxu0 0.0
    %3188 = vmatprep.subr.mxu0 0.0
    %3189 = vmatpush1.msra.mxu0 0.0
    %3190 = vmatprep.subr.mxu0 0.0
    %3191 = vmatpush1.msra.mxu0 0.0
    %3192 = vmatprep.subr.mxu0 0.0
    %3193 = vmatpush1.msra.mxu0 0.0
    %3194 = vmatprep.subr.mxu0 0.0
    %3195 = vmatpush1.msra.mxu0 0.0
    %3196 = vmatprep.subr.mxu0 0.0
    %3197 = vmatpush1.msra.mxu0 0.0
    %3198 = vmatprep.subr.mxu0 0.0
    %3199 = vmatpush1.msra.mxu0 0.0
    %3200 = vmatprep.subr.mxu0 0.0
    %3201 = vmatpush1.msra.mxu0 0.0
    %3202 = vmatprep.subr.mxu0 0.0
    %3203 = vmatpush1.msra.mxu0 0.0
    %3204 = vmatprep.subr.mxu0 0.0
    %3205 = vmatpush1.msra.mxu0 0.0
    %3206 = vmatprep.subr.mxu0 0.0
    %3207 = vmatpush1.msra.mxu0 0.0
    %3208 = vmatprep.subr.mxu0 0.0
    %3209 = vmatpush1.msra.mxu0 0.0
    %3210 = vmatprep.subr.mxu0 0.0
    %3211 = vmatpush1.msra.mxu0 0.0
    %3212 = vmatprep.subr.mxu0 0.0
    %3213 = vmatpush1.msra.mxu0 0.0
    %3214 = vmatprep.subr.mxu0 0.0
    %3215 = vmatpush1.msra.mxu0 0.0
    %3216 = vmatprep.subr.mxu0 0.0
    %3217 = vmatpush1.msra.mxu0 0.0
    %3218 = vmatprep.subr.mxu0 0.0
    %3219 = vmatpush1.msra.mxu0 0.0
    %3220 = vmatprep.subr.mxu0 0.0
    %3221 = vmatpush1.msra.mxu0 0.0
    %3222 = vmatprep.subr.mxu0 0.0
    %3223 = vmatpush1.msra.mxu0 0.0
    %3224 = vmatprep.subr.mxu0 0.0
    %3225 = vmatpush1.msra.mxu0 0.0
    %3226 = vmatprep.subr.mxu0 0.0
    %3227 = vmatpush1.msra.mxu0 0.0
    %3228 = vmatprep.subr.mxu0 0.0
    %3229 = vmatpush1.msra.mxu0 0.0
    %3230 = vmatprep.subr.mxu0 0.0
    %3231 = vmatpush1.msra.mxu0 0.0
    %3232 = vmatprep.subr.mxu0 0.0
    %3233 = vmatpush1.msra.mxu0 0.0
    %3234 = vmatprep.subr.mxu0 0.0
    %3235 = vmatpush1.msra.mxu0 0.0
    %3236 = vmatprep.subr.mxu0 0.0
    %3237 = vmatpush1.msra.mxu0 0.0
    %3238 = vmatprep.mubr.f32.mxu0 0.0
    %3239 = vmatmul.mubr.f32.gmra.mrb[0].mxu0 %v3172
    %v3240 = vpop.f32.mrb[0].mxu0
    %v3241 = vadd.f32 %v2534, %v3240
    %v3242 = vpop.f32.mrb[0].mxu0
    %3243 = vdwg.mxu0
    %v3244 = vxor.u32 %v3241, 2147483648
    %v3245 = vmul.f32 %v3244, 1.442695
    %v3246 = vpow.pop %v3245
    %v3247 = vadd.f32 %v3246, 1.0
    %v3248 = vrcp.pop %v3247
    %v3249 = vmul.f32 1.0, %v3248
    %v3250 = vtanh.pop %v3241
    %v3251 = vmul.f32 %v3249, %v3155
    %3253 = vrot.lane.b32.xlu0 %v3250, 80
    %v3254 = vpop.permute.xlu0 %3253
    %v3256 = vmul.f32 %v3249, %v3254
    %3258 = vrot.lane.b32.xlu0 %v3256, 16
    %v3259 = vpop.permute.xlu0 %3258
    %v3261 = vadd.f32 %v3251, %v3259
    %v3262 = vtanh.pop %v3261
    %3264 = vrot.lane.b32.xlu0 %v3262, 16
    %v3265 = vpop.permute.xlu0 %3264
    %v3267 = vmul.f32 %v3249, %v3265
    %3269 = vrot.lane.b32.xlu0 %v2520, 112
    %v3270 = vpop.permute.xlu0 %3269
    %3273 = vrot.lane.b32.xlu0 %v3267, 104
    %v3274 = vpop.permute.xlu0 %3273
    %v3276 = vsel %vm2529, %v3270, %v3274
    %v3278 = vsel %vm1709, %v3276, 0
    %3280 = vmatprep.subr.mxu0 0.0
    %3281 = vmatpush1.msra.mxu0 %v2521
    %3282 = vmatprep.subr.mxu0 0.0
    %3283 = vmatpush1.msra.mxu0 %v2522
    %3284 = vmatprep.subr.mxu0 0.0
    %3285 = vmatpush1.msra.mxu0 %v2523
    %3286 = vmatprep.subr.mxu0 0.0
    %3287 = vmatpush1.msra.mxu0 0.0
    %3288 = vmatprep.subr.mxu0 0.0
    %3289 = vmatpush1.msra.mxu0 0.0
    %3290 = vmatprep.subr.mxu0 0.0
    %3291 = vmatpush1.msra.mxu0 0.0
    %3292 = vmatprep.subr.mxu0 0.0
    %3293 = vmatpush1.msra.mxu0 0.0
    %3294 = vmatprep.subr.mxu0 0.0
    %3295 = vmatpush1.msra.mxu0 0.0
    %3296 = vmatprep.subr.mxu0 0.0
    %3297 = vmatpush1.msra.mxu0 0.0
    %3298 = vmatprep.subr.mxu0 0.0
    %3299 = vmatpush1.msra.mxu0 0.0
    %3300 = vmatprep.subr.mxu0 0.0
    %3301 = vmatpush1.msra.mxu0 0.0
    %3302 = vmatprep.subr.mxu0 0.0
    %3303 = vmatpush1.msra.mxu0 0.0
    %3304 = vmatprep.subr.mxu0 0.0
    %3305 = vmatpush1.msra.mxu0 0.0
    %3306 = vmatprep.subr.mxu0 0.0
    %3307 = vmatpush1.msra.mxu0 0.0
    %3308 = vmatprep.subr.mxu0 0.0
    %3309 = vmatpush1.msra.mxu0 0.0
    %3310 = vmatprep.subr.mxu0 0.0
    %3311 = vmatpush1.msra.mxu0 0.0
    %3312 = vmatprep.subr.mxu0 0.0
    %3313 = vmatpush1.msra.mxu0 0.0
    %3314 = vmatprep.subr.mxu0 0.0
    %3315 = vmatpush1.msra.mxu0 0.0
    %3316 = vmatprep.subr.mxu0 0.0
    %3317 = vmatpush1.msra.mxu0 0.0
    %3318 = vmatprep.subr.mxu0 0.0
    %3319 = vmatpush1.msra.mxu0 0.0
    %3320 = vmatprep.subr.mxu0 0.0
    %3321 = vmatpush1.msra.mxu0 0.0
    %3322 = vmatprep.subr.mxu0 0.0
    %3323 = vmatpush1.msra.mxu0 0.0
    %3324 = vmatprep.subr.mxu0 0.0
    %3325 = vmatpush1.msra.mxu0 0.0
    %3326 = vmatprep.subr.mxu0 0.0
    %3327 = vmatpush1.msra.mxu0 0.0
    %3328 = vmatprep.subr.mxu0 0.0
    %3329 = vmatpush1.msra.mxu0 0.0
    %3330 = vmatprep.subr.mxu0 0.0
    %3331 = vmatpush1.msra.mxu0 0.0
    %3332 = vmatprep.subr.mxu0 0.0
    %3333 = vmatpush1.msra.mxu0 0.0
    %3334 = vmatprep.subr.mxu0 0.0
    %3335 = vmatpush1.msra.mxu0 0.0
    %3336 = vmatprep.subr.mxu0 0.0
    %3337 = vmatpush1.msra.mxu0 0.0
    %3338 = vmatprep.subr.mxu0 0.0
    %3339 = vmatpush1.msra.mxu0 0.0
    %3340 = vmatprep.subr.mxu0 0.0
    %3341 = vmatpush1.msra.mxu0 0.0
    %3342 = vmatprep.subr.mxu0 0.0
    %3343 = vmatpush1.msra.mxu0 0.0
    %3344 = vmatprep.mubr.f32.mxu0 0.0
    %3345 = vmatmul.mubr.f32.gmra.mrb[0].mxu0 %v3278
    %v3346 = vpop.f32.mrb[0].mxu0
    %v3347 = vadd.f32 %v2534, %v3346
    %v3348 = vpop.f32.mrb[0].mxu0
    %3349 = vdwg.mxu0
    %v3350 = vxor.u32 %v3347, 2147483648
    %v3351 = vmul.f32 %v3350, 1.442695
    %v3352 = vpow.pop %v3351
    %v3353 = vadd.f32 %v3352, 1.0
    %v3354 = vrcp.pop %v3353
    %v3355 = vmul.f32 1.0, %v3354
    %v3356 = vtanh.pop %v3347
    %v3357 = vmul.f32 %v3355, %v3261
    %3359 = vrot.lane.b32.xlu0 %v3356, 80
    %v3360 = vpop.permute.xlu0 %3359
    %v3362 = vmul.f32 %v3355, %v3360
    %3364 = vrot.lane.b32.xlu0 %v3362, 16
    %v3365 = vpop.permute.xlu0 %3364
    %v3367 = vadd.f32 %v3357, %v3365
    %v3368 = vtanh.pop %v3367
    %3370 = vrot.lane.b32.xlu0 %v3368, 16
    %v3371 = vpop.permute.xlu0 %3370
    %v3373 = vmul.f32 %v3355, %v3371
    %v3374 = vld [vmem:[#allocation2 + $0xa0] sm:$0xff]
    %v3375 = vld [vmem:[#allocation2 + $0xa8] sm:$0xff]
    %v3376 = vld [vmem:[%s3 + $0x4] sm:$0x1]
    %v3377 = vlaneseq
    %v3378 = vshrl.u32 %v3377, 7
    %v3379 = vsub.s32 0, %v3378
    %v3380 = vrot.slane %v3376, %v3379
    %3381 = vrot.lane.b32.xlu0 %v2631, 96
    %v3382 = vpop.permute.xlu0 %3381
    %v3383 = vsel %vm1703, %v3382, 0
    %3385 = vmatprep.subr.mxu0 0.0
    %3386 = vmatpush1.msra.mxu0 %v3374
    %3387 = vmatprep.subr.mxu0 0.0
    %3388 = vmatpush1.msra.mxu0 %v3375
    %3389 = vmatprep.subr.mxu0 0.0
    %3390 = vmatpush1.msra.mxu0 0.0
    %3391 = vmatprep.subr.mxu0 0.0
    %3392 = vmatpush1.msra.mxu0 0.0
    %3393 = vmatprep.subr.mxu0 0.0
    %3394 = vmatpush1.msra.mxu0 0.0
    %3395 = vmatprep.subr.mxu0 0.0
    %3396 = vmatpush1.msra.mxu0 0.0
    %3397 = vmatprep.subr.mxu0 0.0
    %3398 = vmatpush1.msra.mxu0 0.0
    %3399 = vmatprep.subr.mxu0 0.0
    %3400 = vmatpush1.msra.mxu0 0.0
    %3401 = vmatprep.subr.mxu0 0.0
    %3402 = vmatpush1.msra.mxu0 0.0
    %3403 = vmatprep.subr.mxu0 0.0
    %3404 = vmatpush1.msra.mxu0 0.0
    %3405 = vmatprep.subr.mxu0 0.0
    %3406 = vmatpush1.msra.mxu0 0.0
    %3407 = vmatprep.subr.mxu0 0.0
    %3408 = vmatpush1.msra.mxu0 0.0
    %3409 = vmatprep.subr.mxu0 0.0
    %3410 = vmatpush1.msra.mxu0 0.0
    %3411 = vmatprep.subr.mxu0 0.0
    %3412 = vmatpush1.msra.mxu0 0.0
    %3413 = vmatprep.subr.mxu0 0.0
    %3414 = vmatpush1.msra.mxu0 0.0
    %3415 = vmatprep.subr.mxu0 0.0
    %3416 = vmatpush1.msra.mxu0 0.0
    %3417 = vmatprep.subr.mxu0 0.0
    %3418 = vmatpush1.msra.mxu0 0.0
    %3419 = vmatprep.subr.mxu0 0.0
    %3420 = vmatpush1.msra.mxu0 0.0
    %3421 = vmatprep.subr.mxu0 0.0
    %3422 = vmatpush1.msra.mxu0 0.0
    %3423 = vmatprep.subr.mxu0 0.0
    %3424 = vmatpush1.msra.mxu0 0.0
    %3425 = vmatprep.subr.mxu0 0.0
    %3426 = vmatpush1.msra.mxu0 0.0
    %3427 = vmatprep.subr.mxu0 0.0
    %3428 = vmatpush1.msra.mxu0 0.0
    %3429 = vmatprep.subr.mxu0 0.0
    %3430 = vmatpush1.msra.mxu0 0.0
    %3431 = vmatprep.subr.mxu0 0.0
    %3432 = vmatpush1.msra.mxu0 0.0
    %3433 = vmatprep.subr.mxu0 0.0
    %3434 = vmatpush1.msra.mxu0 0.0
    %3435 = vmatprep.subr.mxu0 0.0
    %3436 = vmatpush1.msra.mxu0 0.0
    %3437 = vmatprep.subr.mxu0 0.0
    %3438 = vmatpush1.msra.mxu0 0.0
    %3439 = vmatprep.subr.mxu0 0.0
    %3440 = vmatpush1.msra.mxu0 0.0
    %3441 = vmatprep.subr.mxu0 0.0
    %3442 = vmatpush1.msra.mxu0 0.0
    %3443 = vmatprep.subr.mxu0 0.0
    %3444 = vmatpush1.msra.mxu0 0.0
    %3445 = vmatprep.subr.mxu0 0.0
    %3446 = vmatpush1.msra.mxu0 0.0
    %3447 = vmatprep.subr.mxu0 0.0
    %3448 = vmatpush1.msra.mxu0 0.0
    %3449 = vmatprep.mubr.f32.mxu0 0.0
    %3450 = vmatmul.mubr.f32.gmra.mrb[0].mxu0 %v3383
    %v3451 = vpop.f32.mrb[0].mxu0
    %v3452 = vadd.f32 %v3380, %v3451
    %v3453 = vpop.f32.mrb[0].mxu0
    %3454 = vdwg.mxu0
    %v3455 = vmax.f32 %v3452, 0.0
    %v3456 = vmul.f32 %v3455, 0.5
    %v3457 = vmul.f32 %v3456, 1.442695
    %v3458 = vpow.pop %v3457
    %3460 = vrot.lane.b32.xlu0 %v3458, 112
    %v3461 = vpop.permute.xlu0 %3460
    %v3463 = vmul.f32 %v33, %v3461
    %v3464 = vadd.f32 %v3455, %v3463
    %3467 = vrot.lane.b32.xlu0 %v3464, 16
    %v3468 = vpop.permute.xlu0 %3467
    %v3470 = vsel %vm1703, %v3382, %v3468
    %3471 = vrot.lane.b32.xlu0 %v2737, 96
    %v3472 = vpop.permute.xlu0 %3471
    %v3473 = vsel %vm1703, %v3472, 0
    %3475 = vmatprep.subr.mxu0 0.0
    %3476 = vmatpush1.msra.mxu0 %v3374
    %3477 = vmatprep.subr.mxu0 0.0
    %3478 = vmatpush1.msra.mxu0 %v3375
    %3479 = vmatprep.subr.mxu0 0.0
    %3480 = vmatpush1.msra.mxu0 0.0
    %3481 = vmatprep.subr.mxu0 0.0
    %3482 = vmatpush1.msra.mxu0 0.0
    %3483 = vmatprep.subr.mxu0 0.0
    %3484 = vmatpush1.msra.mxu0 0.0
    %3485 = vmatprep.subr.mxu0 0.0
    %3486 = vmatpush1.msra.mxu0 0.0
    %3487 = vmatprep.subr.mxu0 0.0
    %3488 = vmatpush1.msra.mxu0 0.0
    %3489 = vmatprep.subr.mxu0 0.0
    %3490 = vmatpush1.msra.mxu0 0.0
    %3491 = vmatprep.subr.mxu0 0.0
    %3492 = vmatpush1.msra.mxu0 0.0
    %3493 = vmatprep.subr.mxu0 0.0
    %3494 = vmatpush1.msra.mxu0 0.0
    %3495 = vmatprep.subr.mxu0 0.0
    %3496 = vmatpush1.msra.mxu0 0.0
    %3497 = vmatprep.subr.mxu0 0.0
    %3498 = vmatpush1.msra.mxu0 0.0
    %3499 = vmatprep.subr.mxu0 0.0
    %3500 = vmatpush1.msra.mxu0 0.0
    %3501 = vmatprep.subr.mxu0 0.0
    %3502 = vmatpush1.msra.mxu0 0.0
    %3503 = vmatprep.subr.mxu0 0.0
    %3504 = vmatpush1.msra.mxu0 0.0
    %3505 = vmatprep.subr.mxu0 0.0
    %3506 = vmatpush1.msra.mxu0 0.0
    %3507 = vmatprep.subr.mxu0 0.0
    %3508 = vmatpush1.msra.mxu0 0.0
    %3509 = vmatprep.subr.mxu0 0.0
    %3510 = vmatpush1.msra.mxu0 0.0
    %3511 = vmatprep.subr.mxu0 0.0
    %3512 = vmatpush1.msra.mxu0 0.0
    %3513 = vmatprep.subr.mxu0 0.0
    %3514 = vmatpush1.msra.mxu0 0.0
    %3515 = vmatprep.subr.mxu0 0.0
    %3516 = vmatpush1.msra.mxu0 0.0
    %3517 = vmatprep.subr.mxu0 0.0
    %3518 = vmatpush1.msra.mxu0 0.0
    %3519 = vmatprep.subr.mxu0 0.0
    %3520 = vmatpush1.msra.mxu0 0.0
    %3521 = vmatprep.subr.mxu0 0.0
    %3522 = vmatpush1.msra.mxu0 0.0
    %3523 = vmatprep.subr.mxu0 0.0
    %3524 = vmatpush1.msra.mxu0 0.0
    %3525 = vmatprep.subr.mxu0 0.0
    %3526 = vmatpush1.msra.mxu0 0.0
    %3527 = vmatprep.subr.mxu0 0.0
    %3528 = vmatpush1.msra.mxu0 0.0
    %3529 = vmatprep.subr.mxu0 0.0
    %3530 = vmatpush1.msra.mxu0 0.0
    %3531 = vmatprep.subr.mxu0 0.0
    %3532 = vmatpush1.msra.mxu0 0.0
    %3533 = vmatprep.subr.mxu0 0.0
    %3534 = vmatpush1.msra.mxu0 0.0
    %3535 = vmatprep.subr.mxu0 0.0
    %3536 = vmatpush1.msra.mxu0 0.0
    %3537 = vmatprep.subr.mxu0 0.0
    %3538 = vmatpush1.msra.mxu0 0.0
    %3539 = vmatprep.mubr.f32.mxu0 0.0
    %3540 = vmatmul.mubr.f32.gmra.mrb[0].mxu0 %v3473
    %v3541 = vpop.f32.mrb[0].mxu0
    %v3542 = vadd.f32 %v3380, %v3541
    %v3543 = vpop.f32.mrb[0].mxu0
    %3544 = vdwg.mxu0
    %v3545 = vmax.f32 %v3542, 0.0
    %v3546 = vmul.f32 %v3545, 0.5
    %v3547 = vmul.f32 %v3546, 1.442695
    %v3548 = vpow.pop %v3547
    %v3550 = vrot.slane %v3548, 6
    %3551 = vrot.lane.b32.xlu0 %v3550, 112
    %v3552 = vpop.permute.xlu0 %3551
    %v3554 = vmul.f32 %v33, %v3552
    %v3556 = vrot.slane %v3554, 2
    %v3558 = vadd.f32 %v3545, %v3556
    %3561 = vrot.lane.b32.xlu0 %v3558, 16
    %v3562 = vpop.permute.xlu0 %3561
    %v3564 = vsel %vm1703, %v3472, %v3562
    %3565 = vrot.lane.b32.xlu0 %v2843, 96
    %v3566 = vpop.permute.xlu0 %3565
    %v3567 = vsel %vm1703, %v3566, 0
    %3569 = vmatprep.subr.mxu0 0.0
    %3570 = vmatpush1.msra.mxu0 %v3374
    %3571 = vmatprep.subr.mxu0 0.0
    %3572 = vmatpush1.msra.mxu0 %v3375
    %3573 = vmatprep.subr.mxu0 0.0
    %3574 = vmatpush1.msra.mxu0 0.0
    %3575 = vmatprep.subr.mxu0 0.0
    %3576 = vmatpush1.msra.mxu0 0.0
    %3577 = vmatprep.subr.mxu0 0.0
    %3578 = vmatpush1.msra.mxu0 0.0
    %3579 = vmatprep.subr.mxu0 0.0
    %3580 = vmatpush1.msra.mxu0 0.0
    %3581 = vmatprep.subr.mxu0 0.0
    %3582 = vmatpush1.msra.mxu0 0.0
    %3583 = vmatprep.subr.mxu0 0.0
    %3584 = vmatpush1.msra.mxu0 0.0
    %3585 = vmatprep.subr.mxu0 0.0
    %3586 = vmatpush1.msra.mxu0 0.0
    %3587 = vmatprep.subr.mxu0 0.0
    %3588 = vmatpush1.msra.mxu0 0.0
    %3589 = vmatprep.subr.mxu0 0.0
    %3590 = vmatpush1.msra.mxu0 0.0
    %3591 = vmatprep.subr.mxu0 0.0
    %3592 = vmatpush1.msra.mxu0 0.0
    %3593 = vmatprep.subr.mxu0 0.0
    %3594 = vmatpush1.msra.mxu0 0.0
    %3595 = vmatprep.subr.mxu0 0.0
    %3596 = vmatpush1.msra.mxu0 0.0
    %3597 = vmatprep.subr.mxu0 0.0
    %3598 = vmatpush1.msra.mxu0 0.0
    %3599 = vmatprep.subr.mxu0 0.0
    %3600 = vmatpush1.msra.mxu0 0.0
    %3601 = vmatprep.subr.mxu0 0.0
    %3602 = vmatpush1.msra.mxu0 0.0
    %3603 = vmatprep.subr.mxu0 0.0
    %3604 = vmatpush1.msra.mxu0 0.0
    %3605 = vmatprep.subr.mxu0 0.0
    %3606 = vmatpush1.msra.mxu0 0.0
    %3607 = vmatprep.subr.mxu0 0.0
    %3608 = vmatpush1.msra.mxu0 0.0
    %3609 = vmatprep.subr.mxu0 0.0
    %3610 = vmatpush1.msra.mxu0 0.0
    %3611 = vmatprep.subr.mxu0 0.0
    %3612 = vmatpush1.msra.mxu0 0.0
    %3613 = vmatprep.subr.mxu0 0.0
    %3614 = vmatpush1.msra.mxu0 0.0
    %3615 = vmatprep.subr.mxu0 0.0
    %3616 = vmatpush1.msra.mxu0 0.0
    %3617 = vmatprep.subr.mxu0 0.0
    %3618 = vmatpush1.msra.mxu0 0.0
    %3619 = vmatprep.subr.mxu0 0.0
    %3620 = vmatpush1.msra.mxu0 0.0
    %3621 = vmatprep.subr.mxu0 0.0
    %3622 = vmatpush1.msra.mxu0 0.0
    %3623 = vmatprep.subr.mxu0 0.0
    %3624 = vmatpush1.msra.mxu0 0.0
    %3625 = vmatprep.subr.mxu0 0.0
    %3626 = vmatpush1.msra.mxu0 0.0
    %3627 = vmatprep.subr.mxu0 0.0
    %3628 = vmatpush1.msra.mxu0 0.0
    %3629 = vmatprep.subr.mxu0 0.0
    %3630 = vmatpush1.msra.mxu0 0.0
    %3631 = vmatprep.subr.mxu0 0.0
    %3632 = vmatpush1.msra.mxu0 0.0
    %3633 = vmatprep.mubr.f32.mxu0 0.0
    %3634 = vmatmul.mubr.f32.gmra.mrb[0].mxu0 %v3567
    %v3635 = vpop.f32.mrb[0].mxu0
    %v3636 = vadd.f32 %v3380, %v3635
    %v3637 = vpop.f32.mrb[0].mxu0
    %3638 = vdwg.mxu0
    %v3639 = vmax.f32 %v3636, 0.0
    %v3640 = vmul.f32 %v3639, 0.5
    %v3641 = vmul.f32 %v3640, 1.442695
    %v3642 = vpow.pop %v3641
    %v3644 = vrot.slane %v3642, 4
    %3645 = vrot.lane.b32.xlu0 %v3644, 112
    %v3646 = vpop.permute.xlu0 %3645
    %v3648 = vmul.f32 %v33, %v3646
    %v3650 = vrot.slane %v3648, 4
    %v3652 = vadd.f32 %v3639, %v3650
    %3655 = vrot.lane.b32.xlu0 %v3652, 16
    %v3656 = vpop.permute.xlu0 %3655
    %v3658 = vsel %vm1703, %v3566, %v3656
    %3659 = vrot.lane.b32.xlu0 %v2949, 96
    %v3660 = vpop.permute.xlu0 %3659
    %v3661 = vsel %vm1703, %v3660, 0
    %3663 = vmatprep.subr.mxu0 0.0
    %3664 = vmatpush1.msra.mxu0 %v3374
    %3665 = vmatprep.subr.mxu0 0.0
    %3666 = vmatpush1.msra.mxu0 %v3375
    %3667 = vmatprep.subr.mxu0 0.0
    %3668 = vmatpush1.msra.mxu0 0.0
    %3669 = vmatprep.subr.mxu0 0.0
    %3670 = vmatpush1.msra.mxu0 0.0
    %3671 = vmatprep.subr.mxu0 0.0
    %3672 = vmatpush1.msra.mxu0 0.0
    %3673 = vmatprep.subr.mxu0 0.0
    %3674 = vmatpush1.msra.mxu0 0.0
    %3675 = vmatprep.subr.mxu0 0.0
    %3676 = vmatpush1.msra.mxu0 0.0
    %3677 = vmatprep.subr.mxu0 0.0
    %3678 = vmatpush1.msra.mxu0 0.0
    %3679 = vmatprep.subr.mxu0 0.0
    %3680 = vmatpush1.msra.mxu0 0.0
    %3681 = vmatprep.subr.mxu0 0.0
    %3682 = vmatpush1.msra.mxu0 0.0
    %3683 = vmatprep.subr.mxu0 0.0
    %3684 = vmatpush1.msra.mxu0 0.0
    %3685 = vmatprep.subr.mxu0 0.0
    %3686 = vmatpush1.msra.mxu0 0.0
    %3687 = vmatprep.subr.mxu0 0.0
    %3688 = vmatpush1.msra.mxu0 0.0
    %3689 = vmatprep.subr.mxu0 0.0
    %3690 = vmatpush1.msra.mxu0 0.0
    %3691 = vmatprep.subr.mxu0 0.0
    %3692 = vmatpush1.msra.mxu0 0.0
    %3693 = vmatprep.subr.mxu0 0.0
    %3694 = vmatpush1.msra.mxu0 0.0
    %3695 = vmatprep.subr.mxu0 0.0
    %3696 = vmatpush1.msra.mxu0 0.0
    %3697 = vmatprep.subr.mxu0 0.0
    %3698 = vmatpush1.msra.mxu0 0.0
    %3699 = vmatprep.subr.mxu0 0.0
    %3700 = vmatpush1.msra.mxu0 0.0
    %3701 = vmatprep.subr.mxu0 0.0
    %3702 = vmatpush1.msra.mxu0 0.0
    %3703 = vmatprep.subr.mxu0 0.0
    %3704 = vmatpush1.msra.mxu0 0.0
    %3705 = vmatprep.subr.mxu0 0.0
    %3706 = vmatpush1.msra.mxu0 0.0
    %3707 = vmatprep.subr.mxu0 0.0
    %3708 = vmatpush1.msra.mxu0 0.0
    %3709 = vmatprep.subr.mxu0 0.0
    %3710 = vmatpush1.msra.mxu0 0.0
    %3711 = vmatprep.subr.mxu0 0.0
    %3712 = vmatpush1.msra.mxu0 0.0
    %3713 = vmatprep.subr.mxu0 0.0
    %3714 = vmatpush1.msra.mxu0 0.0
    %3715 = vmatprep.subr.mxu0 0.0
    %3716 = vmatpush1.msra.mxu0 0.0
    %3717 = vmatprep.subr.mxu0 0.0
    %3718 = vmatpush1.msra.mxu0 0.0
    %3719 = vmatprep.subr.mxu0 0.0
    %3720 = vmatpush1.msra.mxu0 0.0
    %3721 = vmatprep.subr.mxu0 0.0
    %3722 = vmatpush1.msra.mxu0 0.0
    %3723 = vmatprep.subr.mxu0 0.0
    %3724 = vmatpush1.msra.mxu0 0.0
    %3725 = vmatprep.subr.mxu0 0.0
    %3726 = vmatpush1.msra.mxu0 0.0
    %3727 = vmatprep.mubr.f32.mxu0 0.0
    %3728 = vmatmul.mubr.f32.gmra.mrb[0].mxu0 %v3661
    %v3729 = vpop.f32.mrb[0].mxu0
    %v3730 = vadd.f32 %v3380, %v3729
    %v3731 = vpop.f32.mrb[0].mxu0
    %3732 = vdwg.mxu0
    %v3733 = vmax.f32 %v3730, 0.0
    %v3734 = vmul.f32 %v3733, 0.5
    %v3735 = vmul.f32 %v3734, 1.442695
    %v3736 = vpow.pop %v3735
    %v3738 = vrot.slane %v3736, 2
    %3739 = vrot.lane.b32.xlu0 %v3738, 112
    %v3740 = vpop.permute.xlu0 %3739
    %v3742 = vmul.f32 %v33, %v3740
    %v3744 = vrot.slane %v3742, 6
    %v3746 = vadd.f32 %v3733, %v3744
    %3749 = vrot.lane.b32.xlu0 %v3746, 16
    %v3750 = vpop.permute.xlu0 %3749
    %v3752 = vsel %vm1703, %v3660, %v3750
    %3753 = vrot.lane.b32.xlu0 %v3055, 96
    %v3754 = vpop.permute.xlu0 %3753
    %v3755 = vsel %vm1703, %v3754, 0
    %3757 = vmatprep.subr.mxu0 0.0
    %3758 = vmatpush1.msra.mxu0 %v3374
    %3759 = vmatprep.subr.mxu0 0.0
    %3760 = vmatpush1.msra.mxu0 %v3375
    %3761 = vmatprep.subr.mxu0 0.0
    %3762 = vmatpush1.msra.mxu0 0.0
    %3763 = vmatprep.subr.mxu0 0.0
    %3764 = vmatpush1.msra.mxu0 0.0
    %3765 = vmatprep.subr.mxu0 0.0
    %3766 = vmatpush1.msra.mxu0 0.0
    %3767 = vmatprep.subr.mxu0 0.0
    %3768 = vmatpush1.msra.mxu0 0.0
    %3769 = vmatprep.subr.mxu0 0.0
    %3770 = vmatpush1.msra.mxu0 0.0
    %3771 = vmatprep.subr.mxu0 0.0
    %3772 = vmatpush1.msra.mxu0 0.0
    %3773 = vmatprep.subr.mxu0 0.0
    %3774 = vmatpush1.msra.mxu0 0.0
    %3775 = vmatprep.subr.mxu0 0.0
    %3776 = vmatpush1.msra.mxu0 0.0
    %3777 = vmatprep.subr.mxu0 0.0
    %3778 = vmatpush1.msra.mxu0 0.0
    %3779 = vmatprep.subr.mxu0 0.0
    %3780 = vmatpush1.msra.mxu0 0.0
    %3781 = vmatprep.subr.mxu0 0.0
    %3782 = vmatpush1.msra.mxu0 0.0
    %3783 = vmatprep.subr.mxu0 0.0
    %3784 = vmatpush1.msra.mxu0 0.0
    %3785 = vmatprep.subr.mxu0 0.0
    %3786 = vmatpush1.msra.mxu0 0.0
    %3787 = vmatprep.subr.mxu0 0.0
    %3788 = vmatpush1.msra.mxu0 0.0
    %3789 = vmatprep.subr.mxu0 0.0
    %3790 = vmatpush1.msra.mxu0 0.0
    %3791 = vmatprep.subr.mxu0 0.0
    %3792 = vmatpush1.msra.mxu0 0.0
    %3793 = vmatprep.subr.mxu0 0.0
    %3794 = vmatpush1.msra.mxu0 0.0
    %3795 = vmatprep.subr.mxu0 0.0
    %3796 = vmatpush1.msra.mxu0 0.0
    %3797 = vmatprep.subr.mxu0 0.0
    %3798 = vmatpush1.msra.mxu0 0.0
    %3799 = vmatprep.subr.mxu0 0.0
    %3800 = vmatpush1.msra.mxu0 0.0
    %3801 = vmatprep.subr.mxu0 0.0
    %3802 = vmatpush1.msra.mxu0 0.0
    %3803 = vmatprep.subr.mxu0 0.0
    %3804 = vmatpush1.msra.mxu0 0.0
    %3805 = vmatprep.subr.mxu0 0.0
    %3806 = vmatpush1.msra.mxu0 0.0
    %3807 = vmatprep.subr.mxu0 0.0
    %3808 = vmatpush1.msra.mxu0 0.0
    %3809 = vmatprep.subr.mxu0 0.0
    %3810 = vmatpush1.msra.mxu0 0.0
    %3811 = vmatprep.subr.mxu0 0.0
    %3812 = vmatpush1.msra.mxu0 0.0
    %3813 = vmatprep.subr.mxu0 0.0
    %3814 = vmatpush1.msra.mxu0 0.0
    %3815 = vmatprep.subr.mxu0 0.0
    %3816 = vmatpush1.msra.mxu0 0.0
    %3817 = vmatprep.subr.mxu0 0.0
    %3818 = vmatpush1.msra.mxu0 0.0
    %3819 = vmatprep.subr.mxu0 0.0
    %3820 = vmatpush1.msra.mxu0 0.0
    %3821 = vmatprep.mubr.f32.mxu0 0.0
    %3822 = vmatmul.mubr.f32.gmra.mrb[0].mxu0 %v3755
    %v3823 = vpop.f32.mrb[0].mxu0
    %v3824 = vadd.f32 %v3380, %v3823
    %v3825 = vpop.f32.mrb[0].mxu0
    %3826 = vdwg.mxu0
    %v3827 = vmax.f32 %v3824, 0.0
    %v3828 = vmul.f32 %v3827, 0.5
    %v3829 = vmul.f32 %v3828, 1.442695
    %v3830 = vpow.pop %v3829
    %3832 = vrot.lane.b32.xlu0 %v3830, 112
    %v3833 = vpop.permute.xlu0 %3832
    %v3835 = vmul.f32 %v34, %v3833
    %v3836 = vadd.f32 %v3827, %v3835
    %3839 = vrot.lane.b32.xlu0 %v3836, 16
    %v3840 = vpop.permute.xlu0 %3839
    %v3842 = vsel %vm1703, %v3754, %v3840
    %3843 = vrot.lane.b32.xlu0 %v3161, 96
    %v3844 = vpop.permute.xlu0 %3843
    %v3845 = vsel %vm1703, %v3844, 0
    %3847 = vmatprep.subr.mxu0 0.0
    %3848 = vmatpush1.msra.mxu0 %v3374
    %3849 = vmatprep.subr.mxu0 0.0
    %3850 = vmatpush1.msra.mxu0 %v3375
    %3851 = vmatprep.subr.mxu0 0.0
    %3852 = vmatpush1.msra.mxu0 0.0
    %3853 = vmatprep.subr.mxu0 0.0
    %3854 = vmatpush1.msra.mxu0 0.0
    %3855 = vmatprep.subr.mxu0 0.0
    %3856 = vmatpush1.msra.mxu0 0.0
    %3857 = vmatprep.subr.mxu0 0.0
    %3858 = vmatpush1.msra.mxu0 0.0
    %3859 = vmatprep.subr.mxu0 0.0
    %3860 = vmatpush1.msra.mxu0 0.0
    %3861 = vmatprep.subr.mxu0 0.0
    %3862 = vmatpush1.msra.mxu0 0.0
    %3863 = vmatprep.subr.mxu0 0.0
    %3864 = vmatpush1.msra.mxu0 0.0
    %3865 = vmatprep.subr.mxu0 0.0
    %3866 = vmatpush1.msra.mxu0 0.0
    %3867 = vmatprep.subr.mxu0 0.0
    %3868 = vmatpush1.msra.mxu0 0.0
    %3869 = vmatprep.subr.mxu0 0.0
    %3870 = vmatpush1.msra.mxu0 0.0
    %3871 = vmatprep.subr.mxu0 0.0
    %3872 = vmatpush1.msra.mxu0 0.0
    %3873 = vmatprep.subr.mxu0 0.0
    %3874 = vmatpush1.msra.mxu0 0.0
    %3875 = vmatprep.subr.mxu0 0.0
    %3876 = vmatpush1.msra.mxu0 0.0
    %3877 = vmatprep.subr.mxu0 0.0
    %3878 = vmatpush1.msra.mxu0 0.0
    %3879 = vmatprep.subr.mxu0 0.0
    %3880 = vmatpush1.msra.mxu0 0.0
    %3881 = vmatprep.subr.mxu0 0.0
    %3882 = vmatpush1.msra.mxu0 0.0
    %3883 = vmatprep.subr.mxu0 0.0
    %3884 = vmatpush1.msra.mxu0 0.0
    %3885 = vmatprep.subr.mxu0 0.0
    %3886 = vmatpush1.msra.mxu0 0.0
    %3887 = vmatprep.subr.mxu0 0.0
    %3888 = vmatpush1.msra.mxu0 0.0
    %3889 = vmatprep.subr.mxu0 0.0
    %3890 = vmatpush1.msra.mxu0 0.0
    %3891 = vmatprep.subr.mxu0 0.0
    %3892 = vmatpush1.msra.mxu0 0.0
    %3893 = vmatprep.subr.mxu0 0.0
    %3894 = vmatpush1.msra.mxu0 0.0
    %3895 = vmatprep.subr.mxu0 0.0
    %3896 = vmatpush1.msra.mxu0 0.0
    %3897 = vmatprep.subr.mxu0 0.0
    %3898 = vmatpush1.msra.mxu0 0.0
    %3899 = vmatprep.subr.mxu0 0.0
    %3900 = vmatpush1.msra.mxu0 0.0
    %3901 = vmatprep.subr.mxu0 0.0
    %3902 = vmatpush1.msra.mxu0 0.0
    %3903 = vmatprep.subr.mxu0 0.0
    %3904 = vmatpush1.msra.mxu0 0.0
    %3905 = vmatprep.subr.mxu0 0.0
    %3906 = vmatpush1.msra.mxu0 0.0
    %3907 = vmatprep.subr.mxu0 0.0
    %3908 = vmatpush1.msra.mxu0 0.0
    %3909 = vmatprep.subr.mxu0 0.0
    %3910 = vmatpush1.msra.mxu0 0.0
    %3911 = vmatprep.mubr.f32.mxu0 0.0
    %3912 = vmatmul.mubr.f32.gmra.mrb[0].mxu0 %v3845
    %v3913 = vpop.f32.mrb[0].mxu0
    %v3914 = vadd.f32 %v3380, %v3913
    %v3915 = vpop.f32.mrb[0].mxu0
    %3916 = vdwg.mxu0
    %v3917 = vmax.f32 %v3914, 0.0
    %v3918 = vmul.f32 %v3917, 0.5
    %v3919 = vmul.f32 %v3918, 1.442695
    %v3920 = vpow.pop %v3919
    %v3922 = vrot.slane %v3920, 6
    %3923 = vrot.lane.b32.xlu0 %v3922, 112
    %v3924 = vpop.permute.xlu0 %3923
    %v3926 = vmul.f32 %v34, %v3924
    %v3928 = vrot.slane %v3926, 2
    %v3930 = vadd.f32 %v3917, %v3928
    %3933 = vrot.lane.b32.xlu0 %v3930, 16
    %v3934 = vpop.permute.xlu0 %3933
    %v3936 = vsel %vm1703, %v3844, %v3934
    %3937 = vrot.lane.b32.xlu0 %v3267, 96
    %v3938 = vpop.permute.xlu0 %3937
    %v3939 = vsel %vm1703, %v3938, 0
    %3941 = vmatprep.subr.mxu0 0.0
    %3942 = vmatpush1.msra.mxu0 %v3374
    %3943 = vmatprep.subr.mxu0 0.0
    %3944 = vmatpush1.msra.mxu0 %v3375
    %3945 = vmatprep.subr.mxu0 0.0
    %3946 = vmatpush1.msra.mxu0 0.0
    %3947 = vmatprep.subr.mxu0 0.0
    %3948 = vmatpush1.msra.mxu0 0.0
    %3949 = vmatprep.subr.mxu0 0.0
    %3950 = vmatpush1.msra.mxu0 0.0
    %3951 = vmatprep.subr.mxu0 0.0
    %3952 = vmatpush1.msra.mxu0 0.0
    %3953 = vmatprep.subr.mxu0 0.0
    %3954 = vmatpush1.msra.mxu0 0.0
    %3955 = vmatprep.subr.mxu0 0.0
    %3956 = vmatpush1.msra.mxu0 0.0
    %3957 = vmatprep.subr.mxu0 0.0
    %3958 = vmatpush1.msra.mxu0 0.0
    %3959 = vmatprep.subr.mxu0 0.0
    %3960 = vmatpush1.msra.mxu0 0.0
    %3961 = vmatprep.subr.mxu0 0.0
    %3962 = vmatpush1.msra.mxu0 0.0
    %3963 = vmatprep.subr.mxu0 0.0
    %3964 = vmatpush1.msra.mxu0 0.0
    %3965 = vmatprep.subr.mxu0 0.0
    %3966 = vmatpush1.msra.mxu0 0.0
    %3967 = vmatprep.subr.mxu0 0.0
    %3968 = vmatpush1.msra.mxu0 0.0
    %3969 = vmatprep.subr.mxu0 0.0
    %3970 = vmatpush1.msra.mxu0 0.0
    %3971 = vmatprep.subr.mxu0 0.0
    %3972 = vmatpush1.msra.mxu0 0.0
    %3973 = vmatprep.subr.mxu0 0.0
    %3974 = vmatpush1.msra.mxu0 0.0
    %3975 = vmatprep.subr.mxu0 0.0
    %3976 = vmatpush1.msra.mxu0 0.0
    %3977 = vmatprep.subr.mxu0 0.0
    %3978 = vmatpush1.msra.mxu0 0.0
    %3979 = vmatprep.subr.mxu0 0.0
    %3980 = vmatpush1.msra.mxu0 0.0
    %3981 = vmatprep.subr.mxu0 0.0
    %3982 = vmatpush1.msra.mxu0 0.0
    %3983 = vmatprep.subr.mxu0 0.0
    %3984 = vmatpush1.msra.mxu0 0.0
    %3985 = vmatprep.subr.mxu0 0.0
    %3986 = vmatpush1.msra.mxu0 0.0
    %3987 = vmatprep.subr.mxu0 0.0
    %3988 = vmatpush1.msra.mxu0 0.0
    %3989 = vmatprep.subr.mxu0 0.0
    %3990 = vmatpush1.msra.mxu0 0.0
    %3991 = vmatprep.subr.mxu0 0.0
    %3992 = vmatpush1.msra.mxu0 0.0
    %3993 = vmatprep.subr.mxu0 0.0
    %3994 = vmatpush1.msra.mxu0 0.0
    %3995 = vmatprep.subr.mxu0 0.0
    %3996 = vmatpush1.msra.mxu0 0.0
    %3997 = vmatprep.subr.mxu0 0.0
    %3998 = vmatpush1.msra.mxu0 0.0
    %3999 = vmatprep.subr.mxu0 0.0
    %4000 = vmatpush1.msra.mxu0 0.0
    %4001 = vmatprep.subr.mxu0 0.0
    %4002 = vmatpush1.msra.mxu0 0.0
    %4003 = vmatprep.subr.mxu0 0.0
    %4004 = vmatpush1.msra.mxu0 0.0
    %4005 = vmatprep.mubr.f32.mxu0 0.0
    %4006 = vmatmul.mubr.f32.gmra.mrb[0].mxu0 %v3939
    %v4007 = vpop.f32.mrb[0].mxu0
    %v4008 = vadd.f32 %v3380, %v4007
    %v4009 = vpop.f32.mrb[0].mxu0
    %4010 = vdwg.mxu0
    %v4011 = vmax.f32 %v4008, 0.0
    %v4012 = vmul.f32 %v4011, 0.5
    %v4013 = vmul.f32 %v4012, 1.442695
    %v4014 = vpow.pop %v4013
    %v4016 = vrot.slane %v4014, 4
    %4017 = vrot.lane.b32.xlu0 %v4016, 112
    %v4018 = vpop.permute.xlu0 %4017
    %v4020 = vmul.f32 %v34, %v4018
    %v4022 = vrot.slane %v4020, 4
    %v4024 = vadd.f32 %v4011, %v4022
    %4027 = vrot.lane.b32.xlu0 %v4024, 16
    %v4028 = vpop.permute.xlu0 %4027
    %v4030 = vsel %vm1703, %v3938, %v4028
    %4032 = vrot.lane.b32.xlu0 %v3373, 96
    %v4033 = vpop.permute.xlu0 %4032
    %v4034 = vsel %vm1703, %v4033, 0
    %4036 = vmatprep.subr.mxu0 0.0
    %4037 = vmatpush1.msra.mxu0 %v3374
    %4038 = vmatprep.subr.mxu0 0.0
    %4039 = vmatpush1.msra.mxu0 %v3375
    %4040 = vmatprep.subr.mxu0 0.0
    %4041 = vmatpush1.msra.mxu0 0.0
    %4042 = vmatprep.subr.mxu0 0.0
    %4043 = vmatpush1.msra.mxu0 0.0
    %4044 = vmatprep.subr.mxu0 0.0
    %4045 = vmatpush1.msra.mxu0 0.0
    %4046 = vmatprep.subr.mxu0 0.0
    %4047 = vmatpush1.msra.mxu0 0.0
    %4048 = vmatprep.subr.mxu0 0.0
    %4049 = vmatpush1.msra.mxu0 0.0
    %4050 = vmatprep.subr.mxu0 0.0
    %4051 = vmatpush1.msra.mxu0 0.0
    %4052 = vmatprep.subr.mxu0 0.0
    %4053 = vmatpush1.msra.mxu0 0.0
    %4054 = vmatprep.subr.mxu0 0.0
    %4055 = vmatpush1.msra.mxu0 0.0
    %4056 = vmatprep.subr.mxu0 0.0
    %4057 = vmatpush1.msra.mxu0 0.0
    %4058 = vmatprep.subr.mxu0 0.0
    %4059 = vmatpush1.msra.mxu0 0.0
    %4060 = vmatprep.subr.mxu0 0.0
    %4061 = vmatpush1.msra.mxu0 0.0
    %4062 = vmatprep.subr.mxu0 0.0
    %4063 = vmatpush1.msra.mxu0 0.0
    %4064 = vmatprep.subr.mxu0 0.0
    %4065 = vmatpush1.msra.mxu0 0.0
    %4066 = vmatprep.subr.mxu0 0.0
    %4067 = vmatpush1.msra.mxu0 0.0
    %4068 = vmatprep.subr.mxu0 0.0
    %4069 = vmatpush1.msra.mxu0 0.0
    %4070 = vmatprep.subr.mxu0 0.0
    %4071 = vmatpush1.msra.mxu0 0.0
    %4072 = vmatprep.subr.mxu0 0.0
    %4073 = vmatpush1.msra.mxu0 0.0
    %4074 = vmatprep.subr.mxu0 0.0
    %4075 = vmatpush1.msra.mxu0 0.0
    %4076 = vmatprep.subr.mxu0 0.0
    %4077 = vmatpush1.msra.mxu0 0.0
    %4078 = vmatprep.subr.mxu0 0.0
    %4079 = vmatpush1.msra.mxu0 0.0
    %4080 = vmatprep.subr.mxu0 0.0
    %4081 = vmatpush1.msra.mxu0 0.0
    %4082 = vmatprep.subr.mxu0 0.0
    %4083 = vmatpush1.msra.mxu0 0.0
    %4084 = vmatprep.subr.mxu0 0.0
    %4085 = vmatpush1.msra.mxu0 0.0
    %4086 = vmatprep.subr.mxu0 0.0
    %4087 = vmatpush1.msra.mxu0 0.0
    %4088 = vmatprep.subr.mxu0 0.0
    %4089 = vmatpush1.msra.mxu0 0.0
    %4090 = vmatprep.subr.mxu0 0.0
    %4091 = vmatpush1.msra.mxu0 0.0
    %4092 = vmatprep.subr.mxu0 0.0
    %4093 = vmatpush1.msra.mxu0 0.0
    %4094 = vmatprep.subr.mxu0 0.0
    %4095 = vmatpush1.msra.mxu0 0.0
    %4096 = vmatprep.subr.mxu0 0.0
    %4097 = vmatpush1.msra.mxu0 0.0
    %4098 = vmatprep.subr.mxu0 0.0
    %4099 = vmatpush1.msra.mxu0 0.0
    %4100 = vmatprep.mubr.f32.mxu0 0.0
    %4101 = vmatmul.mubr.f32.gmra.mrb[0].mxu0 %v4034
    %v4102 = vpop.f32.mrb[0].mxu0
    %v4103 = vadd.f32 %v3380, %v4102
    %v4104 = vpop.f32.mrb[0].mxu0
    %4105 = vdwg.mxu0
    %v4106 = vmax.f32 %v4103, 0.0
    %v4107 = vmul.f32 %v4106, 0.5
    %v4108 = vmul.f32 %v4107, 1.442695
    %v4109 = vpow.pop %v4108
    %v4111 = vrot.slane %v4109, 2
    %4112 = vrot.lane.b32.xlu0 %v4111, 112
    %v4113 = vpop.permute.xlu0 %4112
    %v4115 = vmul.f32 %v34, %v4113
    %v4117 = vrot.slane %v4115, 6
    %v4119 = vadd.f32 %v4106, %v4117
    %4122 = vrot.lane.b32.xlu0 %v4119, 16
    %v4123 = vpop.permute.xlu0 %4122
    %v4125 = vsel %vm1703, %v4033, %v4123
    %v4126 = vld [vmem:[#allocation2 + $0xb0] sm:$0xff]
    %v4127 = vld [vmem:[#allocation2 + $0xb8] sm:$0xff]
    %v4128 = vld [vmem:[#allocation2 + $0xc0] sm:$0xff]
    %v4129 = vld [vmem:[#allocation2 + $0xc8] sm:$0xff]
    %v4130 = vld [vmem:[#allocation2 + $0xd0] sm:$0xff]
    %v4131 = vld [vmem:[%s3 + $0x5] sm:$0x1]
    %v4132 = vsel %vm44, %v3470, 0.0
    %v4133 = vlaneseq
    %v4134 = vshrl.u32 %v4133, 7
    %v4135 = vsub.s32 0, %v4134
    %v4136 = vrot.slane %v4131, %v4135
    %vm4137 = vcmask 326656
    %v4139 = vsel %vm4137, %v4132, 0
    %4141 = vmatprep.subr.mxu0 0.0
    %4142 = vmatpush1.msra.mxu0 %v4126
    %4143 = vmatprep.subr.mxu0 0.0
    %4144 = vmatpush1.msra.mxu0 %v4127
    %4145 = vmatprep.subr.mxu0 0.0
    %4146 = vmatpush1.msra.mxu0 %v4128
    %4147 = vmatprep.subr.mxu0 0.0
    %4148 = vmatpush1.msra.mxu0 %v4129
    %4149 = vmatprep.subr.mxu0 0.0
    %4150 = vmatpush1.msra.mxu0 %v4130
    %4151 = vmatprep.subr.mxu0 0.0
    %4152 = vmatpush1.msra.mxu0 0.0
    %4153 = vmatprep.subr.mxu0 0.0
    %4154 = vmatpush1.msra.mxu0 0.0
    %4155 = vmatprep.subr.mxu0 0.0
    %4156 = vmatpush1.msra.mxu0 0.0
    %4157 = vmatprep.subr.mxu0 0.0
    %4158 = vmatpush1.msra.mxu0 0.0
    %4159 = vmatprep.subr.mxu0 0.0
    %4160 = vmatpush1.msra.mxu0 0.0
    %4161 = vmatprep.subr.mxu0 0.0
    %4162 = vmatpush1.msra.mxu0 0.0
    %4163 = vmatprep.subr.mxu0 0.0
    %4164 = vmatpush1.msra.mxu0 0.0
    %4165 = vmatprep.subr.mxu0 0.0
    %4166 = vmatpush1.msra.mxu0 0.0
    %4167 = vmatprep.subr.mxu0 0.0
    %4168 = vmatpush1.msra.mxu0 0.0
    %4169 = vmatprep.subr.mxu0 0.0
    %4170 = vmatpush1.msra.mxu0 0.0
    %4171 = vmatprep.subr.mxu0 0.0
    %4172 = vmatpush1.msra.mxu0 0.0
    %4173 = vmatprep.subr.mxu0 0.0
    %4174 = vmatpush1.msra.mxu0 0.0
    %4175 = vmatprep.subr.mxu0 0.0
    %4176 = vmatpush1.msra.mxu0 0.0
    %4177 = vmatprep.subr.mxu0 0.0
    %4178 = vmatpush1.msra.mxu0 0.0
    %4179 = vmatprep.subr.mxu0 0.0
    %4180 = vmatpush1.msra.mxu0 0.0
    %4181 = vmatprep.subr.mxu0 0.0
    %4182 = vmatpush1.msra.mxu0 0.0
    %4183 = vmatprep.subr.mxu0 0.0
    %4184 = vmatpush1.msra.mxu0 0.0
    %4185 = vmatprep.subr.mxu0 0.0
    %4186 = vmatpush1.msra.mxu0 0.0
    %4187 = vmatprep.subr.mxu0 0.0
    %4188 = vmatpush1.msra.mxu0 0.0
    %4189 = vmatprep.subr.mxu0 0.0
    %4190 = vmatpush1.msra.mxu0 0.0
    %4191 = vmatprep.subr.mxu0 0.0
    %4192 = vmatpush1.msra.mxu0 0.0
    %4193 = vmatprep.subr.mxu0 0.0
    %4194 = vmatpush1.msra.mxu0 0.0
    %4195 = vmatprep.subr.mxu0 0.0
    %4196 = vmatpush1.msra.mxu0 0.0
    %4197 = vmatprep.subr.mxu0 0.0
    %4198 = vmatpush1.msra.mxu0 0.0
    %4199 = vmatprep.subr.mxu0 0.0
    %4200 = vmatpush1.msra.mxu0 0.0
    %4201 = vmatprep.subr.mxu0 0.0
    %4202 = vmatpush1.msra.mxu0 0.0
    %4203 = vmatprep.subr.mxu0 0.0
    %4204 = vmatpush1.msra.mxu0 0.0
    %4205 = vmatprep.mubr.f32.mxu0 0.0
    %4206 = vmatmul.mubr.f32.gmra.mrb[0].mxu0 %v4139
    %v4207 = vpop.f32.mrb[0].mxu0
    %v4208 = vadd.f32 %v4136, %v4207
    %v4209 = vpop.f32.mrb[0].mxu0
    %4210 = vdwg.mxu0
    %v4211 = vxor.u32 %v4208, 2147483648
    %v4212 = vmul.f32 %v4211, 1.442695
    %v4213 = vpow.pop %v4212
    %v4214 = vadd.f32 %v4213, 1.0
    %v4215 = vrcp.pop %v4214
    %v4216 = vmul.f32 1.0, %v4215
    %v4217 = vtanh.pop %v4208
    %v4218 = vmul.f32 %v4216, 0.0
    %4220 = vrot.lane.b32.xlu0 %v4217, 104
    %v4221 = vpop.permute.xlu0 %4220
    %v4223 = vmul.f32 %v4216, %v4221
    %4225 = vrot.lane.b32.xlu0 %v4223, 8
    %v4226 = vpop.permute.xlu0 %4225
    %v4228 = vadd.f32 %v4218, %v4226
    %v4229 = vtanh.pop %v4228
    %4231 = vrot.lane.b32.xlu0 %v4229, 8
    %v4232 = vpop.permute.xlu0 %4231
    %v4234 = vmul.f32 %v4216, %v4232
    %4236 = vrot.lane.b32.xlu0 %v4234, 16
    %v4237 = vpop.permute.xlu0 %4236
    %v4239 = vsel %vm44, %v3564, %v4237
    %v4241 = vsel %vm4137, %v4239, 0
    %4243 = vmatprep.subr.mxu0 0.0
    %4244 = vmatpush1.msra.mxu0 %v4126
    %4245 = vmatprep.subr.mxu0 0.0
    %4246 = vmatpush1.msra.mxu0 %v4127
    %4247 = vmatprep.subr.mxu0 0.0
    %4248 = vmatpush1.msra.mxu0 %v4128
    %4249 = vmatprep.subr.mxu0 0.0
    %4250 = vmatpush1.msra.mxu0 %v4129
    %4251 = vmatprep.subr.mxu0 0.0
    %4252 = vmatpush1.msra.mxu0 %v4130
    %4253 = vmatprep.subr.mxu0 0.0
    %4254 = vmatpush1.msra.mxu0 0.0
    %4255 = vmatprep.subr.mxu0 0.0
    %4256 = vmatpush1.msra.mxu0 0.0
    %4257 = vmatprep.subr.mxu0 0.0
    %4258 = vmatpush1.msra.mxu0 0.0
    %4259 = vmatprep.subr.mxu0 0.0
    %4260 = vmatpush1.msra.mxu0 0.0
    %4261 = vmatprep.subr.mxu0 0.0
    %4262 = vmatpush1.msra.mxu0 0.0
    %4263 = vmatprep.subr.mxu0 0.0
    %4264 = vmatpush1.msra.mxu0 0.0
    %4265 = vmatprep.subr.mxu0 0.0
    %4266 = vmatpush1.msra.mxu0 0.0
    %4267 = vmatprep.subr.mxu0 0.0
    %4268 = vmatpush1.msra.mxu0 0.0
    %4269 = vmatprep.subr.mxu0 0.0
    %4270 = vmatpush1.msra.mxu0 0.0
    %4271 = vmatprep.subr.mxu0 0.0
    %4272 = vmatpush1.msra.mxu0 0.0
    %4273 = vmatprep.subr.mxu0 0.0
    %4274 = vmatpush1.msra.mxu0 0.0
    %4275 = vmatprep.subr.mxu0 0.0
    %4276 = vmatpush1.msra.mxu0 0.0
    %4277 = vmatprep.subr.mxu0 0.0
    %4278 = vmatpush1.msra.mxu0 0.0
    %4279 = vmatprep.subr.mxu0 0.0
    %4280 = vmatpush1.msra.mxu0 0.0
    %4281 = vmatprep.subr.mxu0 0.0
    %4282 = vmatpush1.msra.mxu0 0.0
    %4283 = vmatprep.subr.mxu0 0.0
    %4284 = vmatpush1.msra.mxu0 0.0
    %4285 = vmatprep.subr.mxu0 0.0
    %4286 = vmatpush1.msra.mxu0 0.0
    %4287 = vmatprep.subr.mxu0 0.0
    %4288 = vmatpush1.msra.mxu0 0.0
    %4289 = vmatprep.subr.mxu0 0.0
    %4290 = vmatpush1.msra.mxu0 0.0
    %4291 = vmatprep.subr.mxu0 0.0
    %4292 = vmatpush1.msra.mxu0 0.0
    %4293 = vmatprep.subr.mxu0 0.0
    %4294 = vmatpush1.msra.mxu0 0.0
    %4295 = vmatprep.subr.mxu0 0.0
    %4296 = vmatpush1.msra.mxu0 0.0
    %4297 = vmatprep.subr.mxu0 0.0
    %4298 = vmatpush1.msra.mxu0 0.0
    %4299 = vmatprep.subr.mxu0 0.0
    %4300 = vmatpush1.msra.mxu0 0.0
    %4301 = vmatprep.subr.mxu0 0.0
    %4302 = vmatpush1.msra.mxu0 0.0
    %4303 = vmatprep.subr.mxu0 0.0
    %4304 = vmatpush1.msra.mxu0 0.0
    %4305 = vmatprep.subr.mxu0 0.0
    %4306 = vmatpush1.msra.mxu0 0.0
    %4307 = vmatprep.mubr.f32.mxu0 0.0
    %4308 = vmatmul.mubr.f32.gmra.mrb[0].mxu0 %v4241
    %v4309 = vpop.f32.mrb[0].mxu0
    %v4310 = vadd.f32 %v4136, %v4309
    %v4311 = vpop.f32.mrb[0].mxu0
    %4312 = vdwg.mxu0
    %v4313 = vxor.u32 %v4310, 2147483648
    %v4314 = vmul.f32 %v4313, 1.442695
    %v4315 = vpow.pop %v4314
    %v4316 = vadd.f32 %v4315, 1.0
    %v4317 = vrcp.pop %v4316
    %v4318 = vmul.f32 1.0, %v4317
    %v4319 = vtanh.pop %v4310
    %v4320 = vmul.f32 %v4318, %v4228
    %4322 = vrot.lane.b32.xlu0 %v4319, 104
    %v4323 = vpop.permute.xlu0 %4322
    %v4325 = vmul.f32 %v4318, %v4323
    %4327 = vrot.lane.b32.xlu0 %v4325, 8
    %v4328 = vpop.permute.xlu0 %4327
    %v4330 = vadd.f32 %v4320, %v4328
    %v4331 = vtanh.pop %v4330
    %4333 = vrot.lane.b32.xlu0 %v4331, 8
    %v4334 = vpop.permute.xlu0 %4333
    %v4336 = vmul.f32 %v4318, %v4334
    %4338 = vrot.lane.b32.xlu0 %v4336, 16
    %v4339 = vpop.permute.xlu0 %4338
    %v4341 = vsel %vm44, %v3658, %v4339
    %v4343 = vsel %vm4137, %v4341, 0
    %4345 = vmatprep.subr.mxu0 0.0
    %4346 = vmatpush1.msra.mxu0 %v4126
    %4347 = vmatprep.subr.mxu0 0.0
    %4348 = vmatpush1.msra.mxu0 %v4127
    %4349 = vmatprep.subr.mxu0 0.0
    %4350 = vmatpush1.msra.mxu0 %v4128
    %4351 = vmatprep.subr.mxu0 0.0
    %4352 = vmatpush1.msra.mxu0 %v4129
    %4353 = vmatprep.subr.mxu0 0.0
    %4354 = vmatpush1.msra.mxu0 %v4130
    %4355 = vmatprep.subr.mxu0 0.0
    %4356 = vmatpush1.msra.mxu0 0.0
    %4357 = vmatprep.subr.mxu0 0.0
    %4358 = vmatpush1.msra.mxu0 0.0
    %4359 = vmatprep.subr.mxu0 0.0
    %4360 = vmatpush1.msra.mxu0 0.0
    %4361 = vmatprep.subr.mxu0 0.0
    %4362 = vmatpush1.msra.mxu0 0.0
    %4363 = vmatprep.subr.mxu0 0.0
    %4364 = vmatpush1.msra.mxu0 0.0
    %4365 = vmatprep.subr.mxu0 0.0
    %4366 = vmatpush1.msra.mxu0 0.0
    %4367 = vmatprep.subr.mxu0 0.0
    %4368 = vmatpush1.msra.mxu0 0.0
    %4369 = vmatprep.subr.mxu0 0.0
    %4370 = vmatpush1.msra.mxu0 0.0
    %4371 = vmatprep.subr.mxu0 0.0
    %4372 = vmatpush1.msra.mxu0 0.0
    %4373 = vmatprep.subr.mxu0 0.0
    %4374 = vmatpush1.msra.mxu0 0.0
    %4375 = vmatprep.subr.mxu0 0.0
    %4376 = vmatpush1.msra.mxu0 0.0
    %4377 = vmatprep.subr.mxu0 0.0
    %4378 = vmatpush1.msra.mxu0 0.0
    %4379 = vmatprep.subr.mxu0 0.0
    %4380 = vmatpush1.msra.mxu0 0.0
    %4381 = vmatprep.subr.mxu0 0.0
    %4382 = vmatpush1.msra.mxu0 0.0
    %4383 = vmatprep.subr.mxu0 0.0
    %4384 = vmatpush1.msra.mxu0 0.0
    %4385 = vmatprep.subr.mxu0 0.0
    %4386 = vmatpush1.msra.mxu0 0.0
    %4387 = vmatprep.subr.mxu0 0.0
    %4388 = vmatpush1.msra.mxu0 0.0
    %4389 = vmatprep.subr.mxu0 0.0
    %4390 = vmatpush1.msra.mxu0 0.0
    %4391 = vmatprep.subr.mxu0 0.0
    %4392 = vmatpush1.msra.mxu0 0.0
    %4393 = vmatprep.subr.mxu0 0.0
    %4394 = vmatpush1.msra.mxu0 0.0
    %4395 = vmatprep.subr.mxu0 0.0
    %4396 = vmatpush1.msra.mxu0 0.0
    %4397 = vmatprep.subr.mxu0 0.0
    %4398 = vmatpush1.msra.mxu0 0.0
    %4399 = vmatprep.subr.mxu0 0.0
    %4400 = vmatpush1.msra.mxu0 0.0
    %4401 = vmatprep.subr.mxu0 0.0
    %4402 = vmatpush1.msra.mxu0 0.0
    %4403 = vmatprep.subr.mxu0 0.0
    %4404 = vmatpush1.msra.mxu0 0.0
    %4405 = vmatprep.subr.mxu0 0.0
    %4406 = vmatpush1.msra.mxu0 0.0
    %4407 = vmatprep.subr.mxu0 0.0
    %4408 = vmatpush1.msra.mxu0 0.0
    %4409 = vmatprep.mubr.f32.mxu0 0.0
    %4410 = vmatmul.mubr.f32.gmra.mrb[0].mxu0 %v4343
    %v4411 = vpop.f32.mrb[0].mxu0
    %v4412 = vadd.f32 %v4136, %v4411
    %v4413 = vpop.f32.mrb[0].mxu0
    %4414 = vdwg.mxu0
    %v4415 = vxor.u32 %v4412, 2147483648
    %v4416 = vmul.f32 %v4415, 1.442695
    %v4417 = vpow.pop %v4416
    %v4418 = vadd.f32 %v4417, 1.0
    %v4419 = vrcp.pop %v4418
    %v4420 = vmul.f32 1.0, %v4419
    %v4421 = vtanh.pop %v4412
    %v4422 = vmul.f32 %v4420, %v4330
    %4424 = vrot.lane.b32.xlu0 %v4421, 104
    %v4425 = vpop.permute.xlu0 %4424
    %v4427 = vmul.f32 %v4420, %v4425
    %4429 = vrot.lane.b32.xlu0 %v4427, 8
    %v4430 = vpop.permute.xlu0 %4429
    %v4432 = vadd.f32 %v4422, %v4430
    %v4433 = vtanh.pop %v4432
    %4435 = vrot.lane.b32.xlu0 %v4433, 8
    %v4436 = vpop.permute.xlu0 %4435
    %v4438 = vmul.f32 %v4420, %v4436
    %4440 = vrot.lane.b32.xlu0 %v4438, 16
    %v4441 = vpop.permute.xlu0 %4440
    %v4443 = vsel %vm44, %v3752, %v4441
    %v4445 = vsel %vm4137, %v4443, 0
    %4447 = vmatprep.subr.mxu0 0.0
    %4448 = vmatpush1.msra.mxu0 %v4126
    %4449 = vmatprep.subr.mxu0 0.0
    %4450 = vmatpush1.msra.mxu0 %v4127
    %4451 = vmatprep.subr.mxu0 0.0
    %4452 = vmatpush1.msra.mxu0 %v4128
    %4453 = vmatprep.subr.mxu0 0.0
    %4454 = vmatpush1.msra.mxu0 %v4129
    %4455 = vmatprep.subr.mxu0 0.0
    %4456 = vmatpush1.msra.mxu0 %v4130
    %4457 = vmatprep.subr.mxu0 0.0
    %4458 = vmatpush1.msra.mxu0 0.0
    %4459 = vmatprep.subr.mxu0 0.0
    %4460 = vmatpush1.msra.mxu0 0.0
    %4461 = vmatprep.subr.mxu0 0.0
    %4462 = vmatpush1.msra.mxu0 0.0
    %4463 = vmatprep.subr.mxu0 0.0
    %4464 = vmatpush1.msra.mxu0 0.0
    %4465 = vmatprep.subr.mxu0 0.0
    %4466 = vmatpush1.msra.mxu0 0.0
    %4467 = vmatprep.subr.mxu0 0.0
    %4468 = vmatpush1.msra.mxu0 0.0
    %4469 = vmatprep.subr.mxu0 0.0
    %4470 = vmatpush1.msra.mxu0 0.0
    %4471 = vmatprep.subr.mxu0 0.0
    %4472 = vmatpush1.msra.mxu0 0.0
    %4473 = vmatprep.subr.mxu0 0.0
    %4474 = vmatpush1.msra.mxu0 0.0
    %4475 = vmatprep.subr.mxu0 0.0
    %4476 = vmatpush1.msra.mxu0 0.0
    %4477 = vmatprep.subr.mxu0 0.0
    %4478 = vmatpush1.msra.mxu0 0.0
    %4479 = vmatprep.subr.mxu0 0.0
    %4480 = vmatpush1.msra.mxu0 0.0
    %4481 = vmatprep.subr.mxu0 0.0
    %4482 = vmatpush1.msra.mxu0 0.0
    %4483 = vmatprep.subr.mxu0 0.0
    %4484 = vmatpush1.msra.mxu0 0.0
    %4485 = vmatprep.subr.mxu0 0.0
    %4486 = vmatpush1.msra.mxu0 0.0
    %4487 = vmatprep.subr.mxu0 0.0
    %4488 = vmatpush1.msra.mxu0 0.0
    %4489 = vmatprep.subr.mxu0 0.0
    %4490 = vmatpush1.msra.mxu0 0.0
    %4491 = vmatprep.subr.mxu0 0.0
    %4492 = vmatpush1.msra.mxu0 0.0
    %4493 = vmatprep.subr.mxu0 0.0
    %4494 = vmatpush1.msra.mxu0 0.0
    %4495 = vmatprep.subr.mxu0 0.0
    %4496 = vmatpush1.msra.mxu0 0.0
    %4497 = vmatprep.subr.mxu0 0.0
    %4498 = vmatpush1.msra.mxu0 0.0
    %4499 = vmatprep.subr.mxu0 0.0
    %4500 = vmatpush1.msra.mxu0 0.0
    %4501 = vmatprep.subr.mxu0 0.0
    %4502 = vmatpush1.msra.mxu0 0.0
    %4503 = vmatprep.subr.mxu0 0.0
    %4504 = vmatpush1.msra.mxu0 0.0
    %4505 = vmatprep.subr.mxu0 0.0
    %4506 = vmatpush1.msra.mxu0 0.0
    %4507 = vmatprep.subr.mxu0 0.0
    %4508 = vmatpush1.msra.mxu0 0.0
    %4509 = vmatprep.subr.mxu0 0.0
    %4510 = vmatpush1.msra.mxu0 0.0
    %4511 = vmatprep.mubr.f32.mxu0 0.0
    %4512 = vmatmul.mubr.f32.gmra.mrb[0].mxu0 %v4445
    %v4513 = vpop.f32.mrb[0].mxu0
    %v4514 = vadd.f32 %v4136, %v4513
    %v4515 = vpop.f32.mrb[0].mxu0
    %4516 = vdwg.mxu0
    %v4517 = vxor.u32 %v4514, 2147483648
    %v4518 = vmul.f32 %v4517, 1.442695
    %v4519 = vpow.pop %v4518
    %v4520 = vadd.f32 %v4519, 1.0
    %v4521 = vrcp.pop %v4520
    %v4522 = vmul.f32 1.0, %v4521
    %v4523 = vtanh.pop %v4514
    %v4524 = vmul.f32 %v4522, %v4432
    %4526 = vrot.lane.b32.xlu0 %v4523, 104
    %v4527 = vpop.permute.xlu0 %4526
    %v4529 = vmul.f32 %v4522, %v4527
    %4531 = vrot.lane.b32.xlu0 %v4529, 8
    %v4532 = vpop.permute.xlu0 %4531
    %v4534 = vadd.f32 %v4524, %v4532
    %v4535 = vtanh.pop %v4534
    %4537 = vrot.lane.b32.xlu0 %v4535, 8
    %v4538 = vpop.permute.xlu0 %4537
    %v4540 = vmul.f32 %v4522, %v4538
    %4542 = vrot.lane.b32.xlu0 %v4540, 16
    %v4543 = vpop.permute.xlu0 %4542
    %v4545 = vsel %vm44, %v3842, %v4543
    %v4547 = vsel %vm4137, %v4545, 0
    %4549 = vmatprep.subr.mxu0 0.0
    %4550 = vmatpush1.msra.mxu0 %v4126
    %4551 = vmatprep.subr.mxu0 0.0
    %4552 = vmatpush1.msra.mxu0 %v4127
    %4553 = vmatprep.subr.mxu0 0.0
    %4554 = vmatpush1.msra.mxu0 %v4128
    %4555 = vmatprep.subr.mxu0 0.0
    %4556 = vmatpush1.msra.mxu0 %v4129
    %4557 = vmatprep.subr.mxu0 0.0
    %4558 = vmatpush1.msra.mxu0 %v4130
    %4559 = vmatprep.subr.mxu0 0.0
    %4560 = vmatpush1.msra.mxu0 0.0
    %4561 = vmatprep.subr.mxu0 0.0
    %4562 = vmatpush1.msra.mxu0 0.0
    %4563 = vmatprep.subr.mxu0 0.0
    %4564 = vmatpush1.msra.mxu0 0.0
    %4565 = vmatprep.subr.mxu0 0.0
    %4566 = vmatpush1.msra.mxu0 0.0
    %4567 = vmatprep.subr.mxu0 0.0
    %4568 = vmatpush1.msra.mxu0 0.0
    %4569 = vmatprep.subr.mxu0 0.0
    %4570 = vmatpush1.msra.mxu0 0.0
    %4571 = vmatprep.subr.mxu0 0.0
    %4572 = vmatpush1.msra.mxu0 0.0
    %4573 = vmatprep.subr.mxu0 0.0
    %4574 = vmatpush1.msra.mxu0 0.0
    %4575 = vmatprep.subr.mxu0 0.0
    %4576 = vmatpush1.msra.mxu0 0.0
    %4577 = vmatprep.subr.mxu0 0.0
    %4578 = vmatpush1.msra.mxu0 0.0
    %4579 = vmatprep.subr.mxu0 0.0
    %4580 = vmatpush1.msra.mxu0 0.0
    %4581 = vmatprep.subr.mxu0 0.0
    %4582 = vmatpush1.msra.mxu0 0.0
    %4583 = vmatprep.subr.mxu0 0.0
    %4584 = vmatpush1.msra.mxu0 0.0
    %4585 = vmatprep.subr.mxu0 0.0
    %4586 = vmatpush1.msra.mxu0 0.0
    %4587 = vmatprep.subr.mxu0 0.0
    %4588 = vmatpush1.msra.mxu0 0.0
    %4589 = vmatprep.subr.mxu0 0.0
    %4590 = vmatpush1.msra.mxu0 0.0
    %4591 = vmatprep.subr.mxu0 0.0
    %4592 = vmatpush1.msra.mxu0 0.0
    %4593 = vmatprep.subr.mxu0 0.0
    %4594 = vmatpush1.msra.mxu0 0.0
    %4595 = vmatprep.subr.mxu0 0.0
    %4596 = vmatpush1.msra.mxu0 0.0
    %4597 = vmatprep.subr.mxu0 0.0
    %4598 = vmatpush1.msra.mxu0 0.0
    %4599 = vmatprep.subr.mxu0 0.0
    %4600 = vmatpush1.msra.mxu0 0.0
    %4601 = vmatprep.subr.mxu0 0.0
    %4602 = vmatpush1.msra.mxu0 0.0
    %4603 = vmatprep.subr.mxu0 0.0
    %4604 = vmatpush1.msra.mxu0 0.0
    %4605 = vmatprep.subr.mxu0 0.0
    %4606 = vmatpush1.msra.mxu0 0.0
    %4607 = vmatprep.subr.mxu0 0.0
    %4608 = vmatpush1.msra.mxu0 0.0
    %4609 = vmatprep.subr.mxu0 0.0
    %4610 = vmatpush1.msra.mxu0 0.0
    %4611 = vmatprep.subr.mxu0 0.0
    %4612 = vmatpush1.msra.mxu0 0.0
    %4613 = vmatprep.mubr.f32.mxu0 0.0
    %4614 = vmatmul.mubr.f32.gmra.mrb[0].mxu0 %v4547
    %v4615 = vpop.f32.mrb[0].mxu0
    %v4616 = vadd.f32 %v4136, %v4615
    %v4617 = vpop.f32.mrb[0].mxu0
    %4618 = vdwg.mxu0
    %v4619 = vxor.u32 %v4616, 2147483648
    %v4620 = vmul.f32 %v4619, 1.442695
    %v4621 = vpow.pop %v4620
    %v4622 = vadd.f32 %v4621, 1.0
    %v4623 = vrcp.pop %v4622
    %v4624 = vmul.f32 1.0, %v4623
    %v4625 = vtanh.pop %v4616
    %v4626 = vmul.f32 %v4624, %v4534
    %4628 = vrot.lane.b32.xlu0 %v4625, 104
    %v4629 = vpop.permute.xlu0 %4628
    %v4631 = vmul.f32 %v4624, %v4629
    %4633 = vrot.lane.b32.xlu0 %v4631, 8
    %v4634 = vpop.permute.xlu0 %4633
    %v4636 = vadd.f32 %v4626, %v4634
    %v4637 = vtanh.pop %v4636
    %4639 = vrot.lane.b32.xlu0 %v4637, 8
    %v4640 = vpop.permute.xlu0 %4639
    %v4642 = vmul.f32 %v4624, %v4640
    %4644 = vrot.lane.b32.xlu0 %v4642, 16
    %v4645 = vpop.permute.xlu0 %4644
    %v4647 = vsel %vm44, %v3936, %v4645
    %v4649 = vsel %vm4137, %v4647, 0
    %4651 = vmatprep.subr.mxu0 0.0
    %4652 = vmatpush1.msra.mxu0 %v4126
    %4653 = vmatprep.subr.mxu0 0.0
    %4654 = vmatpush1.msra.mxu0 %v4127
    %4655 = vmatprep.subr.mxu0 0.0
    %4656 = vmatpush1.msra.mxu0 %v4128
    %4657 = vmatprep.subr.mxu0 0.0
    %4658 = vmatpush1.msra.mxu0 %v4129
    %4659 = vmatprep.subr.mxu0 0.0
    %4660 = vmatpush1.msra.mxu0 %v4130
    %4661 = vmatprep.subr.mxu0 0.0
    %4662 = vmatpush1.msra.mxu0 0.0
    %4663 = vmatprep.subr.mxu0 0.0
    %4664 = vmatpush1.msra.mxu0 0.0
    %4665 = vmatprep.subr.mxu0 0.0
    %4666 = vmatpush1.msra.mxu0 0.0
    %4667 = vmatprep.subr.mxu0 0.0
    %4668 = vmatpush1.msra.mxu0 0.0
    %4669 = vmatprep.subr.mxu0 0.0
    %4670 = vmatpush1.msra.mxu0 0.0
    %4671 = vmatprep.subr.mxu0 0.0
    %4672 = vmatpush1.msra.mxu0 0.0
    %4673 = vmatprep.subr.mxu0 0.0
    %4674 = vmatpush1.msra.mxu0 0.0
    %4675 = vmatprep.subr.mxu0 0.0
    %4676 = vmatpush1.msra.mxu0 0.0
    %4677 = vmatprep.subr.mxu0 0.0
    %4678 = vmatpush1.msra.mxu0 0.0
    %4679 = vmatprep.subr.mxu0 0.0
    %4680 = vmatpush1.msra.mxu0 0.0
    %4681 = vmatprep.subr.mxu0 0.0
    %4682 = vmatpush1.msra.mxu0 0.0
    %4683 = vmatprep.subr.mxu0 0.0
    %4684 = vmatpush1.msra.mxu0 0.0
    %4685 = vmatprep.subr.mxu0 0.0
    %4686 = vmatpush1.msra.mxu0 0.0
    %4687 = vmatprep.subr.mxu0 0.0
    %4688 = vmatpush1.msra.mxu0 0.0
    %4689 = vmatprep.subr.mxu0 0.0
    %4690 = vmatpush1.msra.mxu0 0.0
    %4691 = vmatprep.subr.mxu0 0.0
    %4692 = vmatpush1.msra.mxu0 0.0
    %4693 = vmatprep.subr.mxu0 0.0
    %4694 = vmatpush1.msra.mxu0 0.0
    %4695 = vmatprep.subr.mxu0 0.0
    %4696 = vmatpush1.msra.mxu0 0.0
    %4697 = vmatprep.subr.mxu0 0.0
    %4698 = vmatpush1.msra.mxu0 0.0
    %4699 = vmatprep.subr.mxu0 0.0
    %4700 = vmatpush1.msra.mxu0 0.0
    %4701 = vmatprep.subr.mxu0 0.0
    %4702 = vmatpush1.msra.mxu0 0.0
    %4703 = vmatprep.subr.mxu0 0.0
    %4704 = vmatpush1.msra.mxu0 0.0
    %4705 = vmatprep.subr.mxu0 0.0
    %4706 = vmatpush1.msra.mxu0 0.0
    %4707 = vmatprep.subr.mxu0 0.0
    %4708 = vmatpush1.msra.mxu0 0.0
    %4709 = vmatprep.subr.mxu0 0.0
    %4710 = vmatpush1.msra.mxu0 0.0
    %4711 = vmatprep.subr.mxu0 0.0
    %4712 = vmatpush1.msra.mxu0 0.0
    %4713 = vmatprep.subr.mxu0 0.0
    %4714 = vmatpush1.msra.mxu0 0.0
    %4715 = vmatprep.mubr.f32.mxu0 0.0
    %4716 = vmatmul.mubr.f32.gmra.mrb[0].mxu0 %v4649
    %v4717 = vpop.f32.mrb[0].mxu0
    %v4718 = vadd.f32 %v4136, %v4717
    %v4719 = vpop.f32.mrb[0].mxu0
    %4720 = vdwg.mxu0
    %v4721 = vxor.u32 %v4718, 2147483648
    %v4722 = vmul.f32 %v4721, 1.442695
    %v4723 = vpow.pop %v4722
    %v4724 = vadd.f32 %v4723, 1.0
    %v4725 = vrcp.pop %v4724
    %v4726 = vmul.f32 1.0, %v4725
    %v4727 = vtanh.pop %v4718
    %v4728 = vmul.f32 %v4726, %v4636
    %4730 = vrot.lane.b32.xlu0 %v4727, 104
    %v4731 = vpop.permute.xlu0 %4730
    %v4733 = vmul.f32 %v4726, %v4731
    %4735 = vrot.lane.b32.xlu0 %v4733, 8
    %v4736 = vpop.permute.xlu0 %4735
    %v4738 = vadd.f32 %v4728, %v4736
    %v4739 = vtanh.pop %v4738
    %4741 = vrot.lane.b32.xlu0 %v4739, 8
    %v4742 = vpop.permute.xlu0 %4741
    %v4744 = vmul.f32 %v4726, %v4742
    %4746 = vrot.lane.b32.xlu0 %v4744, 16
    %v4747 = vpop.permute.xlu0 %4746
    %v4749 = vsel %vm44, %v4030, %v4747
    %v4751 = vsel %vm4137, %v4749, 0
    %4753 = vmatprep.subr.mxu0 0.0
    %4754 = vmatpush1.msra.mxu0 %v4126
    %4755 = vmatprep.subr.mxu0 0.0
    %4756 = vmatpush1.msra.mxu0 %v4127
    %4757 = vmatprep.subr.mxu0 0.0
    %4758 = vmatpush1.msra.mxu0 %v4128
    %4759 = vmatprep.subr.mxu0 0.0
    %4760 = vmatpush1.msra.mxu0 %v4129
    %4761 = vmatprep.subr.mxu0 0.0
    %4762 = vmatpush1.msra.mxu0 %v4130
    %4763 = vmatprep.subr.mxu0 0.0
    %4764 = vmatpush1.msra.mxu0 0.0
    %4765 = vmatprep.subr.mxu0 0.0
    %4766 = vmatpush1.msra.mxu0 0.0
    %4767 = vmatprep.subr.mxu0 0.0
    %4768 = vmatpush1.msra.mxu0 0.0
    %4769 = vmatprep.subr.mxu0 0.0
    %4770 = vmatpush1.msra.mxu0 0.0
    %4771 = vmatprep.subr.mxu0 0.0
    %4772 = vmatpush1.msra.mxu0 0.0
    %4773 = vmatprep.subr.mxu0 0.0
    %4774 = vmatpush1.msra.mxu0 0.0
    %4775 = vmatprep.subr.mxu0 0.0
    %4776 = vmatpush1.msra.mxu0 0.0
    %4777 = vmatprep.subr.mxu0 0.0
    %4778 = vmatpush1.msra.mxu0 0.0
    %4779 = vmatprep.subr.mxu0 0.0
    %4780 = vmatpush1.msra.mxu0 0.0
    %4781 = vmatprep.subr.mxu0 0.0
    %4782 = vmatpush1.msra.mxu0 0.0
    %4783 = vmatprep.subr.mxu0 0.0
    %4784 = vmatpush1.msra.mxu0 0.0
    %4785 = vmatprep.subr.mxu0 0.0
    %4786 = vmatpush1.msra.mxu0 0.0
    %4787 = vmatprep.subr.mxu0 0.0
    %4788 = vmatpush1.msra.mxu0 0.0
    %4789 = vmatprep.subr.mxu0 0.0
    %4790 = vmatpush1.msra.mxu0 0.0
    %4791 = vmatprep.subr.mxu0 0.0
    %4792 = vmatpush1.msra.mxu0 0.0
    %4793 = vmatprep.subr.mxu0 0.0
    %4794 = vmatpush1.msra.mxu0 0.0
    %4795 = vmatprep.subr.mxu0 0.0
    %4796 = vmatpush1.msra.mxu0 0.0
    %4797 = vmatprep.subr.mxu0 0.0
    %4798 = vmatpush1.msra.mxu0 0.0
    %4799 = vmatprep.subr.mxu0 0.0
    %4800 = vmatpush1.msra.mxu0 0.0
    %4801 = vmatprep.subr.mxu0 0.0
    %4802 = vmatpush1.msra.mxu0 0.0
    %4803 = vmatprep.subr.mxu0 0.0
    %4804 = vmatpush1.msra.mxu0 0.0
    %4805 = vmatprep.subr.mxu0 0.0
    %4806 = vmatpush1.msra.mxu0 0.0
    %4807 = vmatprep.subr.mxu0 0.0
    %4808 = vmatpush1.msra.mxu0 0.0
    %4809 = vmatprep.subr.mxu0 0.0
    %4810 = vmatpush1.msra.mxu0 0.0
    %4811 = vmatprep.subr.mxu0 0.0
    %4812 = vmatpush1.msra.mxu0 0.0
    %4813 = vmatprep.subr.mxu0 0.0
    %4814 = vmatpush1.msra.mxu0 0.0
    %4815 = vmatprep.subr.mxu0 0.0
    %4816 = vmatpush1.msra.mxu0 0.0
    %4817 = vmatprep.mubr.f32.mxu0 0.0
    %4818 = vmatmul.mubr.f32.gmra.mrb[0].mxu0 %v4751
    %v4819 = vpop.f32.mrb[0].mxu0
    %v4820 = vadd.f32 %v4136, %v4819
    %v4821 = vpop.f32.mrb[0].mxu0
    %4822 = vdwg.mxu0
    %v4823 = vxor.u32 %v4820, 2147483648
    %v4824 = vmul.f32 %v4823, 1.442695
    %v4825 = vpow.pop %v4824
    %v4826 = vadd.f32 %v4825, 1.0
    %v4827 = vrcp.pop %v4826
    %v4828 = vmul.f32 1.0, %v4827
    %v4829 = vtanh.pop %v4820
    %v4830 = vmul.f32 %v4828, %v4738
    %4832 = vrot.lane.b32.xlu0 %v4829, 104
    %v4833 = vpop.permute.xlu0 %4832
    %v4835 = vmul.f32 %v4828, %v4833
    %4837 = vrot.lane.b32.xlu0 %v4835, 8
    %v4838 = vpop.permute.xlu0 %4837
    %v4840 = vadd.f32 %v4830, %v4838
    %v4841 = vtanh.pop %v4840
    %4843 = vrot.lane.b32.xlu0 %v4841, 8
    %v4844 = vpop.permute.xlu0 %4843
    %v4846 = vmul.f32 %v4828, %v4844
    %4848 = vrot.lane.b32.xlu0 %v4846, 16
    %v4849 = vpop.permute.xlu0 %4848
    %v4851 = vsel %vm44, %v4125, %v4849
    %v4853 = vsel %vm4137, %v4851, 0
    %4855 = vmatprep.subr.mxu0 0.0
    %4856 = vmatpush1.msra.mxu0 %v4126
    %4857 = vmatprep.subr.mxu0 0.0
    %4858 = vmatpush1.msra.mxu0 %v4127
    %4859 = vmatprep.subr.mxu0 0.0
    %4860 = vmatpush1.msra.mxu0 %v4128
    %4861 = vmatprep.subr.mxu0 0.0
    %4862 = vmatpush1.msra.mxu0 %v4129
    %4863 = vmatprep.subr.mxu0 0.0
    %4864 = vmatpush1.msra.mxu0 %v4130
    %4865 = vmatprep.subr.mxu0 0.0
    %4866 = vmatpush1.msra.mxu0 0.0
    %4867 = vmatprep.subr.mxu0 0.0
    %4868 = vmatpush1.msra.mxu0 0.0
    %4869 = vmatprep.subr.mxu0 0.0
    %4870 = vmatpush1.msra.mxu0 0.0
    %4871 = vmatprep.subr.mxu0 0.0
    %4872 = vmatpush1.msra.mxu0 0.0
    %4873 = vmatprep.subr.mxu0 0.0
    %4874 = vmatpush1.msra.mxu0 0.0
    %4875 = vmatprep.subr.mxu0 0.0
    %4876 = vmatpush1.msra.mxu0 0.0
    %4877 = vmatprep.subr.mxu0 0.0
    %4878 = vmatpush1.msra.mxu0 0.0
    %4879 = vmatprep.subr.mxu0 0.0
    %4880 = vmatpush1.msra.mxu0 0.0
    %4881 = vmatprep.subr.mxu0 0.0
    %4882 = vmatpush1.msra.mxu0 0.0
    %4883 = vmatprep.subr.mxu0 0.0
    %4884 = vmatpush1.msra.mxu0 0.0
    %4885 = vmatprep.subr.mxu0 0.0
    %4886 = vmatpush1.msra.mxu0 0.0
    %4887 = vmatprep.subr.mxu0 0.0
    %4888 = vmatpush1.msra.mxu0 0.0
    %4889 = vmatprep.subr.mxu0 0.0
    %4890 = vmatpush1.msra.mxu0 0.0
    %4891 = vmatprep.subr.mxu0 0.0
    %4892 = vmatpush1.msra.mxu0 0.0
    %4893 = vmatprep.subr.mxu0 0.0
    %4894 = vmatpush1.msra.mxu0 0.0
    %4895 = vmatprep.subr.mxu0 0.0
    %4896 = vmatpush1.msra.mxu0 0.0
    %4897 = vmatprep.subr.mxu0 0.0
    %4898 = vmatpush1.msra.mxu0 0.0
    %4899 = vmatprep.subr.mxu0 0.0
    %4900 = vmatpush1.msra.mxu0 0.0
    %4901 = vmatprep.subr.mxu0 0.0
    %4902 = vmatpush1.msra.mxu0 0.0
    %4903 = vmatprep.subr.mxu0 0.0
    %4904 = vmatpush1.msra.mxu0 0.0
    %4905 = vmatprep.subr.mxu0 0.0
    %4906 = vmatpush1.msra.mxu0 0.0
    %4907 = vmatprep.subr.mxu0 0.0
    %4908 = vmatpush1.msra.mxu0 0.0
    %4909 = vmatprep.subr.mxu0 0.0
    %4910 = vmatpush1.msra.mxu0 0.0
    %4911 = vmatprep.subr.mxu0 0.0
    %4912 = vmatpush1.msra.mxu0 0.0
    %4913 = vmatprep.subr.mxu0 0.0
    %4914 = vmatpush1.msra.mxu0 0.0
    %4915 = vmatprep.subr.mxu0 0.0
    %4916 = vmatpush1.msra.mxu0 0.0
    %4917 = vmatprep.subr.mxu0 0.0
    %4918 = vmatpush1.msra.mxu0 0.0
    %4919 = vmatprep.mubr.f32.mxu0 0.0
    %4920 = vmatmul.mubr.f32.gmra.mrb[0].mxu0 %v4853
    %v4921 = vpop.f32.mrb[0].mxu0
    %v4922 = vadd.f32 %v4136, %v4921
    %v4923 = vpop.f32.mrb[0].mxu0
    %4924 = vdwg.mxu0
    %v4925 = vxor.u32 %v4922, 2147483648
    %v4926 = vmul.f32 %v4925, 1.442695
    %v4927 = vpow.pop %v4926
    %v4928 = vadd.f32 %v4927, 1.0
    %v4929 = vrcp.pop %v4928
    %v4930 = vmul.f32 1.0, %v4929
    %v4931 = vtanh.pop %v4922
    %v4932 = vmul.f32 %v4930, %v4840
    %4934 = vrot.lane.b32.xlu0 %v4931, 104
    %v4935 = vpop.permute.xlu0 %4934
    %v4937 = vmul.f32 %v4930, %v4935
    %4939 = vrot.lane.b32.xlu0 %v4937, 8
    %v4940 = vpop.permute.xlu0 %4939
    %v4942 = vadd.f32 %v4932, %v4940
    %v4943 = vtanh.pop %v4942
    %4945 = vrot.lane.b32.xlu0 %v4943, 8
    %v4946 = vpop.permute.xlu0 %4945
    %v4948 = vmul.f32 %v4930, %v4946
    %v4949 = vld [vmem:[#allocation2 + $0xd8] sm:$0xff]
    %v4950 = vld [vmem:[#allocation2 + $0xe0] sm:$0xff]
    %v4951 = vld [vmem:[#allocation2 + $0xe8] sm:$0xff]
    %v4952 = vld [vmem:[%s3 + $0x6] sm:$0x1]
    %4953 = vrot.lane.b32.xlu0 %v4234, 112
    %v4954 = vpop.permute.xlu0 %4953
    %v4956 = vsel %vm2529, %v4954, 0.0
    %v4957 = vlaneseq
    %v4958 = vshrl.u32 %v4957, 7
    %v4959 = vsub.s32 0, %v4958
    %v4960 = vrot.slane %v4952, %v4959
    %v4962 = vsel %vm1709, %v4956, 0
    %4964 = vmatprep.subr.mxu0 0.0
    %4965 = vmatpush1.msra.mxu0 %v4949
    %4966 = vmatprep.subr.mxu0 0.0
    %4967 = vmatpush1.msra.mxu0 %v4950
    %4968 = vmatprep.subr.mxu0 0.0
    %4969 = vmatpush1.msra.mxu0 %v4951
    %4970 = vmatprep.subr.mxu0 0.0
    %4971 = vmatpush1.msra.mxu0 0.0
    %4972 = vmatprep.subr.mxu0 0.0
    %4973 = vmatpush1.msra.mxu0 0.0
    %4974 = vmatprep.subr.mxu0 0.0
    %4975 = vmatpush1.msra.mxu0 0.0
    %4976 = vmatprep.subr.mxu0 0.0
    %4977 = vmatpush1.msra.mxu0 0.0
    %4978 = vmatprep.subr.mxu0 0.0
    %4979 = vmatpush1.msra.mxu0 0.0
    %4980 = vmatprep.subr.mxu0 0.0
    %4981 = vmatpush1.msra.mxu0 0.0
    %4982 = vmatprep.subr.mxu0 0.0
    %4983 = vmatpush1.msra.mxu0 0.0
    %4984 = vmatprep.subr.mxu0 0.0
    %4985 = vmatpush1.msra.mxu0 0.0
    %4986 = vmatprep.subr.mxu0 0.0
    %4987 = vmatpush1.msra.mxu0 0.0
    %4988 = vmatprep.subr.mxu0 0.0
    %4989 = vmatpush1.msra.mxu0 0.0
    %4990 = vmatprep.subr.mxu0 0.0
    %4991 = vmatpush1.msra.mxu0 0.0
    %4992 = vmatprep.subr.mxu0 0.0
    %4993 = vmatpush1.msra.mxu0 0.0
    %4994 = vmatprep.subr.mxu0 0.0
    %4995 = vmatpush1.msra.mxu0 0.0
    %4996 = vmatprep.subr.mxu0 0.0
    %4997 = vmatpush1.msra.mxu0 0.0
    %4998 = vmatprep.subr.mxu0 0.0
    %4999 = vmatpush1.msra.mxu0 0.0
    %5000 = vmatprep.subr.mxu0 0.0
    %5001 = vmatpush1.msra.mxu0 0.0
    %5002 = vmatprep.subr.mxu0 0.0
    %5003 = vmatpush1.msra.mxu0 0.0
    %5004 = vmatprep.subr.mxu0 0.0
    %5005 = vmatpush1.msra.mxu0 0.0
    %5006 = vmatprep.subr.mxu0 0.0
    %5007 = vmatpush1.msra.mxu0 0.0
    %5008 = vmatprep.subr.mxu0 0.0
    %5009 = vmatpush1.msra.mxu0 0.0
    %5010 = vmatprep.subr.mxu0 0.0
    %5011 = vmatpush1.msra.mxu0 0.0
    %5012 = vmatprep.subr.mxu0 0.0
    %5013 = vmatpush1.msra.mxu0 0.0
    %5014 = vmatprep.subr.mxu0 0.0
    %5015 = vmatpush1.msra.mxu0 0.0
    %5016 = vmatprep.subr.mxu0 0.0
    %5017 = vmatpush1.msra.mxu0 0.0
    %5018 = vmatprep.subr.mxu0 0.0
    %5019 = vmatpush1.msra.mxu0 0.0
    %5020 = vmatprep.subr.mxu0 0.0
    %5021 = vmatpush1.msra.mxu0 0.0
    %5022 = vmatprep.subr.mxu0 0.0
    %5023 = vmatpush1.msra.mxu0 0.0
    %5024 = vmatprep.subr.mxu0 0.0
    %5025 = vmatpush1.msra.mxu0 0.0
    %5026 = vmatprep.subr.mxu0 0.0
    %5027 = vmatpush1.msra.mxu0 0.0
    %5028 = vmatprep.mubr.f32.mxu0 0.0
    %5029 = vmatmul.mubr.f32.gmra.mrb[0].mxu0 %v4962
    %v5030 = vpop.f32.mrb[0].mxu0
    %v5031 = vadd.f32 %v4960, %v5030
    %v5032 = vpop.f32.mrb[0].mxu0
    %5033 = vdwg.mxu0
    %v5034 = vxor.u32 %v5031, 2147483648
    %v5035 = vmul.f32 %v5034, 1.442695
    %v5036 = vpow.pop %v5035
    %v5037 = vadd.f32 %v5036, 1.0
    %v5038 = vrcp.pop %v5037
    %v5039 = vmul.f32 1.0, %v5038
    %v5040 = vtanh.pop %v5031
    %v5041 = vmul.f32 %v5039, 0.0
    %5043 = vrot.lane.b32.xlu0 %v5040, 80
    %v5044 = vpop.permute.xlu0 %5043
    %v5046 = vmul.f32 %v5039, %v5044
    %5048 = vrot.lane.b32.xlu0 %v5046, 16
    %v5049 = vpop.permute.xlu0 %5048
    %v5051 = vadd.f32 %v5041, %v5049
    %v5052 = vtanh.pop %v5051
    %5054 = vrot.lane.b32.xlu0 %v5052, 16
    %v5055 = vpop.permute.xlu0 %5054
    %v5057 = vmul.f32 %v5039, %v5055
    %5058 = vrot.lane.b32.xlu0 %v4336, 112
    %v5059 = vpop.permute.xlu0 %5058
    %5062 = vrot.lane.b32.xlu0 %v5057, 104
    %v5063 = vpop.permute.xlu0 %5062
    %v5065 = vsel %vm2529, %v5059, %v5063
    %v5067 = vsel %vm1709, %v5065, 0
    %5069 = vmatprep.subr.mxu0 0.0
    %5070 = vmatpush1.msra.mxu0 %v4949
    %5071 = vmatprep.subr.mxu0 0.0
    %5072 = vmatpush1.msra.mxu0 %v4950
    %5073 = vmatprep.subr.mxu0 0.0
    %5074 = vmatpush1.msra.mxu0 %v4951
    %5075 = vmatprep.subr.mxu0 0.0
    %5076 = vmatpush1.msra.mxu0 0.0
    %5077 = vmatprep.subr.mxu0 0.0
    %5078 = vmatpush1.msra.mxu0 0.0
    %5079 = vmatprep.subr.mxu0 0.0
    %5080 = vmatpush1.msra.mxu0 0.0
    %5081 = vmatprep.subr.mxu0 0.0
    %5082 = vmatpush1.msra.mxu0 0.0
    %5083 = vmatprep.subr.mxu0 0.0
    %5084 = vmatpush1.msra.mxu0 0.0
    %5085 = vmatprep.subr.mxu0 0.0
    %5086 = vmatpush1.msra.mxu0 0.0
    %5087 = vmatprep.subr.mxu0 0.0
    %5088 = vmatpush1.msra.mxu0 0.0
    %5089 = vmatprep.subr.mxu0 0.0
    %5090 = vmatpush1.msra.mxu0 0.0
    %5091 = vmatprep.subr.mxu0 0.0
    %5092 = vmatpush1.msra.mxu0 0.0
    %5093 = vmatprep.subr.mxu0 0.0
    %5094 = vmatpush1.msra.mxu0 0.0
    %5095 = vmatprep.subr.mxu0 0.0
    %5096 = vmatpush1.msra.mxu0 0.0
    %5097 = vmatprep.subr.mxu0 0.0
    %5098 = vmatpush1.msra.mxu0 0.0
    %5099 = vmatprep.subr.mxu0 0.0
    %5100 = vmatpush1.msra.mxu0 0.0
    %5101 = vmatprep.subr.mxu0 0.0
    %5102 = vmatpush1.msra.mxu0 0.0
    %5103 = vmatprep.subr.mxu0 0.0
    %5104 = vmatpush1.msra.mxu0 0.0
    %5105 = vmatprep.subr.mxu0 0.0
    %5106 = vmatpush1.msra.mxu0 0.0
    %5107 = vmatprep.subr.mxu0 0.0
    %5108 = vmatpush1.msra.mxu0 0.0
    %5109 = vmatprep.subr.mxu0 0.0
    %5110 = vmatpush1.msra.mxu0 0.0
    %5111 = vmatprep.subr.mxu0 0.0
    %5112 = vmatpush1.msra.mxu0 0.0
    %5113 = vmatprep.subr.mxu0 0.0
    %5114 = vmatpush1.msra.mxu0 0.0
    %5115 = vmatprep.subr.mxu0 0.0
    %5116 = vmatpush1.msra.mxu0 0.0
    %5117 = vmatprep.subr.mxu0 0.0
    %5118 = vmatpush1.msra.mxu0 0.0
    %5119 = vmatprep.subr.mxu0 0.0
    %5120 = vmatpush1.msra.mxu0 0.0
    %5121 = vmatprep.subr.mxu0 0.0
    %5122 = vmatpush1.msra.mxu0 0.0
    %5123 = vmatprep.subr.mxu0 0.0
    %5124 = vmatpush1.msra.mxu0 0.0
    %5125 = vmatprep.subr.mxu0 0.0
    %5126 = vmatpush1.msra.mxu0 0.0
    %5127 = vmatprep.subr.mxu0 0.0
    %5128 = vmatpush1.msra.mxu0 0.0
    %5129 = vmatprep.subr.mxu0 0.0
    %5130 = vmatpush1.msra.mxu0 0.0
    %5131 = vmatprep.subr.mxu0 0.0
    %5132 = vmatpush1.msra.mxu0 0.0
    %5133 = vmatprep.mubr.f32.mxu0 0.0
    %5134 = vmatmul.mubr.f32.gmra.mrb[0].mxu0 %v5067
    %v5135 = vpop.f32.mrb[0].mxu0
    %v5136 = vadd.f32 %v4960, %v5135
    %v5137 = vpop.f32.mrb[0].mxu0
    %5138 = vdwg.mxu0
    %v5139 = vxor.u32 %v5136, 2147483648
    %v5140 = vmul.f32 %v5139, 1.442695
    %v5141 = vpow.pop %v5140
    %v5142 = vadd.f32 %v5141, 1.0
    %v5143 = vrcp.pop %v5142
    %v5144 = vmul.f32 1.0, %v5143
    %v5145 = vtanh.pop %v5136
    %v5146 = vmul.f32 %v5144, %v5051
    %5148 = vrot.lane.b32.xlu0 %v5145, 80
    %v5149 = vpop.permute.xlu0 %5148
    %v5151 = vmul.f32 %v5144, %v5149
    %5153 = vrot.lane.b32.xlu0 %v5151, 16
    %v5154 = vpop.permute.xlu0 %5153
    %v5156 = vadd.f32 %v5146, %v5154
    %v5157 = vtanh.pop %v5156
    %5159 = vrot.lane.b32.xlu0 %v5157, 16
    %v5160 = vpop.permute.xlu0 %5159
    %v5162 = vmul.f32 %v5144, %v5160
    %5163 = vrot.lane.b32.xlu0 %v4438, 112
    %v5164 = vpop.permute.xlu0 %5163
    %5167 = vrot.lane.b32.xlu0 %v5162, 104
    %v5168 = vpop.permute.xlu0 %5167
    %v5170 = vsel %vm2529, %v5164, %v5168
    %v5172 = vsel %vm1709, %v5170, 0
    %5174 = vmatprep.subr.mxu0 0.0
    %5175 = vmatpush1.msra.mxu0 %v4949
    %5176 = vmatprep.subr.mxu0 0.0
    %5177 = vmatpush1.msra.mxu0 %v4950
    %5178 = vmatprep.subr.mxu0 0.0
    %5179 = vmatpush1.msra.mxu0 %v4951
    %5180 = vmatprep.subr.mxu0 0.0
    %5181 = vmatpush1.msra.mxu0 0.0
    %5182 = vmatprep.subr.mxu0 0.0
    %5183 = vmatpush1.msra.mxu0 0.0
    %5184 = vmatprep.subr.mxu0 0.0
    %5185 = vmatpush1.msra.mxu0 0.0
    %5186 = vmatprep.subr.mxu0 0.0
    %5187 = vmatpush1.msra.mxu0 0.0
    %5188 = vmatprep.subr.mxu0 0.0
    %5189 = vmatpush1.msra.mxu0 0.0
    %5190 = vmatprep.subr.mxu0 0.0
    %5191 = vmatpush1.msra.mxu0 0.0
    %5192 = vmatprep.subr.mxu0 0.0
    %5193 = vmatpush1.msra.mxu0 0.0
    %5194 = vmatprep.subr.mxu0 0.0
    %5195 = vmatpush1.msra.mxu0 0.0
    %5196 = vmatprep.subr.mxu0 0.0
    %5197 = vmatpush1.msra.mxu0 0.0
    %5198 = vmatprep.subr.mxu0 0.0
    %5199 = vmatpush1.msra.mxu0 0.0
    %5200 = vmatprep.subr.mxu0 0.0
    %5201 = vmatpush1.msra.mxu0 0.0
    %5202 = vmatprep.subr.mxu0 0.0
    %5203 = vmatpush1.msra.mxu0 0.0
    %5204 = vmatprep.subr.mxu0 0.0
    %5205 = vmatpush1.msra.mxu0 0.0
    %5206 = vmatprep.subr.mxu0 0.0
    %5207 = vmatpush1.msra.mxu0 0.0
    %5208 = vmatprep.subr.mxu0 0.0
    %5209 = vmatpush1.msra.mxu0 0.0
    %5210 = vmatprep.subr.mxu0 0.0
    %5211 = vmatpush1.msra.mxu0 0.0
    %5212 = vmatprep.subr.mxu0 0.0
    %5213 = vmatpush1.msra.mxu0 0.0
    %5214 = vmatprep.subr.mxu0 0.0
    %5215 = vmatpush1.msra.mxu0 0.0
    %5216 = vmatprep.subr.mxu0 0.0
    %5217 = vmatpush1.msra.mxu0 0.0
    %5218 = vmatprep.subr.mxu0 0.0
    %5219 = vmatpush1.msra.mxu0 0.0
    %5220 = vmatprep.subr.mxu0 0.0
    %5221 = vmatpush1.msra.mxu0 0.0
    %5222 = vmatprep.subr.mxu0 0.0
    %5223 = vmatpush1.msra.mxu0 0.0
    %5224 = vmatprep.subr.mxu0 0.0
    %5225 = vmatpush1.msra.mxu0 0.0
    %5226 = vmatprep.subr.mxu0 0.0
    %5227 = vmatpush1.msra.mxu0 0.0
    %5228 = vmatprep.subr.mxu0 0.0
    %5229 = vmatpush1.msra.mxu0 0.0
    %5230 = vmatprep.subr.mxu0 0.0
    %5231 = vmatpush1.msra.mxu0 0.0
    %5232 = vmatprep.subr.mxu0 0.0
    %5233 = vmatpush1.msra.mxu0 0.0
    %5234 = vmatprep.subr.mxu0 0.0
    %5235 = vmatpush1.msra.mxu0 0.0
    %5236 = vmatprep.subr.mxu0 0.0
    %5237 = vmatpush1.msra.mxu0 0.0
    %5238 = vmatprep.mubr.f32.mxu0 0.0
    %5239 = vmatmul.mubr.f32.gmra.mrb[0].mxu0 %v5172
    %v5240 = vpop.f32.mrb[0].mxu0
    %v5241 = vadd.f32 %v4960, %v5240
    %v5242 = vpop.f32.mrb[0].mxu0
    %5243 = vdwg.mxu0
    %v5244 = vxor.u32 %v5241, 2147483648
    %v5245 = vmul.f32 %v5244, 1.442695
    %v5246 = vpow.pop %v5245
    %v5247 = vadd.f32 %v5246, 1.0
    %v5248 = vrcp.pop %v5247
    %v5249 = vmul.f32 1.0, %v5248
    %v5250 = vtanh.pop %v5241
    %v5251 = vmul.f32 %v5249, %v5156
    %5253 = vrot.lane.b32.xlu0 %v5250, 80
    %v5254 = vpop.permute.xlu0 %5253
    %v5256 = vmul.f32 %v5249, %v5254
    %5258 = vrot.lane.b32.xlu0 %v5256, 16
    %v5259 = vpop.permute.xlu0 %5258
    %v5261 = vadd.f32 %v5251, %v5259
    %v5262 = vtanh.pop %v5261
    %5264 = vrot.lane.b32.xlu0 %v5262, 16
    %v5265 = vpop.permute.xlu0 %5264
    %v5267 = vmul.f32 %v5249, %v5265
    %5268 = vrot.lane.b32.xlu0 %v4540, 112
    %v5269 = vpop.permute.xlu0 %5268
    %5272 = vrot.lane.b32.xlu0 %v5267, 104
    %v5273 = vpop.permute.xlu0 %5272
    %v5275 = vsel %vm2529, %v5269, %v5273
    %v5277 = vsel %vm1709, %v5275, 0
    %5279 = vmatprep.subr.mxu0 0.0
    %5280 = vmatpush1.msra.mxu0 %v4949
    %5281 = vmatprep.subr.mxu0 0.0
    %5282 = vmatpush1.msra.mxu0 %v4950
    %5283 = vmatprep.subr.mxu0 0.0
    %5284 = vmatpush1.msra.mxu0 %v4951
    %5285 = vmatprep.subr.mxu0 0.0
    %5286 = vmatpush1.msra.mxu0 0.0
    %5287 = vmatprep.subr.mxu0 0.0
    %5288 = vmatpush1.msra.mxu0 0.0
    %5289 = vmatprep.subr.mxu0 0.0
    %5290 = vmatpush1.msra.mxu0 0.0
    %5291 = vmatprep.subr.mxu0 0.0
    %5292 = vmatpush1.msra.mxu0 0.0
    %5293 = vmatprep.subr.mxu0 0.0
    %5294 = vmatpush1.msra.mxu0 0.0
    %5295 = vmatprep.subr.mxu0 0.0
    %5296 = vmatpush1.msra.mxu0 0.0
    %5297 = vmatprep.subr.mxu0 0.0
    %5298 = vmatpush1.msra.mxu0 0.0
    %5299 = vmatprep.subr.mxu0 0.0
    %5300 = vmatpush1.msra.mxu0 0.0
    %5301 = vmatprep.subr.mxu0 0.0
    %5302 = vmatpush1.msra.mxu0 0.0
    %5303 = vmatprep.subr.mxu0 0.0
    %5304 = vmatpush1.msra.mxu0 0.0
    %5305 = vmatprep.subr.mxu0 0.0
    %5306 = vmatpush1.msra.mxu0 0.0
    %5307 = vmatprep.subr.mxu0 0.0
    %5308 = vmatpush1.msra.mxu0 0.0
    %5309 = vmatprep.subr.mxu0 0.0
    %5310 = vmatpush1.msra.mxu0 0.0
    %5311 = vmatprep.subr.mxu0 0.0
    %5312 = vmatpush1.msra.mxu0 0.0
    %5313 = vmatprep.subr.mxu0 0.0
    %5314 = vmatpush1.msra.mxu0 0.0
    %5315 = vmatprep.subr.mxu0 0.0
    %5316 = vmatpush1.msra.mxu0 0.0
    %5317 = vmatprep.subr.mxu0 0.0
    %5318 = vmatpush1.msra.mxu0 0.0
    %5319 = vmatprep.subr.mxu0 0.0
    %5320 = vmatpush1.msra.mxu0 0.0
    %5321 = vmatprep.subr.mxu0 0.0
    %5322 = vmatpush1.msra.mxu0 0.0
    %5323 = vmatprep.subr.mxu0 0.0
    %5324 = vmatpush1.msra.mxu0 0.0
    %5325 = vmatprep.subr.mxu0 0.0
    %5326 = vmatpush1.msra.mxu0 0.0
    %5327 = vmatprep.subr.mxu0 0.0
    %5328 = vmatpush1.msra.mxu0 0.0
    %5329 = vmatprep.subr.mxu0 0.0
    %5330 = vmatpush1.msra.mxu0 0.0
    %5331 = vmatprep.subr.mxu0 0.0
    %5332 = vmatpush1.msra.mxu0 0.0
    %5333 = vmatprep.subr.mxu0 0.0
    %5334 = vmatpush1.msra.mxu0 0.0
    %5335 = vmatprep.subr.mxu0 0.0
    %5336 = vmatpush1.msra.mxu0 0.0
    %5337 = vmatprep.subr.mxu0 0.0
    %5338 = vmatpush1.msra.mxu0 0.0
    %5339 = vmatprep.subr.mxu0 0.0
    %5340 = vmatpush1.msra.mxu0 0.0
    %5341 = vmatprep.subr.mxu0 0.0
    %5342 = vmatpush1.msra.mxu0 0.0
    %5343 = vmatprep.mubr.f32.mxu0 0.0
    %5344 = vmatmul.mubr.f32.gmra.mrb[0].mxu0 %v5277
    %v5345 = vpop.f32.mrb[0].mxu0
    %v5346 = vadd.f32 %v4960, %v5345
    %v5347 = vpop.f32.mrb[0].mxu0
    %5348 = vdwg.mxu0
    %v5349 = vxor.u32 %v5346, 2147483648
    %v5350 = vmul.f32 %v5349, 1.442695
    %v5351 = vpow.pop %v5350
    %v5352 = vadd.f32 %v5351, 1.0
    %v5353 = vrcp.pop %v5352
    %v5354 = vmul.f32 1.0, %v5353
    %v5355 = vtanh.pop %v5346
    %v5356 = vmul.f32 %v5354, %v5261
    %5358 = vrot.lane.b32.xlu0 %v5355, 80
    %v5359 = vpop.permute.xlu0 %5358
    %v5361 = vmul.f32 %v5354, %v5359
    %5363 = vrot.lane.b32.xlu0 %v5361, 16
    %v5364 = vpop.permute.xlu0 %5363
    %v5366 = vadd.f32 %v5356, %v5364
    %v5367 = vtanh.pop %v5366
    %5369 = vrot.lane.b32.xlu0 %v5367, 16
    %v5370 = vpop.permute.xlu0 %5369
    %v5372 = vmul.f32 %v5354, %v5370
    %5373 = vrot.lane.b32.xlu0 %v4642, 112
    %v5374 = vpop.permute.xlu0 %5373
    %5377 = vrot.lane.b32.xlu0 %v5372, 104
    %v5378 = vpop.permute.xlu0 %5377
    %v5380 = vsel %vm2529, %v5374, %v5378
    %v5382 = vsel %vm1709, %v5380, 0
    %5384 = vmatprep.subr.mxu0 0.0
    %5385 = vmatpush1.msra.mxu0 %v4949
    %5386 = vmatprep.subr.mxu0 0.0
    %5387 = vmatpush1.msra.mxu0 %v4950
    %5388 = vmatprep.subr.mxu0 0.0
    %5389 = vmatpush1.msra.mxu0 %v4951
    %5390 = vmatprep.subr.mxu0 0.0
    %5391 = vmatpush1.msra.mxu0 0.0
    %5392 = vmatprep.subr.mxu0 0.0
    %5393 = vmatpush1.msra.mxu0 0.0
    %5394 = vmatprep.subr.mxu0 0.0
    %5395 = vmatpush1.msra.mxu0 0.0
    %5396 = vmatprep.subr.mxu0 0.0
    %5397 = vmatpush1.msra.mxu0 0.0
    %5398 = vmatprep.subr.mxu0 0.0
    %5399 = vmatpush1.msra.mxu0 0.0
    %5400 = vmatprep.subr.mxu0 0.0
    %5401 = vmatpush1.msra.mxu0 0.0
    %5402 = vmatprep.subr.mxu0 0.0
    %5403 = vmatpush1.msra.mxu0 0.0
    %5404 = vmatprep.subr.mxu0 0.0
    %5405 = vmatpush1.msra.mxu0 0.0
    %5406 = vmatprep.subr.mxu0 0.0
    %5407 = vmatpush1.msra.mxu0 0.0
    %5408 = vmatprep.subr.mxu0 0.0
    %5409 = vmatpush1.msra.mxu0 0.0
    %5410 = vmatprep.subr.mxu0 0.0
    %5411 = vmatpush1.msra.mxu0 0.0
    %5412 = vmatprep.subr.mxu0 0.0
    %5413 = vmatpush1.msra.mxu0 0.0
    %5414 = vmatprep.subr.mxu0 0.0
    %5415 = vmatpush1.msra.mxu0 0.0
    %5416 = vmatprep.subr.mxu0 0.0
    %5417 = vmatpush1.msra.mxu0 0.0
    %5418 = vmatprep.subr.mxu0 0.0
    %5419 = vmatpush1.msra.mxu0 0.0
    %5420 = vmatprep.subr.mxu0 0.0
    %5421 = vmatpush1.msra.mxu0 0.0
    %5422 = vmatprep.subr.mxu0 0.0
    %5423 = vmatpush1.msra.mxu0 0.0
    %5424 = vmatprep.subr.mxu0 0.0
    %5425 = vmatpush1.msra.mxu0 0.0
    %5426 = vmatprep.subr.mxu0 0.0
    %5427 = vmatpush1.msra.mxu0 0.0
    %5428 = vmatprep.subr.mxu0 0.0
    %5429 = vmatpush1.msra.mxu0 0.0
    %5430 = vmatprep.subr.mxu0 0.0
    %5431 = vmatpush1.msra.mxu0 0.0
    %5432 = vmatprep.subr.mxu0 0.0
    %5433 = vmatpush1.msra.mxu0 0.0
    %5434 = vmatprep.subr.mxu0 0.0
    %5435 = vmatpush1.msra.mxu0 0.0
    %5436 = vmatprep.subr.mxu0 0.0
    %5437 = vmatpush1.msra.mxu0 0.0
    %5438 = vmatprep.subr.mxu0 0.0
    %5439 = vmatpush1.msra.mxu0 0.0
    %5440 = vmatprep.subr.mxu0 0.0
    %5441 = vmatpush1.msra.mxu0 0.0
    %5442 = vmatprep.subr.mxu0 0.0
    %5443 = vmatpush1.msra.mxu0 0.0
    %5444 = vmatprep.subr.mxu0 0.0
    %5445 = vmatpush1.msra.mxu0 0.0
    %5446 = vmatprep.subr.mxu0 0.0
    %5447 = vmatpush1.msra.mxu0 0.0
    %5448 = vmatprep.mubr.f32.mxu0 0.0
    %5449 = vmatmul.mubr.f32.gmra.mrb[0].mxu0 %v5382
    %v5450 = vpop.f32.mrb[0].mxu0
    %v5451 = vadd.f32 %v4960, %v5450
    %v5452 = vpop.f32.mrb[0].mxu0
    %5453 = vdwg.mxu0
    %v5454 = vxor.u32 %v5451, 2147483648
    %v5455 = vmul.f32 %v5454, 1.442695
    %v5456 = vpow.pop %v5455
    %v5457 = vadd.f32 %v5456, 1.0
    %v5458 = vrcp.pop %v5457
    %v5459 = vmul.f32 1.0, %v5458
    %v5460 = vtanh.pop %v5451
    %v5461 = vmul.f32 %v5459, %v5366
    %5463 = vrot.lane.b32.xlu0 %v5460, 80
    %v5464 = vpop.permute.xlu0 %5463
    %v5466 = vmul.f32 %v5459, %v5464
    %5468 = vrot.lane.b32.xlu0 %v5466, 16
    %v5469 = vpop.permute.xlu0 %5468
    %v5471 = vadd.f32 %v5461, %v5469
    %v5472 = vtanh.pop %v5471
    %5474 = vrot.lane.b32.xlu0 %v5472, 16
    %v5475 = vpop.permute.xlu0 %5474
    %v5477 = vmul.f32 %v5459, %v5475
    %5478 = vrot.lane.b32.xlu0 %v4744, 112
    %v5479 = vpop.permute.xlu0 %5478
    %5482 = vrot.lane.b32.xlu0 %v5477, 104
    %v5483 = vpop.permute.xlu0 %5482
    %v5485 = vsel %vm2529, %v5479, %v5483
    %v5487 = vsel %vm1709, %v5485, 0
    %5489 = vmatprep.subr.mxu0 0.0
    %5490 = vmatpush1.msra.mxu0 %v4949
    %5491 = vmatprep.subr.mxu0 0.0
    %5492 = vmatpush1.msra.mxu0 %v4950
    %5493 = vmatprep.subr.mxu0 0.0
    %5494 = vmatpush1.msra.mxu0 %v4951
    %5495 = vmatprep.subr.mxu0 0.0
    %5496 = vmatpush1.msra.mxu0 0.0
    %5497 = vmatprep.subr.mxu0 0.0
    %5498 = vmatpush1.msra.mxu0 0.0
    %5499 = vmatprep.subr.mxu0 0.0
    %5500 = vmatpush1.msra.mxu0 0.0
    %5501 = vmatprep.subr.mxu0 0.0
    %5502 = vmatpush1.msra.mxu0 0.0
    %5503 = vmatprep.subr.mxu0 0.0
    %5504 = vmatpush1.msra.mxu0 0.0
    %5505 = vmatprep.subr.mxu0 0.0
    %5506 = vmatpush1.msra.mxu0 0.0
    %5507 = vmatprep.subr.mxu0 0.0
    %5508 = vmatpush1.msra.mxu0 0.0
    %5509 = vmatprep.subr.mxu0 0.0
    %5510 = vmatpush1.msra.mxu0 0.0
    %5511 = vmatprep.subr.mxu0 0.0
    %5512 = vmatpush1.msra.mxu0 0.0
    %5513 = vmatprep.subr.mxu0 0.0
    %5514 = vmatpush1.msra.mxu0 0.0
    %5515 = vmatprep.subr.mxu0 0.0
    %5516 = vmatpush1.msra.mxu0 0.0
    %5517 = vmatprep.subr.mxu0 0.0
    %5518 = vmatpush1.msra.mxu0 0.0
    %5519 = vmatprep.subr.mxu0 0.0
    %5520 = vmatpush1.msra.mxu0 0.0
    %5521 = vmatprep.subr.mxu0 0.0
    %5522 = vmatpush1.msra.mxu0 0.0
    %5523 = vmatprep.subr.mxu0 0.0
    %5524 = vmatpush1.msra.mxu0 0.0
    %5525 = vmatprep.subr.mxu0 0.0
    %5526 = vmatpush1.msra.mxu0 0.0
    %5527 = vmatprep.subr.mxu0 0.0
    %5528 = vmatpush1.msra.mxu0 0.0
    %5529 = vmatprep.subr.mxu0 0.0
    %5530 = vmatpush1.msra.mxu0 0.0
    %5531 = vmatprep.subr.mxu0 0.0
    %5532 = vmatpush1.msra.mxu0 0.0
    %5533 = vmatprep.subr.mxu0 0.0
    %5534 = vmatpush1.msra.mxu0 0.0
    %5535 = vmatprep.subr.mxu0 0.0
    %5536 = vmatpush1.msra.mxu0 0.0
    %5537 = vmatprep.subr.mxu0 0.0
    %5538 = vmatpush1.msra.mxu0 0.0
    %5539 = vmatprep.subr.mxu0 0.0
    %5540 = vmatpush1.msra.mxu0 0.0
    %5541 = vmatprep.subr.mxu0 0.0
    %5542 = vmatpush1.msra.mxu0 0.0
    %5543 = vmatprep.subr.mxu0 0.0
    %5544 = vmatpush1.msra.mxu0 0.0
    %5545 = vmatprep.subr.mxu0 0.0
    %5546 = vmatpush1.msra.mxu0 0.0
    %5547 = vmatprep.subr.mxu0 0.0
    %5548 = vmatpush1.msra.mxu0 0.0
    %5549 = vmatprep.subr.mxu0 0.0
    %5550 = vmatpush1.msra.mxu0 0.0
    %5551 = vmatprep.subr.mxu0 0.0
    %5552 = vmatpush1.msra.mxu0 0.0
    %5553 = vmatprep.mubr.f32.mxu0 0.0
    %5554 = vmatmul.mubr.f32.gmra.mrb[0].mxu0 %v5487
    %v5555 = vpop.f32.mrb[0].mxu0
    %v5556 = vadd.f32 %v4960, %v5555
    %v5557 = vpop.f32.mrb[0].mxu0
    %5558 = vdwg.mxu0
    %v5559 = vxor.u32 %v5556, 2147483648
    %v5560 = vmul.f32 %v5559, 1.442695
    %v5561 = vpow.pop %v5560
    %v5562 = vadd.f32 %v5561, 1.0
    %v5563 = vrcp.pop %v5562
    %v5564 = vmul.f32 1.0, %v5563
    %v5565 = vtanh.pop %v5556
    %v5566 = vmul.f32 %v5564, %v5471
    %5568 = vrot.lane.b32.xlu0 %v5565, 80
    %v5569 = vpop.permute.xlu0 %5568
    %v5571 = vmul.f32 %v5564, %v5569
    %5573 = vrot.lane.b32.xlu0 %v5571, 16
    %v5574 = vpop.permute.xlu0 %5573
    %v5576 = vadd.f32 %v5566, %v5574
    %v5577 = vtanh.pop %v5576
    %5579 = vrot.lane.b32.xlu0 %v5577, 16
    %v5580 = vpop.permute.xlu0 %5579
    %v5582 = vmul.f32 %v5564, %v5580
    %5583 = vrot.lane.b32.xlu0 %v4846, 112
    %v5584 = vpop.permute.xlu0 %5583
    %5587 = vrot.lane.b32.xlu0 %v5582, 104
    %v5588 = vpop.permute.xlu0 %5587
    %v5590 = vsel %vm2529, %v5584, %v5588
    %v5592 = vsel %vm1709, %v5590, 0
    %5594 = vmatprep.subr.mxu0 0.0
    %5595 = vmatpush1.msra.mxu0 %v4949
    %5596 = vmatprep.subr.mxu0 0.0
    %5597 = vmatpush1.msra.mxu0 %v4950
    %5598 = vmatprep.subr.mxu0 0.0
    %5599 = vmatpush1.msra.mxu0 %v4951
    %5600 = vmatprep.subr.mxu0 0.0
    %5601 = vmatpush1.msra.mxu0 0.0
    %5602 = vmatprep.subr.mxu0 0.0
    %5603 = vmatpush1.msra.mxu0 0.0
    %5604 = vmatprep.subr.mxu0 0.0
    %5605 = vmatpush1.msra.mxu0 0.0
    %5606 = vmatprep.subr.mxu0 0.0
    %5607 = vmatpush1.msra.mxu0 0.0
    %5608 = vmatprep.subr.mxu0 0.0
    %5609 = vmatpush1.msra.mxu0 0.0
    %5610 = vmatprep.subr.mxu0 0.0
    %5611 = vmatpush1.msra.mxu0 0.0
    %5612 = vmatprep.subr.mxu0 0.0
    %5613 = vmatpush1.msra.mxu0 0.0
    %5614 = vmatprep.subr.mxu0 0.0
    %5615 = vmatpush1.msra.mxu0 0.0
    %5616 = vmatprep.subr.mxu0 0.0
    %5617 = vmatpush1.msra.mxu0 0.0
    %5618 = vmatprep.subr.mxu0 0.0
    %5619 = vmatpush1.msra.mxu0 0.0
    %5620 = vmatprep.subr.mxu0 0.0
    %5621 = vmatpush1.msra.mxu0 0.0
    %5622 = vmatprep.subr.mxu0 0.0
    %5623 = vmatpush1.msra.mxu0 0.0
    %5624 = vmatprep.subr.mxu0 0.0
    %5625 = vmatpush1.msra.mxu0 0.0
    %5626 = vmatprep.subr.mxu0 0.0
    %5627 = vmatpush1.msra.mxu0 0.0
    %5628 = vmatprep.subr.mxu0 0.0
    %5629 = vmatpush1.msra.mxu0 0.0
    %5630 = vmatprep.subr.mxu0 0.0
    %5631 = vmatpush1.msra.mxu0 0.0
    %5632 = vmatprep.subr.mxu0 0.0
    %5633 = vmatpush1.msra.mxu0 0.0
    %5634 = vmatprep.subr.mxu0 0.0
    %5635 = vmatpush1.msra.mxu0 0.0
    %5636 = vmatprep.subr.mxu0 0.0
    %5637 = vmatpush1.msra.mxu0 0.0
    %5638 = vmatprep.subr.mxu0 0.0
    %5639 = vmatpush1.msra.mxu0 0.0
    %5640 = vmatprep.subr.mxu0 0.0
    %5641 = vmatpush1.msra.mxu0 0.0
    %5642 = vmatprep.subr.mxu0 0.0
    %5643 = vmatpush1.msra.mxu0 0.0
    %5644 = vmatprep.subr.mxu0 0.0
    %5645 = vmatpush1.msra.mxu0 0.0
    %5646 = vmatprep.subr.mxu0 0.0
    %5647 = vmatpush1.msra.mxu0 0.0
    %5648 = vmatprep.subr.mxu0 0.0
    %5649 = vmatpush1.msra.mxu0 0.0
    %5650 = vmatprep.subr.mxu0 0.0
    %5651 = vmatpush1.msra.mxu0 0.0
    %5652 = vmatprep.subr.mxu0 0.0
    %5653 = vmatpush1.msra.mxu0 0.0
    %5654 = vmatprep.subr.mxu0 0.0
    %5655 = vmatpush1.msra.mxu0 0.0
    %5656 = vmatprep.subr.mxu0 0.0
    %5657 = vmatpush1.msra.mxu0 0.0
    %5658 = vmatprep.mubr.f32.mxu0 0.0
    %5659 = vmatmul.mubr.f32.gmra.mrb[0].mxu0 %v5592
    %v5660 = vpop.f32.mrb[0].mxu0
    %v5661 = vadd.f32 %v4960, %v5660
    %v5662 = vpop.f32.mrb[0].mxu0
    %5663 = vdwg.mxu0
    %v5664 = vxor.u32 %v5661, 2147483648
    %v5665 = vmul.f32 %v5664, 1.442695
    %v5666 = vpow.pop %v5665
    %v5667 = vadd.f32 %v5666, 1.0
    %v5668 = vrcp.pop %v5667
    %v5669 = vmul.f32 1.0, %v5668
    %v5670 = vtanh.pop %v5661
    %v5671 = vmul.f32 %v5669, %v5576
    %5673 = vrot.lane.b32.xlu0 %v5670, 80
    %v5674 = vpop.permute.xlu0 %5673
    %v5676 = vmul.f32 %v5669, %v5674
    %5678 = vrot.lane.b32.xlu0 %v5676, 16
    %v5679 = vpop.permute.xlu0 %5678
    %v5681 = vadd.f32 %v5671, %v5679
    %v5682 = vtanh.pop %v5681
    %5684 = vrot.lane.b32.xlu0 %v5682, 16
    %v5685 = vpop.permute.xlu0 %5684
    %v5687 = vmul.f32 %v5669, %v5685
    %5689 = vrot.lane.b32.xlu0 %v4948, 112
    %v5690 = vpop.permute.xlu0 %5689
    %5693 = vrot.lane.b32.xlu0 %v5687, 104
    %v5694 = vpop.permute.xlu0 %5693
    %v5696 = vsel %vm2529, %v5690, %v5694
    %v5698 = vsel %vm1709, %v5696, 0
    %5700 = vmatprep.subr.mxu0 0.0
    %5701 = vmatpush1.msra.mxu0 %v4949
    %5702 = vmatprep.subr.mxu0 0.0
    %5703 = vmatpush1.msra.mxu0 %v4950
    %5704 = vmatprep.subr.mxu0 0.0
    %5705 = vmatpush1.msra.mxu0 %v4951
    %5706 = vmatprep.subr.mxu0 0.0
    %5707 = vmatpush1.msra.mxu0 0.0
    %5708 = vmatprep.subr.mxu0 0.0
    %5709 = vmatpush1.msra.mxu0 0.0
    %5710 = vmatprep.subr.mxu0 0.0
    %5711 = vmatpush1.msra.mxu0 0.0
    %5712 = vmatprep.subr.mxu0 0.0
    %5713 = vmatpush1.msra.mxu0 0.0
    %5714 = vmatprep.subr.mxu0 0.0
    %5715 = vmatpush1.msra.mxu0 0.0
    %5716 = vmatprep.subr.mxu0 0.0
    %5717 = vmatpush1.msra.mxu0 0.0
    %5718 = vmatprep.subr.mxu0 0.0
    %5719 = vmatpush1.msra.mxu0 0.0
    %5720 = vmatprep.subr.mxu0 0.0
    %5721 = vmatpush1.msra.mxu0 0.0
    %5722 = vmatprep.subr.mxu0 0.0
    %5723 = vmatpush1.msra.mxu0 0.0
    %5724 = vmatprep.subr.mxu0 0.0
    %5725 = vmatpush1.msra.mxu0 0.0
    %5726 = vmatprep.subr.mxu0 0.0
    %5727 = vmatpush1.msra.mxu0 0.0
    %5728 = vmatprep.subr.mxu0 0.0
    %5729 = vmatpush1.msra.mxu0 0.0
    %5730 = vmatprep.subr.mxu0 0.0
    %5731 = vmatpush1.msra.mxu0 0.0
    %5732 = vmatprep.subr.mxu0 0.0
    %5733 = vmatpush1.msra.mxu0 0.0
    %5734 = vmatprep.subr.mxu0 0.0
    %5735 = vmatpush1.msra.mxu0 0.0
    %5736 = vmatprep.subr.mxu0 0.0
    %5737 = vmatpush1.msra.mxu0 0.0
    %5738 = vmatprep.subr.mxu0 0.0
    %5739 = vmatpush1.msra.mxu0 0.0
    %5740 = vmatprep.subr.mxu0 0.0
    %5741 = vmatpush1.msra.mxu0 0.0
    %5742 = vmatprep.subr.mxu0 0.0
    %5743 = vmatpush1.msra.mxu0 0.0
    %5744 = vmatprep.subr.mxu0 0.0
    %5745 = vmatpush1.msra.mxu0 0.0
    %5746 = vmatprep.subr.mxu0 0.0
    %5747 = vmatpush1.msra.mxu0 0.0
    %5748 = vmatprep.subr.mxu0 0.0
    %5749 = vmatpush1.msra.mxu0 0.0
    %5750 = vmatprep.subr.mxu0 0.0
    %5751 = vmatpush1.msra.mxu0 0.0
    %5752 = vmatprep.subr.mxu0 0.0
    %5753 = vmatpush1.msra.mxu0 0.0
    %5754 = vmatprep.subr.mxu0 0.0
    %5755 = vmatpush1.msra.mxu0 0.0
    %5756 = vmatprep.subr.mxu0 0.0
    %5757 = vmatpush1.msra.mxu0 0.0
    %5758 = vmatprep.subr.mxu0 0.0
    %5759 = vmatpush1.msra.mxu0 0.0
    %5760 = vmatprep.subr.mxu0 0.0
    %5761 = vmatpush1.msra.mxu0 0.0
    %5762 = vmatprep.subr.mxu0 0.0
    %5763 = vmatpush1.msra.mxu0 0.0
    %5764 = vmatprep.mubr.f32.mxu0 0.0
    %5765 = vmatmul.mubr.f32.gmra.mrb[0].mxu0 %v5698
    %v5766 = vpop.f32.mrb[0].mxu0
    %v5767 = vadd.f32 %v4960, %v5766
    %v5768 = vpop.f32.mrb[0].mxu0
    %5769 = vdwg.mxu0
    %v5770 = vxor.u32 %v5767, 2147483648
    %v5771 = vmul.f32 %v5770, 1.442695
    %v5772 = vpow.pop %v5771
    %v5773 = vadd.f32 %v5772, 1.0
    %v5774 = vrcp.pop %v5773
    %v5775 = vmul.f32 1.0, %v5774
    %v5776 = vtanh.pop %v5767
    %v5777 = vmul.f32 %v5775, %v5681
    %5779 = vrot.lane.b32.xlu0 %v5776, 80
    %v5780 = vpop.permute.xlu0 %5779
    %v5782 = vmul.f32 %v5775, %v5780
    %5784 = vrot.lane.b32.xlu0 %v5782, 16
    %v5785 = vpop.permute.xlu0 %5784
    %v5787 = vadd.f32 %v5777, %v5785
    %v5788 = vtanh.pop %v5787
    %5790 = vrot.lane.b32.xlu0 %v5788, 16
    %v5791 = vpop.permute.xlu0 %5790
    %v5793 = vmul.f32 %v5775, %v5791
    %v5794 = vld [vmem:[#allocation2 + $0xf0] sm:$0xff]
    %v5795 = vld [vmem:[#allocation2 + $0xf8] sm:$0xff]
    %v5796 = vld [vmem:[#allocation2 + $0x100] sm:$0xff]
    %v5797 = vld [vmem:[#allocation2 + $0x108] sm:$0xff]
    %v5798 = vld [vmem:[#allocation2 + $0x110] sm:$0xff]
    %v5799 = vld [vmem:[#allocation2 + $0x118] sm:$0xff]
    %v5800 = vld [vmem:[%s3 + $0x7] sm:$0x1]
    %5801 = vrot.lane.b32.xlu0 %v5057, 96
    %v5802 = vpop.permute.xlu0 %5801
    %v5804 = vsel %vm1703, %v5802, 0.0
    %v5805 = vlaneseq
    %v5806 = vshrl.u32 %v5805, 7
    %v5807 = vsub.s32 0, %v5806
    %v5808 = vrot.slane %v5800, %v5807
    %v5810 = vsel %vm889, %v5804, 0
    %5812 = vmatprep.subr.mxu0 0.0
    %5813 = vmatpush1.msra.mxu0 %v5794
    %5814 = vmatprep.subr.mxu0 0.0
    %5815 = vmatpush1.msra.mxu0 %v5795
    %5816 = vmatprep.subr.mxu0 0.0
    %5817 = vmatpush1.msra.mxu0 %v5796
    %5818 = vmatprep.subr.mxu0 0.0
    %5819 = vmatpush1.msra.mxu0 %v5797
    %5820 = vmatprep.subr.mxu0 0.0
    %5821 = vmatpush1.msra.mxu0 %v5798
    %5822 = vmatprep.subr.mxu0 0.0
    %5823 = vmatpush1.msra.mxu0 %v5799
    %5824 = vmatprep.subr.mxu0 0.0
    %5825 = vmatpush1.msra.mxu0 0.0
    %5826 = vmatprep.subr.mxu0 0.0
    %5827 = vmatpush1.msra.mxu0 0.0
    %5828 = vmatprep.subr.mxu0 0.0
    %5829 = vmatpush1.msra.mxu0 0.0
    %5830 = vmatprep.subr.mxu0 0.0
    %5831 = vmatpush1.msra.mxu0 0.0
    %5832 = vmatprep.subr.mxu0 0.0
    %5833 = vmatpush1.msra.mxu0 0.0
    %5834 = vmatprep.subr.mxu0 0.0
    %5835 = vmatpush1.msra.mxu0 0.0
    %5836 = vmatprep.subr.mxu0 0.0
    %5837 = vmatpush1.msra.mxu0 0.0
    %5838 = vmatprep.subr.mxu0 0.0
    %5839 = vmatpush1.msra.mxu0 0.0
    %5840 = vmatprep.subr.mxu0 0.0
    %5841 = vmatpush1.msra.mxu0 0.0
    %5842 = vmatprep.subr.mxu0 0.0
    %5843 = vmatpush1.msra.mxu0 0.0
    %5844 = vmatprep.subr.mxu0 0.0
    %5845 = vmatpush1.msra.mxu0 0.0
    %5846 = vmatprep.subr.mxu0 0.0
    %5847 = vmatpush1.msra.mxu0 0.0
    %5848 = vmatprep.subr.mxu0 0.0
    %5849 = vmatpush1.msra.mxu0 0.0
    %5850 = vmatprep.subr.mxu0 0.0
    %5851 = vmatpush1.msra.mxu0 0.0
    %5852 = vmatprep.subr.mxu0 0.0
    %5853 = vmatpush1.msra.mxu0 0.0
    %5854 = vmatprep.subr.mxu0 0.0
    %5855 = vmatpush1.msra.mxu0 0.0
    %5856 = vmatprep.subr.mxu0 0.0
    %5857 = vmatpush1.msra.mxu0 0.0
    %5858 = vmatprep.subr.mxu0 0.0
    %5859 = vmatpush1.msra.mxu0 0.0
    %5860 = vmatprep.subr.mxu0 0.0
    %5861 = vmatpush1.msra.mxu0 0.0
    %5862 = vmatprep.subr.mxu0 0.0
    %5863 = vmatpush1.msra.mxu0 0.0
    %5864 = vmatprep.subr.mxu0 0.0
    %5865 = vmatpush1.msra.mxu0 0.0
    %5866 = vmatprep.subr.mxu0 0.0
    %5867 = vmatpush1.msra.mxu0 0.0
    %5868 = vmatprep.subr.mxu0 0.0
    %5869 = vmatpush1.msra.mxu0 0.0
    %5870 = vmatprep.subr.mxu0 0.0
    %5871 = vmatpush1.msra.mxu0 0.0
    %5872 = vmatprep.subr.mxu0 0.0
    %5873 = vmatpush1.msra.mxu0 0.0
    %5874 = vmatprep.subr.mxu0 0.0
    %5875 = vmatpush1.msra.mxu0 0.0
    %5876 = vmatprep.mubr.f32.mxu0 0.0
    %5877 = vmatmul.mubr.f32.gmra.mrb[0].mxu0 %v5810
    %v5878 = vpop.f32.mrb[0].mxu0
    %v5879 = vadd.f32 %v5808, %v5878
    %v5880 = vpop.f32.mrb[0].mxu0
    %5881 = vdwg.mxu0
    %v5882 = vxor.u32 %v5879, 2147483648
    %v5883 = vmul.f32 %v5882, 1.442695
    %v5884 = vpow.pop %v5883
    %v5885 = vadd.f32 %v5884, 1.0
    %v5886 = vrcp.pop %v5885
    %v5887 = vmul.f32 1.0, %v5886
    %v5888 = vtanh.pop %v5879
    %v5889 = vmul.f32 %v5887, 0.0
    %5891 = vrot.lane.b32.xlu0 %v5888, 32
    %v5892 = vpop.permute.xlu0 %5891
    %v5894 = vmul.f32 %v5887, %v5892
    %5896 = vrot.lane.b32.xlu0 %v5894, 32
    %v5897 = vpop.permute.xlu0 %5896
    %v5899 = vadd.f32 %v5889, %v5897
    %v5900 = vtanh.pop %v5899
    %5902 = vrot.lane.b32.xlu0 %v5900, 32
    %v5903 = vpop.permute.xlu0 %5902
    %v5905 = vmul.f32 %v5887, %v5903
    %5906 = vrot.lane.b32.xlu0 %v5162, 96
    %v5907 = vpop.permute.xlu0 %5906
    %5910 = vrot.lane.b32.xlu0 %v5905, 80
    %v5911 = vpop.permute.xlu0 %5910
    %v5913 = vsel %vm1703, %v5907, %v5911
    %v5915 = vsel %vm889, %v5913, 0
    %5917 = vmatprep.subr.mxu0 0.0
    %5918 = vmatpush1.msra.mxu0 %v5794
    %5919 = vmatprep.subr.mxu0 0.0
    %5920 = vmatpush1.msra.mxu0 %v5795
    %5921 = vmatprep.subr.mxu0 0.0
    %5922 = vmatpush1.msra.mxu0 %v5796
    %5923 = vmatprep.subr.mxu0 0.0
    %5924 = vmatpush1.msra.mxu0 %v5797
    %5925 = vmatprep.subr.mxu0 0.0
    %5926 = vmatpush1.msra.mxu0 %v5798
    %5927 = vmatprep.subr.mxu0 0.0
    %5928 = vmatpush1.msra.mxu0 %v5799
    %5929 = vmatprep.subr.mxu0 0.0
    %5930 = vmatpush1.msra.mxu0 0.0
    %5931 = vmatprep.subr.mxu0 0.0
    %5932 = vmatpush1.msra.mxu0 0.0
    %5933 = vmatprep.subr.mxu0 0.0
    %5934 = vmatpush1.msra.mxu0 0.0
    %5935 = vmatprep.subr.mxu0 0.0
    %5936 = vmatpush1.msra.mxu0 0.0
    %5937 = vmatprep.subr.mxu0 0.0
    %5938 = vmatpush1.msra.mxu0 0.0
    %5939 = vmatprep.subr.mxu0 0.0
    %5940 = vmatpush1.msra.mxu0 0.0
    %5941 = vmatprep.subr.mxu0 0.0
    %5942 = vmatpush1.msra.mxu0 0.0
    %5943 = vmatprep.subr.mxu0 0.0
    %5944 = vmatpush1.msra.mxu0 0.0
    %5945 = vmatprep.subr.mxu0 0.0
    %5946 = vmatpush1.msra.mxu0 0.0
    %5947 = vmatprep.subr.mxu0 0.0
    %5948 = vmatpush1.msra.mxu0 0.0
    %5949 = vmatprep.subr.mxu0 0.0
    %5950 = vmatpush1.msra.mxu0 0.0
    %5951 = vmatprep.subr.mxu0 0.0
    %5952 = vmatpush1.msra.mxu0 0.0
    %5953 = vmatprep.subr.mxu0 0.0
    %5954 = vmatpush1.msra.mxu0 0.0
    %5955 = vmatprep.subr.mxu0 0.0
    %5956 = vmatpush1.msra.mxu0 0.0
    %5957 = vmatprep.subr.mxu0 0.0
    %5958 = vmatpush1.msra.mxu0 0.0
    %5959 = vmatprep.subr.mxu0 0.0
    %5960 = vmatpush1.msra.mxu0 0.0
    %5961 = vmatprep.subr.mxu0 0.0
    %5962 = vmatpush1.msra.mxu0 0.0
    %5963 = vmatprep.subr.mxu0 0.0
    %5964 = vmatpush1.msra.mxu0 0.0
    %5965 = vmatprep.subr.mxu0 0.0
    %5966 = vmatpush1.msra.mxu0 0.0
    %5967 = vmatprep.subr.mxu0 0.0
    %5968 = vmatpush1.msra.mxu0 0.0
    %5969 = vmatprep.subr.mxu0 0.0
    %5970 = vmatpush1.msra.mxu0 0.0
    %5971 = vmatprep.subr.mxu0 0.0
    %5972 = vmatpush1.msra.mxu0 0.0
    %5973 = vmatprep.subr.mxu0 0.0
    %5974 = vmatpush1.msra.mxu0 0.0
    %5975 = vmatprep.subr.mxu0 0.0
    %5976 = vmatpush1.msra.mxu0 0.0
    %5977 = vmatprep.subr.mxu0 0.0
    %5978 = vmatpush1.msra.mxu0 0.0
    %5979 = vmatprep.subr.mxu0 0.0
    %5980 = vmatpush1.msra.mxu0 0.0
    %5981 = vmatprep.mubr.f32.mxu0 0.0
    %5982 = vmatmul.mubr.f32.gmra.mrb[0].mxu0 %v5915
    %v5983 = vpop.f32.mrb[0].mxu0
    %v5984 = vadd.f32 %v5808, %v5983
    %v5985 = vpop.f32.mrb[0].mxu0
    %5986 = vdwg.mxu0
    %v5987 = vxor.u32 %v5984, 2147483648
    %v5988 = vmul.f32 %v5987, 1.442695
    %v5989 = vpow.pop %v5988
    %v5990 = vadd.f32 %v5989, 1.0
    %v5991 = vrcp.pop %v5990
    %v5992 = vmul.f32 1.0, %v5991
    %v5993 = vtanh.pop %v5984
    %v5994 = vmul.f32 %v5992, %v5899
    %5996 = vrot.lane.b32.xlu0 %v5993, 32
    %v5997 = vpop.permute.xlu0 %5996
    %v5999 = vmul.f32 %v5992, %v5997
    %6001 = vrot.lane.b32.xlu0 %v5999, 32
    %v6002 = vpop.permute.xlu0 %6001
    %v6004 = vadd.f32 %v5994, %v6002
    %v6005 = vtanh.pop %v6004
    %6007 = vrot.lane.b32.xlu0 %v6005, 32
    %v6008 = vpop.permute.xlu0 %6007
    %v6010 = vmul.f32 %v5992, %v6008
    %6011 = vrot.lane.b32.xlu0 %v5267, 96
    %v6012 = vpop.permute.xlu0 %6011
    %6015 = vrot.lane.b32.xlu0 %v6010, 80
    %v6016 = vpop.permute.xlu0 %6015
    %v6018 = vsel %vm1703, %v6012, %v6016
    %v6020 = vsel %vm889, %v6018, 0
    %6022 = vmatprep.subr.mxu0 0.0
    %6023 = vmatpush1.msra.mxu0 %v5794
    %6024 = vmatprep.subr.mxu0 0.0
    %6025 = vmatpush1.msra.mxu0 %v5795
    %6026 = vmatprep.subr.mxu0 0.0
    %6027 = vmatpush1.msra.mxu0 %v5796
    %6028 = vmatprep.subr.mxu0 0.0
    %6029 = vmatpush1.msra.mxu0 %v5797
    %6030 = vmatprep.subr.mxu0 0.0
    %6031 = vmatpush1.msra.mxu0 %v5798
    %6032 = vmatprep.subr.mxu0 0.0
    %6033 = vmatpush1.msra.mxu0 %v5799
    %6034 = vmatprep.subr.mxu0 0.0
    %6035 = vmatpush1.msra.mxu0 0.0
    %6036 = vmatprep.subr.mxu0 0.0
    %6037 = vmatpush1.msra.mxu0 0.0
    %6038 = vmatprep.subr.mxu0 0.0
    %6039 = vmatpush1.msra.mxu0 0.0
    %6040 = vmatprep.subr.mxu0 0.0
    %6041 = vmatpush1.msra.mxu0 0.0
    %6042 = vmatprep.subr.mxu0 0.0
    %6043 = vmatpush1.msra.mxu0 0.0
    %6044 = vmatprep.subr.mxu0 0.0
    %6045 = vmatpush1.msra.mxu0 0.0
    %6046 = vmatprep.subr.mxu0 0.0
    %6047 = vmatpush1.msra.mxu0 0.0
    %6048 = vmatprep.subr.mxu0 0.0
    %6049 = vmatpush1.msra.mxu0 0.0
    %6050 = vmatprep.subr.mxu0 0.0
    %6051 = vmatpush1.msra.mxu0 0.0
    %6052 = vmatprep.subr.mxu0 0.0
    %6053 = vmatpush1.msra.mxu0 0.0
    %6054 = vmatprep.subr.mxu0 0.0
    %6055 = vmatpush1.msra.mxu0 0.0
    %6056 = vmatprep.subr.mxu0 0.0
    %6057 = vmatpush1.msra.mxu0 0.0
    %6058 = vmatprep.subr.mxu0 0.0
    %6059 = vmatpush1.msra.mxu0 0.0
    %6060 = vmatprep.subr.mxu0 0.0
    %6061 = vmatpush1.msra.mxu0 0.0
    %6062 = vmatprep.subr.mxu0 0.0
    %6063 = vmatpush1.msra.mxu0 0.0
    %6064 = vmatprep.subr.mxu0 0.0
    %6065 = vmatpush1.msra.mxu0 0.0
    %6066 = vmatprep.subr.mxu0 0.0
    %6067 = vmatpush1.msra.mxu0 0.0
    %6068 = vmatprep.subr.mxu0 0.0
    %6069 = vmatpush1.msra.mxu0 0.0
    %6070 = vmatprep.subr.mxu0 0.0
    %6071 = vmatpush1.msra.mxu0 0.0
    %6072 = vmatprep.subr.mxu0 0.0
    %6073 = vmatpush1.msra.mxu0 0.0
    %6074 = vmatprep.subr.mxu0 0.0
    %6075 = vmatpush1.msra.mxu0 0.0
    %6076 = vmatprep.subr.mxu0 0.0
    %6077 = vmatpush1.msra.mxu0 0.0
    %6078 = vmatprep.subr.mxu0 0.0
    %6079 = vmatpush1.msra.mxu0 0.0
    %6080 = vmatprep.subr.mxu0 0.0
    %6081 = vmatpush1.msra.mxu0 0.0
    %6082 = vmatprep.subr.mxu0 0.0
    %6083 = vmatpush1.msra.mxu0 0.0
    %6084 = vmatprep.subr.mxu0 0.0
    %6085 = vmatpush1.msra.mxu0 0.0
    %6086 = vmatprep.mubr.f32.mxu0 0.0
    %6087 = vmatmul.mubr.f32.gmra.mrb[0].mxu0 %v6020
    %v6088 = vpop.f32.mrb[0].mxu0
    %v6089 = vadd.f32 %v5808, %v6088
    %v6090 = vpop.f32.mrb[0].mxu0
    %6091 = vdwg.mxu0
    %v6092 = vxor.u32 %v6089, 2147483648
    %v6093 = vmul.f32 %v6092, 1.442695
    %v6094 = vpow.pop %v6093
    %v6095 = vadd.f32 %v6094, 1.0
    %v6096 = vrcp.pop %v6095
    %v6097 = vmul.f32 1.0, %v6096
    %v6098 = vtanh.pop %v6089
    %v6099 = vmul.f32 %v6097, %v6004
    %6101 = vrot.lane.b32.xlu0 %v6098, 32
    %v6102 = vpop.permute.xlu0 %6101
    %v6104 = vmul.f32 %v6097, %v6102
    %6106 = vrot.lane.b32.xlu0 %v6104, 32
    %v6107 = vpop.permute.xlu0 %6106
    %v6109 = vadd.f32 %v6099, %v6107
    %v6110 = vtanh.pop %v6109
    %6112 = vrot.lane.b32.xlu0 %v6110, 32
    %v6113 = vpop.permute.xlu0 %6112
    %v6115 = vmul.f32 %v6097, %v6113
    %6116 = vrot.lane.b32.xlu0 %v5372, 96
    %v6117 = vpop.permute.xlu0 %6116
    %6120 = vrot.lane.b32.xlu0 %v6115, 80
    %v6121 = vpop.permute.xlu0 %6120
    %v6123 = vsel %vm1703, %v6117, %v6121
    %v6125 = vsel %vm889, %v6123, 0
    %6127 = vmatprep.subr.mxu0 0.0
    %6128 = vmatpush1.msra.mxu0 %v5794
    %6129 = vmatprep.subr.mxu0 0.0
    %6130 = vmatpush1.msra.mxu0 %v5795
    %6131 = vmatprep.subr.mxu0 0.0
    %6132 = vmatpush1.msra.mxu0 %v5796
    %6133 = vmatprep.subr.mxu0 0.0
    %6134 = vmatpush1.msra.mxu0 %v5797
    %6135 = vmatprep.subr.mxu0 0.0
    %6136 = vmatpush1.msra.mxu0 %v5798
    %6137 = vmatprep.subr.mxu0 0.0
    %6138 = vmatpush1.msra.mxu0 %v5799
    %6139 = vmatprep.subr.mxu0 0.0
    %6140 = vmatpush1.msra.mxu0 0.0
    %6141 = vmatprep.subr.mxu0 0.0
    %6142 = vmatpush1.msra.mxu0 0.0
    %6143 = vmatprep.subr.mxu0 0.0
    %6144 = vmatpush1.msra.mxu0 0.0
    %6145 = vmatprep.subr.mxu0 0.0
    %6146 = vmatpush1.msra.mxu0 0.0
    %6147 = vmatprep.subr.mxu0 0.0
    %6148 = vmatpush1.msra.mxu0 0.0
    %6149 = vmatprep.subr.mxu0 0.0
    %6150 = vmatpush1.msra.mxu0 0.0
    %6151 = vmatprep.subr.mxu0 0.0
    %6152 = vmatpush1.msra.mxu0 0.0
    %6153 = vmatprep.subr.mxu0 0.0
    %6154 = vmatpush1.msra.mxu0 0.0
    %6155 = vmatprep.subr.mxu0 0.0
    %6156 = vmatpush1.msra.mxu0 0.0
    %6157 = vmatprep.subr.mxu0 0.0
    %6158 = vmatpush1.msra.mxu0 0.0
    %6159 = vmatprep.subr.mxu0 0.0
    %6160 = vmatpush1.msra.mxu0 0.0
    %6161 = vmatprep.subr.mxu0 0.0
    %6162 = vmatpush1.msra.mxu0 0.0
    %6163 = vmatprep.subr.mxu0 0.0
    %6164 = vmatpush1.msra.mxu0 0.0
    %6165 = vmatprep.subr.mxu0 0.0
    %6166 = vmatpush1.msra.mxu0 0.0
    %6167 = vmatprep.subr.mxu0 0.0
    %6168 = vmatpush1.msra.mxu0 0.0
    %6169 = vmatprep.subr.mxu0 0.0
    %6170 = vmatpush1.msra.mxu0 0.0
    %6171 = vmatprep.subr.mxu0 0.0
    %6172 = vmatpush1.msra.mxu0 0.0
    %6173 = vmatprep.subr.mxu0 0.0
    %6174 = vmatpush1.msra.mxu0 0.0
    %6175 = vmatprep.subr.mxu0 0.0
    %6176 = vmatpush1.msra.mxu0 0.0
    %6177 = vmatprep.subr.mxu0 0.0
    %6178 = vmatpush1.msra.mxu0 0.0
    %6179 = vmatprep.subr.mxu0 0.0
    %6180 = vmatpush1.msra.mxu0 0.0
    %6181 = vmatprep.subr.mxu0 0.0
    %6182 = vmatpush1.msra.mxu0 0.0
    %6183 = vmatprep.subr.mxu0 0.0
    %6184 = vmatpush1.msra.mxu0 0.0
    %6185 = vmatprep.subr.mxu0 0.0
    %6186 = vmatpush1.msra.mxu0 0.0
    %6187 = vmatprep.subr.mxu0 0.0
    %6188 = vmatpush1.msra.mxu0 0.0
    %6189 = vmatprep.subr.mxu0 0.0
    %6190 = vmatpush1.msra.mxu0 0.0
    %6191 = vmatprep.mubr.f32.mxu0 0.0
    %6192 = vmatmul.mubr.f32.gmra.mrb[0].mxu0 %v6125
    %v6193 = vpop.f32.mrb[0].mxu0
    %v6194 = vadd.f32 %v5808, %v6193
    %v6195 = vpop.f32.mrb[0].mxu0
    %6196 = vdwg.mxu0
    %v6197 = vxor.u32 %v6194, 2147483648
    %v6198 = vmul.f32 %v6197, 1.442695
    %v6199 = vpow.pop %v6198
    %v6200 = vadd.f32 %v6199, 1.0
    %v6201 = vrcp.pop %v6200
    %v6202 = vmul.f32 1.0, %v6201
    %v6203 = vtanh.pop %v6194
    %v6204 = vmul.f32 %v6202, %v6109
    %6206 = vrot.lane.b32.xlu0 %v6203, 32
    %v6207 = vpop.permute.xlu0 %6206
    %v6209 = vmul.f32 %v6202, %v6207
    %6211 = vrot.lane.b32.xlu0 %v6209, 32
    %v6212 = vpop.permute.xlu0 %6211
    %v6214 = vadd.f32 %v6204, %v6212
    %v6215 = vtanh.pop %v6214
    %6217 = vrot.lane.b32.xlu0 %v6215, 32
    %v6218 = vpop.permute.xlu0 %6217
    %v6220 = vmul.f32 %v6202, %v6218
    %6221 = vrot.lane.b32.xlu0 %v5477, 96
    %v6222 = vpop.permute.xlu0 %6221
    %6225 = vrot.lane.b32.xlu0 %v6220, 80
    %v6226 = vpop.permute.xlu0 %6225
    %v6228 = vsel %vm1703, %v6222, %v6226
    %v6230 = vsel %vm889, %v6228, 0
    %6232 = vmatprep.subr.mxu0 0.0
    %6233 = vmatpush1.msra.mxu0 %v5794
    %6234 = vmatprep.subr.mxu0 0.0
    %6235 = vmatpush1.msra.mxu0 %v5795
    %6236 = vmatprep.subr.mxu0 0.0
    %6237 = vmatpush1.msra.mxu0 %v5796
    %6238 = vmatprep.subr.mxu0 0.0
    %6239 = vmatpush1.msra.mxu0 %v5797
    %6240 = vmatprep.subr.mxu0 0.0
    %6241 = vmatpush1.msra.mxu0 %v5798
    %6242 = vmatprep.subr.mxu0 0.0
    %6243 = vmatpush1.msra.mxu0 %v5799
    %6244 = vmatprep.subr.mxu0 0.0
    %6245 = vmatpush1.msra.mxu0 0.0
    %6246 = vmatprep.subr.mxu0 0.0
    %6247 = vmatpush1.msra.mxu0 0.0
    %6248 = vmatprep.subr.mxu0 0.0
    %6249 = vmatpush1.msra.mxu0 0.0
    %6250 = vmatprep.subr.mxu0 0.0
    %6251 = vmatpush1.msra.mxu0 0.0
    %6252 = vmatprep.subr.mxu0 0.0
    %6253 = vmatpush1.msra.mxu0 0.0
    %6254 = vmatprep.subr.mxu0 0.0
    %6255 = vmatpush1.msra.mxu0 0.0
    %6256 = vmatprep.subr.mxu0 0.0
    %6257 = vmatpush1.msra.mxu0 0.0
    %6258 = vmatprep.subr.mxu0 0.0
    %6259 = vmatpush1.msra.mxu0 0.0
    %6260 = vmatprep.subr.mxu0 0.0
    %6261 = vmatpush1.msra.mxu0 0.0
    %6262 = vmatprep.subr.mxu0 0.0
    %6263 = vmatpush1.msra.mxu0 0.0
    %6264 = vmatprep.subr.mxu0 0.0
    %6265 = vmatpush1.msra.mxu0 0.0
    %6266 = vmatprep.subr.mxu0 0.0
    %6267 = vmatpush1.msra.mxu0 0.0
    %6268 = vmatprep.subr.mxu0 0.0
    %6269 = vmatpush1.msra.mxu0 0.0
    %6270 = vmatprep.subr.mxu0 0.0
    %6271 = vmatpush1.msra.mxu0 0.0
    %6272 = vmatprep.subr.mxu0 0.0
    %6273 = vmatpush1.msra.mxu0 0.0
    %6274 = vmatprep.subr.mxu0 0.0
    %6275 = vmatpush1.msra.mxu0 0.0
    %6276 = vmatprep.subr.mxu0 0.0
    %6277 = vmatpush1.msra.mxu0 0.0
    %6278 = vmatprep.subr.mxu0 0.0
    %6279 = vmatpush1.msra.mxu0 0.0
    %6280 = vmatprep.subr.mxu0 0.0
    %6281 = vmatpush1.msra.mxu0 0.0
    %6282 = vmatprep.subr.mxu0 0.0
    %6283 = vmatpush1.msra.mxu0 0.0
    %6284 = vmatprep.subr.mxu0 0.0
    %6285 = vmatpush1.msra.mxu0 0.0
    %6286 = vmatprep.subr.mxu0 0.0
    %6287 = vmatpush1.msra.mxu0 0.0
    %6288 = vmatprep.subr.mxu0 0.0
    %6289 = vmatpush1.msra.mxu0 0.0
    %6290 = vmatprep.subr.mxu0 0.0
    %6291 = vmatpush1.msra.mxu0 0.0
    %6292 = vmatprep.subr.mxu0 0.0
    %6293 = vmatpush1.msra.mxu0 0.0
    %6294 = vmatprep.subr.mxu0 0.0
    %6295 = vmatpush1.msra.mxu0 0.0
    %6296 = vmatprep.mubr.f32.mxu0 0.0
    %6297 = vmatmul.mubr.f32.gmra.mrb[0].mxu0 %v6230
    %v6298 = vpop.f32.mrb[0].mxu0
    %v6299 = vadd.f32 %v5808, %v6298
    %v6300 = vpop.f32.mrb[0].mxu0
    %6301 = vdwg.mxu0
    %v6302 = vxor.u32 %v6299, 2147483648
    %v6303 = vmul.f32 %v6302, 1.442695
    %v6304 = vpow.pop %v6303
    %v6305 = vadd.f32 %v6304, 1.0
    %v6306 = vrcp.pop %v6305
    %v6307 = vmul.f32 1.0, %v6306
    %v6308 = vtanh.pop %v6299
    %v6309 = vmul.f32 %v6307, %v6214
    %6311 = vrot.lane.b32.xlu0 %v6308, 32
    %v6312 = vpop.permute.xlu0 %6311
    %v6314 = vmul.f32 %v6307, %v6312
    %6316 = vrot.lane.b32.xlu0 %v6314, 32
    %v6317 = vpop.permute.xlu0 %6316
    %v6319 = vadd.f32 %v6309, %v6317
    %v6320 = vtanh.pop %v6319
    %6322 = vrot.lane.b32.xlu0 %v6320, 32
    %v6323 = vpop.permute.xlu0 %6322
    %v6325 = vmul.f32 %v6307, %v6323
    %6326 = vrot.lane.b32.xlu0 %v5582, 96
    %v6327 = vpop.permute.xlu0 %6326
    %6330 = vrot.lane.b32.xlu0 %v6325, 80
    %v6331 = vpop.permute.xlu0 %6330
    %v6333 = vsel %vm1703, %v6327, %v6331
    %v6335 = vsel %vm889, %v6333, 0
    %6337 = vmatprep.subr.mxu0 0.0
    %6338 = vmatpush1.msra.mxu0 %v5794
    %6339 = vmatprep.subr.mxu0 0.0
    %6340 = vmatpush1.msra.mxu0 %v5795
    %6341 = vmatprep.subr.mxu0 0.0
    %6342 = vmatpush1.msra.mxu0 %v5796
    %6343 = vmatprep.subr.mxu0 0.0
    %6344 = vmatpush1.msra.mxu0 %v5797
    %6345 = vmatprep.subr.mxu0 0.0
    %6346 = vmatpush1.msra.mxu0 %v5798
    %6347 = vmatprep.subr.mxu0 0.0
    %6348 = vmatpush1.msra.mxu0 %v5799
    %6349 = vmatprep.subr.mxu0 0.0
    %6350 = vmatpush1.msra.mxu0 0.0
    %6351 = vmatprep.subr.mxu0 0.0
    %6352 = vmatpush1.msra.mxu0 0.0
    %6353 = vmatprep.subr.mxu0 0.0
    %6354 = vmatpush1.msra.mxu0 0.0
    %6355 = vmatprep.subr.mxu0 0.0
    %6356 = vmatpush1.msra.mxu0 0.0
    %6357 = vmatprep.subr.mxu0 0.0
    %6358 = vmatpush1.msra.mxu0 0.0
    %6359 = vmatprep.subr.mxu0 0.0
    %6360 = vmatpush1.msra.mxu0 0.0
    %6361 = vmatprep.subr.mxu0 0.0
    %6362 = vmatpush1.msra.mxu0 0.0
    %6363 = vmatprep.subr.mxu0 0.0
    %6364 = vmatpush1.msra.mxu0 0.0
    %6365 = vmatprep.subr.mxu0 0.0
    %6366 = vmatpush1.msra.mxu0 0.0
    %6367 = vmatprep.subr.mxu0 0.0
    %6368 = vmatpush1.msra.mxu0 0.0
    %6369 = vmatprep.subr.mxu0 0.0
    %6370 = vmatpush1.msra.mxu0 0.0
    %6371 = vmatprep.subr.mxu0 0.0
    %6372 = vmatpush1.msra.mxu0 0.0
    %6373 = vmatprep.subr.mxu0 0.0
    %6374 = vmatpush1.msra.mxu0 0.0
    %6375 = vmatprep.subr.mxu0 0.0
    %6376 = vmatpush1.msra.mxu0 0.0
    %6377 = vmatprep.subr.mxu0 0.0
    %6378 = vmatpush1.msra.mxu0 0.0
    %6379 = vmatprep.subr.mxu0 0.0
    %6380 = vmatpush1.msra.mxu0 0.0
    %6381 = vmatprep.subr.mxu0 0.0
    %6382 = vmatpush1.msra.mxu0 0.0
    %6383 = vmatprep.subr.mxu0 0.0
    %6384 = vmatpush1.msra.mxu0 0.0
    %6385 = vmatprep.subr.mxu0 0.0
    %6386 = vmatpush1.msra.mxu0 0.0
    %6387 = vmatprep.subr.mxu0 0.0
    %6388 = vmatpush1.msra.mxu0 0.0
    %6389 = vmatprep.subr.mxu0 0.0
    %6390 = vmatpush1.msra.mxu0 0.0
    %6391 = vmatprep.subr.mxu0 0.0
    %6392 = vmatpush1.msra.mxu0 0.0
    %6393 = vmatprep.subr.mxu0 0.0
    %6394 = vmatpush1.msra.mxu0 0.0
    %6395 = vmatprep.subr.mxu0 0.0
    %6396 = vmatpush1.msra.mxu0 0.0
    %6397 = vmatprep.subr.mxu0 0.0
    %6398 = vmatpush1.msra.mxu0 0.0
    %6399 = vmatprep.subr.mxu0 0.0
    %6400 = vmatpush1.msra.mxu0 0.0
    %6401 = vmatprep.mubr.f32.mxu0 0.0
    %6402 = vmatmul.mubr.f32.gmra.mrb[0].mxu0 %v6335
    %v6403 = vpop.f32.mrb[0].mxu0
    %v6404 = vadd.f32 %v5808, %v6403
    %v6405 = vpop.f32.mrb[0].mxu0
    %6406 = vdwg.mxu0
    %v6407 = vxor.u32 %v6404, 2147483648
    %v6408 = vmul.f32 %v6407, 1.442695
    %v6409 = vpow.pop %v6408
    %v6410 = vadd.f32 %v6409, 1.0
    %v6411 = vrcp.pop %v6410
    %v6412 = vmul.f32 1.0, %v6411
    %v6413 = vtanh.pop %v6404
    %v6414 = vmul.f32 %v6412, %v6319
    %6416 = vrot.lane.b32.xlu0 %v6413, 32
    %v6417 = vpop.permute.xlu0 %6416
    %v6419 = vmul.f32 %v6412, %v6417
    %6421 = vrot.lane.b32.xlu0 %v6419, 32
    %v6422 = vpop.permute.xlu0 %6421
    %v6424 = vadd.f32 %v6414, %v6422
    %v6425 = vtanh.pop %v6424
    %6427 = vrot.lane.b32.xlu0 %v6425, 32
    %v6428 = vpop.permute.xlu0 %6427
    %v6430 = vmul.f32 %v6412, %v6428
    %6431 = vrot.lane.b32.xlu0 %v5687, 96
    %v6432 = vpop.permute.xlu0 %6431
    %6435 = vrot.lane.b32.xlu0 %v6430, 80
    %v6436 = vpop.permute.xlu0 %6435
    %v6438 = vsel %vm1703, %v6432, %v6436
    %v6440 = vsel %vm889, %v6438, 0
    %6442 = vmatprep.subr.mxu0 0.0
    %6443 = vmatpush1.msra.mxu0 %v5794
    %6444 = vmatprep.subr.mxu0 0.0
    %6445 = vmatpush1.msra.mxu0 %v5795
    %6446 = vmatprep.subr.mxu0 0.0
    %6447 = vmatpush1.msra.mxu0 %v5796
    %6448 = vmatprep.subr.mxu0 0.0
    %6449 = vmatpush1.msra.mxu0 %v5797
    %6450 = vmatprep.subr.mxu0 0.0
    %6451 = vmatpush1.msra.mxu0 %v5798
    %6452 = vmatprep.subr.mxu0 0.0
    %6453 = vmatpush1.msra.mxu0 %v5799
    %6454 = vmatprep.subr.mxu0 0.0
    %6455 = vmatpush1.msra.mxu0 0.0
    %6456 = vmatprep.subr.mxu0 0.0
    %6457 = vmatpush1.msra.mxu0 0.0
    %6458 = vmatprep.subr.mxu0 0.0
    %6459 = vmatpush1.msra.mxu0 0.0
    %6460 = vmatprep.subr.mxu0 0.0
    %6461 = vmatpush1.msra.mxu0 0.0
    %6462 = vmatprep.subr.mxu0 0.0
    %6463 = vmatpush1.msra.mxu0 0.0
    %6464 = vmatprep.subr.mxu0 0.0
    %6465 = vmatpush1.msra.mxu0 0.0
    %6466 = vmatprep.subr.mxu0 0.0
    %6467 = vmatpush1.msra.mxu0 0.0
    %6468 = vmatprep.subr.mxu0 0.0
    %6469 = vmatpush1.msra.mxu0 0.0
    %6470 = vmatprep.subr.mxu0 0.0
    %6471 = vmatpush1.msra.mxu0 0.0
    %6472 = vmatprep.subr.mxu0 0.0
    %6473 = vmatpush1.msra.mxu0 0.0
    %6474 = vmatprep.subr.mxu0 0.0
    %6475 = vmatpush1.msra.mxu0 0.0
    %6476 = vmatprep.subr.mxu0 0.0
    %6477 = vmatpush1.msra.mxu0 0.0
    %6478 = vmatprep.subr.mxu0 0.0
    %6479 = vmatpush1.msra.mxu0 0.0
    %6480 = vmatprep.subr.mxu0 0.0
    %6481 = vmatpush1.msra.mxu0 0.0
    %6482 = vmatprep.subr.mxu0 0.0
    %6483 = vmatpush1.msra.mxu0 0.0
    %6484 = vmatprep.subr.mxu0 0.0
    %6485 = vmatpush1.msra.mxu0 0.0
    %6486 = vmatprep.subr.mxu0 0.0
    %6487 = vmatpush1.msra.mxu0 0.0
    %6488 = vmatprep.subr.mxu0 0.0
    %6489 = vmatpush1.msra.mxu0 0.0
    %6490 = vmatprep.subr.mxu0 0.0
    %6491 = vmatpush1.msra.mxu0 0.0
    %6492 = vmatprep.subr.mxu0 0.0
    %6493 = vmatpush1.msra.mxu0 0.0
    %6494 = vmatprep.subr.mxu0 0.0
    %6495 = vmatpush1.msra.mxu0 0.0
    %6496 = vmatprep.subr.mxu0 0.0
    %6497 = vmatpush1.msra.mxu0 0.0
    %6498 = vmatprep.subr.mxu0 0.0
    %6499 = vmatpush1.msra.mxu0 0.0
    %6500 = vmatprep.subr.mxu0 0.0
    %6501 = vmatpush1.msra.mxu0 0.0
    %6502 = vmatprep.subr.mxu0 0.0
    %6503 = vmatpush1.msra.mxu0 0.0
    %6504 = vmatprep.subr.mxu0 0.0
    %6505 = vmatpush1.msra.mxu0 0.0
    %6506 = vmatprep.mubr.f32.mxu0 0.0
    %6507 = vmatmul.mubr.f32.gmra.mrb[0].mxu0 %v6440
    %v6508 = vpop.f32.mrb[0].mxu0
    %v6509 = vadd.f32 %v5808, %v6508
    %v6510 = vpop.f32.mrb[0].mxu0
    %6511 = vdwg.mxu0
    %v6512 = vxor.u32 %v6509, 2147483648
    %v6513 = vmul.f32 %v6512, 1.442695
    %v6514 = vpow.pop %v6513
    %v6515 = vadd.f32 %v6514, 1.0
    %v6516 = vrcp.pop %v6515
    %v6517 = vmul.f32 1.0, %v6516
    %v6518 = vtanh.pop %v6509
    %v6519 = vmul.f32 %v6517, %v6424
    %6521 = vrot.lane.b32.xlu0 %v6518, 32
    %v6522 = vpop.permute.xlu0 %6521
    %v6524 = vmul.f32 %v6517, %v6522
    %6526 = vrot.lane.b32.xlu0 %v6524, 32
    %v6527 = vpop.permute.xlu0 %6526
    %v6529 = vadd.f32 %v6519, %v6527
    %v6530 = vtanh.pop %v6529
    %6532 = vrot.lane.b32.xlu0 %v6530, 32
    %v6533 = vpop.permute.xlu0 %6532
    %v6535 = vmul.f32 %v6517, %v6533
    %6537 = vrot.lane.b32.xlu0 %v5793, 96
    %v6538 = vpop.permute.xlu0 %6537
    %6541 = vrot.lane.b32.xlu0 %v6535, 80
    %v6542 = vpop.permute.xlu0 %6541
    %v6544 = vsel %vm1703, %v6538, %v6542
    %v6546 = vsel %vm889, %v6544, 0
    %6548 = vmatprep.subr.mxu0 0.0
    %6549 = vmatpush1.msra.mxu0 %v5794
    %6550 = vmatprep.subr.mxu0 0.0
    %6551 = vmatpush1.msra.mxu0 %v5795
    %6552 = vmatprep.subr.mxu0 0.0
    %6553 = vmatpush1.msra.mxu0 %v5796
    %6554 = vmatprep.subr.mxu0 0.0
    %6555 = vmatpush1.msra.mxu0 %v5797
    %6556 = vmatprep.subr.mxu0 0.0
    %6557 = vmatpush1.msra.mxu0 %v5798
    %6558 = vmatprep.subr.mxu0 0.0
    %6559 = vmatpush1.msra.mxu0 %v5799
    %6560 = vmatprep.subr.mxu0 0.0
    %6561 = vmatpush1.msra.mxu0 0.0
    %6562 = vmatprep.subr.mxu0 0.0
    %6563 = vmatpush1.msra.mxu0 0.0
    %6564 = vmatprep.subr.mxu0 0.0
    %6565 = vmatpush1.msra.mxu0 0.0
    %6566 = vmatprep.subr.mxu0 0.0
    %6567 = vmatpush1.msra.mxu0 0.0
    %6568 = vmatprep.subr.mxu0 0.0
    %6569 = vmatpush1.msra.mxu0 0.0
    %6570 = vmatprep.subr.mxu0 0.0
    %6571 = vmatpush1.msra.mxu0 0.0
    %6572 = vmatprep.subr.mxu0 0.0
    %6573 = vmatpush1.msra.mxu0 0.0
    %6574 = vmatprep.subr.mxu0 0.0
    %6575 = vmatpush1.msra.mxu0 0.0
    %6576 = vmatprep.subr.mxu0 0.0
    %6577 = vmatpush1.msra.mxu0 0.0
    %6578 = vmatprep.subr.mxu0 0.0
    %6579 = vmatpush1.msra.mxu0 0.0
    %6580 = vmatprep.subr.mxu0 0.0
    %6581 = vmatpush1.msra.mxu0 0.0
    %6582 = vmatprep.subr.mxu0 0.0
    %6583 = vmatpush1.msra.mxu0 0.0
    %6584 = vmatprep.subr.mxu0 0.0
    %6585 = vmatpush1.msra.mxu0 0.0
    %6586 = vmatprep.subr.mxu0 0.0
    %6587 = vmatpush1.msra.mxu0 0.0
    %6588 = vmatprep.subr.mxu0 0.0
    %6589 = vmatpush1.msra.mxu0 0.0
    %6590 = vmatprep.subr.mxu0 0.0
    %6591 = vmatpush1.msra.mxu0 0.0
    %6592 = vmatprep.subr.mxu0 0.0
    %6593 = vmatpush1.msra.mxu0 0.0
    %6594 = vmatprep.subr.mxu0 0.0
    %6595 = vmatpush1.msra.mxu0 0.0
    %6596 = vmatprep.subr.mxu0 0.0
    %6597 = vmatpush1.msra.mxu0 0.0
    %6598 = vmatprep.subr.mxu0 0.0
    %6599 = vmatpush1.msra.mxu0 0.0
    %6600 = vmatprep.subr.mxu0 0.0
    %6601 = vmatpush1.msra.mxu0 0.0
    %6602 = vmatprep.subr.mxu0 0.0
    %6603 = vmatpush1.msra.mxu0 0.0
    %6604 = vmatprep.subr.mxu0 0.0
    %6605 = vmatpush1.msra.mxu0 0.0
    %6606 = vmatprep.subr.mxu0 0.0
    %6607 = vmatpush1.msra.mxu0 0.0
    %6608 = vmatprep.subr.mxu0 0.0
    %6609 = vmatpush1.msra.mxu0 0.0
    %6610 = vmatprep.subr.mxu0 0.0
    %6611 = vmatpush1.msra.mxu0 0.0
    %6612 = vmatprep.mubr.f32.mxu0 0.0
    %6613 = vmatmul.mubr.f32.gmra.mrb[0].mxu0 %v6546
    %v6614 = vpop.f32.mrb[0].mxu0
    %v6615 = vadd.f32 %v5808, %v6614
    %v6616 = vpop.f32.mrb[0].mxu0
    %6617 = vdwg.mxu0
    %v6618 = vxor.u32 %v6615, 2147483648
    %v6619 = vmul.f32 %v6618, 1.442695
    %v6620 = vpow.pop %v6619
    %v6621 = vadd.f32 %v6620, 1.0
    %v6622 = vrcp.pop %v6621
    %v6623 = vmul.f32 1.0, %v6622
    %v6624 = vtanh.pop %v6615
    %v6625 = vmul.f32 %v6623, %v6529
    %6627 = vrot.lane.b32.xlu0 %v6624, 32
    %v6628 = vpop.permute.xlu0 %6627
    %v6630 = vmul.f32 %v6623, %v6628
    %6632 = vrot.lane.b32.xlu0 %v6630, 32
    %v6633 = vpop.permute.xlu0 %6632
    %v6635 = vadd.f32 %v6625, %v6633
    %v6636 = vtanh.pop %v6635
    %6638 = vrot.lane.b32.xlu0 %v6636, 32
    %v6639 = vpop.permute.xlu0 %6638
    %v6641 = vmul.f32 %v6623, %v6639
    %v6642 = vld [vmem:[#allocation2 + $0x120] sm:$0xff]
    %v6643 = vld [vmem:[#allocation2 + $0x128] sm:$0xff]
    %v6644 = vld [vmem:[#allocation2 + $0x130] sm:$0xff]
    %v6645 = vld [vmem:[#allocation2 + $0x138] sm:$0xff]
    %v6646 = vld [vmem:[#allocation2 + $0x140] sm:$0xff]
    %v6647 = vld [vmem:[#allocation2 + $0x148] sm:$0xff]
    %v6648 = vld [vmem:[#allocation2 + $0x150] sm:$0xff]
    %v6649 = vld [vmem:[#allocation2 + $0x158] sm:$0xff]
    %v6650 = vld [vmem:[%s3 + $0x8] sm:$0x1]
    %6651 = vrot.lane.b32.xlu0 %v5905, 64
    %v6652 = vpop.permute.xlu0 %6651
    %v6654 = vsel %vm44, %v6652, 0.0
    %v6655 = vlaneseq
    %v6656 = vshrl.u32 %v6655, 7
    %v6657 = vsub.s32 0, %v6656
    %v6658 = vrot.slane %v6650, %v6657
    %v6660 = vsel %vm50, %v6654, 0
    %6662 = vmatprep.subr.mxu0 0.0
    %6663 = vmatpush1.msra.mxu0 %v6642
    %6664 = vmatprep.subr.mxu0 0.0
    %6665 = vmatpush1.msra.mxu0 %v6643
    %6666 = vmatprep.subr.mxu0 0.0
    %6667 = vmatpush1.msra.mxu0 %v6644
    %6668 = vmatprep.subr.mxu0 0.0
    %6669 = vmatpush1.msra.mxu0 %v6645
    %6670 = vmatprep.subr.mxu0 0.0
    %6671 = vmatpush1.msra.mxu0 %v6646
    %6672 = vmatprep.subr.mxu0 0.0
    %6673 = vmatpush1.msra.mxu0 %v6647
    %6674 = vmatprep.subr.mxu0 0.0
    %6675 = vmatpush1.msra.mxu0 %v6648
    %6676 = vmatprep.subr.mxu0 0.0
    %6677 = vmatpush1.msra.mxu0 %v6649
    %6678 = vmatprep.subr.mxu0 0.0
    %6679 = vmatpush1.msra.mxu0 0.0
    %6680 = vmatprep.subr.mxu0 0.0
    %6681 = vmatpush1.msra.mxu0 0.0
    %6682 = vmatprep.subr.mxu0 0.0
    %6683 = vmatpush1.msra.mxu0 0.0
    %6684 = vmatprep.subr.mxu0 0.0
    %6685 = vmatpush1.msra.mxu0 0.0
    %6686 = vmatprep.subr.mxu0 0.0
    %6687 = vmatpush1.msra.mxu0 0.0
    %6688 = vmatprep.subr.mxu0 0.0
    %6689 = vmatpush1.msra.mxu0 0.0
    %6690 = vmatprep.subr.mxu0 0.0
    %6691 = vmatpush1.msra.mxu0 0.0
    %6692 = vmatprep.subr.mxu0 0.0
    %6693 = vmatpush1.msra.mxu0 0.0
    %6694 = vmatprep.subr.mxu0 0.0
    %6695 = vmatpush1.msra.mxu0 0.0
    %6696 = vmatprep.subr.mxu0 0.0
    %6697 = vmatpush1.msra.mxu0 0.0
    %6698 = vmatprep.subr.mxu0 0.0
    %6699 = vmatpush1.msra.mxu0 0.0
    %6700 = vmatprep.subr.mxu0 0.0
    %6701 = vmatpush1.msra.mxu0 0.0
    %6702 = vmatprep.subr.mxu0 0.0
    %6703 = vmatpush1.msra.mxu0 0.0
    %6704 = vmatprep.subr.mxu0 0.0
    %6705 = vmatpush1.msra.mxu0 0.0
    %6706 = vmatprep.subr.mxu0 0.0
    %6707 = vmatpush1.msra.mxu0 0.0
    %6708 = vmatprep.subr.mxu0 0.0
    %6709 = vmatpush1.msra.mxu0 0.0
    %6710 = vmatprep.subr.mxu0 0.0
    %6711 = vmatpush1.msra.mxu0 0.0
    %6712 = vmatprep.subr.mxu0 0.0
    %6713 = vmatpush1.msra.mxu0 0.0
    %6714 = vmatprep.subr.mxu0 0.0
    %6715 = vmatpush1.msra.mxu0 0.0
    %6716 = vmatprep.subr.mxu0 0.0
    %6717 = vmatpush1.msra.mxu0 0.0
    %6718 = vmatprep.subr.mxu0 0.0
    %6719 = vmatpush1.msra.mxu0 0.0
    %6720 = vmatprep.subr.mxu0 0.0
    %6721 = vmatpush1.msra.mxu0 0.0
    %6722 = vmatprep.subr.mxu0 0.0
    %6723 = vmatpush1.msra.mxu0 0.0
    %6724 = vmatprep.subr.mxu0 0.0
    %6725 = vmatpush1.msra.mxu0 0.0
    %6726 = vmatprep.mubr.f32.mxu0 0.0
    %6727 = vmatmul.mubr.f32.gmra.mrb[0].mxu0 %v6660
    %v6728 = vpop.f32.mrb[0].mxu0
    %v6729 = vadd.f32 %v6658, %v6728
    %v6730 = vpop.f32.mrb[0].mxu0
    %6731 = vdwg.mxu0
    %v6732 = vxor.u32 %v6729, 2147483648
    %v6733 = vmul.f32 %v6732, 1.442695
    %v6734 = vpow.pop %v6733
    %v6735 = vadd.f32 %v6734, 1.0
    %v6736 = vrcp.pop %v6735
    %v6737 = vmul.f32 1.0, %v6736
    %v6738 = vtanh.pop %v6729
    %v6739 = vmul.f32 %v6737, 0.0
    %6741 = vrot.lane.b32.xlu0 %v6738, 32
    %v6742 = vpop.permute.xlu0 %6741
    %v6744 = vmul.f32 %v6737, %v6742
    %6746 = vrot.lane.b32.xlu0 %v6744, 32
    %v6747 = vpop.permute.xlu0 %6746
    %v6749 = vadd.f32 %v6739, %v6747
    %v6750 = vtanh.pop %v6749
    %6752 = vrot.lane.b32.xlu0 %v6750, 32
    %v6753 = vpop.permute.xlu0 %6752
    %v6755 = vmul.f32 %v6737, %v6753
    %6756 = vrot.lane.b32.xlu0 %v6010, 64
    %v6757 = vpop.permute.xlu0 %6756
    %6760 = vrot.lane.b32.xlu0 %v6755, 96
    %v6761 = vpop.permute.xlu0 %6760
    %v6763 = vsel %vm44, %v6757, %v6761
    %v6765 = vsel %vm50, %v6763, 0
    %6767 = vmatprep.subr.mxu0 0.0
    %6768 = vmatpush1.msra.mxu0 %v6642
    %6769 = vmatprep.subr.mxu0 0.0
    %6770 = vmatpush1.msra.mxu0 %v6643
    %6771 = vmatprep.subr.mxu0 0.0
    %6772 = vmatpush1.msra.mxu0 %v6644
    %6773 = vmatprep.subr.mxu0 0.0
    %6774 = vmatpush1.msra.mxu0 %v6645
    %6775 = vmatprep.subr.mxu0 0.0
    %6776 = vmatpush1.msra.mxu0 %v6646
    %6777 = vmatprep.subr.mxu0 0.0
    %6778 = vmatpush1.msra.mxu0 %v6647
    %6779 = vmatprep.subr.mxu0 0.0
    %6780 = vmatpush1.msra.mxu0 %v6648
    %6781 = vmatprep.subr.mxu0 0.0
    %6782 = vmatpush1.msra.mxu0 %v6649
    %6783 = vmatprep.subr.mxu0 0.0
    %6784 = vmatpush1.msra.mxu0 0.0
    %6785 = vmatprep.subr.mxu0 0.0
    %6786 = vmatpush1.msra.mxu0 0.0
    %6787 = vmatprep.subr.mxu0 0.0
    %6788 = vmatpush1.msra.mxu0 0.0
    %6789 = vmatprep.subr.mxu0 0.0
    %6790 = vmatpush1.msra.mxu0 0.0
    %6791 = vmatprep.subr.mxu0 0.0
    %6792 = vmatpush1.msra.mxu0 0.0
    %6793 = vmatprep.subr.mxu0 0.0
    %6794 = vmatpush1.msra.mxu0 0.0
    %6795 = vmatprep.subr.mxu0 0.0
    %6796 = vmatpush1.msra.mxu0 0.0
    %6797 = vmatprep.subr.mxu0 0.0
    %6798 = vmatpush1.msra.mxu0 0.0
    %6799 = vmatprep.subr.mxu0 0.0
    %6800 = vmatpush1.msra.mxu0 0.0
    %6801 = vmatprep.subr.mxu0 0.0
    %6802 = vmatpush1.msra.mxu0 0.0
    %6803 = vmatprep.subr.mxu0 0.0
    %6804 = vmatpush1.msra.mxu0 0.0
    %6805 = vmatprep.subr.mxu0 0.0
    %6806 = vmatpush1.msra.mxu0 0.0
    %6807 = vmatprep.subr.mxu0 0.0
    %6808 = vmatpush1.msra.mxu0 0.0
    %6809 = vmatprep.subr.mxu0 0.0
    %6810 = vmatpush1.msra.mxu0 0.0
    %6811 = vmatprep.subr.mxu0 0.0
    %6812 = vmatpush1.msra.mxu0 0.0
    %6813 = vmatprep.subr.mxu0 0.0
    %6814 = vmatpush1.msra.mxu0 0.0
    %6815 = vmatprep.subr.mxu0 0.0
    %6816 = vmatpush1.msra.mxu0 0.0
    %6817 = vmatprep.subr.mxu0 0.0
    %6818 = vmatpush1.msra.mxu0 0.0
    %6819 = vmatprep.subr.mxu0 0.0
    %6820 = vmatpush1.msra.mxu0 0.0
    %6821 = vmatprep.subr.mxu0 0.0
    %6822 = vmatpush1.msra.mxu0 0.0
    %6823 = vmatprep.subr.mxu0 0.0
    %6824 = vmatpush1.msra.mxu0 0.0
    %6825 = vmatprep.subr.mxu0 0.0
    %6826 = vmatpush1.msra.mxu0 0.0
    %6827 = vmatprep.subr.mxu0 0.0
    %6828 = vmatpush1.msra.mxu0 0.0
    %6829 = vmatprep.subr.mxu0 0.0
    %6830 = vmatpush1.msra.mxu0 0.0
    %6831 = vmatprep.mubr.f32.mxu0 0.0
    %6832 = vmatmul.mubr.f32.gmra.mrb[0].mxu0 %v6765
    %v6833 = vpop.f32.mrb[0].mxu0
    %v6834 = vadd.f32 %v6658, %v6833
    %v6835 = vpop.f32.mrb[0].mxu0
    %6836 = vdwg.mxu0
    %v6837 = vxor.u32 %v6834, 2147483648
    %v6838 = vmul.f32 %v6837, 1.442695
    %v6839 = vpow.pop %v6838
    %v6840 = vadd.f32 %v6839, 1.0
    %v6841 = vrcp.pop %v6840
    %v6842 = vmul.f32 1.0, %v6841
    %v6843 = vtanh.pop %v6834
    %v6844 = vmul.f32 %v6842, %v6749
    %6846 = vrot.lane.b32.xlu0 %v6843, 32
    %v6847 = vpop.permute.xlu0 %6846
    %v6849 = vmul.f32 %v6842, %v6847
    %6851 = vrot.lane.b32.xlu0 %v6849, 32
    %v6852 = vpop.permute.xlu0 %6851
    %v6854 = vadd.f32 %v6844, %v6852
    %v6855 = vtanh.pop %v6854
    %6857 = vrot.lane.b32.xlu0 %v6855, 32
    %v6858 = vpop.permute.xlu0 %6857
    %v6860 = vmul.f32 %v6842, %v6858
    %6861 = vrot.lane.b32.xlu0 %v6115, 64
    %v6862 = vpop.permute.xlu0 %6861
    %6865 = vrot.lane.b32.xlu0 %v6860, 96
    %v6866 = vpop.permute.xlu0 %6865
    %v6868 = vsel %vm44, %v6862, %v6866
    %v6870 = vsel %vm50, %v6868, 0
    %6872 = vmatprep.subr.mxu0 0.0
    %6873 = vmatpush1.msra.mxu0 %v6642
    %6874 = vmatprep.subr.mxu0 0.0
    %6875 = vmatpush1.msra.mxu0 %v6643
    %6876 = vmatprep.subr.mxu0 0.0
    %6877 = vmatpush1.msra.mxu0 %v6644
    %6878 = vmatprep.subr.mxu0 0.0
    %6879 = vmatpush1.msra.mxu0 %v6645
    %6880 = vmatprep.subr.mxu0 0.0
    %6881 = vmatpush1.msra.mxu0 %v6646
    %6882 = vmatprep.subr.mxu0 0.0
    %6883 = vmatpush1.msra.mxu0 %v6647
    %6884 = vmatprep.subr.mxu0 0.0
    %6885 = vmatpush1.msra.mxu0 %v6648
    %6886 = vmatprep.subr.mxu0 0.0
    %6887 = vmatpush1.msra.mxu0 %v6649
    %6888 = vmatprep.subr.mxu0 0.0
    %6889 = vmatpush1.msra.mxu0 0.0
    %6890 = vmatprep.subr.mxu0 0.0
    %6891 = vmatpush1.msra.mxu0 0.0
    %6892 = vmatprep.subr.mxu0 0.0
    %6893 = vmatpush1.msra.mxu0 0.0
    %6894 = vmatprep.subr.mxu0 0.0
    %6895 = vmatpush1.msra.mxu0 0.0
    %6896 = vmatprep.subr.mxu0 0.0
    %6897 = vmatpush1.msra.mxu0 0.0
    %6898 = vmatprep.subr.mxu0 0.0
    %6899 = vmatpush1.msra.mxu0 0.0
    %6900 = vmatprep.subr.mxu0 0.0
    %6901 = vmatpush1.msra.mxu0 0.0
    %6902 = vmatprep.subr.mxu0 0.0
    %6903 = vmatpush1.msra.mxu0 0.0
    %6904 = vmatprep.subr.mxu0 0.0
    %6905 = vmatpush1.msra.mxu0 0.0
    %6906 = vmatprep.subr.mxu0 0.0
    %6907 = vmatpush1.msra.mxu0 0.0
    %6908 = vmatprep.subr.mxu0 0.0
    %6909 = vmatpush1.msra.mxu0 0.0
    %6910 = vmatprep.subr.mxu0 0.0
    %6911 = vmatpush1.msra.mxu0 0.0
    %6912 = vmatprep.subr.mxu0 0.0
    %6913 = vmatpush1.msra.mxu0 0.0
    %6914 = vmatprep.subr.mxu0 0.0
    %6915 = vmatpush1.msra.mxu0 0.0
    %6916 = vmatprep.subr.mxu0 0.0
    %6917 = vmatpush1.msra.mxu0 0.0
    %6918 = vmatprep.subr.mxu0 0.0
    %6919 = vmatpush1.msra.mxu0 0.0
    %6920 = vmatprep.subr.mxu0 0.0
    %6921 = vmatpush1.msra.mxu0 0.0
    %6922 = vmatprep.subr.mxu0 0.0
    %6923 = vmatpush1.msra.mxu0 0.0
    %6924 = vmatprep.subr.mxu0 0.0
    %6925 = vmatpush1.msra.mxu0 0.0
    %6926 = vmatprep.subr.mxu0 0.0
    %6927 = vmatpush1.msra.mxu0 0.0
    %6928 = vmatprep.subr.mxu0 0.0
    %6929 = vmatpush1.msra.mxu0 0.0
    %6930 = vmatprep.subr.mxu0 0.0
    %6931 = vmatpush1.msra.mxu0 0.0
    %6932 = vmatprep.subr.mxu0 0.0
    %6933 = vmatpush1.msra.mxu0 0.0
    %6934 = vmatprep.subr.mxu0 0.0
    %6935 = vmatpush1.msra.mxu0 0.0
    %6936 = vmatprep.mubr.f32.mxu0 0.0
    %6937 = vmatmul.mubr.f32.gmra.mrb[0].mxu0 %v6870
    %v6938 = vpop.f32.mrb[0].mxu0
    %v6939 = vadd.f32 %v6658, %v6938
    %v6940 = vpop.f32.mrb[0].mxu0
    %6941 = vdwg.mxu0
    %v6942 = vxor.u32 %v6939, 2147483648
    %v6943 = vmul.f32 %v6942, 1.442695
    %v6944 = vpow.pop %v6943
    %v6945 = vadd.f32 %v6944, 1.0
    %v6946 = vrcp.pop %v6945
    %v6947 = vmul.f32 1.0, %v6946
    %v6948 = vtanh.pop %v6939
    %v6949 = vmul.f32 %v6947, %v6854
    %6951 = vrot.lane.b32.xlu0 %v6948, 32
    %v6952 = vpop.permute.xlu0 %6951
    %v6954 = vmul.f32 %v6947, %v6952
    %6956 = vrot.lane.b32.xlu0 %v6954, 32
    %v6957 = vpop.permute.xlu0 %6956
    %v6959 = vadd.f32 %v6949, %v6957
    %v6960 = vtanh.pop %v6959
    %6962 = vrot.lane.b32.xlu0 %v6960, 32
    %v6963 = vpop.permute.xlu0 %6962
    %v6965 = vmul.f32 %v6947, %v6963
    %6966 = vrot.lane.b32.xlu0 %v6220, 64
    %v6967 = vpop.permute.xlu0 %6966
    %6970 = vrot.lane.b32.xlu0 %v6965, 96
    %v6971 = vpop.permute.xlu0 %6970
    %v6973 = vsel %vm44, %v6967, %v6971
    %v6975 = vsel %vm50, %v6973, 0
    %6977 = vmatprep.subr.mxu0 0.0
    %6978 = vmatpush1.msra.mxu0 %v6642
    %6979 = vmatprep.subr.mxu0 0.0
    %6980 = vmatpush1.msra.mxu0 %v6643
    %6981 = vmatprep.subr.mxu0 0.0
    %6982 = vmatpush1.msra.mxu0 %v6644
    %6983 = vmatprep.subr.mxu0 0.0
    %6984 = vmatpush1.msra.mxu0 %v6645
    %6985 = vmatprep.subr.mxu0 0.0
    %6986 = vmatpush1.msra.mxu0 %v6646
    %6987 = vmatprep.subr.mxu0 0.0
    %6988 = vmatpush1.msra.mxu0 %v6647
    %6989 = vmatprep.subr.mxu0 0.0
    %6990 = vmatpush1.msra.mxu0 %v6648
    %6991 = vmatprep.subr.mxu0 0.0
    %6992 = vmatpush1.msra.mxu0 %v6649
    %6993 = vmatprep.subr.mxu0 0.0
    %6994 = vmatpush1.msra.mxu0 0.0
    %6995 = vmatprep.subr.mxu0 0.0
    %6996 = vmatpush1.msra.mxu0 0.0
    %6997 = vmatprep.subr.mxu0 0.0
    %6998 = vmatpush1.msra.mxu0 0.0
    %6999 = vmatprep.subr.mxu0 0.0
    %7000 = vmatpush1.msra.mxu0 0.0
    %7001 = vmatprep.subr.mxu0 0.0
    %7002 = vmatpush1.msra.mxu0 0.0
    %7003 = vmatprep.subr.mxu0 0.0
    %7004 = vmatpush1.msra.mxu0 0.0
    %7005 = vmatprep.subr.mxu0 0.0
    %7006 = vmatpush1.msra.mxu0 0.0
    %7007 = vmatprep.subr.mxu0 0.0
    %7008 = vmatpush1.msra.mxu0 0.0
    %7009 = vmatprep.subr.mxu0 0.0
    %7010 = vmatpush1.msra.mxu0 0.0
    %7011 = vmatprep.subr.mxu0 0.0
    %7012 = vmatpush1.msra.mxu0 0.0
    %7013 = vmatprep.subr.mxu0 0.0
    %7014 = vmatpush1.msra.mxu0 0.0
    %7015 = vmatprep.subr.mxu0 0.0
    %7016 = vmatpush1.msra.mxu0 0.0
    %7017 = vmatprep.subr.mxu0 0.0
    %7018 = vmatpush1.msra.mxu0 0.0
    %7019 = vmatprep.subr.mxu0 0.0
    %7020 = vmatpush1.msra.mxu0 0.0
    %7021 = vmatprep.subr.mxu0 0.0
    %7022 = vmatpush1.msra.mxu0 0.0
    %7023 = vmatprep.subr.mxu0 0.0
    %7024 = vmatpush1.msra.mxu0 0.0
    %7025 = vmatprep.subr.mxu0 0.0
    %7026 = vmatpush1.msra.mxu0 0.0
    %7027 = vmatprep.subr.mxu0 0.0
    %7028 = vmatpush1.msra.mxu0 0.0
    %7029 = vmatprep.subr.mxu0 0.0
    %7030 = vmatpush1.msra.mxu0 0.0
    %7031 = vmatprep.subr.mxu0 0.0
    %7032 = vmatpush1.msra.mxu0 0.0
    %7033 = vmatprep.subr.mxu0 0.0
    %7034 = vmatpush1.msra.mxu0 0.0
    %7035 = vmatprep.subr.mxu0 0.0
    %7036 = vmatpush1.msra.mxu0 0.0
    %7037 = vmatprep.subr.mxu0 0.0
    %7038 = vmatpush1.msra.mxu0 0.0
    %7039 = vmatprep.subr.mxu0 0.0
    %7040 = vmatpush1.msra.mxu0 0.0
    %7041 = vmatprep.mubr.f32.mxu0 0.0
    %7042 = vmatmul.mubr.f32.gmra.mrb[0].mxu0 %v6975
    %v7043 = vpop.f32.mrb[0].mxu0
    %v7044 = vadd.f32 %v6658, %v7043
    %v7045 = vpop.f32.mrb[0].mxu0
    %7046 = vdwg.mxu0
    %v7047 = vxor.u32 %v7044, 2147483648
    %v7048 = vmul.f32 %v7047, 1.442695
    %v7049 = vpow.pop %v7048
    %v7050 = vadd.f32 %v7049, 1.0
    %v7051 = vrcp.pop %v7050
    %v7052 = vmul.f32 1.0, %v7051
    %v7053 = vtanh.pop %v7044
    %v7054 = vmul.f32 %v7052, %v6959
    %7056 = vrot.lane.b32.xlu0 %v7053, 32
    %v7057 = vpop.permute.xlu0 %7056
    %v7059 = vmul.f32 %v7052, %v7057
    %7061 = vrot.lane.b32.xlu0 %v7059, 32
    %v7062 = vpop.permute.xlu0 %7061
    %v7064 = vadd.f32 %v7054, %v7062
    %v7065 = vtanh.pop %v7064
    %7067 = vrot.lane.b32.xlu0 %v7065, 32
    %v7068 = vpop.permute.xlu0 %7067
    %v7070 = vmul.f32 %v7052, %v7068
    %7071 = vrot.lane.b32.xlu0 %v6325, 64
    %v7072 = vpop.permute.xlu0 %7071
    %7075 = vrot.lane.b32.xlu0 %v7070, 96
    %v7076 = vpop.permute.xlu0 %7075
    %v7078 = vsel %vm44, %v7072, %v7076
    %v7080 = vsel %vm50, %v7078, 0
    %7082 = vmatprep.subr.mxu0 0.0
    %7083 = vmatpush1.msra.mxu0 %v6642
    %7084 = vmatprep.subr.mxu0 0.0
    %7085 = vmatpush1.msra.mxu0 %v6643
    %7086 = vmatprep.subr.mxu0 0.0
    %7087 = vmatpush1.msra.mxu0 %v6644
    %7088 = vmatprep.subr.mxu0 0.0
    %7089 = vmatpush1.msra.mxu0 %v6645
    %7090 = vmatprep.subr.mxu0 0.0
    %7091 = vmatpush1.msra.mxu0 %v6646
    %7092 = vmatprep.subr.mxu0 0.0
    %7093 = vmatpush1.msra.mxu0 %v6647
    %7094 = vmatprep.subr.mxu0 0.0
    %7095 = vmatpush1.msra.mxu0 %v6648
    %7096 = vmatprep.subr.mxu0 0.0
    %7097 = vmatpush1.msra.mxu0 %v6649
    %7098 = vmatprep.subr.mxu0 0.0
    %7099 = vmatpush1.msra.mxu0 0.0
    %7100 = vmatprep.subr.mxu0 0.0
    %7101 = vmatpush1.msra.mxu0 0.0
    %7102 = vmatprep.subr.mxu0 0.0
    %7103 = vmatpush1.msra.mxu0 0.0
    %7104 = vmatprep.subr.mxu0 0.0
    %7105 = vmatpush1.msra.mxu0 0.0
    %7106 = vmatprep.subr.mxu0 0.0
    %7107 = vmatpush1.msra.mxu0 0.0
    %7108 = vmatprep.subr.mxu0 0.0
    %7109 = vmatpush1.msra.mxu0 0.0
    %7110 = vmatprep.subr.mxu0 0.0
    %7111 = vmatpush1.msra.mxu0 0.0
    %7112 = vmatprep.subr.mxu0 0.0
    %7113 = vmatpush1.msra.mxu0 0.0
    %7114 = vmatprep.subr.mxu0 0.0
    %7115 = vmatpush1.msra.mxu0 0.0
    %7116 = vmatprep.subr.mxu0 0.0
    %7117 = vmatpush1.msra.mxu0 0.0
    %7118 = vmatprep.subr.mxu0 0.0
    %7119 = vmatpush1.msra.mxu0 0.0
    %7120 = vmatprep.subr.mxu0 0.0
    %7121 = vmatpush1.msra.mxu0 0.0
    %7122 = vmatprep.subr.mxu0 0.0
    %7123 = vmatpush1.msra.mxu0 0.0
    %7124 = vmatprep.subr.mxu0 0.0
    %7125 = vmatpush1.msra.mxu0 0.0
    %7126 = vmatprep.subr.mxu0 0.0
    %7127 = vmatpush1.msra.mxu0 0.0
    %7128 = vmatprep.subr.mxu0 0.0
    %7129 = vmatpush1.msra.mxu0 0.0
    %7130 = vmatprep.subr.mxu0 0.0
    %7131 = vmatpush1.msra.mxu0 0.0
    %7132 = vmatprep.subr.mxu0 0.0
    %7133 = vmatpush1.msra.mxu0 0.0
    %7134 = vmatprep.subr.mxu0 0.0
    %7135 = vmatpush1.msra.mxu0 0.0
    %7136 = vmatprep.subr.mxu0 0.0
    %7137 = vmatpush1.msra.mxu0 0.0
    %7138 = vmatprep.subr.mxu0 0.0
    %7139 = vmatpush1.msra.mxu0 0.0
    %7140 = vmatprep.subr.mxu0 0.0
    %7141 = vmatpush1.msra.mxu0 0.0
    %7142 = vmatprep.subr.mxu0 0.0
    %7143 = vmatpush1.msra.mxu0 0.0
    %7144 = vmatprep.subr.mxu0 0.0
    %7145 = vmatpush1.msra.mxu0 0.0
    %7146 = vmatprep.mubr.f32.mxu0 0.0
    %7147 = vmatmul.mubr.f32.gmra.mrb[0].mxu0 %v7080
    %v7148 = vpop.f32.mrb[0].mxu0
    %v7149 = vadd.f32 %v6658, %v7148
    %v7150 = vpop.f32.mrb[0].mxu0
    %7151 = vdwg.mxu0
    %v7152 = vxor.u32 %v7149, 2147483648
    %v7153 = vmul.f32 %v7152, 1.442695
    %v7154 = vpow.pop %v7153
    %v7155 = vadd.f32 %v7154, 1.0
    %v7156 = vrcp.pop %v7155
    %v7157 = vmul.f32 1.0, %v7156
    %v7158 = vtanh.pop %v7149
    %v7159 = vmul.f32 %v7157, %v7064
    %7161 = vrot.lane.b32.xlu0 %v7158, 32
    %v7162 = vpop.permute.xlu0 %7161
    %v7164 = vmul.f32 %v7157, %v7162
    %7166 = vrot.lane.b32.xlu0 %v7164, 32
    %v7167 = vpop.permute.xlu0 %7166
    %v7169 = vadd.f32 %v7159, %v7167
    %v7170 = vtanh.pop %v7169
    %7172 = vrot.lane.b32.xlu0 %v7170, 32
    %v7173 = vpop.permute.xlu0 %7172
    %v7175 = vmul.f32 %v7157, %v7173
    %7176 = vrot.lane.b32.xlu0 %v6430, 64
    %v7177 = vpop.permute.xlu0 %7176
    %7180 = vrot.lane.b32.xlu0 %v7175, 96
    %v7181 = vpop.permute.xlu0 %7180
    %v7183 = vsel %vm44, %v7177, %v7181
    %v7185 = vsel %vm50, %v7183, 0
    %7187 = vmatprep.subr.mxu0 0.0
    %7188 = vmatpush1.msra.mxu0 %v6642
    %7189 = vmatprep.subr.mxu0 0.0
    %7190 = vmatpush1.msra.mxu0 %v6643
    %7191 = vmatprep.subr.mxu0 0.0
    %7192 = vmatpush1.msra.mxu0 %v6644
    %7193 = vmatprep.subr.mxu0 0.0
    %7194 = vmatpush1.msra.mxu0 %v6645
    %7195 = vmatprep.subr.mxu0 0.0
    %7196 = vmatpush1.msra.mxu0 %v6646
    %7197 = vmatprep.subr.mxu0 0.0
    %7198 = vmatpush1.msra.mxu0 %v6647
    %7199 = vmatprep.subr.mxu0 0.0
    %7200 = vmatpush1.msra.mxu0 %v6648
    %7201 = vmatprep.subr.mxu0 0.0
    %7202 = vmatpush1.msra.mxu0 %v6649
    %7203 = vmatprep.subr.mxu0 0.0
    %7204 = vmatpush1.msra.mxu0 0.0
    %7205 = vmatprep.subr.mxu0 0.0
    %7206 = vmatpush1.msra.mxu0 0.0
    %7207 = vmatprep.subr.mxu0 0.0
    %7208 = vmatpush1.msra.mxu0 0.0
    %7209 = vmatprep.subr.mxu0 0.0
    %7210 = vmatpush1.msra.mxu0 0.0
    %7211 = vmatprep.subr.mxu0 0.0
    %7212 = vmatpush1.msra.mxu0 0.0
    %7213 = vmatprep.subr.mxu0 0.0
    %7214 = vmatpush1.msra.mxu0 0.0
    %7215 = vmatprep.subr.mxu0 0.0
    %7216 = vmatpush1.msra.mxu0 0.0
    %7217 = vmatprep.subr.mxu0 0.0
    %7218 = vmatpush1.msra.mxu0 0.0
    %7219 = vmatprep.subr.mxu0 0.0
    %7220 = vmatpush1.msra.mxu0 0.0
    %7221 = vmatprep.subr.mxu0 0.0
    %7222 = vmatpush1.msra.mxu0 0.0
    %7223 = vmatprep.subr.mxu0 0.0
    %7224 = vmatpush1.msra.mxu0 0.0
    %7225 = vmatprep.subr.mxu0 0.0
    %7226 = vmatpush1.msra.mxu0 0.0
    %7227 = vmatprep.subr.mxu0 0.0
    %7228 = vmatpush1.msra.mxu0 0.0
    %7229 = vmatprep.subr.mxu0 0.0
    %7230 = vmatpush1.msra.mxu0 0.0
    %7231 = vmatprep.subr.mxu0 0.0
    %7232 = vmatpush1.msra.mxu0 0.0
    %7233 = vmatprep.subr.mxu0 0.0
    %7234 = vmatpush1.msra.mxu0 0.0
    %7235 = vmatprep.subr.mxu0 0.0
    %7236 = vmatpush1.msra.mxu0 0.0
    %7237 = vmatprep.subr.mxu0 0.0
    %7238 = vmatpush1.msra.mxu0 0.0
    %7239 = vmatprep.subr.mxu0 0.0
    %7240 = vmatpush1.msra.mxu0 0.0
    %7241 = vmatprep.subr.mxu0 0.0
    %7242 = vmatpush1.msra.mxu0 0.0
    %7243 = vmatprep.subr.mxu0 0.0
    %7244 = vmatpush1.msra.mxu0 0.0
    %7245 = vmatprep.subr.mxu0 0.0
    %7246 = vmatpush1.msra.mxu0 0.0
    %7247 = vmatprep.subr.mxu0 0.0
    %7248 = vmatpush1.msra.mxu0 0.0
    %7249 = vmatprep.subr.mxu0 0.0
    %7250 = vmatpush1.msra.mxu0 0.0
    %7251 = vmatprep.mubr.f32.mxu0 0.0
    %7252 = vmatmul.mubr.f32.gmra.mrb[0].mxu0 %v7185
    %v7253 = vpop.f32.mrb[0].mxu0
    %v7254 = vadd.f32 %v6658, %v7253
    %v7255 = vpop.f32.mrb[0].mxu0
    %7256 = vdwg.mxu0
    %v7257 = vxor.u32 %v7254, 2147483648
    %v7258 = vmul.f32 %v7257, 1.442695
    %v7259 = vpow.pop %v7258
    %v7260 = vadd.f32 %v7259, 1.0
    %v7261 = vrcp.pop %v7260
    %v7262 = vmul.f32 1.0, %v7261
    %v7263 = vtanh.pop %v7254
    %v7264 = vmul.f32 %v7262, %v7169
    %7266 = vrot.lane.b32.xlu0 %v7263, 32
    %v7267 = vpop.permute.xlu0 %7266
    %v7269 = vmul.f32 %v7262, %v7267
    %7271 = vrot.lane.b32.xlu0 %v7269, 32
    %v7272 = vpop.permute.xlu0 %7271
    %v7274 = vadd.f32 %v7264, %v7272
    %v7275 = vtanh.pop %v7274
    %7277 = vrot.lane.b32.xlu0 %v7275, 32
    %v7278 = vpop.permute.xlu0 %7277
    %v7280 = vmul.f32 %v7262, %v7278
    %7281 = vrot.lane.b32.xlu0 %v6535, 64
    %v7282 = vpop.permute.xlu0 %7281
    %7285 = vrot.lane.b32.xlu0 %v7280, 96
    %v7286 = vpop.permute.xlu0 %7285
    %v7288 = vsel %vm44, %v7282, %v7286
    %v7290 = vsel %vm50, %v7288, 0
    %7292 = vmatprep.subr.mxu0 0.0
    %7293 = vmatpush1.msra.mxu0 %v6642
    %7294 = vmatprep.subr.mxu0 0.0
    %7295 = vmatpush1.msra.mxu0 %v6643
    %7296 = vmatprep.subr.mxu0 0.0
    %7297 = vmatpush1.msra.mxu0 %v6644
    %7298 = vmatprep.subr.mxu0 0.0
    %7299 = vmatpush1.msra.mxu0 %v6645
    %7300 = vmatprep.subr.mxu0 0.0
    %7301 = vmatpush1.msra.mxu0 %v6646
    %7302 = vmatprep.subr.mxu0 0.0
    %7303 = vmatpush1.msra.mxu0 %v6647
    %7304 = vmatprep.subr.mxu0 0.0
    %7305 = vmatpush1.msra.mxu0 %v6648
    %7306 = vmatprep.subr.mxu0 0.0
    %7307 = vmatpush1.msra.mxu0 %v6649
    %7308 = vmatprep.subr.mxu0 0.0
    %7309 = vmatpush1.msra.mxu0 0.0
    %7310 = vmatprep.subr.mxu0 0.0
    %7311 = vmatpush1.msra.mxu0 0.0
    %7312 = vmatprep.subr.mxu0 0.0
    %7313 = vmatpush1.msra.mxu0 0.0
    %7314 = vmatprep.subr.mxu0 0.0
    %7315 = vmatpush1.msra.mxu0 0.0
    %7316 = vmatprep.subr.mxu0 0.0
    %7317 = vmatpush1.msra.mxu0 0.0
    %7318 = vmatprep.subr.mxu0 0.0
    %7319 = vmatpush1.msra.mxu0 0.0
    %7320 = vmatprep.subr.mxu0 0.0
    %7321 = vmatpush1.msra.mxu0 0.0
    %7322 = vmatprep.subr.mxu0 0.0
    %7323 = vmatpush1.msra.mxu0 0.0
    %7324 = vmatprep.subr.mxu0 0.0
    %7325 = vmatpush1.msra.mxu0 0.0
    %7326 = vmatprep.subr.mxu0 0.0
    %7327 = vmatpush1.msra.mxu0 0.0
    %7328 = vmatprep.subr.mxu0 0.0
    %7329 = vmatpush1.msra.mxu0 0.0
    %7330 = vmatprep.subr.mxu0 0.0
    %7331 = vmatpush1.msra.mxu0 0.0
    %7332 = vmatprep.subr.mxu0 0.0
    %7333 = vmatpush1.msra.mxu0 0.0
    %7334 = vmatprep.subr.mxu0 0.0
    %7335 = vmatpush1.msra.mxu0 0.0
    %7336 = vmatprep.subr.mxu0 0.0
    %7337 = vmatpush1.msra.mxu0 0.0
    %7338 = vmatprep.subr.mxu0 0.0
    %7339 = vmatpush1.msra.mxu0 0.0
    %7340 = vmatprep.subr.mxu0 0.0
    %7341 = vmatpush1.msra.mxu0 0.0
    %7342 = vmatprep.subr.mxu0 0.0
    %7343 = vmatpush1.msra.mxu0 0.0
    %7344 = vmatprep.subr.mxu0 0.0
    %7345 = vmatpush1.msra.mxu0 0.0
    %7346 = vmatprep.subr.mxu0 0.0
    %7347 = vmatpush1.msra.mxu0 0.0
    %7348 = vmatprep.subr.mxu0 0.0
    %7349 = vmatpush1.msra.mxu0 0.0
    %7350 = vmatprep.subr.mxu0 0.0
    %7351 = vmatpush1.msra.mxu0 0.0
    %7352 = vmatprep.subr.mxu0 0.0
    %7353 = vmatpush1.msra.mxu0 0.0
    %7354 = vmatprep.subr.mxu0 0.0
    %7355 = vmatpush1.msra.mxu0 0.0
    %7356 = vmatprep.mubr.f32.mxu0 0.0
    %7357 = vmatmul.mubr.f32.gmra.mrb[0].mxu0 %v7290
    %v7358 = vpop.f32.mrb[0].mxu0
    %v7359 = vadd.f32 %v6658, %v7358
    %v7360 = vpop.f32.mrb[0].mxu0
    %7361 = vdwg.mxu0
    %v7362 = vxor.u32 %v7359, 2147483648
    %v7363 = vmul.f32 %v7362, 1.442695
    %v7364 = vpow.pop %v7363
    %v7365 = vadd.f32 %v7364, 1.0
    %v7366 = vrcp.pop %v7365
    %v7367 = vmul.f32 1.0, %v7366
    %v7368 = vtanh.pop %v7359
    %v7369 = vmul.f32 %v7367, %v7274
    %7371 = vrot.lane.b32.xlu0 %v7368, 32
    %v7372 = vpop.permute.xlu0 %7371
    %v7374 = vmul.f32 %v7367, %v7372
    %7376 = vrot.lane.b32.xlu0 %v7374, 32
    %v7377 = vpop.permute.xlu0 %7376
    %v7379 = vadd.f32 %v7369, %v7377
    %v7380 = vtanh.pop %v7379
    %7382 = vrot.lane.b32.xlu0 %v7380, 32
    %v7383 = vpop.permute.xlu0 %7382
    %v7385 = vmul.f32 %v7367, %v7383
    %7387 = vrot.lane.b32.xlu0 %v6641, 64
    %v7388 = vpop.permute.xlu0 %7387
    %7391 = vrot.lane.b32.xlu0 %v7385, 96
    %v7392 = vpop.permute.xlu0 %7391
    %v7394 = vsel %vm44, %v7388, %v7392
    %v7396 = vsel %vm50, %v7394, 0
    %7398 = vmatprep.subr.mxu0 0.0
    %7399 = vmatpush1.msra.mxu0 %v6642
    %7400 = vmatprep.subr.mxu0 0.0
    %7401 = vmatpush1.msra.mxu0 %v6643
    %7402 = vmatprep.subr.mxu0 0.0
    %7403 = vmatpush1.msra.mxu0 %v6644
    %7404 = vmatprep.subr.mxu0 0.0
    %7405 = vmatpush1.msra.mxu0 %v6645
    %7406 = vmatprep.subr.mxu0 0.0
    %7407 = vmatpush1.msra.mxu0 %v6646
    %7408 = vmatprep.subr.mxu0 0.0
    %7409 = vmatpush1.msra.mxu0 %v6647
    %7410 = vmatprep.subr.mxu0 0.0
    %7411 = vmatpush1.msra.mxu0 %v6648
    %7412 = vmatprep.subr.mxu0 0.0
    %7413 = vmatpush1.msra.mxu0 %v6649
    %7414 = vmatprep.subr.mxu0 0.0
    %7415 = vmatpush1.msra.mxu0 0.0
    %7416 = vmatprep.subr.mxu0 0.0
    %7417 = vmatpush1.msra.mxu0 0.0
    %7418 = vmatprep.subr.mxu0 0.0
    %7419 = vmatpush1.msra.mxu0 0.0
    %7420 = vmatprep.subr.mxu0 0.0
    %7421 = vmatpush1.msra.mxu0 0.0
    %7422 = vmatprep.subr.mxu0 0.0
    %7423 = vmatpush1.msra.mxu0 0.0
    %7424 = vmatprep.subr.mxu0 0.0
    %7425 = vmatpush1.msra.mxu0 0.0
    %7426 = vmatprep.subr.mxu0 0.0
    %7427 = vmatpush1.msra.mxu0 0.0
    %7428 = vmatprep.subr.mxu0 0.0
    %7429 = vmatpush1.msra.mxu0 0.0
    %7430 = vmatprep.subr.mxu0 0.0
    %7431 = vmatpush1.msra.mxu0 0.0
    %7432 = vmatprep.subr.mxu0 0.0
    %7433 = vmatpush1.msra.mxu0 0.0
    %7434 = vmatprep.subr.mxu0 0.0
    %7435 = vmatpush1.msra.mxu0 0.0
    %7436 = vmatprep.subr.mxu0 0.0
    %7437 = vmatpush1.msra.mxu0 0.0
    %7438 = vmatprep.subr.mxu0 0.0
    %7439 = vmatpush1.msra.mxu0 0.0
    %7440 = vmatprep.subr.mxu0 0.0
    %7441 = vmatpush1.msra.mxu0 0.0
    %7442 = vmatprep.subr.mxu0 0.0
    %7443 = vmatpush1.msra.mxu0 0.0
    %7444 = vmatprep.subr.mxu0 0.0
    %7445 = vmatpush1.msra.mxu0 0.0
    %7446 = vmatprep.subr.mxu0 0.0
    %7447 = vmatpush1.msra.mxu0 0.0
    %7448 = vmatprep.subr.mxu0 0.0
    %7449 = vmatpush1.msra.mxu0 0.0
    %7450 = vmatprep.subr.mxu0 0.0
    %7451 = vmatpush1.msra.mxu0 0.0
    %7452 = vmatprep.subr.mxu0 0.0
    %7453 = vmatpush1.msra.mxu0 0.0
    %7454 = vmatprep.subr.mxu0 0.0
    %7455 = vmatpush1.msra.mxu0 0.0
    %7456 = vmatprep.subr.mxu0 0.0
    %7457 = vmatpush1.msra.mxu0 0.0
    %7458 = vmatprep.subr.mxu0 0.0
    %7459 = vmatpush1.msra.mxu0 0.0
    %7460 = vmatprep.subr.mxu0 0.0
    %7461 = vmatpush1.msra.mxu0 0.0
    %7462 = vmatprep.mubr.f32.mxu0 0.0
    %7463 = vmatmul.mubr.f32.gmra.mrb[0].mxu0 %v7396
    %v7464 = vpop.f32.mrb[0].mxu0
    %v7465 = vadd.f32 %v6658, %v7464
    %v7466 = vpop.f32.mrb[0].mxu0
    %7467 = vdwg.mxu0
    %v7468 = vxor.u32 %v7465, 2147483648
    %v7469 = vmul.f32 %v7468, 1.442695
    %v7470 = vpow.pop %v7469
    %v7471 = vadd.f32 %v7470, 1.0
    %v7472 = vrcp.pop %v7471
    %v7473 = vmul.f32 1.0, %v7472
    %v7474 = vtanh.pop %v7465
    %v7475 = vmul.f32 %v7473, %v7379
    %7477 = vrot.lane.b32.xlu0 %v7474, 32
    %v7478 = vpop.permute.xlu0 %7477
    %v7480 = vmul.f32 %v7473, %v7478
    %7482 = vrot.lane.b32.xlu0 %v7480, 32
    %v7483 = vpop.permute.xlu0 %7482
    %v7485 = vadd.f32 %v7475, %v7483
    %v7486 = vtanh.pop %v7485
    %7488 = vrot.lane.b32.xlu0 %v7486, 32
    %v7489 = vpop.permute.xlu0 %7488
    %v7491 = vmul.f32 %v7473, %v7489
    %v7492 = vld [vmem:[#allocation2 + $0x160] sm:$0xff]
    %v7493 = vld [vmem:[#allocation2 + $0x168] sm:$0xff]
    %v7494 = vld [vmem:[#allocation2 + $0x170] sm:$0xff]
    %v7495 = vld [vmem:[#allocation2 + $0x178] sm:$0xff]
    %v7496 = vld [vmem:[%s3 + $0x9] sm:$0x1]
    %v7497 = vlaneseq
    %v7498 = vshrl.u32 %v7497, 7
    %v7499 = vsub.s32 0, %v7498
    %v7500 = vrot.slane %v7496, %v7499
    %7501 = vrot.lane.b32.xlu0 %v6755, 64
    %v7502 = vpop.permute.xlu0 %7501
    %v7503 = vsel %vm44, %v7502, 0
    %7505 = vmatprep.subr.mxu0 0.0
    %7506 = vmatpush1.msra.mxu0 %v7492
    %7507 = vmatprep.subr.mxu0 0.0
    %7508 = vmatpush1.msra.mxu0 %v7493
    %7509 = vmatprep.subr.mxu0 0.0
    %7510 = vmatpush1.msra.mxu0 %v7494
    %7511 = vmatprep.subr.mxu0 0.0
    %7512 = vmatpush1.msra.mxu0 %v7495
    %7513 = vmatprep.subr.mxu0 0.0
    %7514 = vmatpush1.msra.mxu0 0.0
    %7515 = vmatprep.subr.mxu0 0.0
    %7516 = vmatpush1.msra.mxu0 0.0
    %7517 = vmatprep.subr.mxu0 0.0
    %7518 = vmatpush1.msra.mxu0 0.0
    %7519 = vmatprep.subr.mxu0 0.0
    %7520 = vmatpush1.msra.mxu0 0.0
    %7521 = vmatprep.subr.mxu0 0.0
    %7522 = vmatpush1.msra.mxu0 0.0
    %7523 = vmatprep.subr.mxu0 0.0
    %7524 = vmatpush1.msra.mxu0 0.0
    %7525 = vmatprep.subr.mxu0 0.0
    %7526 = vmatpush1.msra.mxu0 0.0
    %7527 = vmatprep.subr.mxu0 0.0
    %7528 = vmatpush1.msra.mxu0 0.0
    %7529 = vmatprep.subr.mxu0 0.0
    %7530 = vmatpush1.msra.mxu0 0.0
    %7531 = vmatprep.subr.mxu0 0.0
    %7532 = vmatpush1.msra.mxu0 0.0
    %7533 = vmatprep.subr.mxu0 0.0
    %7534 = vmatpush1.msra.mxu0 0.0
    %7535 = vmatprep.subr.mxu0 0.0
    %7536 = vmatpush1.msra.mxu0 0.0
    %7537 = vmatprep.subr.mxu0 0.0
    %7538 = vmatpush1.msra.mxu0 0.0
    %7539 = vmatprep.subr.mxu0 0.0
    %7540 = vmatpush1.msra.mxu0 0.0
    %7541 = vmatprep.subr.mxu0 0.0
    %7542 = vmatpush1.msra.mxu0 0.0
    %7543 = vmatprep.subr.mxu0 0.0
    %7544 = vmatpush1.msra.mxu0 0.0
    %7545 = vmatprep.subr.mxu0 0.0
    %7546 = vmatpush1.msra.mxu0 0.0
    %7547 = vmatprep.subr.mxu0 0.0
    %7548 = vmatpush1.msra.mxu0 0.0
    %7549 = vmatprep.subr.mxu0 0.0
    %7550 = vmatpush1.msra.mxu0 0.0
    %7551 = vmatprep.subr.mxu0 0.0
    %7552 = vmatpush1.msra.mxu0 0.0
    %7553 = vmatprep.subr.mxu0 0.0
    %7554 = vmatpush1.msra.mxu0 0.0
    %7555 = vmatprep.subr.mxu0 0.0
    %7556 = vmatpush1.msra.mxu0 0.0
    %7557 = vmatprep.subr.mxu0 0.0
    %7558 = vmatpush1.msra.mxu0 0.0
    %7559 = vmatprep.subr.mxu0 0.0
    %7560 = vmatpush1.msra.mxu0 0.0
    %7561 = vmatprep.subr.mxu0 0.0
    %7562 = vmatpush1.msra.mxu0 0.0
    %7563 = vmatprep.subr.mxu0 0.0
    %7564 = vmatpush1.msra.mxu0 0.0
    %7565 = vmatprep.subr.mxu0 0.0
    %7566 = vmatpush1.msra.mxu0 0.0
    %7567 = vmatprep.subr.mxu0 0.0
    %7568 = vmatpush1.msra.mxu0 0.0
    %7569 = vmatprep.mubr.f32.mxu0 0.0
    %7570 = vmatmul.mubr.f32.gmra.mrb[0].mxu0 %v7503
    %v7571 = vpop.f32.mrb[0].mxu0
    %v7572 = vadd.f32 %v7500, %v7571
    %v7573 = vpop.f32.mrb[0].mxu0
    %7574 = vdwg.mxu0
    %7576 = vrot.lane.b32.xlu0 %v3455, 32
    %v7577 = vpop.permute.xlu0 %7576
    %7579 = vrot.lane.b32.xlu0 %v2631, 32
    %v7580 = vpop.permute.xlu0 %7579
    %7582 = vrot.lane.b32.xlu0 %v3464, 80
    %v7583 = vpop.permute.xlu0 %7582
    %v7585 = vsel %vm44, %v7572, %v7577
    %v7586 = vsel %vm889, %v7585, %v7577
    %v7587 = vsel %vm50, %v7586, %v7580
    %vm7588 = vcmask 654336
    %v7589 = vsel %vm7588, %v7587, %v7583
    %vm7590 = vcmask 785408
    %v7591 = vsel %vm7590, %v7589, 0.0
    %7592 = vst [vmem:[%s4] sm:$0x3] %v7591
    %7593 = vrot.lane.b32.xlu0 %v6860, 64
    %v7594 = vpop.permute.xlu0 %7593
    %v7595 = vsel %vm44, %v7594, 0
    %7597 = vmatprep.subr.mxu0 0.0
    %7598 = vmatpush1.msra.mxu0 %v7492
    %7599 = vmatprep.subr.mxu0 0.0
    %7600 = vmatpush1.msra.mxu0 %v7493
    %7601 = vmatprep.subr.mxu0 0.0
    %7602 = vmatpush1.msra.mxu0 %v7494
    %7603 = vmatprep.subr.mxu0 0.0
    %7604 = vmatpush1.msra.mxu0 %v7495
    %7605 = vmatprep.subr.mxu0 0.0
    %7606 = vmatpush1.msra.mxu0 0.0
    %7607 = vmatprep.subr.mxu0 0.0
    %7608 = vmatpush1.msra.mxu0 0.0
    %7609 = vmatprep.subr.mxu0 0.0
    %7610 = vmatpush1.msra.mxu0 0.0
    %7611 = vmatprep.subr.mxu0 0.0
    %7612 = vmatpush1.msra.mxu0 0.0
    %7613 = vmatprep.subr.mxu0 0.0
    %7614 = vmatpush1.msra.mxu0 0.0
    %7615 = vmatprep.subr.mxu0 0.0
    %7616 = vmatpush1.msra.mxu0 0.0
    %7617 = vmatprep.subr.mxu0 0.0
    %7618 = vmatpush1.msra.mxu0 0.0
    %7619 = vmatprep.subr.mxu0 0.0
    %7620 = vmatpush1.msra.mxu0 0.0
    %7621 = vmatprep.subr.mxu0 0.0
    %7622 = vmatpush1.msra.mxu0 0.0
    %7623 = vmatprep.subr.mxu0 0.0
    %7624 = vmatpush1.msra.mxu0 0.0
    %7625 = vmatprep.subr.mxu0 0.0
    %7626 = vmatpush1.msra.mxu0 0.0
    %7627 = vmatprep.subr.mxu0 0.0
    %7628 = vmatpush1.msra.mxu0 0.0
    %7629 = vmatprep.subr.mxu0 0.0
    %7630 = vmatpush1.msra.mxu0 0.0
    %7631 = vmatprep.subr.mxu0 0.0
    %7632 = vmatpush1.msra.mxu0 0.0
    %7633 = vmatprep.subr.mxu0 0.0
    %7634 = vmatpush1.msra.mxu0 0.0
    %7635 = vmatprep.subr.mxu0 0.0
    %7636 = vmatpush1.msra.mxu0 0.0
    %7637 = vmatprep.subr.mxu0 0.0
    %7638 = vmatpush1.msra.mxu0 0.0
    %7639 = vmatprep.subr.mxu0 0.0
    %7640 = vmatpush1.msra.mxu0 0.0
    %7641 = vmatprep.subr.mxu0 0.0
    %7642 = vmatpush1.msra.mxu0 0.0
    %7643 = vmatprep.subr.mxu0 0.0
    %7644 = vmatpush1.msra.mxu0 0.0
    %7645 = vmatprep.subr.mxu0 0.0
    %7646 = vmatpush1.msra.mxu0 0.0
    %7647 = vmatprep.subr.mxu0 0.0
    %7648 = vmatpush1.msra.mxu0 0.0
    %7649 = vmatprep.subr.mxu0 0.0
    %7650 = vmatpush1.msra.mxu0 0.0
    %7651 = vmatprep.subr.mxu0 0.0
    %7652 = vmatpush1.msra.mxu0 0.0
    %7653 = vmatprep.subr.mxu0 0.0
    %7654 = vmatpush1.msra.mxu0 0.0
    %7655 = vmatprep.subr.mxu0 0.0
    %7656 = vmatpush1.msra.mxu0 0.0
    %7657 = vmatprep.subr.mxu0 0.0
    %7658 = vmatpush1.msra.mxu0 0.0
    %7659 = vmatprep.subr.mxu0 0.0
    %7660 = vmatpush1.msra.mxu0 0.0
    %7661 = vmatprep.mubr.f32.mxu0 0.0
    %7662 = vmatmul.mubr.f32.gmra.mrb[0].mxu0 %v7595
    %v7663 = vpop.f32.mrb[0].mxu0
    %v7664 = vadd.f32 %v7500, %v7663
    %v7665 = vpop.f32.mrb[0].mxu0
    %7666 = vdwg.mxu0
    %7668 = vrot.lane.b32.xlu0 %v3545, 32
    %v7669 = vpop.permute.xlu0 %7668
    %7671 = vrot.lane.b32.xlu0 %v2737, 32
    %v7672 = vpop.permute.xlu0 %7671
    %7674 = vrot.lane.b32.xlu0 %v3558, 80
    %v7675 = vpop.permute.xlu0 %7674
    %v7677 = vsel %vm44, %v7664, %v7669
    %v7678 = vsel %vm889, %v7677, %v7669
    %v7679 = vsel %vm50, %v7678, %v7672
    %v7680 = vsel %vm7588, %v7679, %v7675
    %v7681 = vsel %vm7590, %v7680, 0.0
    %7682 = vst [vmem:[%s4 + $0x2] sm:$0x3] %v7681
    %7683 = vrot.lane.b32.xlu0 %v6965, 64
    %v7684 = vpop.permute.xlu0 %7683
    %v7685 = vsel %vm44, %v7684, 0
    %7687 = vmatprep.subr.mxu0 0.0
    %7688 = vmatpush1.msra.mxu0 %v7492
    %7689 = vmatprep.subr.mxu0 0.0
    %7690 = vmatpush1.msra.mxu0 %v7493
    %7691 = vmatprep.subr.mxu0 0.0
    %7692 = vmatpush1.msra.mxu0 %v7494
    %7693 = vmatprep.subr.mxu0 0.0
    %7694 = vmatpush1.msra.mxu0 %v7495
    %7695 = vmatprep.subr.mxu0 0.0
    %7696 = vmatpush1.msra.mxu0 0.0
    %7697 = vmatprep.subr.mxu0 0.0
    %7698 = vmatpush1.msra.mxu0 0.0
    %7699 = vmatprep.subr.mxu0 0.0
    %7700 = vmatpush1.msra.mxu0 0.0
    %7701 = vmatprep.subr.mxu0 0.0
    %7702 = vmatpush1.msra.mxu0 0.0
    %7703 = vmatprep.subr.mxu0 0.0
    %7704 = vmatpush1.msra.mxu0 0.0
    %7705 = vmatprep.subr.mxu0 0.0
    %7706 = vmatpush1.msra.mxu0 0.0
    %7707 = vmatprep.subr.mxu0 0.0
    %7708 = vmatpush1.msra.mxu0 0.0
    %7709 = vmatprep.subr.mxu0 0.0
    %7710 = vmatpush1.msra.mxu0 0.0
    %7711 = vmatprep.subr.mxu0 0.0
    %7712 = vmatpush1.msra.mxu0 0.0
    %7713 = vmatprep.subr.mxu0 0.0
    %7714 = vmatpush1.msra.mxu0 0.0
    %7715 = vmatprep.subr.mxu0 0.0
    %7716 = vmatpush1.msra.mxu0 0.0
    %7717 = vmatprep.subr.mxu0 0.0
    %7718 = vmatpush1.msra.mxu0 0.0
    %7719 = vmatprep.subr.mxu0 0.0
    %7720 = vmatpush1.msra.mxu0 0.0
    %7721 = vmatprep.subr.mxu0 0.0
    %7722 = vmatpush1.msra.mxu0 0.0
    %7723 = vmatprep.subr.mxu0 0.0
    %7724 = vmatpush1.msra.mxu0 0.0
    %7725 = vmatprep.subr.mxu0 0.0
    %7726 = vmatpush1.msra.mxu0 0.0
    %7727 = vmatprep.subr.mxu0 0.0
    %7728 = vmatpush1.msra.mxu0 0.0
    %7729 = vmatprep.subr.mxu0 0.0
    %7730 = vmatpush1.msra.mxu0 0.0
    %7731 = vmatprep.subr.mxu0 0.0
    %7732 = vmatpush1.msra.mxu0 0.0
    %7733 = vmatprep.subr.mxu0 0.0
    %7734 = vmatpush1.msra.mxu0 0.0
    %7735 = vmatprep.subr.mxu0 0.0
    %7736 = vmatpush1.msra.mxu0 0.0
    %7737 = vmatprep.subr.mxu0 0.0
    %7738 = vmatpush1.msra.mxu0 0.0
    %7739 = vmatprep.subr.mxu0 0.0
    %7740 = vmatpush1.msra.mxu0 0.0
    %7741 = vmatprep.subr.mxu0 0.0
    %7742 = vmatpush1.msra.mxu0 0.0
    %7743 = vmatprep.subr.mxu0 0.0
    %7744 = vmatpush1.msra.mxu0 0.0
    %7745 = vmatprep.subr.mxu0 0.0
    %7746 = vmatpush1.msra.mxu0 0.0
    %7747 = vmatprep.subr.mxu0 0.0
    %7748 = vmatpush1.msra.mxu0 0.0
    %7749 = vmatprep.subr.mxu0 0.0
    %7750 = vmatpush1.msra.mxu0 0.0
    %7751 = vmatprep.mubr.f32.mxu0 0.0
    %7752 = vmatmul.mubr.f32.gmra.mrb[0].mxu0 %v7685
    %v7753 = vpop.f32.mrb[0].mxu0
    %v7754 = vadd.f32 %v7500, %v7753
    %v7755 = vpop.f32.mrb[0].mxu0
    %7756 = vdwg.mxu0
    %7758 = vrot.lane.b32.xlu0 %v3639, 32
    %v7759 = vpop.permute.xlu0 %7758
    %7761 = vrot.lane.b32.xlu0 %v2843, 32
    %v7762 = vpop.permute.xlu0 %7761
    %7764 = vrot.lane.b32.xlu0 %v3652, 80
    %v7765 = vpop.permute.xlu0 %7764
    %v7767 = vsel %vm44, %v7754, %v7759
    %v7768 = vsel %vm889, %v7767, %v7759
    %v7769 = vsel %vm50, %v7768, %v7762
    %v7770 = vsel %vm7588, %v7769, %v7765
    %v7771 = vsel %vm7590, %v7770, 0.0
    %7772 = vst [vmem:[%s4 + $0x4] sm:$0x3] %v7771
    %7773 = vrot.lane.b32.xlu0 %v7070, 64
    %v7774 = vpop.permute.xlu0 %7773
    %v7775 = vsel %vm44, %v7774, 0
    %7777 = vmatprep.subr.mxu0 0.0
    %7778 = vmatpush1.msra.mxu0 %v7492
    %7779 = vmatprep.subr.mxu0 0.0
    %7780 = vmatpush1.msra.mxu0 %v7493
    %7781 = vmatprep.subr.mxu0 0.0
    %7782 = vmatpush1.msra.mxu0 %v7494
    %7783 = vmatprep.subr.mxu0 0.0
    %7784 = vmatpush1.msra.mxu0 %v7495
    %7785 = vmatprep.subr.mxu0 0.0
    %7786 = vmatpush1.msra.mxu0 0.0
    %7787 = vmatprep.subr.mxu0 0.0
    %7788 = vmatpush1.msra.mxu0 0.0
    %7789 = vmatprep.subr.mxu0 0.0
    %7790 = vmatpush1.msra.mxu0 0.0
    %7791 = vmatprep.subr.mxu0 0.0
    %7792 = vmatpush1.msra.mxu0 0.0
    %7793 = vmatprep.subr.mxu0 0.0
    %7794 = vmatpush1.msra.mxu0 0.0
    %7795 = vmatprep.subr.mxu0 0.0
    %7796 = vmatpush1.msra.mxu0 0.0
    %7797 = vmatprep.subr.mxu0 0.0
    %7798 = vmatpush1.msra.mxu0 0.0
    %7799 = vmatprep.subr.mxu0 0.0
    %7800 = vmatpush1.msra.mxu0 0.0
    %7801 = vmatprep.subr.mxu0 0.0
    %7802 = vmatpush1.msra.mxu0 0.0
    %7803 = vmatprep.subr.mxu0 0.0
    %7804 = vmatpush1.msra.mxu0 0.0
    %7805 = vmatprep.subr.mxu0 0.0
    %7806 = vmatpush1.msra.mxu0 0.0
    %7807 = vmatprep.subr.mxu0 0.0
    %7808 = vmatpush1.msra.mxu0 0.0
    %7809 = vmatprep.subr.mxu0 0.0
    %7810 = vmatpush1.msra.mxu0 0.0
    %7811 = vmatprep.subr.mxu0 0.0
    %7812 = vmatpush1.msra.mxu0 0.0
    %7813 = vmatprep.subr.mxu0 0.0
    %7814 = vmatpush1.msra.mxu0 0.0
    %7815 = vmatprep.subr.mxu0 0.0
    %7816 = vmatpush1.msra.mxu0 0.0
    %7817 = vmatprep.subr.mxu0 0.0
    %7818 = vmatpush1.msra.mxu0 0.0
    %7819 = vmatprep.subr.mxu0 0.0
    %7820 = vmatpush1.msra.mxu0 0.0
    %7821 = vmatprep.subr.mxu0 0.0
    %7822 = vmatpush1.msra.mxu0 0.0
    %7823 = vmatprep.subr.mxu0 0.0
    %7824 = vmatpush1.msra.mxu0 0.0
    %7825 = vmatprep.subr.mxu0 0.0
    %7826 = vmatpush1.msra.mxu0 0.0
    %7827 = vmatprep.subr.mxu0 0.0
    %7828 = vmatpush1.msra.mxu0 0.0
    %7829 = vmatprep.subr.mxu0 0.0
    %7830 = vmatpush1.msra.mxu0 0.0
    %7831 = vmatprep.subr.mxu0 0.0
    %7832 = vmatpush1.msra.mxu0 0.0
    %7833 = vmatprep.subr.mxu0 0.0
    %7834 = vmatpush1.msra.mxu0 0.0
    %7835 = vmatprep.subr.mxu0 0.0
    %7836 = vmatpush1.msra.mxu0 0.0
    %7837 = vmatprep.subr.mxu0 0.0
    %7838 = vmatpush1.msra.mxu0 0.0
    %7839 = vmatprep.subr.mxu0 0.0
    %7840 = vmatpush1.msra.mxu0 0.0
    %7841 = vmatprep.mubr.f32.mxu0 0.0
    %7842 = vmatmul.mubr.f32.gmra.mrb[0].mxu0 %v7775
    %v7843 = vpop.f32.mrb[0].mxu0
    %v7844 = vadd.f32 %v7500, %v7843
    %v7845 = vpop.f32.mrb[0].mxu0
    %7846 = vdwg.mxu0
    %7848 = vrot.lane.b32.xlu0 %v3733, 32
    %v7849 = vpop.permute.xlu0 %7848
    %7851 = vrot.lane.b32.xlu0 %v2949, 32
    %v7852 = vpop.permute.xlu0 %7851
    %7854 = vrot.lane.b32.xlu0 %v3746, 80
    %v7855 = vpop.permute.xlu0 %7854
    %v7857 = vsel %vm44, %v7844, %v7849
    %v7858 = vsel %vm889, %v7857, %v7849
    %v7859 = vsel %vm50, %v7858, %v7852
    %v7860 = vsel %vm7588, %v7859, %v7855
    %v7861 = vsel %vm7590, %v7860, 0.0
    %7862 = vst [vmem:[%s4 + $0x6] sm:$0x3] %v7861
    %7863 = vrot.lane.b32.xlu0 %v7175, 64
    %v7864 = vpop.permute.xlu0 %7863
    %v7865 = vsel %vm44, %v7864, 0
    %7867 = vmatprep.subr.mxu0 0.0
    %7868 = vmatpush1.msra.mxu0 %v7492
    %7869 = vmatprep.subr.mxu0 0.0
    %7870 = vmatpush1.msra.mxu0 %v7493
    %7871 = vmatprep.subr.mxu0 0.0
    %7872 = vmatpush1.msra.mxu0 %v7494
    %7873 = vmatprep.subr.mxu0 0.0
    %7874 = vmatpush1.msra.mxu0 %v7495
    %7875 = vmatprep.subr.mxu0 0.0
    %7876 = vmatpush1.msra.mxu0 0.0
    %7877 = vmatprep.subr.mxu0 0.0
    %7878 = vmatpush1.msra.mxu0 0.0
    %7879 = vmatprep.subr.mxu0 0.0
    %7880 = vmatpush1.msra.mxu0 0.0
    %7881 = vmatprep.subr.mxu0 0.0
    %7882 = vmatpush1.msra.mxu0 0.0
    %7883 = vmatprep.subr.mxu0 0.0
    %7884 = vmatpush1.msra.mxu0 0.0
    %7885 = vmatprep.subr.mxu0 0.0
    %7886 = vmatpush1.msra.mxu0 0.0
    %7887 = vmatprep.subr.mxu0 0.0
    %7888 = vmatpush1.msra.mxu0 0.0
    %7889 = vmatprep.subr.mxu0 0.0
    %7890 = vmatpush1.msra.mxu0 0.0
    %7891 = vmatprep.subr.mxu0 0.0
    %7892 = vmatpush1.msra.mxu0 0.0
    %7893 = vmatprep.subr.mxu0 0.0
    %7894 = vmatpush1.msra.mxu0 0.0
    %7895 = vmatprep.subr.mxu0 0.0
    %7896 = vmatpush1.msra.mxu0 0.0
    %7897 = vmatprep.subr.mxu0 0.0
    %7898 = vmatpush1.msra.mxu0 0.0
    %7899 = vmatprep.subr.mxu0 0.0
    %7900 = vmatpush1.msra.mxu0 0.0
    %7901 = vmatprep.subr.mxu0 0.0
    %7902 = vmatpush1.msra.mxu0 0.0
    %7903 = vmatprep.subr.mxu0 0.0
    %7904 = vmatpush1.msra.mxu0 0.0
    %7905 = vmatprep.subr.mxu0 0.0
    %7906 = vmatpush1.msra.mxu0 0.0
    %7907 = vmatprep.subr.mxu0 0.0
    %7908 = vmatpush1.msra.mxu0 0.0
    %7909 = vmatprep.subr.mxu0 0.0
    %7910 = vmatpush1.msra.mxu0 0.0
    %7911 = vmatprep.subr.mxu0 0.0
    %7912 = vmatpush1.msra.mxu0 0.0
    %7913 = vmatprep.subr.mxu0 0.0
    %7914 = vmatpush1.msra.mxu0 0.0
    %7915 = vmatprep.subr.mxu0 0.0
    %7916 = vmatpush1.msra.mxu0 0.0
    %7917 = vmatprep.subr.mxu0 0.0
    %7918 = vmatpush1.msra.mxu0 0.0
    %7919 = vmatprep.subr.mxu0 0.0
    %7920 = vmatpush1.msra.mxu0 0.0
    %7921 = vmatprep.subr.mxu0 0.0
    %7922 = vmatpush1.msra.mxu0 0.0
    %7923 = vmatprep.subr.mxu0 0.0
    %7924 = vmatpush1.msra.mxu0 0.0
    %7925 = vmatprep.subr.mxu0 0.0
    %7926 = vmatpush1.msra.mxu0 0.0
    %7927 = vmatprep.subr.mxu0 0.0
    %7928 = vmatpush1.msra.mxu0 0.0
    %7929 = vmatprep.subr.mxu0 0.0
    %7930 = vmatpush1.msra.mxu0 0.0
    %7931 = vmatprep.mubr.f32.mxu0 0.0
    %7932 = vmatmul.mubr.f32.gmra.mrb[0].mxu0 %v7865
    %v7933 = vpop.f32.mrb[0].mxu0
    %v7934 = vadd.f32 %v7500, %v7933
    %v7935 = vpop.f32.mrb[0].mxu0
    %7936 = vdwg.mxu0
    %7938 = vrot.lane.b32.xlu0 %v3827, 32
    %v7939 = vpop.permute.xlu0 %7938
    %7941 = vrot.lane.b32.xlu0 %v3055, 32
    %v7942 = vpop.permute.xlu0 %7941
    %7944 = vrot.lane.b32.xlu0 %v3836, 80
    %v7945 = vpop.permute.xlu0 %7944
    %v7947 = vsel %vm44, %v7934, %v7939
    %v7948 = vsel %vm889, %v7947, %v7939
    %v7949 = vsel %vm50, %v7948, %v7942
    %v7950 = vsel %vm7588, %v7949, %v7945
    %v7951 = vsel %vm7590, %v7950, 0.0
    %7952 = vst [vmem:[%s4 + $0x8] sm:$0x3] %v7951
    %7953 = vrot.lane.b32.xlu0 %v7280, 64
    %v7954 = vpop.permute.xlu0 %7953
    %v7955 = vsel %vm44, %v7954, 0
    %7957 = vmatprep.subr.mxu0 0.0
    %7958 = vmatpush1.msra.mxu0 %v7492
    %7959 = vmatprep.subr.mxu0 0.0
    %7960 = vmatpush1.msra.mxu0 %v7493
    %7961 = vmatprep.subr.mxu0 0.0
    %7962 = vmatpush1.msra.mxu0 %v7494
    %7963 = vmatprep.subr.mxu0 0.0
    %7964 = vmatpush1.msra.mxu0 %v7495
    %7965 = vmatprep.subr.mxu0 0.0
    %7966 = vmatpush1.msra.mxu0 0.0
    %7967 = vmatprep.subr.mxu0 0.0
    %7968 = vmatpush1.msra.mxu0 0.0
    %7969 = vmatprep.subr.mxu0 0.0
    %7970 = vmatpush1.msra.mxu0 0.0
    %7971 = vmatprep.subr.mxu0 0.0
    %7972 = vmatpush1.msra.mxu0 0.0
    %7973 = vmatprep.subr.mxu0 0.0
    %7974 = vmatpush1.msra.mxu0 0.0
    %7975 = vmatprep.subr.mxu0 0.0
    %7976 = vmatpush1.msra.mxu0 0.0
    %7977 = vmatprep.subr.mxu0 0.0
    %7978 = vmatpush1.msra.mxu0 0.0
    %7979 = vmatprep.subr.mxu0 0.0
    %7980 = vmatpush1.msra.mxu0 0.0
    %7981 = vmatprep.subr.mxu0 0.0
    %7982 = vmatpush1.msra.mxu0 0.0
    %7983 = vmatprep.subr.mxu0 0.0
    %7984 = vmatpush1.msra.mxu0 0.0
    %7985 = vmatprep.subr.mxu0 0.0
    %7986 = vmatpush1.msra.mxu0 0.0
    %7987 = vmatprep.subr.mxu0 0.0
    %7988 = vmatpush1.msra.mxu0 0.0
    %7989 = vmatprep.subr.mxu0 0.0
    %7990 = vmatpush1.msra.mxu0 0.0
    %7991 = vmatprep.subr.mxu0 0.0
    %7992 = vmatpush1.msra.mxu0 0.0
    %7993 = vmatprep.subr.mxu0 0.0
    %7994 = vmatpush1.msra.mxu0 0.0
    %7995 = vmatprep.subr.mxu0 0.0
    %7996 = vmatpush1.msra.mxu0 0.0
    %7997 = vmatprep.subr.mxu0 0.0
    %7998 = vmatpush1.msra.mxu0 0.0
    %7999 = vmatprep.subr.mxu0 0.0
    %8000 = vmatpush1.msra.mxu0 0.0
    %8001 = vmatprep.subr.mxu0 0.0
    %8002 = vmatpush1.msra.mxu0 0.0
    %8003 = vmatprep.subr.mxu0 0.0
    %8004 = vmatpush1.msra.mxu0 0.0
    %8005 = vmatprep.subr.mxu0 0.0
    %8006 = vmatpush1.msra.mxu0 0.0
    %8007 = vmatprep.subr.mxu0 0.0
    %8008 = vmatpush1.msra.mxu0 0.0
    %8009 = vmatprep.subr.mxu0 0.0
    %8010 = vmatpush1.msra.mxu0 0.0
    %8011 = vmatprep.subr.mxu0 0.0
    %8012 = vmatpush1.msra.mxu0 0.0
    %8013 = vmatprep.subr.mxu0 0.0
    %8014 = vmatpush1.msra.mxu0 0.0
    %8015 = vmatprep.subr.mxu0 0.0
    %8016 = vmatpush1.msra.mxu0 0.0
    %8017 = vmatprep.subr.mxu0 0.0
    %8018 = vmatpush1.msra.mxu0 0.0
    %8019 = vmatprep.subr.mxu0 0.0
    %8020 = vmatpush1.msra.mxu0 0.0
    %8021 = vmatprep.mubr.f32.mxu0 0.0
    %8022 = vmatmul.mubr.f32.gmra.mrb[0].mxu0 %v7955
    %v8023 = vpop.f32.mrb[0].mxu0
    %v8024 = vadd.f32 %v7500, %v8023
    %v8025 = vpop.f32.mrb[0].mxu0
    %8026 = vdwg.mxu0
    %8028 = vrot.lane.b32.xlu0 %v3917, 32
    %v8029 = vpop.permute.xlu0 %8028
    %8031 = vrot.lane.b32.xlu0 %v3161, 32
    %v8032 = vpop.permute.xlu0 %8031
    %8034 = vrot.lane.b32.xlu0 %v3930, 80
    %v8035 = vpop.permute.xlu0 %8034
    %v8037 = vsel %vm44, %v8024, %v8029
    %v8038 = vsel %vm889, %v8037, %v8029
    %v8039 = vsel %vm50, %v8038, %v8032
    %v8040 = vsel %vm7588, %v8039, %v8035
    %v8041 = vsel %vm7590, %v8040, 0.0
    %8042 = vst [vmem:[%s4 + $0xa] sm:$0x3] %v8041
    %8043 = vrot.lane.b32.xlu0 %v7385, 64
    %v8044 = vpop.permute.xlu0 %8043
    %v8045 = vsel %vm44, %v8044, 0
    %8047 = vmatprep.subr.mxu0 0.0
    %8048 = vmatpush1.msra.mxu0 %v7492
    %8049 = vmatprep.subr.mxu0 0.0
    %8050 = vmatpush1.msra.mxu0 %v7493
    %8051 = vmatprep.subr.mxu0 0.0
    %8052 = vmatpush1.msra.mxu0 %v7494
    %8053 = vmatprep.subr.mxu0 0.0
    %8054 = vmatpush1.msra.mxu0 %v7495
    %8055 = vmatprep.subr.mxu0 0.0
    %8056 = vmatpush1.msra.mxu0 0.0
    %8057 = vmatprep.subr.mxu0 0.0
    %8058 = vmatpush1.msra.mxu0 0.0
    %8059 = vmatprep.subr.mxu0 0.0
    %8060 = vmatpush1.msra.mxu0 0.0
    %8061 = vmatprep.subr.mxu0 0.0
    %8062 = vmatpush1.msra.mxu0 0.0
    %8063 = vmatprep.subr.mxu0 0.0
    %8064 = vmatpush1.msra.mxu0 0.0
    %8065 = vmatprep.subr.mxu0 0.0
    %8066 = vmatpush1.msra.mxu0 0.0
    %8067 = vmatprep.subr.mxu0 0.0
    %8068 = vmatpush1.msra.mxu0 0.0
    %8069 = vmatprep.subr.mxu0 0.0
    %8070 = vmatpush1.msra.mxu0 0.0
    %8071 = vmatprep.subr.mxu0 0.0
    %8072 = vmatpush1.msra.mxu0 0.0
    %8073 = vmatprep.subr.mxu0 0.0
    %8074 = vmatpush1.msra.mxu0 0.0
    %8075 = vmatprep.subr.mxu0 0.0
    %8076 = vmatpush1.msra.mxu0 0.0
    %8077 = vmatprep.subr.mxu0 0.0
    %8078 = vmatpush1.msra.mxu0 0.0
    %8079 = vmatprep.subr.mxu0 0.0
    %8080 = vmatpush1.msra.mxu0 0.0
    %8081 = vmatprep.subr.mxu0 0.0
    %8082 = vmatpush1.msra.mxu0 0.0
    %8083 = vmatprep.subr.mxu0 0.0
    %8084 = vmatpush1.msra.mxu0 0.0
    %8085 = vmatprep.subr.mxu0 0.0
    %8086 = vmatpush1.msra.mxu0 0.0
    %8087 = vmatprep.subr.mxu0 0.0
    %8088 = vmatpush1.msra.mxu0 0.0
    %8089 = vmatprep.subr.mxu0 0.0
    %8090 = vmatpush1.msra.mxu0 0.0
    %8091 = vmatprep.subr.mxu0 0.0
    %8092 = vmatpush1.msra.mxu0 0.0
    %8093 = vmatprep.subr.mxu0 0.0
    %8094 = vmatpush1.msra.mxu0 0.0
    %8095 = vmatprep.subr.mxu0 0.0
    %8096 = vmatpush1.msra.mxu0 0.0
    %8097 = vmatprep.subr.mxu0 0.0
    %8098 = vmatpush1.msra.mxu0 0.0
    %8099 = vmatprep.subr.mxu0 0.0
    %8100 = vmatpush1.msra.mxu0 0.0
    %8101 = vmatprep.subr.mxu0 0.0
    %8102 = vmatpush1.msra.mxu0 0.0
    %8103 = vmatprep.subr.mxu0 0.0
    %8104 = vmatpush1.msra.mxu0 0.0
    %8105 = vmatprep.subr.mxu0 0.0
    %8106 = vmatpush1.msra.mxu0 0.0
    %8107 = vmatprep.subr.mxu0 0.0
    %8108 = vmatpush1.msra.mxu0 0.0
    %8109 = vmatprep.subr.mxu0 0.0
    %8110 = vmatpush1.msra.mxu0 0.0
    %8111 = vmatprep.mubr.f32.mxu0 0.0
    %8112 = vmatmul.mubr.f32.gmra.mrb[0].mxu0 %v8045
    %v8113 = vpop.f32.mrb[0].mxu0
    %v8114 = vadd.f32 %v7500, %v8113
    %v8115 = vpop.f32.mrb[0].mxu0
    %8116 = vdwg.mxu0
    %8118 = vrot.lane.b32.xlu0 %v4011, 32
    %v8119 = vpop.permute.xlu0 %8118
    %8121 = vrot.lane.b32.xlu0 %v3267, 32
    %v8122 = vpop.permute.xlu0 %8121
    %8124 = vrot.lane.b32.xlu0 %v4024, 80
    %v8125 = vpop.permute.xlu0 %8124
    %v8127 = vsel %vm44, %v8114, %v8119
    %v8128 = vsel %vm889, %v8127, %v8119
    %v8129 = vsel %vm50, %v8128, %v8122
    %v8130 = vsel %vm7588, %v8129, %v8125
    %v8131 = vsel %vm7590, %v8130, 0.0
    %8132 = vst [vmem:[%s4 + $0xc] sm:$0x3] %v8131
    %8134 = vrot.lane.b32.xlu0 %v7491, 64
    %v8135 = vpop.permute.xlu0 %8134
    %v8136 = vsel %vm44, %v8135, 0
    %8138 = vmatprep.subr.mxu0 0.0
    %8139 = vmatpush1.msra.mxu0 %v7492
    %8140 = vmatprep.subr.mxu0 0.0
    %8141 = vmatpush1.msra.mxu0 %v7493
    %8142 = vmatprep.subr.mxu0 0.0
    %8143 = vmatpush1.msra.mxu0 %v7494
    %8144 = vmatprep.subr.mxu0 0.0
    %8145 = vmatpush1.msra.mxu0 %v7495
    %8146 = vmatprep.subr.mxu0 0.0
    %8147 = vmatpush1.msra.mxu0 0.0
    %8148 = vmatprep.subr.mxu0 0.0
    %8149 = vmatpush1.msra.mxu0 0.0
    %8150 = vmatprep.subr.mxu0 0.0
    %8151 = vmatpush1.msra.mxu0 0.0
    %8152 = vmatprep.subr.mxu0 0.0
    %8153 = vmatpush1.msra.mxu0 0.0
    %8154 = vmatprep.subr.mxu0 0.0
    %8155 = vmatpush1.msra.mxu0 0.0
    %8156 = vmatprep.subr.mxu0 0.0
    %8157 = vmatpush1.msra.mxu0 0.0
    %8158 = vmatprep.subr.mxu0 0.0
    %8159 = vmatpush1.msra.mxu0 0.0
    %8160 = vmatprep.subr.mxu0 0.0
    %8161 = vmatpush1.msra.mxu0 0.0
    %8162 = vmatprep.subr.mxu0 0.0
    %8163 = vmatpush1.msra.mxu0 0.0
    %8164 = vmatprep.subr.mxu0 0.0
    %8165 = vmatpush1.msra.mxu0 0.0
    %8166 = vmatprep.subr.mxu0 0.0
    %8167 = vmatpush1.msra.mxu0 0.0
    %8168 = vmatprep.subr.mxu0 0.0
    %8169 = vmatpush1.msra.mxu0 0.0
    %8170 = vmatprep.subr.mxu0 0.0
    %8171 = vmatpush1.msra.mxu0 0.0
    %8172 = vmatprep.subr.mxu0 0.0
    %8173 = vmatpush1.msra.mxu0 0.0
    %8174 = vmatprep.subr.mxu0 0.0
    %8175 = vmatpush1.msra.mxu0 0.0
    %8176 = vmatprep.subr.mxu0 0.0
    %8177 = vmatpush1.msra.mxu0 0.0
    %8178 = vmatprep.subr.mxu0 0.0
    %8179 = vmatpush1.msra.mxu0 0.0
    %8180 = vmatprep.subr.mxu0 0.0
    %8181 = vmatpush1.msra.mxu0 0.0
    %8182 = vmatprep.subr.mxu0 0.0
    %8183 = vmatpush1.msra.mxu0 0.0
    %8184 = vmatprep.subr.mxu0 0.0
    %8185 = vmatpush1.msra.mxu0 0.0
    %8186 = vmatprep.subr.mxu0 0.0
    %8187 = vmatpush1.msra.mxu0 0.0
    %8188 = vmatprep.subr.mxu0 0.0
    %8189 = vmatpush1.msra.mxu0 0.0
    %8190 = vmatprep.subr.mxu0 0.0
    %8191 = vmatpush1.msra.mxu0 0.0
    %8192 = vmatprep.subr.mxu0 0.0
    %8193 = vmatpush1.msra.mxu0 0.0
    %8194 = vmatprep.subr.mxu0 0.0
    %8195 = vmatpush1.msra.mxu0 0.0
    %8196 = vmatprep.subr.mxu0 0.0
    %8197 = vmatpush1.msra.mxu0 0.0
    %8198 = vmatprep.subr.mxu0 0.0
    %8199 = vmatpush1.msra.mxu0 0.0
    %8200 = vmatprep.subr.mxu0 0.0
    %8201 = vmatpush1.msra.mxu0 0.0
    %8202 = vmatprep.mubr.f32.mxu0 0.0
    %8203 = vmatmul.mubr.f32.gmra.mrb[0].mxu0 %v8136
    %v8204 = vpop.f32.mrb[0].mxu0
    %v8205 = vadd.f32 %v7500, %v8204
    %v8206 = vpop.f32.mrb[0].mxu0
    %8207 = vdwg.mxu0
    %8209 = vrot.lane.b32.xlu0 %v4106, 32
    %v8210 = vpop.permute.xlu0 %8209
    %8212 = vrot.lane.b32.xlu0 %v3373, 32
    %v8213 = vpop.permute.xlu0 %8212
    %8215 = vrot.lane.b32.xlu0 %v4119, 80
    %v8216 = vpop.permute.xlu0 %8215
    %v8218 = vsel %vm44, %v8205, %v8210
    %v8219 = vsel %vm889, %v8218, %v8210
    %v8220 = vsel %vm50, %v8219, %v8213
    %v8221 = vsel %vm7588, %v8220, %v8216
    %v8222 = vsel %vm7590, %v8221, 0.0
    %8223 = vst [vmem:[%s4 + $0xe] sm:$0x3] %v8222
    // Predicated region
    $region22: #{model_forward.1} parent=1 // pred_check
      _
    $region23: #{model_forward.1} parent=1 // pred_check_branch
      %8225 = sbr.rel (0) target = $region25
    $region24: #{model_forward.1} parent=1 // pred_region
      _
    $region25: #{model_forward.1} parent=1 // pred_fallthru
      _
    // Predicated region
    $region26: #{model_forward.1} parent=1 // pred_check
      _
    $region27: #{model_forward.1} parent=1 // pred_check_branch
      %8227 = sbr.rel (0) target = $region29
    $region28: #{model_forward.1} parent=1 // pred_region
      _
    $region29: #{model_forward.1} parent=1 // pred_fallthru
      _
    %8228 = vsyncpa [#allocation3], 1

</llo_original>
